<compile_context>
chip_gen: v7x
topology: tpu7x:2x2x1
jax: 0.10.0
libtpu: 0.0.40
codegen_flags: <defaults>
</compile_context>

<pallas_src>
import math

import jax
import jax.numpy as jnp
from jax.experimental import pallas as pl
from jax.experimental.pallas import tpu as pltpu

# ---------------- config (small, consistent with the module) ----------------
VOCAB = 64
VOCAB_PAD = 128        # lane-dense logits; padding sliced off outside the kernel
D_MODEL = 32
N_HEADS = 4
D_Q = 8                # d_queries == d_keys
D_V = 8                # d_values
D_INNER = 64
N_LAYERS = 2
MAX_LEN = 16
NEG_INF = -1e30        # finite additive mask value

HQ = N_HEADS * D_Q            # 32  (query / key projection width)
HKV = N_HEADS * (D_Q + D_V)   # 64  (fused key+value projection width)
HV = N_HEADS * D_V            # 32  (concatenated per-head context width)


# ---------------- fused kernel builder ----------------
def _build_kernel(n, l_enc, l_dec):
    r_enc, r_dec = n * l_enc, n * l_dec
    inv_sqrt_dq = 1.0 / math.sqrt(D_Q)

    def normalize(x, eps=1e-5):
        mu = jnp.mean(x, axis=-1, keepdims=True)
        var = jnp.mean(jnp.square(x - mu), axis=-1, keepdims=True)
        return (x - mu) * jax.lax.rsqrt(var + eps)

    def kernel(enc_x_ref, dec_x_ref, eb_ref, db_ref, xb_ref,
               mw_ref, mb_ref, w1_ref, w2_ref, fb_ref, fln_ref,
               ow_ref, ob_ref, o_ref, ctx_scr):

        def mha(x, kv_src, bias, idx, self_attn, rq):
            # x: (rq, D) flat (batch folded into rows); bias: (rq, rkv) additive mask
            w = mw_ref[idx]          # (D, 128): [Wq | Wkv | Wo]
            b = mb_ref[idx]          # (1, 128): [bq | bkv | bo]
            xn = normalize(x)        # LN affine already folded into Wq / Wkv(self)
            kv_in = xn if self_attn else kv_src

            q = jnp.dot(xn, w[:, :HQ],
                        preferred_element_type=jnp.float32) + b[:, :HQ]          # (rq, 32)
            kv = jnp.dot(kv_in, w[:, HQ:HQ + HKV],
                         preferred_element_type=jnp.float32) + b[:, HQ:HQ + HKV]  # (rkv, 64)

            for h in range(N_HEADS):
                qh = q[:, h * D_Q:(h + 1) * D_Q]                  # (rq, 8)
                kh = kv[:, h * D_Q:(h + 1) * D_Q]                 # (rkv, 8)
                vh = kv[:, HQ + h * D_V:HQ + (h + 1) * D_V]       # (rkv, 8)
                s = jax.lax.dot_general(
                    qh, kh, (((1,), (1,)), ((), ())),
                    preferred_element_type=jnp.float32) * inv_sqrt_dq + bias
                s = s - jnp.max(s, axis=-1, keepdims=True)
                e = jnp.exp(s)
                p = e * pl.reciprocal(jnp.sum(e, axis=-1, keepdims=True), approx=False)
                ctx_scr[0:rq, h * D_V:(h + 1) * D_V] = jnp.dot(
                    p, vh, preferred_element_type=jnp.float32)

            # single output matmul folds the head sum into the contraction
            out = jnp.dot(ctx_scr[0:rq, :], w[:, HQ + HKV:],
                          preferred_element_type=jnp.float32) + b[:, HQ + HKV:]
            return out + x                                        # dropout == identity

        def ffn(x, idx):
            xn = normalize(x)                 # LN affine folded into w1
            bb = fb_ref[idx]                  # (1, 96): [b1 | b2]
            hid = jnp.maximum(
                jnp.dot(xn, w1_ref[idx], preferred_element_type=jnp.float32)
                + bb[:, :D_INNER], 0.0)
            out = jnp.dot(hid, w2_ref[idx],
                          preferred_element_type=jnp.float32) + bb[:, D_INNER:]
            return out + x                                        # dropout == identity

        eb = eb_ref[...]      # (r_enc, r_enc)  enc self-attn bias (pad + block-diag)
        db = db_ref[...]      # (r_dec, r_dec)  dec self-attn bias (pad + causal + block-diag)
        xb = xb_ref[...]      # (r_dec, r_enc)  cross-attn bias    (pad + block-diag)

        # ---------------- encoder stack (activations stay resident) ----------------
        x = enc_x_ref[...]
        for li in range(N_LAYERS):
            x = mha(x, x, eb, li, True, r_enc)
            x = ffn(x, li)
        enc_out = normalize(x) * fln_ref[0:1, :] + fln_ref[1:2, :]

        # ---------------- decoder stack ----------------
        y = dec_x_ref[...]
        for li in range(N_LAYERS):
            y = mha(y, y, db, N_LAYERS + 2 * li, True, r_dec)
            y = mha(y, enc_out, xb, N_LAYERS + 2 * li + 1, False, r_dec)
            y = ffn(y, N_LAYERS + li)
        y = normalize(y) * fln_ref[2:3, :] + fln_ref[3:4, :]

        # tied-weight output projection (weight pre-transposed, lane-dense 128 output)
        logits = jnp.dot(y, ow_ref[...],
                         preferred_element_type=jnp.float32) + ob_ref[...]
        o_ref[...] = logits.astype(o_ref.dtype)

    return kernel


# ---------------- forward pass (JAX glue + single pallas_call) ----------------
def transformer_forward(params, enc_tokens, dec_tokens, enc_lens, dec_lens):
    n, l_enc = enc_tokens.shape
    _, l_dec = dec_tokens.shape
    emb = params['embedding']
    pe = params['pos_enc']
    scale = math.sqrt(D_MODEL)

    # embedding gather + positional encoding (glue), flattened to (n*L, D)
    enc_x = (emb[enc_tokens] * scale + pe[:, :l_enc, :]).astype(jnp.float32)
    dec_x = (emb[dec_tokens] * scale + pe[:, :l_dec, :]).astype(jnp.float32)
    enc_x = enc_x.reshape(n * l_enc, D_MODEL)
    dec_x = dec_x.reshape(n * l_dec, D_MODEL)

    # additive masks: batch block-diagonal + key padding (+ causal for decoder self-attn)
    r_e, r_d = n * l_enc, n * l_dec
    be = jnp.arange(r_e) // l_enc
    pe_pos = jnp.arange(r_e) % l_enc
    bd = jnp.arange(r_d) // l_dec
    pd_pos = jnp.arange(r_d) % l_dec
    key_ok_e = pe_pos < enc_lens[be]
    key_ok_d = pd_pos < dec_lens[bd]
    zero = jnp.float32(0.0)
    neg = jnp.float32(NEG_INF)
    enc_self_bias = jnp.where(
        (be[:, None] == be[None, :]) & key_ok_e[None, :], zero, neg)
    dec_self_bias = jnp.where(
        (bd[:, None] == bd[None, :]) & key_ok_d[None, :]
        & (pd_pos[None, :] <= pd_pos[:, None]), zero, neg)
    cross_bias = jnp.where(
        (bd[:, None] == be[None, :]) & key_ok_e[None, :], zero, neg)

    # ---- fold LayerNorm affine into downstream projections and pack operands ----
    m, f = params['mha'], params['ffn']
    # MHA order: [enc0, enc1, dec0.self, dec0.cross, dec1.self, dec1.cross]
    self_col = jnp.array([1., 1., 1., 0., 1., 0.], jnp.float32)[:, None]

    wq_f = m['ln_g'][:, :, None] * m['wq']
    bq_f = jnp.einsum('md,mde->me', m['ln_b'], m['wq']) + m['bq']
    g_kv = self_col * m['ln_g'] + (1.0 - self_col)   # fold only for self-attention K/V
    b_kv = self_col * m['ln_b']
    wkv_f = g_kv[:, :, None] * m['wkv']
    bkv_f = jnp.einsum('md,mde->me', b_kv, m['wkv']) + m['bkv']
    mha_w = jnp.concatenate([wq_f, wkv_f, m['wo']], axis=2)                 # (6, 32, 128)
    mha_b = jnp.concatenate([bq_f, bkv_f, m['bo']], axis=1)[:, None, :]     # (6, 1, 128)

    w1_f = f['ln_g'][:, :, None] * f['w1']                                  # (4, 32, 64)
    b1_f = jnp.einsum('md,mde->me', f['ln_b'], f['w1']) + f['b1']
    ffn_b = jnp.concatenate([b1_f, f['b2']], axis=1)[:, None, :]            # (4, 1, 96)

    final_ln = jnp.stack([params['enc_ln_g'], params['enc_ln_b'],
                          params['dec_ln_g'], params['dec_ln_b']])          # (4, 32)

    # tied output weight, pre-transposed + lane-dense padded (glue)
    out_w = jnp.pad(emb, ((0, VOCAB_PAD - VOCAB), (0, 0))).T                # (32, 128)
    out_b = jnp.pad(params['fc_b'], (0, VOCAB_PAD - VOCAB))[None, :]        # (1, 128)

    kernel = _build_kernel(n, l_enc, l_dec)
    logits_pad = pl.pallas_call(
        kernel,
        out_shape=jax.ShapeDtypeStruct((n * l_dec, VOCAB_PAD), jnp.float32),
        scratch_shapes=[pltpu.VMEM((max(r_e, r_d), HV), jnp.float32)],
    )(enc_x, dec_x, enc_self_bias, dec_self_bias, cross_bias,
      mha_w, mha_b, w1_f, f['w2'], ffn_b, final_ln, out_w, out_b)

    return logits_pad.reshape(n, l_dec, VOCAB_PAD)[:, :, :VOCAB]


# ---------------- parameter init (deterministic) ----------------
def _xavier(key, fan_in, fan_out):
    bound = math.sqrt(6.0 / (fan_in + fan_out))
    return jax.random.uniform(key, (fan_in, fan_out), jnp.float32, -bound, bound)


def sinusoidal_positional_encoding(max_len, d_model):
    pos = jnp.arange(max_len, dtype=jnp.float32)[:, None]
    i = jnp.arange(0, d_model, 2, dtype=jnp.float32)
    div = jnp.exp(-math.log(10000.0) * i / d_model)
    pe = jnp.zeros((max_len, d_model), jnp.float32)
    pe = pe.at[:, 0::2].set(jnp.sin(pos * div))
    pe = pe.at[:, 1::2].set(jnp.cos(pos * div))
    return pe[None]  # (1, max_len, d_model)


def init_transformer_params(key):
    # MHA order: [enc0, enc1, dec0.self, dec0.cross, dec1.self, dec1.cross]
    # FFN order: [enc0, enc1, dec0, dec1]
    n_mha = 3 * N_LAYERS
    n_ffn = 2 * N_LAYERS
    keys = iter(jax.random.split(key, 1 + 3 * n_mha + 2 * n_ffn))

    emb = jax.random.normal(next(keys), (VOCAB, D_MODEL), jnp.float32) * D_MODEL ** -0.5

    wq = jnp.stack([_xavier(next(keys), D_MODEL, HQ) for _ in range(n_mha)])
    wkv = jnp.stack([_xavier(next(keys), D_MODEL, HKV) for _ in range(n_mha)])
    wo = jnp.stack([_xavier(next(keys), HV, D_MODEL) for _ in range(n_mha)])
    mha = dict(
        wq=wq, wkv=wkv, wo=wo,
        bq=jnp.zeros((n_mha, HQ), jnp.float32),
        bkv=jnp.zeros((n_mha, HKV), jnp.float32),
        bo=jnp.zeros((n_mha, D_MODEL), jnp.float32),
        ln_g=jnp.ones((n_mha, D_MODEL), jnp.float32),
        ln_b=jnp.zeros((n_mha, D_MODEL), jnp.float32),
    )

    w1 = jnp.stack([_xavier(next(keys), D_MODEL, D_INNER) for _ in range(n_ffn)])
    w2 = jnp.stack([_xavier(next(keys), D_INNER, D_MODEL) for _ in range(n_ffn)])
    ffn = dict(
        w1=w1, w2=w2,
        b1=jnp.zeros((n_ffn, D_INNER), jnp.float32),
        b2=jnp.zeros((n_ffn, D_MODEL), jnp.float32),
        ln_g=jnp.ones((n_ffn, D_MODEL), jnp.float32),
        ln_b=jnp.zeros((n_ffn, D_MODEL), jnp.float32),
    )

    return dict(
        embedding=emb,
        pos_enc=sinusoidal_positional_encoding(MAX_LEN, D_MODEL),
        mha=mha, ffn=ffn,
        enc_ln_g=jnp.ones((D_MODEL,), jnp.float32),
        enc_ln_b=jnp.zeros((D_MODEL,), jnp.float32),
        dec_ln_g=jnp.ones((D_MODEL,), jnp.float32),
        dec_ln_b=jnp.zeros((D_MODEL,), jnp.float32),
        fc_b=jnp.zeros((VOCAB,), jnp.float32),
    )


# ---------------- main ----------------
if __name__ == "__main__":
    key = jax.random.PRNGKey(0)
    kp, ke, kd = jax.random.split(key, 3)

    params = init_transformer_params(kp)

    N, L_ENC, L_DEC = 2, 8, 8
    enc_tokens = jax.random.randint(ke, (N, L_ENC), 0, VOCAB, dtype=jnp.int32)
    dec_tokens = jax.random.randint(kd, (N, L_DEC), 0, VOCAB, dtype=jnp.int32)
    enc_lens = jnp.array([8, 5], dtype=jnp.int32)
    dec_lens = jnp.array([8, 6], dtype=jnp.int32)

    fwd = jax.jit(transformer_forward)
    logits = jax.block_until_ready(
        fwd(params, enc_tokens, dec_tokens, enc_lens, dec_lens))

    assert logits.shape == (N, L_DEC, VOCAB)
    assert bool(jnp.all(jnp.isfinite(logits)))
    print("KERNEL_OK")
</pallas_src>

<mosaic_0001>
module attributes {stable_mosaic.version = 11 : i64} {
  func.func @kernel(%arg0: memref<16x32xf32, #tpu.memory_space<vmem>>, %arg1: memref<16x32xf32, #tpu.memory_space<vmem>>, %arg2: memref<16x16xf32, #tpu.memory_space<vmem>>, %arg3: memref<16x16xf32, #tpu.memory_space<vmem>>, %arg4: memref<16x16xf32, #tpu.memory_space<vmem>>, %arg5: memref<6x32x128xf32, #tpu.memory_space<vmem>>, %arg6: memref<6x1x128xf32, #tpu.memory_space<vmem>>, %arg7: memref<4x32x64xf32, #tpu.memory_space<vmem>>, %arg8: memref<4x64x32xf32, #tpu.memory_space<vmem>>, %arg9: memref<4x1x96xf32, #tpu.memory_space<vmem>>, %arg10: memref<4x32xf32, #tpu.memory_space<vmem>>, %arg11: memref<32x128xf32, #tpu.memory_space<vmem>>, %arg12: memref<1x128xf32, #tpu.memory_space<vmem>>, %arg13: memref<16x128xf32, #tpu.memory_space<vmem>>, %arg14: memref<16x32xf32, #tpu.memory_space<vmem>>) attributes {dimension_semantics = [], scalar_prefetch = 0 : i64, scratch_operands = 1 : i64, tpu.core_type = #tpu.core_type<tc>} {
    %c0 = arith.constant 0 : index
    %c0_0 = arith.constant 0 : index
    %0 = vector.load %arg2[%c0, %c0_0] : memref<16x16xf32, #tpu.memory_space<vmem>>, vector<16x16xf32>
    %c0_1 = arith.constant 0 : index
    %c0_2 = arith.constant 0 : index
    %1 = vector.load %arg3[%c0_1, %c0_2] : memref<16x16xf32, #tpu.memory_space<vmem>>, vector<16x16xf32>
    %c0_3 = arith.constant 0 : index
    %c0_4 = arith.constant 0 : index
    %2 = vector.load %arg4[%c0_3, %c0_4] : memref<16x16xf32, #tpu.memory_space<vmem>>, vector<16x16xf32>
    %c0_5 = arith.constant 0 : index
    %c0_6 = arith.constant 0 : index
    %3 = vector.load %arg0[%c0_5, %c0_6] : memref<16x32xf32, #tpu.memory_space<vmem>>, vector<16x32xf32>
    %c0_7 = arith.constant 0 : index
    %c0_8 = arith.constant 0 : index
    %c0_9 = arith.constant 0 : index
    %4 = vector.load %arg5[%c0_7, %c0_8, %c0_9] : memref<6x32x128xf32, #tpu.memory_space<vmem>>, vector<1x32x128xf32>
    %5 = vector.shape_cast %4 : vector<1x32x128xf32> to vector<32x128xf32>
    %c0_10 = arith.constant 0 : index
    %c0_11 = arith.constant 0 : index
    %c0_12 = arith.constant 0 : index
    %6 = vector.load %arg6[%c0_10, %c0_11, %c0_12] : memref<6x1x128xf32, #tpu.memory_space<vmem>>, vector<1x1x128xf32>
    %7 = vector.shape_cast %6 : vector<1x1x128xf32> to vector<1x128xf32>
    %cst = arith.constant dense<0.000000e+00> : vector<16xf32>
    %8 = vector.multi_reduction <add>, %3, %cst [1] : vector<16x32xf32> to vector<16xf32>
    %9 = vector.shape_cast %8 : vector<16xf32> to vector<16x1xf32>
    %cst_13 = arith.constant 3.200000e+01 : f32
    %10 = vector.broadcast %cst_13 : f32 to vector<16x1xf32>
    %11 = arith.divf %9, %10 : vector<16x1xf32>
    %12 = vector.broadcast %11 : vector<16x1xf32> to vector<16x32xf32>
    %13 = arith.subf %3, %12 : vector<16x32xf32>
    %14 = arith.mulf %13, %13 : vector<16x32xf32>
    %cst_14 = arith.constant dense<0.000000e+00> : vector<16xf32>
    %15 = vector.multi_reduction <add>, %14, %cst_14 [1] : vector<16x32xf32> to vector<16xf32>
    %16 = vector.shape_cast %15 : vector<16xf32> to vector<16x1xf32>
    %cst_15 = arith.constant 3.200000e+01 : f32
    %17 = vector.broadcast %cst_15 : f32 to vector<16x1xf32>
    %18 = arith.divf %16, %17 : vector<16x1xf32>
    %19 = vector.broadcast %11 : vector<16x1xf32> to vector<16x32xf32>
    %20 = arith.subf %3, %19 : vector<16x32xf32>
    %cst_16 = arith.constant 9.99999974E-6 : f32
    %21 = vector.broadcast %cst_16 : f32 to vector<16x1xf32>
    %22 = arith.addf %18, %21 : vector<16x1xf32>
    %23 = math.rsqrt %22 : vector<16x1xf32>
    %24 = vector.broadcast %23 : vector<16x1xf32> to vector<16x32xf32>
    %25 = arith.mulf %20, %24 : vector<16x32xf32>
    %26 = vector.extract_strided_slice %5 {offsets = [0, 0], sizes = [32, 32], strides = [1, 1]} : vector<32x128xf32> to vector<32x32xf32>
    %cst_17 = arith.constant dense<0.000000e+00> : vector<16x32xf32>
    %27 = tpu.matmul %25, %26, %cst_17 {dimension_numbers = #tpu.dot_dimension_numbers<[1], [0], [0], [1], [0, 0, 1, 1], [], []>} : vector<16x32xf32>, vector<32x32xf32>, vector<16x32xf32> -> vector<16x32xf32>
    %28 = vector.extract_strided_slice %7 {offsets = [0, 0], sizes = [1, 32], strides = [1, 1]} : vector<1x128xf32> to vector<1x32xf32>
    %29 = vector.broadcast %28 : vector<1x32xf32> to vector<16x32xf32>
    %30 = arith.addf %27, %29 : vector<16x32xf32>
    %31 = vector.extract_strided_slice %5 {offsets = [0, 32], sizes = [32, 64], strides = [1, 1]} : vector<32x128xf32> to vector<32x64xf32>
    %cst_18 = arith.constant dense<0.000000e+00> : vector<16x64xf32>
    %32 = tpu.matmul %25, %31, %cst_18 {dimension_numbers = #tpu.dot_dimension_numbers<[1], [0], [0], [1], [0, 0, 1, 1], [], []>} : vector<16x32xf32>, vector<32x64xf32>, vector<16x64xf32> -> vector<16x64xf32>
    %33 = vector.extract_strided_slice %7 {offsets = [0, 32], sizes = [1, 64], strides = [1, 1]} : vector<1x128xf32> to vector<1x64xf32>
    %34 = vector.broadcast %33 : vector<1x64xf32> to vector<16x64xf32>
    %35 = arith.addf %32, %34 : vector<16x64xf32>
    %36 = vector.extract_strided_slice %30 {offsets = [0, 0], sizes = [16, 8], strides = [1, 1]} : vector<16x32xf32> to vector<16x8xf32>
    %37 = vector.extract_strided_slice %35 {offsets = [0, 0], sizes = [16, 8], strides = [1, 1]} : vector<16x64xf32> to vector<16x8xf32>
    %38 = vector.extract_strided_slice %35 {offsets = [0, 32], sizes = [16, 8], strides = [1, 1]} : vector<16x64xf32> to vector<16x8xf32>
    %cst_19 = arith.constant dense<0.000000e+00> : vector<16x16xf32>
    %39 = tpu.matmul %36, %37, %cst_19 {dimension_numbers = #tpu.dot_dimension_numbers<[1], [1], [0], [0], [0, 0, 1, 0], [], []>} : vector<16x8xf32>, vector<16x8xf32>, vector<16x16xf32> -> vector<16x16xf32>
    %cst_20 = arith.constant 0.353553385 : f32
    %40 = vector.broadcast %cst_20 : f32 to vector<16x16xf32>
    %41 = arith.mulf %39, %40 : vector<16x16xf32>
    %42 = arith.addf %41, %0 : vector<16x16xf32>
    %cst_21 = arith.constant dense<0xFF800000> : vector<16xf32>
    %43 = vector.multi_reduction <maximumf>, %42, %cst_21 [1] : vector<16x16xf32> to vector<16xf32>
    %44 = vector.shape_cast %43 : vector<16xf32> to vector<16x1xf32>
    %45 = vector.broadcast %44 : vector<16x1xf32> to vector<16x16xf32>
    %46 = arith.subf %42, %45 : vector<16x16xf32>
    %47 = math.exp %46 : vector<16x16xf32>
    %cst_22 = arith.constant dense<0.000000e+00> : vector<16xf32>
    %48 = vector.multi_reduction <add>, %47, %cst_22 [1] : vector<16x16xf32> to vector<16xf32>
    %49 = vector.shape_cast %48 : vector<16xf32> to vector<16x1xf32>
    %50 = tpu.reciprocal %49 : vector<16x1xf32> -> vector<16x1xf32>
    %51 = vector.broadcast %50 : vector<16x1xf32> to vector<16x16xf32>
    %52 = arith.mulf %47, %51 : vector<16x16xf32>
    %cst_23 = arith.constant dense<0.000000e+00> : vector<16x8xf32>
    %53 = tpu.matmul %52, %38, %cst_23 {dimension_numbers = #tpu.dot_dimension_numbers<[1], [0], [0], [1], [0, 0, 1, 1], [], []>} : vector<16x16xf32>, vector<16x8xf32>, vector<16x8xf32> -> vector<16x8xf32>
    %c0_24 = arith.constant 0 : index
    %c0_25 = arith.constant 0 : index
    %54 = vector.load %arg14[%c0_24, %c0_25] : memref<16x32xf32, #tpu.memory_space<vmem>>, vector<16x8xf32>
    tpu.vector_store %arg14[%c0_24, %c0_25], %53 {strides = array<i32>} : memref<16x32xf32, #tpu.memory_space<vmem>>, vector<16x8xf32>,
    %55 = vector.extract_strided_slice %30 {offsets = [0, 8], sizes = [16, 8], strides = [1, 1]} : vector<16x32xf32> to vector<16x8xf32>
    %56 = vector.extract_strided_slice %35 {offsets = [0, 8], sizes = [16, 8], strides = [1, 1]} : vector<16x64xf32> to vector<16x8xf32>
    %57 = vector.extract_strided_slice %35 {offsets = [0, 40], sizes = [16, 8], strides = [1, 1]} : vector<16x64xf32> to vector<16x8xf32>
    %cst_26 = arith.constant dense<0.000000e+00> : vector<16x16xf32>
    %58 = tpu.matmul %55, %56, %cst_26 {dimension_numbers = #tpu.dot_dimension_numbers<[1], [1], [0], [0], [0, 0, 1, 0], [], []>} : vector<16x8xf32>, vector<16x8xf32>, vector<16x16xf32> -> vector<16x16xf32>
    %cst_27 = arith.constant 0.353553385 : f32
    %59 = vector.broadcast %cst_27 : f32 to vector<16x16xf32>
    %60 = arith.mulf %58, %59 : vector<16x16xf32>
    %61 = arith.addf %60, %0 : vector<16x16xf32>
    %cst_28 = arith.constant dense<0xFF800000> : vector<16xf32>
    %62 = vector.multi_reduction <maximumf>, %61, %cst_28 [1] : vector<16x16xf32> to vector<16xf32>
    %63 = vector.shape_cast %62 : vector<16xf32> to vector<16x1xf32>
    %64 = vector.broadcast %63 : vector<16x1xf32> to vector<16x16xf32>
    %65 = arith.subf %61, %64 : vector<16x16xf32>
    %66 = math.exp %65 : vector<16x16xf32>
    %cst_29 = arith.constant dense<0.000000e+00> : vector<16xf32>
    %67 = vector.multi_reduction <add>, %66, %cst_29 [1] : vector<16x16xf32> to vector<16xf32>
    %68 = vector.shape_cast %67 : vector<16xf32> to vector<16x1xf32>
    %69 = tpu.reciprocal %68 : vector<16x1xf32> -> vector<16x1xf32>
    %70 = vector.broadcast %69 : vector<16x1xf32> to vector<16x16xf32>
    %71 = arith.mulf %66, %70 : vector<16x16xf32>
    %cst_30 = arith.constant dense<0.000000e+00> : vector<16x8xf32>
    %72 = tpu.matmul %71, %57, %cst_30 {dimension_numbers = #tpu.dot_dimension_numbers<[1], [0], [0], [1], [0, 0, 1, 1], [], []>} : vector<16x16xf32>, vector<16x8xf32>, vector<16x8xf32> -> vector<16x8xf32>
    %c0_31 = arith.constant 0 : index
    %c8 = arith.constant 8 : index
    %73 = vector.load %arg14[%c0_31, %c8] : memref<16x32xf32, #tpu.memory_space<vmem>>, vector<16x8xf32>
    tpu.vector_store %arg14[%c0_31, %c8], %72 {strides = array<i32>} : memref<16x32xf32, #tpu.memory_space<vmem>>, vector<16x8xf32>,
    %74 = vector.extract_strided_slice %30 {offsets = [0, 16], sizes = [16, 8], strides = [1, 1]} : vector<16x32xf32> to vector<16x8xf32>
    %75 = vector.extract_strided_slice %35 {offsets = [0, 16], sizes = [16, 8], strides = [1, 1]} : vector<16x64xf32> to vector<16x8xf32>
    %76 = vector.extract_strided_slice %35 {offsets = [0, 48], sizes = [16, 8], strides = [1, 1]} : vector<16x64xf32> to vector<16x8xf32>
    %cst_32 = arith.constant dense<0.000000e+00> : vector<16x16xf32>
    %77 = tpu.matmul %74, %75, %cst_32 {dimension_numbers = #tpu.dot_dimension_numbers<[1], [1], [0], [0], [0, 0, 1, 0], [], []>} : vector<16x8xf32>, vector<16x8xf32>, vector<16x16xf32> -> vector<16x16xf32>
    %cst_33 = arith.constant 0.353553385 : f32
    %78 = vector.broadcast %cst_33 : f32 to vector<16x16xf32>
    %79 = arith.mulf %77, %78 : vector<16x16xf32>
    %80 = arith.addf %79, %0 : vector<16x16xf32>
    %cst_34 = arith.constant dense<0xFF800000> : vector<16xf32>
    %81 = vector.multi_reduction <maximumf>, %80, %cst_34 [1] : vector<16x16xf32> to vector<16xf32>
    %82 = vector.shape_cast %81 : vector<16xf32> to vector<16x1xf32>
    %83 = vector.broadcast %82 : vector<16x1xf32> to vector<16x16xf32>
    %84 = arith.subf %80, %83 : vector<16x16xf32>
    %85 = math.exp %84 : vector<16x16xf32>
    %cst_35 = arith.constant dense<0.000000e+00> : vector<16xf32>
    %86 = vector.multi_reduction <add>, %85, %cst_35 [1] : vector<16x16xf32> to vector<16xf32>
    %87 = vector.shape_cast %86 : vector<16xf32> to vector<16x1xf32>
    %88 = tpu.reciprocal %87 : vector<16x1xf32> -> vector<16x1xf32>
    %89 = vector.broadcast %88 : vector<16x1xf32> to vector<16x16xf32>
    %90 = arith.mulf %85, %89 : vector<16x16xf32>
    %cst_36 = arith.constant dense<0.000000e+00> : vector<16x8xf32>
    %91 = tpu.matmul %90, %76, %cst_36 {dimension_numbers = #tpu.dot_dimension_numbers<[1], [0], [0], [1], [0, 0, 1, 1], [], []>} : vector<16x16xf32>, vector<16x8xf32>, vector<16x8xf32> -> vector<16x8xf32>
    %c0_37 = arith.constant 0 : index
    %c16 = arith.constant 16 : index
    %92 = vector.load %arg14[%c0_37, %c16] : memref<16x32xf32, #tpu.memory_space<vmem>>, vector<16x8xf32>
    tpu.vector_store %arg14[%c0_37, %c16], %91 {strides = array<i32>} : memref<16x32xf32, #tpu.memory_space<vmem>>, vector<16x8xf32>,
    %93 = vector.extract_strided_slice %30 {offsets = [0, 24], sizes = [16, 8], strides = [1, 1]} : vector<16x32xf32> to vector<16x8xf32>
    %94 = vector.extract_strided_slice %35 {offsets = [0, 24], sizes = [16, 8], strides = [1, 1]} : vector<16x64xf32> to vector<16x8xf32>
    %95 = vector.extract_strided_slice %35 {offsets = [0, 56], sizes = [16, 8], strides = [1, 1]} : vector<16x64xf32> to vector<16x8xf32>
    %cst_38 = arith.constant dense<0.000000e+00> : vector<16x16xf32>
    %96 = tpu.matmul %93, %94, %cst_38 {dimension_numbers = #tpu.dot_dimension_numbers<[1], [1], [0], [0], [0, 0, 1, 0], [], []>} : vector<16x8xf32>, vector<16x8xf32>, vector<16x16xf32> -> vector<16x16xf32>
    %cst_39 = arith.constant 0.353553385 : f32
    %97 = vector.broadcast %cst_39 : f32 to vector<16x16xf32>
    %98 = arith.mulf %96, %97 : vector<16x16xf32>
    %99 = arith.addf %98, %0 : vector<16x16xf32>
    %cst_40 = arith.constant dense<0xFF800000> : vector<16xf32>
    %100 = vector.multi_reduction <maximumf>, %99, %cst_40 [1] : vector<16x16xf32> to vector<16xf32>
    %101 = vector.shape_cast %100 : vector<16xf32> to vector<16x1xf32>
    %102 = vector.broadcast %101 : vector<16x1xf32> to vector<16x16xf32>
    %103 = arith.subf %99, %102 : vector<16x16xf32>
    %104 = math.exp %103 : vector<16x16xf32>
    %cst_41 = arith.constant dense<0.000000e+00> : vector<16xf32>
    %105 = vector.multi_reduction <add>, %104, %cst_41 [1] : vector<16x16xf32> to vector<16xf32>
    %106 = vector.shape_cast %105 : vector<16xf32> to vector<16x1xf32>
    %107 = tpu.reciprocal %106 : vector<16x1xf32> -> vector<16x1xf32>
    %108 = vector.broadcast %107 : vector<16x1xf32> to vector<16x16xf32>
    %109 = arith.mulf %104, %108 : vector<16x16xf32>
    %cst_42 = arith.constant dense<0.000000e+00> : vector<16x8xf32>
    %110 = tpu.matmul %109, %95, %cst_42 {dimension_numbers = #tpu.dot_dimension_numbers<[1], [0], [0], [1], [0, 0, 1, 1], [], []>} : vector<16x16xf32>, vector<16x8xf32>, vector<16x8xf32> -> vector<16x8xf32>
    %c0_43 = arith.constant 0 : index
    %c24 = arith.constant 24 : index
    %111 = vector.load %arg14[%c0_43, %c24] : memref<16x32xf32, #tpu.memory_space<vmem>>, vector<16x8xf32>
    tpu.vector_store %arg14[%c0_43, %c24], %110 {strides = array<i32>} : memref<16x32xf32, #tpu.memory_space<vmem>>, vector<16x8xf32>,
    %c0_44 = arith.constant 0 : index
    %c0_45 = arith.constant 0 : index
    %112 = vector.load %arg14[%c0_44, %c0_45] : memref<16x32xf32, #tpu.memory_space<vmem>>, vector<16x32xf32>
    %113 = vector.extract_strided_slice %5 {offsets = [0, 96], sizes = [32, 32], strides = [1, 1]} : vector<32x128xf32> to vector<32x32xf32>
    %cst_46 = arith.constant dense<0.000000e+00> : vector<16x32xf32>
    %114 = tpu.matmul %112, %113, %cst_46 {dimension_numbers = #tpu.dot_dimension_numbers<[1], [0], [0], [1], [0, 0, 1, 1], [], []>} : vector<16x32xf32>, vector<32x32xf32>, vector<16x32xf32> -> vector<16x32xf32>
    %115 = vector.extract_strided_slice %7 {offsets = [0, 96], sizes = [1, 32], strides = [1, 1]} : vector<1x128xf32> to vector<1x32xf32>
    %116 = vector.broadcast %115 : vector<1x32xf32> to vector<16x32xf32>
    %117 = arith.addf %114, %116 : vector<16x32xf32>
    %118 = arith.addf %117, %3 : vector<16x32xf32>
    %cst_47 = arith.constant dense<0.000000e+00> : vector<16xf32>
    %119 = vector.multi_reduction <add>, %118, %cst_47 [1] : vector<16x32xf32> to vector<16xf32>
    %120 = vector.shape_cast %119 : vector<16xf32> to vector<16x1xf32>
    %cst_48 = arith.constant 3.200000e+01 : f32
    %121 = vector.broadcast %cst_48 : f32 to vector<16x1xf32>
    %122 = arith.divf %120, %121 : vector<16x1xf32>
    %123 = vector.broadcast %122 : vector<16x1xf32> to vector<16x32xf32>
    %124 = arith.subf %118, %123 : vector<16x32xf32>
    %125 = arith.mulf %124, %124 : vector<16x32xf32>
    %cst_49 = arith.constant dense<0.000000e+00> : vector<16xf32>
    %126 = vector.multi_reduction <add>, %125, %cst_49 [1] : vector<16x32xf32> to vector<16xf32>
    %127 = vector.shape_cast %126 : vector<16xf32> to vector<16x1xf32>
    %cst_50 = arith.constant 3.200000e+01 : f32
    %128 = vector.broadcast %cst_50 : f32 to vector<16x1xf32>
    %129 = arith.divf %127, %128 : vector<16x1xf32>
    %130 = vector.broadcast %122 : vector<16x1xf32> to vector<16x32xf32>
    %131 = arith.subf %118, %130 : vector<16x32xf32>
    %cst_51 = arith.constant 9.99999974E-6 : f32
    %132 = vector.broadcast %cst_51 : f32 to vector<16x1xf32>
    %133 = arith.addf %129, %132 : vector<16x1xf32>
    %134 = math.rsqrt %133 : vector<16x1xf32>
    %135 = vector.broadcast %134 : vector<16x1xf32> to vector<16x32xf32>
    %136 = arith.mulf %131, %135 : vector<16x32xf32>
    %c0_52 = arith.constant 0 : index
    %c0_53 = arith.constant 0 : index
    %c0_54 = arith.constant 0 : index
    %137 = vector.load %arg9[%c0_52, %c0_53, %c0_54] : memref<4x1x96xf32, #tpu.memory_space<vmem>>, vector<1x1x96xf32>
    %138 = vector.shape_cast %137 : vector<1x1x96xf32> to vector<1x96xf32>
    %c0_55 = arith.constant 0 : index
    %c0_56 = arith.constant 0 : index
    %c0_57 = arith.constant 0 : index
    %139 = vector.load %arg7[%c0_55, %c0_56, %c0_57] : memref<4x32x64xf32, #tpu.memory_space<vmem>>, vector<1x32x64xf32>
    %140 = vector.shape_cast %139 : vector<1x32x64xf32> to vector<32x64xf32>
    %cst_58 = arith.constant dense<0.000000e+00> : vector<16x64xf32>
    %141 = tpu.matmul %136, %140, %cst_58 {dimension_numbers = #tpu.dot_dimension_numbers<[1], [0], [0], [1], [0, 0, 1, 1], [], []>} : vector<16x32xf32>, vector<32x64xf32>, vector<16x64xf32> -> vector<16x64xf32>
    %142 = vector.extract_strided_slice %138 {offsets = [0, 0], sizes = [1, 64], strides = [1, 1]} : vector<1x96xf32> to vector<1x64xf32>
    %143 = vector.broadcast %142 : vector<1x64xf32> to vector<16x64xf32>
    %144 = arith.addf %141, %143 : vector<16x64xf32>
    %cst_59 = arith.constant 0.000000e+00 : f32
    %145 = vector.broadcast %cst_59 : f32 to vector<16x64xf32>
    %146 = arith.maximumf %144, %145 : vector<16x64xf32>
    %c0_60 = arith.constant 0 : index
    %c0_61 = arith.constant 0 : index
    %c0_62 = arith.constant 0 : index
    %147 = vector.load %arg8[%c0_60, %c0_61, %c0_62] : memref<4x64x32xf32, #tpu.memory_space<vmem>>, vector<1x64x32xf32>
    %148 = vector.shape_cast %147 : vector<1x64x32xf32> to vector<64x32xf32>
    %cst_63 = arith.constant dense<0.000000e+00> : vector<16x32xf32>
    %149 = tpu.matmul %146, %148, %cst_63 {dimension_numbers = #tpu.dot_dimension_numbers<[1], [0], [0], [1], [0, 0, 1, 1], [], []>} : vector<16x64xf32>, vector<64x32xf32>, vector<16x32xf32> -> vector<16x32xf32>
    %150 = vector.extract_strided_slice %138 {offsets = [0, 64], sizes = [1, 32], strides = [1, 1]} : vector<1x96xf32> to vector<1x32xf32>
    %151 = vector.broadcast %150 : vector<1x32xf32> to vector<16x32xf32>
    %152 = arith.addf %149, %151 : vector<16x32xf32>
    %153 = arith.addf %152, %118 : vector<16x32xf32>
    %c1 = arith.constant 1 : index
    %c0_64 = arith.constant 0 : index
    %c0_65 = arith.constant 0 : index
    %154 = vector.load %arg5[%c1, %c0_64, %c0_65] : memref<6x32x128xf32, #tpu.memory_space<vmem>>, vector<1x32x128xf32>
    %155 = vector.shape_cast %154 : vector<1x32x128xf32> to vector<32x128xf32>
    %c1_66 = arith.constant 1 : index
    %c0_67 = arith.constant 0 : index
    %c0_68 = arith.constant 0 : index
    %156 = vector.load %arg6[%c1_66, %c0_67, %c0_68] : memref<6x1x128xf32, #tpu.memory_space<vmem>>, vector<1x1x128xf32>
    %157 = vector.shape_cast %156 : vector<1x1x128xf32> to vector<1x128xf32>
    %cst_69 = arith.constant dense<0.000000e+00> : vector<16xf32>
    %158 = vector.multi_reduction <add>, %153, %cst_69 [1] : vector<16x32xf32> to vector<16xf32>
    %159 = vector.shape_cast %158 : vector<16xf32> to vector<16x1xf32>
    %cst_70 = arith.constant 3.200000e+01 : f32
    %160 = vector.broadcast %cst_70 : f32 to vector<16x1xf32>
    %161 = arith.divf %159, %160 : vector<16x1xf32>
    %162 = vector.broadcast %161 : vector<16x1xf32> to vector<16x32xf32>
    %163 = arith.subf %153, %162 : vector<16x32xf32>
    %164 = arith.mulf %163, %163 : vector<16x32xf32>
    %cst_71 = arith.constant dense<0.000000e+00> : vector<16xf32>
    %165 = vector.multi_reduction <add>, %164, %cst_71 [1] : vector<16x32xf32> to vector<16xf32>
    %166 = vector.shape_cast %165 : vector<16xf32> to vector<16x1xf32>
    %cst_72 = arith.constant 3.200000e+01 : f32
    %167 = vector.broadcast %cst_72 : f32 to vector<16x1xf32>
    %168 = arith.divf %166, %167 : vector<16x1xf32>
    %169 = vector.broadcast %161 : vector<16x1xf32> to vector<16x32xf32>
    %170 = arith.subf %153, %169 : vector<16x32xf32>
    %cst_73 = arith.constant 9.99999974E-6 : f32
    %171 = vector.broadcast %cst_73 : f32 to vector<16x1xf32>
    %172 = arith.addf %168, %171 : vector<16x1xf32>
    %173 = math.rsqrt %172 : vector<16x1xf32>
    %174 = vector.broadcast %173 : vector<16x1xf32> to vector<16x32xf32>
    %175 = arith.mulf %170, %174 : vector<16x32xf32>
    %176 = vector.extract_strided_slice %155 {offsets = [0, 0], sizes = [32, 32], strides = [1, 1]} : vector<32x128xf32> to vector<32x32xf32>
    %cst_74 = arith.constant dense<0.000000e+00> : vector<16x32xf32>
    %177 = tpu.matmul %175, %176, %cst_74 {dimension_numbers = #tpu.dot_dimension_numbers<[1], [0], [0], [1], [0, 0, 1, 1], [], []>} : vector<16x32xf32>, vector<32x32xf32>, vector<16x32xf32> -> vector<16x32xf32>
    %178 = vector.extract_strided_slice %157 {offsets = [0, 0], sizes = [1, 32], strides = [1, 1]} : vector<1x128xf32> to vector<1x32xf32>
    %179 = vector.broadcast %178 : vector<1x32xf32> to vector<16x32xf32>
    %180 = arith.addf %177, %179 : vector<16x32xf32>
    %181 = vector.extract_strided_slice %155 {offsets = [0, 32], sizes = [32, 64], strides = [1, 1]} : vector<32x128xf32> to vector<32x64xf32>
    %cst_75 = arith.constant dense<0.000000e+00> : vector<16x64xf32>
    %182 = tpu.matmul %175, %181, %cst_75 {dimension_numbers = #tpu.dot_dimension_numbers<[1], [0], [0], [1], [0, 0, 1, 1], [], []>} : vector<16x32xf32>, vector<32x64xf32>, vector<16x64xf32> -> vector<16x64xf32>
    %183 = vector.extract_strided_slice %157 {offsets = [0, 32], sizes = [1, 64], strides = [1, 1]} : vector<1x128xf32> to vector<1x64xf32>
    %184 = vector.broadcast %183 : vector<1x64xf32> to vector<16x64xf32>
    %185 = arith.addf %182, %184 : vector<16x64xf32>
    %186 = vector.extract_strided_slice %180 {offsets = [0, 0], sizes = [16, 8], strides = [1, 1]} : vector<16x32xf32> to vector<16x8xf32>
    %187 = vector.extract_strided_slice %185 {offsets = [0, 0], sizes = [16, 8], strides = [1, 1]} : vector<16x64xf32> to vector<16x8xf32>
    %188 = vector.extract_strided_slice %185 {offsets = [0, 32], sizes = [16, 8], strides = [1, 1]} : vector<16x64xf32> to vector<16x8xf32>
    %cst_76 = arith.constant dense<0.000000e+00> : vector<16x16xf32>
    %189 = tpu.matmul %186, %187, %cst_76 {dimension_numbers = #tpu.dot_dimension_numbers<[1], [1], [0], [0], [0, 0, 1, 0], [], []>} : vector<16x8xf32>, vector<16x8xf32>, vector<16x16xf32> -> vector<16x16xf32>
    %cst_77 = arith.constant 0.353553385 : f32
    %190 = vector.broadcast %cst_77 : f32 to vector<16x16xf32>
    %191 = arith.mulf %189, %190 : vector<16x16xf32>
    %192 = arith.addf %191, %0 : vector<16x16xf32>
    %cst_78 = arith.constant dense<0xFF800000> : vector<16xf32>
    %193 = vector.multi_reduction <maximumf>, %192, %cst_78 [1] : vector<16x16xf32> to vector<16xf32>
    %194 = vector.shape_cast %193 : vector<16xf32> to vector<16x1xf32>
    %195 = vector.broadcast %194 : vector<16x1xf32> to vector<16x16xf32>
    %196 = arith.subf %192, %195 : vector<16x16xf32>
    %197 = math.exp %196 : vector<16x16xf32>
    %cst_79 = arith.constant dense<0.000000e+00> : vector<16xf32>
    %198 = vector.multi_reduction <add>, %197, %cst_79 [1] : vector<16x16xf32> to vector<16xf32>
    %199 = vector.shape_cast %198 : vector<16xf32> to vector<16x1xf32>
    %200 = tpu.reciprocal %199 : vector<16x1xf32> -> vector<16x1xf32>
    %201 = vector.broadcast %200 : vector<16x1xf32> to vector<16x16xf32>
    %202 = arith.mulf %197, %201 : vector<16x16xf32>
    %cst_80 = arith.constant dense<0.000000e+00> : vector<16x8xf32>
    %203 = tpu.matmul %202, %188, %cst_80 {dimension_numbers = #tpu.dot_dimension_numbers<[1], [0], [0], [1], [0, 0, 1, 1], [], []>} : vector<16x16xf32>, vector<16x8xf32>, vector<16x8xf32> -> vector<16x8xf32>
    %c0_81 = arith.constant 0 : index
    %c0_82 = arith.constant 0 : index
    %204 = vector.load %arg14[%c0_81, %c0_82] : memref<16x32xf32, #tpu.memory_space<vmem>>, vector<16x8xf32>
    tpu.vector_store %arg14[%c0_81, %c0_82], %203 {strides = array<i32>} : memref<16x32xf32, #tpu.memory_space<vmem>>, vector<16x8xf32>,
    %205 = vector.extract_strided_slice %180 {offsets = [0, 8], sizes = [16, 8], strides = [1, 1]} : vector<16x32xf32> to vector<16x8xf32>
    %206 = vector.extract_strided_slice %185 {offsets = [0, 8], sizes = [16, 8], strides = [1, 1]} : vector<16x64xf32> to vector<16x8xf32>
    %207 = vector.extract_strided_slice %185 {offsets = [0, 40], sizes = [16, 8], strides = [1, 1]} : vector<16x64xf32> to vector<16x8xf32>
    %cst_83 = arith.constant dense<0.000000e+00> : vector<16x16xf32>
    %208 = tpu.matmul %205, %206, %cst_83 {dimension_numbers = #tpu.dot_dimension_numbers<[1], [1], [0], [0], [0, 0, 1, 0], [], []>} : vector<16x8xf32>, vector<16x8xf32>, vector<16x16xf32> -> vector<16x16xf32>
    %cst_84 = arith.constant 0.353553385 : f32
    %209 = vector.broadcast %cst_84 : f32 to vector<16x16xf32>
    %210 = arith.mulf %208, %209 : vector<16x16xf32>
    %211 = arith.addf %210, %0 : vector<16x16xf32>
    %cst_85 = arith.constant dense<0xFF800000> : vector<16xf32>
    %212 = vector.multi_reduction <maximumf>, %211, %cst_85 [1] : vector<16x16xf32> to vector<16xf32>
    %213 = vector.shape_cast %212 : vector<16xf32> to vector<16x1xf32>
    %214 = vector.broadcast %213 : vector<16x1xf32> to vector<16x16xf32>
    %215 = arith.subf %211, %214 : vector<16x16xf32>
    %216 = math.exp %215 : vector<16x16xf32>
    %cst_86 = arith.constant dense<0.000000e+00> : vector<16xf32>
    %217 = vector.multi_reduction <add>, %216, %cst_86 [1] : vector<16x16xf32> to vector<16xf32>
    %218 = vector.shape_cast %217 : vector<16xf32> to vector<16x1xf32>
    %219 = tpu.reciprocal %218 : vector<16x1xf32> -> vector<16x1xf32>
    %220 = vector.broadcast %219 : vector<16x1xf32> to vector<16x16xf32>
    %221 = arith.mulf %216, %220 : vector<16x16xf32>
    %cst_87 = arith.constant dense<0.000000e+00> : vector<16x8xf32>
    %222 = tpu.matmul %221, %207, %cst_87 {dimension_numbers = #tpu.dot_dimension_numbers<[1], [0], [0], [1], [0, 0, 1, 1], [], []>} : vector<16x16xf32>, vector<16x8xf32>, vector<16x8xf32> -> vector<16x8xf32>
    %c0_88 = arith.constant 0 : index
    %c8_89 = arith.constant 8 : index
    %223 = vector.load %arg14[%c0_88, %c8_89] : memref<16x32xf32, #tpu.memory_space<vmem>>, vector<16x8xf32>
    tpu.vector_store %arg14[%c0_88, %c8_89], %222 {strides = array<i32>} : memref<16x32xf32, #tpu.memory_space<vmem>>, vector<16x8xf32>,
    %224 = vector.extract_strided_slice %180 {offsets = [0, 16], sizes = [16, 8], strides = [1, 1]} : vector<16x32xf32> to vector<16x8xf32>
    %225 = vector.extract_strided_slice %185 {offsets = [0, 16], sizes = [16, 8], strides = [1, 1]} : vector<16x64xf32> to vector<16x8xf32>
    %226 = vector.extract_strided_slice %185 {offsets = [0, 48], sizes = [16, 8], strides = [1, 1]} : vector<16x64xf32> to vector<16x8xf32>
    %cst_90 = arith.constant dense<0.000000e+00> : vector<16x16xf32>
    %227 = tpu.matmul %224, %225, %cst_90 {dimension_numbers = #tpu.dot_dimension_numbers<[1], [1], [0], [0], [0, 0, 1, 0], [], []>} : vector<16x8xf32>, vector<16x8xf32>, vector<16x16xf32> -> vector<16x16xf32>
    %cst_91 = arith.constant 0.353553385 : f32
    %228 = vector.broadcast %cst_91 : f32 to vector<16x16xf32>
    %229 = arith.mulf %227, %228 : vector<16x16xf32>
    %230 = arith.addf %229, %0 : vector<16x16xf32>
    %cst_92 = arith.constant dense<0xFF800000> : vector<16xf32>
    %231 = vector.multi_reduction <maximumf>, %230, %cst_92 [1] : vector<16x16xf32> to vector<16xf32>
    %232 = vector.shape_cast %231 : vector<16xf32> to vector<16x1xf32>
    %233 = vector.broadcast %232 : vector<16x1xf32> to vector<16x16xf32>
    %234 = arith.subf %230, %233 : vector<16x16xf32>
    %235 = math.exp %234 : vector<16x16xf32>
    %cst_93 = arith.constant dense<0.000000e+00> : vector<16xf32>
    %236 = vector.multi_reduction <add>, %235, %cst_93 [1] : vector<16x16xf32> to vector<16xf32>
    %237 = vector.shape_cast %236 : vector<16xf32> to vector<16x1xf32>
    %238 = tpu.reciprocal %237 : vector<16x1xf32> -> vector<16x1xf32>
    %239 = vector.broadcast %238 : vector<16x1xf32> to vector<16x16xf32>
    %240 = arith.mulf %235, %239 : vector<16x16xf32>
    %cst_94 = arith.constant dense<0.000000e+00> : vector<16x8xf32>
    %241 = tpu.matmul %240, %226, %cst_94 {dimension_numbers = #tpu.dot_dimension_numbers<[1], [0], [0], [1], [0, 0, 1, 1], [], []>} : vector<16x16xf32>, vector<16x8xf32>, vector<16x8xf32> -> vector<16x8xf32>
    %c0_95 = arith.constant 0 : index
    %c16_96 = arith.constant 16 : index
    %242 = vector.load %arg14[%c0_95, %c16_96] : memref<16x32xf32, #tpu.memory_space<vmem>>, vector<16x8xf32>
    tpu.vector_store %arg14[%c0_95, %c16_96], %241 {strides = array<i32>} : memref<16x32xf32, #tpu.memory_space<vmem>>, vector<16x8xf32>,
    %243 = vector.extract_strided_slice %180 {offsets = [0, 24], sizes = [16, 8], strides = [1, 1]} : vector<16x32xf32> to vector<16x8xf32>
    %244 = vector.extract_strided_slice %185 {offsets = [0, 24], sizes = [16, 8], strides = [1, 1]} : vector<16x64xf32> to vector<16x8xf32>
    %245 = vector.extract_strided_slice %185 {offsets = [0, 56], sizes = [16, 8], strides = [1, 1]} : vector<16x64xf32> to vector<16x8xf32>
    %cst_97 = arith.constant dense<0.000000e+00> : vector<16x16xf32>
    %246 = tpu.matmul %243, %244, %cst_97 {dimension_numbers = #tpu.dot_dimension_numbers<[1], [1], [0], [0], [0, 0, 1, 0], [], []>} : vector<16x8xf32>, vector<16x8xf32>, vector<16x16xf32> -> vector<16x16xf32>
    %cst_98 = arith.constant 0.353553385 : f32
    %247 = vector.broadcast %cst_98 : f32 to vector<16x16xf32>
    %248 = arith.mulf %246, %247 : vector<16x16xf32>
    %249 = arith.addf %248, %0 : vector<16x16xf32>
    %cst_99 = arith.constant dense<0xFF800000> : vector<16xf32>
    %250 = vector.multi_reduction <maximumf>, %249, %cst_99 [1] : vector<16x16xf32> to vector<16xf32>
    %251 = vector.shape_cast %250 : vector<16xf32> to vector<16x1xf32>
    %252 = vector.broadcast %251 : vector<16x1xf32> to vector<16x16xf32>
    %253 = arith.subf %249, %252 : vector<16x16xf32>
    %254 = math.exp %253 : vector<16x16xf32>
    %cst_100 = arith.constant dense<0.000000e+00> : vector<16xf32>
    %255 = vector.multi_reduction <add>, %254, %cst_100 [1] : vector<16x16xf32> to vector<16xf32>
    %256 = vector.shape_cast %255 : vector<16xf32> to vector<16x1xf32>
    %257 = tpu.reciprocal %256 : vector<16x1xf32> -> vector<16x1xf32>
    %258 = vector.broadcast %257 : vector<16x1xf32> to vector<16x16xf32>
    %259 = arith.mulf %254, %258 : vector<16x16xf32>
    %cst_101 = arith.constant dense<0.000000e+00> : vector<16x8xf32>
    %260 = tpu.matmul %259, %245, %cst_101 {dimension_numbers = #tpu.dot_dimension_numbers<[1], [0], [0], [1], [0, 0, 1, 1], [], []>} : vector<16x16xf32>, vector<16x8xf32>, vector<16x8xf32> -> vector<16x8xf32>
    %c0_102 = arith.constant 0 : index
    %c24_103 = arith.constant 24 : index
    %261 = vector.load %arg14[%c0_102, %c24_103] : memref<16x32xf32, #tpu.memory_space<vmem>>, vector<16x8xf32>
    tpu.vector_store %arg14[%c0_102, %c24_103], %260 {strides = array<i32>} : memref<16x32xf32, #tpu.memory_space<vmem>>, vector<16x8xf32>,
    %c0_104 = arith.constant 0 : index
    %c0_105 = arith.constant 0 : index
    %262 = vector.load %arg14[%c0_104, %c0_105] : memref<16x32xf32, #tpu.memory_space<vmem>>, vector<16x32xf32>
    %263 = vector.extract_strided_slice %155 {offsets = [0, 96], sizes = [32, 32], strides = [1, 1]} : vector<32x128xf32> to vector<32x32xf32>
    %cst_106 = arith.constant dense<0.000000e+00> : vector<16x32xf32>
    %264 = tpu.matmul %262, %263, %cst_106 {dimension_numbers = #tpu.dot_dimension_numbers<[1], [0], [0], [1], [0, 0, 1, 1], [], []>} : vector<16x32xf32>, vector<32x32xf32>, vector<16x32xf32> -> vector<16x32xf32>
    %265 = vector.extract_strided_slice %157 {offsets = [0, 96], sizes = [1, 32], strides = [1, 1]} : vector<1x128xf32> to vector<1x32xf32>
    %266 = vector.broadcast %265 : vector<1x32xf32> to vector<16x32xf32>
    %267 = arith.addf %264, %266 : vector<16x32xf32>
    %268 = arith.addf %267, %153 : vector<16x32xf32>
    %cst_107 = arith.constant dense<0.000000e+00> : vector<16xf32>
    %269 = vector.multi_reduction <add>, %268, %cst_107 [1] : vector<16x32xf32> to vector<16xf32>
    %270 = vector.shape_cast %269 : vector<16xf32> to vector<16x1xf32>
    %cst_108 = arith.constant 3.200000e+01 : f32
    %271 = vector.broadcast %cst_108 : f32 to vector<16x1xf32>
    %272 = arith.divf %270, %271 : vector<16x1xf32>
    %273 = vector.broadcast %272 : vector<16x1xf32> to vector<16x32xf32>
    %274 = arith.subf %268, %273 : vector<16x32xf32>
    %275 = arith.mulf %274, %274 : vector<16x32xf32>
    %cst_109 = arith.constant dense<0.000000e+00> : vector<16xf32>
    %276 = vector.multi_reduction <add>, %275, %cst_109 [1] : vector<16x32xf32> to vector<16xf32>
    %277 = vector.shape_cast %276 : vector<16xf32> to vector<16x1xf32>
    %cst_110 = arith.constant 3.200000e+01 : f32
    %278 = vector.broadcast %cst_110 : f32 to vector<16x1xf32>
    %279 = arith.divf %277, %278 : vector<16x1xf32>
    %280 = vector.broadcast %272 : vector<16x1xf32> to vector<16x32xf32>
    %281 = arith.subf %268, %280 : vector<16x32xf32>
    %cst_111 = arith.constant 9.99999974E-6 : f32
    %282 = vector.broadcast %cst_111 : f32 to vector<16x1xf32>
    %283 = arith.addf %279, %282 : vector<16x1xf32>
    %284 = math.rsqrt %283 : vector<16x1xf32>
    %285 = vector.broadcast %284 : vector<16x1xf32> to vector<16x32xf32>
    %286 = arith.mulf %281, %285 : vector<16x32xf32>
    %c1_112 = arith.constant 1 : index
    %c0_113 = arith.constant 0 : index
    %c0_114 = arith.constant 0 : index
    %287 = vector.load %arg9[%c1_112, %c0_113, %c0_114] : memref<4x1x96xf32, #tpu.memory_space<vmem>>, vector<1x1x96xf32>
    %288 = vector.shape_cast %287 : vector<1x1x96xf32> to vector<1x96xf32>
    %c1_115 = arith.constant 1 : index
    %c0_116 = arith.constant 0 : index
    %c0_117 = arith.constant 0 : index
    %289 = vector.load %arg7[%c1_115, %c0_116, %c0_117] : memref<4x32x64xf32, #tpu.memory_space<vmem>>, vector<1x32x64xf32>
    %290 = vector.shape_cast %289 : vector<1x32x64xf32> to vector<32x64xf32>
    %cst_118 = arith.constant dense<0.000000e+00> : vector<16x64xf32>
    %291 = tpu.matmul %286, %290, %cst_118 {dimension_numbers = #tpu.dot_dimension_numbers<[1], [0], [0], [1], [0, 0, 1, 1], [], []>} : vector<16x32xf32>, vector<32x64xf32>, vector<16x64xf32> -> vector<16x64xf32>
    %292 = vector.extract_strided_slice %288 {offsets = [0, 0], sizes = [1, 64], strides = [1, 1]} : vector<1x96xf32> to vector<1x64xf32>
    %293 = vector.broadcast %292 : vector<1x64xf32> to vector<16x64xf32>
    %294 = arith.addf %291, %293 : vector<16x64xf32>
    %cst_119 = arith.constant 0.000000e+00 : f32
    %295 = vector.broadcast %cst_119 : f32 to vector<16x64xf32>
    %296 = arith.maximumf %294, %295 : vector<16x64xf32>
    %c1_120 = arith.constant 1 : index
    %c0_121 = arith.constant 0 : index
    %c0_122 = arith.constant 0 : index
    %297 = vector.load %arg8[%c1_120, %c0_121, %c0_122] : memref<4x64x32xf32, #tpu.memory_space<vmem>>, vector<1x64x32xf32>
    %298 = vector.shape_cast %297 : vector<1x64x32xf32> to vector<64x32xf32>
    %cst_123 = arith.constant dense<0.000000e+00> : vector<16x32xf32>
    %299 = tpu.matmul %296, %298, %cst_123 {dimension_numbers = #tpu.dot_dimension_numbers<[1], [0], [0], [1], [0, 0, 1, 1], [], []>} : vector<16x64xf32>, vector<64x32xf32>, vector<16x32xf32> -> vector<16x32xf32>
    %300 = vector.extract_strided_slice %288 {offsets = [0, 64], sizes = [1, 32], strides = [1, 1]} : vector<1x96xf32> to vector<1x32xf32>
    %301 = vector.broadcast %300 : vector<1x32xf32> to vector<16x32xf32>
    %302 = arith.addf %299, %301 : vector<16x32xf32>
    %303 = arith.addf %302, %268 : vector<16x32xf32>
    %cst_124 = arith.constant dense<0.000000e+00> : vector<16xf32>
    %304 = vector.multi_reduction <add>, %303, %cst_124 [1] : vector<16x32xf32> to vector<16xf32>
    %305 = vector.shape_cast %304 : vector<16xf32> to vector<16x1xf32>
    %cst_125 = arith.constant 3.200000e+01 : f32
    %306 = vector.broadcast %cst_125 : f32 to vector<16x1xf32>
    %307 = arith.divf %305, %306 : vector<16x1xf32>
    %308 = vector.broadcast %307 : vector<16x1xf32> to vector<16x32xf32>
    %309 = arith.subf %303, %308 : vector<16x32xf32>
    %310 = arith.mulf %309, %309 : vector<16x32xf32>
    %cst_126 = arith.constant dense<0.000000e+00> : vector<16xf32>
    %311 = vector.multi_reduction <add>, %310, %cst_126 [1] : vector<16x32xf32> to vector<16xf32>
    %312 = vector.shape_cast %311 : vector<16xf32> to vector<16x1xf32>
    %cst_127 = arith.constant 3.200000e+01 : f32
    %313 = vector.broadcast %cst_127 : f32 to vector<16x1xf32>
    %314 = arith.divf %312, %313 : vector<16x1xf32>
    %315 = vector.broadcast %307 : vector<16x1xf32> to vector<16x32xf32>
    %316 = arith.subf %303, %315 : vector<16x32xf32>
    %cst_128 = arith.constant 9.99999974E-6 : f32
    %317 = vector.broadcast %cst_128 : f32 to vector<16x1xf32>
    %318 = arith.addf %314, %317 : vector<16x1xf32>
    %319 = math.rsqrt %318 : vector<16x1xf32>
    %320 = vector.broadcast %319 : vector<16x1xf32> to vector<16x32xf32>
    %321 = arith.mulf %316, %320 : vector<16x32xf32>
    %c0_129 = arith.constant 0 : index
    %c0_130 = arith.constant 0 : index
    %322 = vector.load %arg10[%c0_129, %c0_130] : memref<4x32xf32, #tpu.memory_space<vmem>>, vector<1x32xf32>
    %323 = vector.broadcast %322 : vector<1x32xf32> to vector<16x32xf32>
    %324 = arith.mulf %321, %323 : vector<16x32xf32>
    %c1_131 = arith.constant 1 : index
    %c0_132 = arith.constant 0 : index
    %325 = vector.load %arg10[%c1_131, %c0_132] : memref<4x32xf32, #tpu.memory_space<vmem>>, vector<1x32xf32>
    %326 = vector.broadcast %325 : vector<1x32xf32> to vector<16x32xf32>
    %327 = arith.addf %324, %326 : vector<16x32xf32>
    %c0_133 = arith.constant 0 : index
    %c0_134 = arith.constant 0 : index
    %328 = vector.load %arg1[%c0_133, %c0_134] : memref<16x32xf32, #tpu.memory_space<vmem>>, vector<16x32xf32>
    %c2 = arith.constant 2 : index
    %c0_135 = arith.constant 0 : index
    %c0_136 = arith.constant 0 : index
    %329 = vector.load %arg5[%c2, %c0_135, %c0_136] : memref<6x32x128xf32, #tpu.memory_space<vmem>>, vector<1x32x128xf32>
    %330 = vector.shape_cast %329 : vector<1x32x128xf32> to vector<32x128xf32>
    %c2_137 = arith.constant 2 : index
    %c0_138 = arith.constant 0 : index
    %c0_139 = arith.constant 0 : index
    %331 = vector.load %arg6[%c2_137, %c0_138, %c0_139] : memref<6x1x128xf32, #tpu.memory_space<vmem>>, vector<1x1x128xf32>
    %332 = vector.shape_cast %331 : vector<1x1x128xf32> to vector<1x128xf32>
    %cst_140 = arith.constant dense<0.000000e+00> : vector<16xf32>
    %333 = vector.multi_reduction <add>, %328, %cst_140 [1] : vector<16x32xf32> to vector<16xf32>
    %334 = vector.shape_cast %333 : vector<16xf32> to vector<16x1xf32>
    %cst_141 = arith.constant 3.200000e+01 : f32
    %335 = vector.broadcast %cst_141 : f32 to vector<16x1xf32>
    %336 = arith.divf %334, %335 : vector<16x1xf32>
    %337 = vector.broadcast %336 : vector<16x1xf32> to vector<16x32xf32>
    %338 = arith.subf %328, %337 : vector<16x32xf32>
    %339 = arith.mulf %338, %338 : vector<16x32xf32>
    %cst_142 = arith.constant dense<0.000000e+00> : vector<16xf32>
    %340 = vector.multi_reduction <add>, %339, %cst_142 [1] : vector<16x32xf32> to vector<16xf32>
    %341 = vector.shape_cast %340 : vector<16xf32> to vector<16x1xf32>
    %cst_143 = arith.constant 3.200000e+01 : f32
    %342 = vector.broadcast %cst_143 : f32 to vector<16x1xf32>
    %343 = arith.divf %341, %342 : vector<16x1xf32>
    %344 = vector.broadcast %336 : vector<16x1xf32> to vector<16x32xf32>
    %345 = arith.subf %328, %344 : vector<16x32xf32>
    %cst_144 = arith.constant 9.99999974E-6 : f32
    %346 = vector.broadcast %cst_144 : f32 to vector<16x1xf32>
    %347 = arith.addf %343, %346 : vector<16x1xf32>
    %348 = math.rsqrt %347 : vector<16x1xf32>
    %349 = vector.broadcast %348 : vector<16x1xf32> to vector<16x32xf32>
    %350 = arith.mulf %345, %349 : vector<16x32xf32>
    %351 = vector.extract_strided_slice %330 {offsets = [0, 0], sizes = [32, 32], strides = [1, 1]} : vector<32x128xf32> to vector<32x32xf32>
    %cst_145 = arith.constant dense<0.000000e+00> : vector<16x32xf32>
    %352 = tpu.matmul %350, %351, %cst_145 {dimension_numbers = #tpu.dot_dimension_numbers<[1], [0], [0], [1], [0, 0, 1, 1], [], []>} : vector<16x32xf32>, vector<32x32xf32>, vector<16x32xf32> -> vector<16x32xf32>
    %353 = vector.extract_strided_slice %332 {offsets = [0, 0], sizes = [1, 32], strides = [1, 1]} : vector<1x128xf32> to vector<1x32xf32>
    %354 = vector.broadcast %353 : vector<1x32xf32> to vector<16x32xf32>
    %355 = arith.addf %352, %354 : vector<16x32xf32>
    %356 = vector.extract_strided_slice %330 {offsets = [0, 32], sizes = [32, 64], strides = [1, 1]} : vector<32x128xf32> to vector<32x64xf32>
    %cst_146 = arith.constant dense<0.000000e+00> : vector<16x64xf32>
    %357 = tpu.matmul %350, %356, %cst_146 {dimension_numbers = #tpu.dot_dimension_numbers<[1], [0], [0], [1], [0, 0, 1, 1], [], []>} : vector<16x32xf32>, vector<32x64xf32>, vector<16x64xf32> -> vector<16x64xf32>
    %358 = vector.extract_strided_slice %332 {offsets = [0, 32], sizes = [1, 64], strides = [1, 1]} : vector<1x128xf32> to vector<1x64xf32>
    %359 = vector.broadcast %358 : vector<1x64xf32> to vector<16x64xf32>
    %360 = arith.addf %357, %359 : vector<16x64xf32>
    %361 = vector.extract_strided_slice %355 {offsets = [0, 0], sizes = [16, 8], strides = [1, 1]} : vector<16x32xf32> to vector<16x8xf32>
    %362 = vector.extract_strided_slice %360 {offsets = [0, 0], sizes = [16, 8], strides = [1, 1]} : vector<16x64xf32> to vector<16x8xf32>
    %363 = vector.extract_strided_slice %360 {offsets = [0, 32], sizes = [16, 8], strides = [1, 1]} : vector<16x64xf32> to vector<16x8xf32>
    %cst_147 = arith.constant dense<0.000000e+00> : vector<16x16xf32>
    %364 = tpu.matmul %361, %362, %cst_147 {dimension_numbers = #tpu.dot_dimension_numbers<[1], [1], [0], [0], [0, 0, 1, 0], [], []>} : vector<16x8xf32>, vector<16x8xf32>, vector<16x16xf32> -> vector<16x16xf32>
    %cst_148 = arith.constant 0.353553385 : f32
    %365 = vector.broadcast %cst_148 : f32 to vector<16x16xf32>
    %366 = arith.mulf %364, %365 : vector<16x16xf32>
    %367 = arith.addf %366, %1 : vector<16x16xf32>
    %cst_149 = arith.constant dense<0xFF800000> : vector<16xf32>
    %368 = vector.multi_reduction <maximumf>, %367, %cst_149 [1] : vector<16x16xf32> to vector<16xf32>
    %369 = vector.shape_cast %368 : vector<16xf32> to vector<16x1xf32>
    %370 = vector.broadcast %369 : vector<16x1xf32> to vector<16x16xf32>
    %371 = arith.subf %367, %370 : vector<16x16xf32>
    %372 = math.exp %371 : vector<16x16xf32>
    %cst_150 = arith.constant dense<0.000000e+00> : vector<16xf32>
    %373 = vector.multi_reduction <add>, %372, %cst_150 [1] : vector<16x16xf32> to vector<16xf32>
    %374 = vector.shape_cast %373 : vector<16xf32> to vector<16x1xf32>
    %375 = tpu.reciprocal %374 : vector<16x1xf32> -> vector<16x1xf32>
    %376 = vector.broadcast %375 : vector<16x1xf32> to vector<16x16xf32>
    %377 = arith.mulf %372, %376 : vector<16x16xf32>
    %cst_151 = arith.constant dense<0.000000e+00> : vector<16x8xf32>
    %378 = tpu.matmul %377, %363, %cst_151 {dimension_numbers = #tpu.dot_dimension_numbers<[1], [0], [0], [1], [0, 0, 1, 1], [], []>} : vector<16x16xf32>, vector<16x8xf32>, vector<16x8xf32> -> vector<16x8xf32>
    %c0_152 = arith.constant 0 : index
    %c0_153 = arith.constant 0 : index
    %379 = vector.load %arg14[%c0_152, %c0_153] : memref<16x32xf32, #tpu.memory_space<vmem>>, vector<16x8xf32>
    tpu.vector_store %arg14[%c0_152, %c0_153], %378 {strides = array<i32>} : memref<16x32xf32, #tpu.memory_space<vmem>>, vector<16x8xf32>,
    %380 = vector.extract_strided_slice %355 {offsets = [0, 8], sizes = [16, 8], strides = [1, 1]} : vector<16x32xf32> to vector<16x8xf32>
    %381 = vector.extract_strided_slice %360 {offsets = [0, 8], sizes = [16, 8], strides = [1, 1]} : vector<16x64xf32> to vector<16x8xf32>
    %382 = vector.extract_strided_slice %360 {offsets = [0, 40], sizes = [16, 8], strides = [1, 1]} : vector<16x64xf32> to vector<16x8xf32>
    %cst_154 = arith.constant dense<0.000000e+00> : vector<16x16xf32>
    %383 = tpu.matmul %380, %381, %cst_154 {dimension_numbers = #tpu.dot_dimension_numbers<[1], [1], [0], [0], [0, 0, 1, 0], [], []>} : vector<16x8xf32>, vector<16x8xf32>, vector<16x16xf32> -> vector<16x16xf32>
    %cst_155 = arith.constant 0.353553385 : f32
    %384 = vector.broadcast %cst_155 : f32 to vector<16x16xf32>
    %385 = arith.mulf %383, %384 : vector<16x16xf32>
    %386 = arith.addf %385, %1 : vector<16x16xf32>
    %cst_156 = arith.constant dense<0xFF800000> : vector<16xf32>
    %387 = vector.multi_reduction <maximumf>, %386, %cst_156 [1] : vector<16x16xf32> to vector<16xf32>
    %388 = vector.shape_cast %387 : vector<16xf32> to vector<16x1xf32>
    %389 = vector.broadcast %388 : vector<16x1xf32> to vector<16x16xf32>
    %390 = arith.subf %386, %389 : vector<16x16xf32>
    %391 = math.exp %390 : vector<16x16xf32>
    %cst_157 = arith.constant dense<0.000000e+00> : vector<16xf32>
    %392 = vector.multi_reduction <add>, %391, %cst_157 [1] : vector<16x16xf32> to vector<16xf32>
    %393 = vector.shape_cast %392 : vector<16xf32> to vector<16x1xf32>
    %394 = tpu.reciprocal %393 : vector<16x1xf32> -> vector<16x1xf32>
    %395 = vector.broadcast %394 : vector<16x1xf32> to vector<16x16xf32>
    %396 = arith.mulf %391, %395 : vector<16x16xf32>
    %cst_158 = arith.constant dense<0.000000e+00> : vector<16x8xf32>
    %397 = tpu.matmul %396, %382, %cst_158 {dimension_numbers = #tpu.dot_dimension_numbers<[1], [0], [0], [1], [0, 0, 1, 1], [], []>} : vector<16x16xf32>, vector<16x8xf32>, vector<16x8xf32> -> vector<16x8xf32>
    %c0_159 = arith.constant 0 : index
    %c8_160 = arith.constant 8 : index
    %398 = vector.load %arg14[%c0_159, %c8_160] : memref<16x32xf32, #tpu.memory_space<vmem>>, vector<16x8xf32>
    tpu.vector_store %arg14[%c0_159, %c8_160], %397 {strides = array<i32>} : memref<16x32xf32, #tpu.memory_space<vmem>>, vector<16x8xf32>,
    %399 = vector.extract_strided_slice %355 {offsets = [0, 16], sizes = [16, 8], strides = [1, 1]} : vector<16x32xf32> to vector<16x8xf32>
    %400 = vector.extract_strided_slice %360 {offsets = [0, 16], sizes = [16, 8], strides = [1, 1]} : vector<16x64xf32> to vector<16x8xf32>
    %401 = vector.extract_strided_slice %360 {offsets = [0, 48], sizes = [16, 8], strides = [1, 1]} : vector<16x64xf32> to vector<16x8xf32>
    %cst_161 = arith.constant dense<0.000000e+00> : vector<16x16xf32>
    %402 = tpu.matmul %399, %400, %cst_161 {dimension_numbers = #tpu.dot_dimension_numbers<[1], [1], [0], [0], [0, 0, 1, 0], [], []>} : vector<16x8xf32>, vector<16x8xf32>, vector<16x16xf32> -> vector<16x16xf32>
    %cst_162 = arith.constant 0.353553385 : f32
    %403 = vector.broadcast %cst_162 : f32 to vector<16x16xf32>
    %404 = arith.mulf %402, %403 : vector<16x16xf32>
    %405 = arith.addf %404, %1 : vector<16x16xf32>
    %cst_163 = arith.constant dense<0xFF800000> : vector<16xf32>
    %406 = vector.multi_reduction <maximumf>, %405, %cst_163 [1] : vector<16x16xf32> to vector<16xf32>
    %407 = vector.shape_cast %406 : vector<16xf32> to vector<16x1xf32>
    %408 = vector.broadcast %407 : vector<16x1xf32> to vector<16x16xf32>
    %409 = arith.subf %405, %408 : vector<16x16xf32>
    %410 = math.exp %409 : vector<16x16xf32>
    %cst_164 = arith.constant dense<0.000000e+00> : vector<16xf32>
    %411 = vector.multi_reduction <add>, %410, %cst_164 [1] : vector<16x16xf32> to vector<16xf32>
    %412 = vector.shape_cast %411 : vector<16xf32> to vector<16x1xf32>
    %413 = tpu.reciprocal %412 : vector<16x1xf32> -> vector<16x1xf32>
    %414 = vector.broadcast %413 : vector<16x1xf32> to vector<16x16xf32>
    %415 = arith.mulf %410, %414 : vector<16x16xf32>
    %cst_165 = arith.constant dense<0.000000e+00> : vector<16x8xf32>
    %416 = tpu.matmul %415, %401, %cst_165 {dimension_numbers = #tpu.dot_dimension_numbers<[1], [0], [0], [1], [0, 0, 1, 1], [], []>} : vector<16x16xf32>, vector<16x8xf32>, vector<16x8xf32> -> vector<16x8xf32>
    %c0_166 = arith.constant 0 : index
    %c16_167 = arith.constant 16 : index
    %417 = vector.load %arg14[%c0_166, %c16_167] : memref<16x32xf32, #tpu.memory_space<vmem>>, vector<16x8xf32>
    tpu.vector_store %arg14[%c0_166, %c16_167], %416 {strides = array<i32>} : memref<16x32xf32, #tpu.memory_space<vmem>>, vector<16x8xf32>,
    %418 = vector.extract_strided_slice %355 {offsets = [0, 24], sizes = [16, 8], strides = [1, 1]} : vector<16x32xf32> to vector<16x8xf32>
    %419 = vector.extract_strided_slice %360 {offsets = [0, 24], sizes = [16, 8], strides = [1, 1]} : vector<16x64xf32> to vector<16x8xf32>
    %420 = vector.extract_strided_slice %360 {offsets = [0, 56], sizes = [16, 8], strides = [1, 1]} : vector<16x64xf32> to vector<16x8xf32>
    %cst_168 = arith.constant dense<0.000000e+00> : vector<16x16xf32>
    %421 = tpu.matmul %418, %419, %cst_168 {dimension_numbers = #tpu.dot_dimension_numbers<[1], [1], [0], [0], [0, 0, 1, 0], [], []>} : vector<16x8xf32>, vector<16x8xf32>, vector<16x16xf32> -> vector<16x16xf32>
    %cst_169 = arith.constant 0.353553385 : f32
    %422 = vector.broadcast %cst_169 : f32 to vector<16x16xf32>
    %423 = arith.mulf %421, %422 : vector<16x16xf32>
    %424 = arith.addf %423, %1 : vector<16x16xf32>
    %cst_170 = arith.constant dense<0xFF800000> : vector<16xf32>
    %425 = vector.multi_reduction <maximumf>, %424, %cst_170 [1] : vector<16x16xf32> to vector<16xf32>
    %426 = vector.shape_cast %425 : vector<16xf32> to vector<16x1xf32>
    %427 = vector.broadcast %426 : vector<16x1xf32> to vector<16x16xf32>
    %428 = arith.subf %424, %427 : vector<16x16xf32>
    %429 = math.exp %428 : vector<16x16xf32>
    %cst_171 = arith.constant dense<0.000000e+00> : vector<16xf32>
    %430 = vector.multi_reduction <add>, %429, %cst_171 [1] : vector<16x16xf32> to vector<16xf32>
    %431 = vector.shape_cast %430 : vector<16xf32> to vector<16x1xf32>
    %432 = tpu.reciprocal %431 : vector<16x1xf32> -> vector<16x1xf32>
    %433 = vector.broadcast %432 : vector<16x1xf32> to vector<16x16xf32>
    %434 = arith.mulf %429, %433 : vector<16x16xf32>
    %cst_172 = arith.constant dense<0.000000e+00> : vector<16x8xf32>
    %435 = tpu.matmul %434, %420, %cst_172 {dimension_numbers = #tpu.dot_dimension_numbers<[1], [0], [0], [1], [0, 0, 1, 1], [], []>} : vector<16x16xf32>, vector<16x8xf32>, vector<16x8xf32> -> vector<16x8xf32>
    %c0_173 = arith.constant 0 : index
    %c24_174 = arith.constant 24 : index
    %436 = vector.load %arg14[%c0_173, %c24_174] : memref<16x32xf32, #tpu.memory_space<vmem>>, vector<16x8xf32>
    tpu.vector_store %arg14[%c0_173, %c24_174], %435 {strides = array<i32>} : memref<16x32xf32, #tpu.memory_space<vmem>>, vector<16x8xf32>,
    %c0_175 = arith.constant 0 : index
    %c0_176 = arith.constant 0 : index
    %437 = vector.load %arg14[%c0_175, %c0_176] : memref<16x32xf32, #tpu.memory_space<vmem>>, vector<16x32xf32>
    %438 = vector.extract_strided_slice %330 {offsets = [0, 96], sizes = [32, 32], strides = [1, 1]} : vector<32x128xf32> to vector<32x32xf32>
    %cst_177 = arith.constant dense<0.000000e+00> : vector<16x32xf32>
    %439 = tpu.matmul %437, %438, %cst_177 {dimension_numbers = #tpu.dot_dimension_numbers<[1], [0], [0], [1], [0, 0, 1, 1], [], []>} : vector<16x32xf32>, vector<32x32xf32>, vector<16x32xf32> -> vector<16x32xf32>
    %440 = vector.extract_strided_slice %332 {offsets = [0, 96], sizes = [1, 32], strides = [1, 1]} : vector<1x128xf32> to vector<1x32xf32>
    %441 = vector.broadcast %440 : vector<1x32xf32> to vector<16x32xf32>
    %442 = arith.addf %439, %441 : vector<16x32xf32>
    %443 = arith.addf %442, %328 : vector<16x32xf32>
    %c3 = arith.constant 3 : index
    %c0_178 = arith.constant 0 : index
    %c0_179 = arith.constant 0 : index
    %444 = vector.load %arg5[%c3, %c0_178, %c0_179] : memref<6x32x128xf32, #tpu.memory_space<vmem>>, vector<1x32x128xf32>
    %445 = vector.shape_cast %444 : vector<1x32x128xf32> to vector<32x128xf32>
    %c3_180 = arith.constant 3 : index
    %c0_181 = arith.constant 0 : index
    %c0_182 = arith.constant 0 : index
    %446 = vector.load %arg6[%c3_180, %c0_181, %c0_182] : memref<6x1x128xf32, #tpu.memory_space<vmem>>, vector<1x1x128xf32>
    %447 = vector.shape_cast %446 : vector<1x1x128xf32> to vector<1x128xf32>
    %cst_183 = arith.constant dense<0.000000e+00> : vector<16xf32>
    %448 = vector.multi_reduction <add>, %443, %cst_183 [1] : vector<16x32xf32> to vector<16xf32>
    %449 = vector.shape_cast %448 : vector<16xf32> to vector<16x1xf32>
    %cst_184 = arith.constant 3.200000e+01 : f32
    %450 = vector.broadcast %cst_184 : f32 to vector<16x1xf32>
    %451 = arith.divf %449, %450 : vector<16x1xf32>
    %452 = vector.broadcast %451 : vector<16x1xf32> to vector<16x32xf32>
    %453 = arith.subf %443, %452 : vector<16x32xf32>
    %454 = arith.mulf %453, %453 : vector<16x32xf32>
    %cst_185 = arith.constant dense<0.000000e+00> : vector<16xf32>
    %455 = vector.multi_reduction <add>, %454, %cst_185 [1] : vector<16x32xf32> to vector<16xf32>
    %456 = vector.shape_cast %455 : vector<16xf32> to vector<16x1xf32>
    %cst_186 = arith.constant 3.200000e+01 : f32
    %457 = vector.broadcast %cst_186 : f32 to vector<16x1xf32>
    %458 = arith.divf %456, %457 : vector<16x1xf32>
    %459 = vector.broadcast %451 : vector<16x1xf32> to vector<16x32xf32>
    %460 = arith.subf %443, %459 : vector<16x32xf32>
    %cst_187 = arith.constant 9.99999974E-6 : f32
    %461 = vector.broadcast %cst_187 : f32 to vector<16x1xf32>
    %462 = arith.addf %458, %461 : vector<16x1xf32>
    %463 = math.rsqrt %462 : vector<16x1xf32>
    %464 = vector.broadcast %463 : vector<16x1xf32> to vector<16x32xf32>
    %465 = arith.mulf %460, %464 : vector<16x32xf32>
    %466 = vector.extract_strided_slice %445 {offsets = [0, 0], sizes = [32, 32], strides = [1, 1]} : vector<32x128xf32> to vector<32x32xf32>
    %cst_188 = arith.constant dense<0.000000e+00> : vector<16x32xf32>
    %467 = tpu.matmul %465, %466, %cst_188 {dimension_numbers = #tpu.dot_dimension_numbers<[1], [0], [0], [1], [0, 0, 1, 1], [], []>} : vector<16x32xf32>, vector<32x32xf32>, vector<16x32xf32> -> vector<16x32xf32>
    %468 = vector.extract_strided_slice %447 {offsets = [0, 0], sizes = [1, 32], strides = [1, 1]} : vector<1x128xf32> to vector<1x32xf32>
    %469 = vector.broadcast %468 : vector<1x32xf32> to vector<16x32xf32>
    %470 = arith.addf %467, %469 : vector<16x32xf32>
    %471 = vector.extract_strided_slice %445 {offsets = [0, 32], sizes = [32, 64], strides = [1, 1]} : vector<32x128xf32> to vector<32x64xf32>
    %cst_189 = arith.constant dense<0.000000e+00> : vector<16x64xf32>
    %472 = tpu.matmul %327, %471, %cst_189 {dimension_numbers = #tpu.dot_dimension_numbers<[1], [0], [0], [1], [0, 0, 1, 1], [], []>} : vector<16x32xf32>, vector<32x64xf32>, vector<16x64xf32> -> vector<16x64xf32>
    %473 = vector.extract_strided_slice %447 {offsets = [0, 32], sizes = [1, 64], strides = [1, 1]} : vector<1x128xf32> to vector<1x64xf32>
    %474 = vector.broadcast %473 : vector<1x64xf32> to vector<16x64xf32>
    %475 = arith.addf %472, %474 : vector<16x64xf32>
    %476 = vector.extract_strided_slice %470 {offsets = [0, 0], sizes = [16, 8], strides = [1, 1]} : vector<16x32xf32> to vector<16x8xf32>
    %477 = vector.extract_strided_slice %475 {offsets = [0, 0], sizes = [16, 8], strides = [1, 1]} : vector<16x64xf32> to vector<16x8xf32>
    %478 = vector.extract_strided_slice %475 {offsets = [0, 32], sizes = [16, 8], strides = [1, 1]} : vector<16x64xf32> to vector<16x8xf32>
    %cst_190 = arith.constant dense<0.000000e+00> : vector<16x16xf32>
    %479 = tpu.matmul %476, %477, %cst_190 {dimension_numbers = #tpu.dot_dimension_numbers<[1], [1], [0], [0], [0, 0, 1, 0], [], []>} : vector<16x8xf32>, vector<16x8xf32>, vector<16x16xf32> -> vector<16x16xf32>
    %cst_191 = arith.constant 0.353553385 : f32
    %480 = vector.broadcast %cst_191 : f32 to vector<16x16xf32>
    %481 = arith.mulf %479, %480 : vector<16x16xf32>
    %482 = arith.addf %481, %2 : vector<16x16xf32>
    %cst_192 = arith.constant dense<0xFF800000> : vector<16xf32>
    %483 = vector.multi_reduction <maximumf>, %482, %cst_192 [1] : vector<16x16xf32> to vector<16xf32>
    %484 = vector.shape_cast %483 : vector<16xf32> to vector<16x1xf32>
    %485 = vector.broadcast %484 : vector<16x1xf32> to vector<16x16xf32>
    %486 = arith.subf %482, %485 : vector<16x16xf32>
    %487 = math.exp %486 : vector<16x16xf32>
    %cst_193 = arith.constant dense<0.000000e+00> : vector<16xf32>
    %488 = vector.multi_reduction <add>, %487, %cst_193 [1] : vector<16x16xf32> to vector<16xf32>
    %489 = vector.shape_cast %488 : vector<16xf32> to vector<16x1xf32>
    %490 = tpu.reciprocal %489 : vector<16x1xf32> -> vector<16x1xf32>
    %491 = vector.broadcast %490 : vector<16x1xf32> to vector<16x16xf32>
    %492 = arith.mulf %487, %491 : vector<16x16xf32>
    %cst_194 = arith.constant dense<0.000000e+00> : vector<16x8xf32>
    %493 = tpu.matmul %492, %478, %cst_194 {dimension_numbers = #tpu.dot_dimension_numbers<[1], [0], [0], [1], [0, 0, 1, 1], [], []>} : vector<16x16xf32>, vector<16x8xf32>, vector<16x8xf32> -> vector<16x8xf32>
    %c0_195 = arith.constant 0 : index
    %c0_196 = arith.constant 0 : index
    %494 = vector.load %arg14[%c0_195, %c0_196] : memref<16x32xf32, #tpu.memory_space<vmem>>, vector<16x8xf32>
    tpu.vector_store %arg14[%c0_195, %c0_196], %493 {strides = array<i32>} : memref<16x32xf32, #tpu.memory_space<vmem>>, vector<16x8xf32>,
    %495 = vector.extract_strided_slice %470 {offsets = [0, 8], sizes = [16, 8], strides = [1, 1]} : vector<16x32xf32> to vector<16x8xf32>
    %496 = vector.extract_strided_slice %475 {offsets = [0, 8], sizes = [16, 8], strides = [1, 1]} : vector<16x64xf32> to vector<16x8xf32>
    %497 = vector.extract_strided_slice %475 {offsets = [0, 40], sizes = [16, 8], strides = [1, 1]} : vector<16x64xf32> to vector<16x8xf32>
    %cst_197 = arith.constant dense<0.000000e+00> : vector<16x16xf32>
    %498 = tpu.matmul %495, %496, %cst_197 {dimension_numbers = #tpu.dot_dimension_numbers<[1], [1], [0], [0], [0, 0, 1, 0], [], []>} : vector<16x8xf32>, vector<16x8xf32>, vector<16x16xf32> -> vector<16x16xf32>
    %cst_198 = arith.constant 0.353553385 : f32
    %499 = vector.broadcast %cst_198 : f32 to vector<16x16xf32>
    %500 = arith.mulf %498, %499 : vector<16x16xf32>
    %501 = arith.addf %500, %2 : vector<16x16xf32>
    %cst_199 = arith.constant dense<0xFF800000> : vector<16xf32>
    %502 = vector.multi_reduction <maximumf>, %501, %cst_199 [1] : vector<16x16xf32> to vector<16xf32>
    %503 = vector.shape_cast %502 : vector<16xf32> to vector<16x1xf32>
    %504 = vector.broadcast %503 : vector<16x1xf32> to vector<16x16xf32>
    %505 = arith.subf %501, %504 : vector<16x16xf32>
    %506 = math.exp %505 : vector<16x16xf32>
    %cst_200 = arith.constant dense<0.000000e+00> : vector<16xf32>
    %507 = vector.multi_reduction <add>, %506, %cst_200 [1] : vector<16x16xf32> to vector<16xf32>
    %508 = vector.shape_cast %507 : vector<16xf32> to vector<16x1xf32>
    %509 = tpu.reciprocal %508 : vector<16x1xf32> -> vector<16x1xf32>
    %510 = vector.broadcast %509 : vector<16x1xf32> to vector<16x16xf32>
    %511 = arith.mulf %506, %510 : vector<16x16xf32>
    %cst_201 = arith.constant dense<0.000000e+00> : vector<16x8xf32>
    %512 = tpu.matmul %511, %497, %cst_201 {dimension_numbers = #tpu.dot_dimension_numbers<[1], [0], [0], [1], [0, 0, 1, 1], [], []>} : vector<16x16xf32>, vector<16x8xf32>, vector<16x8xf32> -> vector<16x8xf32>
    %c0_202 = arith.constant 0 : index
    %c8_203 = arith.constant 8 : index
    %513 = vector.load %arg14[%c0_202, %c8_203] : memref<16x32xf32, #tpu.memory_space<vmem>>, vector<16x8xf32>
    tpu.vector_store %arg14[%c0_202, %c8_203], %512 {strides = array<i32>} : memref<16x32xf32, #tpu.memory_space<vmem>>, vector<16x8xf32>,
    %514 = vector.extract_strided_slice %470 {offsets = [0, 16], sizes = [16, 8], strides = [1, 1]} : vector<16x32xf32> to vector<16x8xf32>
    %515 = vector.extract_strided_slice %475 {offsets = [0, 16], sizes = [16, 8], strides = [1, 1]} : vector<16x64xf32> to vector<16x8xf32>
    %516 = vector.extract_strided_slice %475 {offsets = [0, 48], sizes = [16, 8], strides = [1, 1]} : vector<16x64xf32> to vector<16x8xf32>
    %cst_204 = arith.constant dense<0.000000e+00> : vector<16x16xf32>
    %517 = tpu.matmul %514, %515, %cst_204 {dimension_numbers = #tpu.dot_dimension_numbers<[1], [1], [0], [0], [0, 0, 1, 0], [], []>} : vector<16x8xf32>, vector<16x8xf32>, vector<16x16xf32> -> vector<16x16xf32>
    %cst_205 = arith.constant 0.353553385 : f32
    %518 = vector.broadcast %cst_205 : f32 to vector<16x16xf32>
    %519 = arith.mulf %517, %518 : vector<16x16xf32>
    %520 = arith.addf %519, %2 : vector<16x16xf32>
    %cst_206 = arith.constant dense<0xFF800000> : vector<16xf32>
    %521 = vector.multi_reduction <maximumf>, %520, %cst_206 [1] : vector<16x16xf32> to vector<16xf32>
    %522 = vector.shape_cast %521 : vector<16xf32> to vector<16x1xf32>
    %523 = vector.broadcast %522 : vector<16x1xf32> to vector<16x16xf32>
    %524 = arith.subf %520, %523 : vector<16x16xf32>
    %525 = math.exp %524 : vector<16x16xf32>
    %cst_207 = arith.constant dense<0.000000e+00> : vector<16xf32>
    %526 = vector.multi_reduction <add>, %525, %cst_207 [1] : vector<16x16xf32> to vector<16xf32>
    %527 = vector.shape_cast %526 : vector<16xf32> to vector<16x1xf32>
    %528 = tpu.reciprocal %527 : vector<16x1xf32> -> vector<16x1xf32>
    %529 = vector.broadcast %528 : vector<16x1xf32> to vector<16x16xf32>
    %530 = arith.mulf %525, %529 : vector<16x16xf32>
    %cst_208 = arith.constant dense<0.000000e+00> : vector<16x8xf32>
    %531 = tpu.matmul %530, %516, %cst_208 {dimension_numbers = #tpu.dot_dimension_numbers<[1], [0], [0], [1], [0, 0, 1, 1], [], []>} : vector<16x16xf32>, vector<16x8xf32>, vector<16x8xf32> -> vector<16x8xf32>
    %c0_209 = arith.constant 0 : index
    %c16_210 = arith.constant 16 : index
    %532 = vector.load %arg14[%c0_209, %c16_210] : memref<16x32xf32, #tpu.memory_space<vmem>>, vector<16x8xf32>
    tpu.vector_store %arg14[%c0_209, %c16_210], %531 {strides = array<i32>} : memref<16x32xf32, #tpu.memory_space<vmem>>, vector<16x8xf32>,
    %533 = vector.extract_strided_slice %470 {offsets = [0, 24], sizes = [16, 8], strides = [1, 1]} : vector<16x32xf32> to vector<16x8xf32>
    %534 = vector.extract_strided_slice %475 {offsets = [0, 24], sizes = [16, 8], strides = [1, 1]} : vector<16x64xf32> to vector<16x8xf32>
    %535 = vector.extract_strided_slice %475 {offsets = [0, 56], sizes = [16, 8], strides = [1, 1]} : vector<16x64xf32> to vector<16x8xf32>
    %cst_211 = arith.constant dense<0.000000e+00> : vector<16x16xf32>
    %536 = tpu.matmul %533, %534, %cst_211 {dimension_numbers = #tpu.dot_dimension_numbers<[1], [1], [0], [0], [0, 0, 1, 0], [], []>} : vector<16x8xf32>, vector<16x8xf32>, vector<16x16xf32> -> vector<16x16xf32>
    %cst_212 = arith.constant 0.353553385 : f32
    %537 = vector.broadcast %cst_212 : f32 to vector<16x16xf32>
    %538 = arith.mulf %536, %537 : vector<16x16xf32>
    %539 = arith.addf %538, %2 : vector<16x16xf32>
    %cst_213 = arith.constant dense<0xFF800000> : vector<16xf32>
    %540 = vector.multi_reduction <maximumf>, %539, %cst_213 [1] : vector<16x16xf32> to vector<16xf32>
    %541 = vector.shape_cast %540 : vector<16xf32> to vector<16x1xf32>
    %542 = vector.broadcast %541 : vector<16x1xf32> to vector<16x16xf32>
    %543 = arith.subf %539, %542 : vector<16x16xf32>
    %544 = math.exp %543 : vector<16x16xf32>
    %cst_214 = arith.constant dense<0.000000e+00> : vector<16xf32>
    %545 = vector.multi_reduction <add>, %544, %cst_214 [1] : vector<16x16xf32> to vector<16xf32>
    %546 = vector.shape_cast %545 : vector<16xf32> to vector<16x1xf32>
    %547 = tpu.reciprocal %546 : vector<16x1xf32> -> vector<16x1xf32>
    %548 = vector.broadcast %547 : vector<16x1xf32> to vector<16x16xf32>
    %549 = arith.mulf %544, %548 : vector<16x16xf32>
    %cst_215 = arith.constant dense<0.000000e+00> : vector<16x8xf32>
    %550 = tpu.matmul %549, %535, %cst_215 {dimension_numbers = #tpu.dot_dimension_numbers<[1], [0], [0], [1], [0, 0, 1, 1], [], []>} : vector<16x16xf32>, vector<16x8xf32>, vector<16x8xf32> -> vector<16x8xf32>
    %c0_216 = arith.constant 0 : index
    %c24_217 = arith.constant 24 : index
    %551 = vector.load %arg14[%c0_216, %c24_217] : memref<16x32xf32, #tpu.memory_space<vmem>>, vector<16x8xf32>
    tpu.vector_store %arg14[%c0_216, %c24_217], %550 {strides = array<i32>} : memref<16x32xf32, #tpu.memory_space<vmem>>, vector<16x8xf32>,
    %c0_218 = arith.constant 0 : index
    %c0_219 = arith.constant 0 : index
    %552 = vector.load %arg14[%c0_218, %c0_219] : memref<16x32xf32, #tpu.memory_space<vmem>>, vector<16x32xf32>
    %553 = vector.extract_strided_slice %445 {offsets = [0, 96], sizes = [32, 32], strides = [1, 1]} : vector<32x128xf32> to vector<32x32xf32>
    %cst_220 = arith.constant dense<0.000000e+00> : vector<16x32xf32>
    %554 = tpu.matmul %552, %553, %cst_220 {dimension_numbers = #tpu.dot_dimension_numbers<[1], [0], [0], [1], [0, 0, 1, 1], [], []>} : vector<16x32xf32>, vector<32x32xf32>, vector<16x32xf32> -> vector<16x32xf32>
    %555 = vector.extract_strided_slice %447 {offsets = [0, 96], sizes = [1, 32], strides = [1, 1]} : vector<1x128xf32> to vector<1x32xf32>
    %556 = vector.broadcast %555 : vector<1x32xf32> to vector<16x32xf32>
    %557 = arith.addf %554, %556 : vector<16x32xf32>
    %558 = arith.addf %557, %443 : vector<16x32xf32>
    %cst_221 = arith.constant dense<0.000000e+00> : vector<16xf32>
    %559 = vector.multi_reduction <add>, %558, %cst_221 [1] : vector<16x32xf32> to vector<16xf32>
    %560 = vector.shape_cast %559 : vector<16xf32> to vector<16x1xf32>
    %cst_222 = arith.constant 3.200000e+01 : f32
    %561 = vector.broadcast %cst_222 : f32 to vector<16x1xf32>
    %562 = arith.divf %560, %561 : vector<16x1xf32>
    %563 = vector.broadcast %562 : vector<16x1xf32> to vector<16x32xf32>
    %564 = arith.subf %558, %563 : vector<16x32xf32>
    %565 = arith.mulf %564, %564 : vector<16x32xf32>
    %cst_223 = arith.constant dense<0.000000e+00> : vector<16xf32>
    %566 = vector.multi_reduction <add>, %565, %cst_223 [1] : vector<16x32xf32> to vector<16xf32>
    %567 = vector.shape_cast %566 : vector<16xf32> to vector<16x1xf32>
    %cst_224 = arith.constant 3.200000e+01 : f32
    %568 = vector.broadcast %cst_224 : f32 to vector<16x1xf32>
    %569 = arith.divf %567, %568 : vector<16x1xf32>
    %570 = vector.broadcast %562 : vector<16x1xf32> to vector<16x32xf32>
    %571 = arith.subf %558, %570 : vector<16x32xf32>
    %cst_225 = arith.constant 9.99999974E-6 : f32
    %572 = vector.broadcast %cst_225 : f32 to vector<16x1xf32>
    %573 = arith.addf %569, %572 : vector<16x1xf32>
    %574 = math.rsqrt %573 : vector<16x1xf32>
    %575 = vector.broadcast %574 : vector<16x1xf32> to vector<16x32xf32>
    %576 = arith.mulf %571, %575 : vector<16x32xf32>
    %c2_226 = arith.constant 2 : index
    %c0_227 = arith.constant 0 : index
    %c0_228 = arith.constant 0 : index
    %577 = vector.load %arg9[%c2_226, %c0_227, %c0_228] : memref<4x1x96xf32, #tpu.memory_space<vmem>>, vector<1x1x96xf32>
    %578 = vector.shape_cast %577 : vector<1x1x96xf32> to vector<1x96xf32>
    %c2_229 = arith.constant 2 : index
    %c0_230 = arith.constant 0 : index
    %c0_231 = arith.constant 0 : index
    %579 = vector.load %arg7[%c2_229, %c0_230, %c0_231] : memref<4x32x64xf32, #tpu.memory_space<vmem>>, vector<1x32x64xf32>
    %580 = vector.shape_cast %579 : vector<1x32x64xf32> to vector<32x64xf32>
    %cst_232 = arith.constant dense<0.000000e+00> : vector<16x64xf32>
    %581 = tpu.matmul %576, %580, %cst_232 {dimension_numbers = #tpu.dot_dimension_numbers<[1], [0], [0], [1], [0, 0, 1, 1], [], []>} : vector<16x32xf32>, vector<32x64xf32>, vector<16x64xf32> -> vector<16x64xf32>
    %582 = vector.extract_strided_slice %578 {offsets = [0, 0], sizes = [1, 64], strides = [1, 1]} : vector<1x96xf32> to vector<1x64xf32>
    %583 = vector.broadcast %582 : vector<1x64xf32> to vector<16x64xf32>
    %584 = arith.addf %581, %583 : vector<16x64xf32>
    %cst_233 = arith.constant 0.000000e+00 : f32
    %585 = vector.broadcast %cst_233 : f32 to vector<16x64xf32>
    %586 = arith.maximumf %584, %585 : vector<16x64xf32>
    %c2_234 = arith.constant 2 : index
    %c0_235 = arith.constant 0 : index
    %c0_236 = arith.constant 0 : index
    %587 = vector.load %arg8[%c2_234, %c0_235, %c0_236] : memref<4x64x32xf32, #tpu.memory_space<vmem>>, vector<1x64x32xf32>
    %588 = vector.shape_cast %587 : vector<1x64x32xf32> to vector<64x32xf32>
    %cst_237 = arith.constant dense<0.000000e+00> : vector<16x32xf32>
    %589 = tpu.matmul %586, %588, %cst_237 {dimension_numbers = #tpu.dot_dimension_numbers<[1], [0], [0], [1], [0, 0, 1, 1], [], []>} : vector<16x64xf32>, vector<64x32xf32>, vector<16x32xf32> -> vector<16x32xf32>
    %590 = vector.extract_strided_slice %578 {offsets = [0, 64], sizes = [1, 32], strides = [1, 1]} : vector<1x96xf32> to vector<1x32xf32>
    %591 = vector.broadcast %590 : vector<1x32xf32> to vector<16x32xf32>
    %592 = arith.addf %589, %591 : vector<16x32xf32>
    %593 = arith.addf %592, %558 : vector<16x32xf32>
    %c4 = arith.constant 4 : index
    %c0_238 = arith.constant 0 : index
    %c0_239 = arith.constant 0 : index
    %594 = vector.load %arg5[%c4, %c0_238, %c0_239] : memref<6x32x128xf32, #tpu.memory_space<vmem>>, vector<1x32x128xf32>
    %595 = vector.shape_cast %594 : vector<1x32x128xf32> to vector<32x128xf32>
    %c4_240 = arith.constant 4 : index
    %c0_241 = arith.constant 0 : index
    %c0_242 = arith.constant 0 : index
    %596 = vector.load %arg6[%c4_240, %c0_241, %c0_242] : memref<6x1x128xf32, #tpu.memory_space<vmem>>, vector<1x1x128xf32>
    %597 = vector.shape_cast %596 : vector<1x1x128xf32> to vector<1x128xf32>
    %cst_243 = arith.constant dense<0.000000e+00> : vector<16xf32>
    %598 = vector.multi_reduction <add>, %593, %cst_243 [1] : vector<16x32xf32> to vector<16xf32>
    %599 = vector.shape_cast %598 : vector<16xf32> to vector<16x1xf32>
    %cst_244 = arith.constant 3.200000e+01 : f32
    %600 = vector.broadcast %cst_244 : f32 to vector<16x1xf32>
    %601 = arith.divf %599, %600 : vector<16x1xf32>
    %602 = vector.broadcast %601 : vector<16x1xf32> to vector<16x32xf32>
    %603 = arith.subf %593, %602 : vector<16x32xf32>
    %604 = arith.mulf %603, %603 : vector<16x32xf32>
    %cst_245 = arith.constant dense<0.000000e+00> : vector<16xf32>
    %605 = vector.multi_reduction <add>, %604, %cst_245 [1] : vector<16x32xf32> to vector<16xf32>
    %606 = vector.shape_cast %605 : vector<16xf32> to vector<16x1xf32>
    %cst_246 = arith.constant 3.200000e+01 : f32
    %607 = vector.broadcast %cst_246 : f32 to vector<16x1xf32>
    %608 = arith.divf %606, %607 : vector<16x1xf32>
    %609 = vector.broadcast %601 : vector<16x1xf32> to vector<16x32xf32>
    %610 = arith.subf %593, %609 : vector<16x32xf32>
    %cst_247 = arith.constant 9.99999974E-6 : f32
    %611 = vector.broadcast %cst_247 : f32 to vector<16x1xf32>
    %612 = arith.addf %608, %611 : vector<16x1xf32>
    %613 = math.rsqrt %612 : vector<16x1xf32>
    %614 = vector.broadcast %613 : vector<16x1xf32> to vector<16x32xf32>
    %615 = arith.mulf %610, %614 : vector<16x32xf32>
    %616 = vector.extract_strided_slice %595 {offsets = [0, 0], sizes = [32, 32], strides = [1, 1]} : vector<32x128xf32> to vector<32x32xf32>
    %cst_248 = arith.constant dense<0.000000e+00> : vector<16x32xf32>
    %617 = tpu.matmul %615, %616, %cst_248 {dimension_numbers = #tpu.dot_dimension_numbers<[1], [0], [0], [1], [0, 0, 1, 1], [], []>} : vector<16x32xf32>, vector<32x32xf32>, vector<16x32xf32> -> vector<16x32xf32>
    %618 = vector.extract_strided_slice %597 {offsets = [0, 0], sizes = [1, 32], strides = [1, 1]} : vector<1x128xf32> to vector<1x32xf32>
    %619 = vector.broadcast %618 : vector<1x32xf32> to vector<16x32xf32>
    %620 = arith.addf %617, %619 : vector<16x32xf32>
    %621 = vector.extract_strided_slice %595 {offsets = [0, 32], sizes = [32, 64], strides = [1, 1]} : vector<32x128xf32> to vector<32x64xf32>
    %cst_249 = arith.constant dense<0.000000e+00> : vector<16x64xf32>
    %622 = tpu.matmul %615, %621, %cst_249 {dimension_numbers = #tpu.dot_dimension_numbers<[1], [0], [0], [1], [0, 0, 1, 1], [], []>} : vector<16x32xf32>, vector<32x64xf32>, vector<16x64xf32> -> vector<16x64xf32>
    %623 = vector.extract_strided_slice %597 {offsets = [0, 32], sizes = [1, 64], strides = [1, 1]} : vector<1x128xf32> to vector<1x64xf32>
    %624 = vector.broadcast %623 : vector<1x64xf32> to vector<16x64xf32>
    %625 = arith.addf %622, %624 : vector<16x64xf32>
    %626 = vector.extract_strided_slice %620 {offsets = [0, 0], sizes = [16, 8], strides = [1, 1]} : vector<16x32xf32> to vector<16x8xf32>
    %627 = vector.extract_strided_slice %625 {offsets = [0, 0], sizes = [16, 8], strides = [1, 1]} : vector<16x64xf32> to vector<16x8xf32>
    %628 = vector.extract_strided_slice %625 {offsets = [0, 32], sizes = [16, 8], strides = [1, 1]} : vector<16x64xf32> to vector<16x8xf32>
    %cst_250 = arith.constant dense<0.000000e+00> : vector<16x16xf32>
    %629 = tpu.matmul %626, %627, %cst_250 {dimension_numbers = #tpu.dot_dimension_numbers<[1], [1], [0], [0], [0, 0, 1, 0], [], []>} : vector<16x8xf32>, vector<16x8xf32>, vector<16x16xf32> -> vector<16x16xf32>
    %cst_251 = arith.constant 0.353553385 : f32
    %630 = vector.broadcast %cst_251 : f32 to vector<16x16xf32>
    %631 = arith.mulf %629, %630 : vector<16x16xf32>
    %632 = arith.addf %631, %1 : vector<16x16xf32>
    %cst_252 = arith.constant dense<0xFF800000> : vector<16xf32>
    %633 = vector.multi_reduction <maximumf>, %632, %cst_252 [1] : vector<16x16xf32> to vector<16xf32>
    %634 = vector.shape_cast %633 : vector<16xf32> to vector<16x1xf32>
    %635 = vector.broadcast %634 : vector<16x1xf32> to vector<16x16xf32>
    %636 = arith.subf %632, %635 : vector<16x16xf32>
    %637 = math.exp %636 : vector<16x16xf32>
    %cst_253 = arith.constant dense<0.000000e+00> : vector<16xf32>
    %638 = vector.multi_reduction <add>, %637, %cst_253 [1] : vector<16x16xf32> to vector<16xf32>
    %639 = vector.shape_cast %638 : vector<16xf32> to vector<16x1xf32>
    %640 = tpu.reciprocal %639 : vector<16x1xf32> -> vector<16x1xf32>
    %641 = vector.broadcast %640 : vector<16x1xf32> to vector<16x16xf32>
    %642 = arith.mulf %637, %641 : vector<16x16xf32>
    %cst_254 = arith.constant dense<0.000000e+00> : vector<16x8xf32>
    %643 = tpu.matmul %642, %628, %cst_254 {dimension_numbers = #tpu.dot_dimension_numbers<[1], [0], [0], [1], [0, 0, 1, 1], [], []>} : vector<16x16xf32>, vector<16x8xf32>, vector<16x8xf32> -> vector<16x8xf32>
    %c0_255 = arith.constant 0 : index
    %c0_256 = arith.constant 0 : index
    %644 = vector.load %arg14[%c0_255, %c0_256] : memref<16x32xf32, #tpu.memory_space<vmem>>, vector<16x8xf32>
    tpu.vector_store %arg14[%c0_255, %c0_256], %643 {strides = array<i32>} : memref<16x32xf32, #tpu.memory_space<vmem>>, vector<16x8xf32>,
    %645 = vector.extract_strided_slice %620 {offsets = [0, 8], sizes = [16, 8], strides = [1, 1]} : vector<16x32xf32> to vector<16x8xf32>
    %646 = vector.extract_strided_slice %625 {offsets = [0, 8], sizes = [16, 8], strides = [1, 1]} : vector<16x64xf32> to vector<16x8xf32>
    %647 = vector.extract_strided_slice %625 {offsets = [0, 40], sizes = [16, 8], strides = [1, 1]} : vector<16x64xf32> to vector<16x8xf32>
    %cst_257 = arith.constant dense<0.000000e+00> : vector<16x16xf32>
    %648 = tpu.matmul %645, %646, %cst_257 {dimension_numbers = #tpu.dot_dimension_numbers<[1], [1], [0], [0], [0, 0, 1, 0], [], []>} : vector<16x8xf32>, vector<16x8xf32>, vector<16x16xf32> -> vector<16x16xf32>
    %cst_258 = arith.constant 0.353553385 : f32
    %649 = vector.broadcast %cst_258 : f32 to vector<16x16xf32>
    %650 = arith.mulf %648, %649 : vector<16x16xf32>
    %651 = arith.addf %650, %1 : vector<16x16xf32>
    %cst_259 = arith.constant dense<0xFF800000> : vector<16xf32>
    %652 = vector.multi_reduction <maximumf>, %651, %cst_259 [1] : vector<16x16xf32> to vector<16xf32>
    %653 = vector.shape_cast %652 : vector<16xf32> to vector<16x1xf32>
    %654 = vector.broadcast %653 : vector<16x1xf32> to vector<16x16xf32>
    %655 = arith.subf %651, %654 : vector<16x16xf32>
    %656 = math.exp %655 : vector<16x16xf32>
    %cst_260 = arith.constant dense<0.000000e+00> : vector<16xf32>
    %657 = vector.multi_reduction <add>, %656, %cst_260 [1] : vector<16x16xf32> to vector<16xf32>
    %658 = vector.shape_cast %657 : vector<16xf32> to vector<16x1xf32>
    %659 = tpu.reciprocal %658 : vector<16x1xf32> -> vector<16x1xf32>
    %660 = vector.broadcast %659 : vector<16x1xf32> to vector<16x16xf32>
    %661 = arith.mulf %656, %660 : vector<16x16xf32>
    %cst_261 = arith.constant dense<0.000000e+00> : vector<16x8xf32>
    %662 = tpu.matmul %661, %647, %cst_261 {dimension_numbers = #tpu.dot_dimension_numbers<[1], [0], [0], [1], [0, 0, 1, 1], [], []>} : vector<16x16xf32>, vector<16x8xf32>, vector<16x8xf32> -> vector<16x8xf32>
    %c0_262 = arith.constant 0 : index
    %c8_263 = arith.constant 8 : index
    %663 = vector.load %arg14[%c0_262, %c8_263] : memref<16x32xf32, #tpu.memory_space<vmem>>, vector<16x8xf32>
    tpu.vector_store %arg14[%c0_262, %c8_263], %662 {strides = array<i32>} : memref<16x32xf32, #tpu.memory_space<vmem>>, vector<16x8xf32>,
    %664 = vector.extract_strided_slice %620 {offsets = [0, 16], sizes = [16, 8], strides = [1, 1]} : vector<16x32xf32> to vector<16x8xf32>
    %665 = vector.extract_strided_slice %625 {offsets = [0, 16], sizes = [16, 8], strides = [1, 1]} : vector<16x64xf32> to vector<16x8xf32>
    %666 = vector.extract_strided_slice %625 {offsets = [0, 48], sizes = [16, 8], strides = [1, 1]} : vector<16x64xf32> to vector<16x8xf32>
    %cst_264 = arith.constant dense<0.000000e+00> : vector<16x16xf32>
    %667 = tpu.matmul %664, %665, %cst_264 {dimension_numbers = #tpu.dot_dimension_numbers<[1], [1], [0], [0], [0, 0, 1, 0], [], []>} : vector<16x8xf32>, vector<16x8xf32>, vector<16x16xf32> -> vector<16x16xf32>
    %cst_265 = arith.constant 0.353553385 : f32
    %668 = vector.broadcast %cst_265 : f32 to vector<16x16xf32>
    %669 = arith.mulf %667, %668 : vector<16x16xf32>
    %670 = arith.addf %669, %1 : vector<16x16xf32>
    %cst_266 = arith.constant dense<0xFF800000> : vector<16xf32>
    %671 = vector.multi_reduction <maximumf>, %670, %cst_266 [1] : vector<16x16xf32> to vector<16xf32>
    %672 = vector.shape_cast %671 : vector<16xf32> to vector<16x1xf32>
    %673 = vector.broadcast %672 : vector<16x1xf32> to vector<16x16xf32>
    %674 = arith.subf %670, %673 : vector<16x16xf32>
    %675 = math.exp %674 : vector<16x16xf32>
    %cst_267 = arith.constant dense<0.000000e+00> : vector<16xf32>
    %676 = vector.multi_reduction <add>, %675, %cst_267 [1] : vector<16x16xf32> to vector<16xf32>
    %677 = vector.shape_cast %676 : vector<16xf32> to vector<16x1xf32>
    %678 = tpu.reciprocal %677 : vector<16x1xf32> -> vector<16x1xf32>
    %679 = vector.broadcast %678 : vector<16x1xf32> to vector<16x16xf32>
    %680 = arith.mulf %675, %679 : vector<16x16xf32>
    %cst_268 = arith.constant dense<0.000000e+00> : vector<16x8xf32>
    %681 = tpu.matmul %680, %666, %cst_268 {dimension_numbers = #tpu.dot_dimension_numbers<[1], [0], [0], [1], [0, 0, 1, 1], [], []>} : vector<16x16xf32>, vector<16x8xf32>, vector<16x8xf32> -> vector<16x8xf32>
    %c0_269 = arith.constant 0 : index
    %c16_270 = arith.constant 16 : index
    %682 = vector.load %arg14[%c0_269, %c16_270] : memref<16x32xf32, #tpu.memory_space<vmem>>, vector<16x8xf32>
    tpu.vector_store %arg14[%c0_269, %c16_270], %681 {strides = array<i32>} : memref<16x32xf32, #tpu.memory_space<vmem>>, vector<16x8xf32>,
    %683 = vector.extract_strided_slice %620 {offsets = [0, 24], sizes = [16, 8], strides = [1, 1]} : vector<16x32xf32> to vector<16x8xf32>
    %684 = vector.extract_strided_slice %625 {offsets = [0, 24], sizes = [16, 8], strides = [1, 1]} : vector<16x64xf32> to vector<16x8xf32>
    %685 = vector.extract_strided_slice %625 {offsets = [0, 56], sizes = [16, 8], strides = [1, 1]} : vector<16x64xf32> to vector<16x8xf32>
    %cst_271 = arith.constant dense<0.000000e+00> : vector<16x16xf32>
    %686 = tpu.matmul %683, %684, %cst_271 {dimension_numbers = #tpu.dot_dimension_numbers<[1], [1], [0], [0], [0, 0, 1, 0], [], []>} : vector<16x8xf32>, vector<16x8xf32>, vector<16x16xf32> -> vector<16x16xf32>
    %cst_272 = arith.constant 0.353553385 : f32
    %687 = vector.broadcast %cst_272 : f32 to vector<16x16xf32>
    %688 = arith.mulf %686, %687 : vector<16x16xf32>
    %689 = arith.addf %688, %1 : vector<16x16xf32>
    %cst_273 = arith.constant dense<0xFF800000> : vector<16xf32>
    %690 = vector.multi_reduction <maximumf>, %689, %cst_273 [1] : vector<16x16xf32> to vector<16xf32>
    %691 = vector.shape_cast %690 : vector<16xf32> to vector<16x1xf32>
    %692 = vector.broadcast %691 : vector<16x1xf32> to vector<16x16xf32>
    %693 = arith.subf %689, %692 : vector<16x16xf32>
    %694 = math.exp %693 : vector<16x16xf32>
    %cst_274 = arith.constant dense<0.000000e+00> : vector<16xf32>
    %695 = vector.multi_reduction <add>, %694, %cst_274 [1] : vector<16x16xf32> to vector<16xf32>
    %696 = vector.shape_cast %695 : vector<16xf32> to vector<16x1xf32>
    %697 = tpu.reciprocal %696 : vector<16x1xf32> -> vector<16x1xf32>
    %698 = vector.broadcast %697 : vector<16x1xf32> to vector<16x16xf32>
    %699 = arith.mulf %694, %698 : vector<16x16xf32>
    %cst_275 = arith.constant dense<0.000000e+00> : vector<16x8xf32>
    %700 = tpu.matmul %699, %685, %cst_275 {dimension_numbers = #tpu.dot_dimension_numbers<[1], [0], [0], [1], [0, 0, 1, 1], [], []>} : vector<16x16xf32>, vector<16x8xf32>, vector<16x8xf32> -> vector<16x8xf32>
    %c0_276 = arith.constant 0 : index
    %c24_277 = arith.constant 24 : index
    %701 = vector.load %arg14[%c0_276, %c24_277] : memref<16x32xf32, #tpu.memory_space<vmem>>, vector<16x8xf32>
    tpu.vector_store %arg14[%c0_276, %c24_277], %700 {strides = array<i32>} : memref<16x32xf32, #tpu.memory_space<vmem>>, vector<16x8xf32>,
    %c0_278 = arith.constant 0 : index
    %c0_279 = arith.constant 0 : index
    %702 = vector.load %arg14[%c0_278, %c0_279] : memref<16x32xf32, #tpu.memory_space<vmem>>, vector<16x32xf32>
    %703 = vector.extract_strided_slice %595 {offsets = [0, 96], sizes = [32, 32], strides = [1, 1]} : vector<32x128xf32> to vector<32x32xf32>
    %cst_280 = arith.constant dense<0.000000e+00> : vector<16x32xf32>
    %704 = tpu.matmul %702, %703, %cst_280 {dimension_numbers = #tpu.dot_dimension_numbers<[1], [0], [0], [1], [0, 0, 1, 1], [], []>} : vector<16x32xf32>, vector<32x32xf32>, vector<16x32xf32> -> vector<16x32xf32>
    %705 = vector.extract_strided_slice %597 {offsets = [0, 96], sizes = [1, 32], strides = [1, 1]} : vector<1x128xf32> to vector<1x32xf32>
    %706 = vector.broadcast %705 : vector<1x32xf32> to vector<16x32xf32>
    %707 = arith.addf %704, %706 : vector<16x32xf32>
    %708 = arith.addf %707, %593 : vector<16x32xf32>
    %c5 = arith.constant 5 : index
    %c0_281 = arith.constant 0 : index
    %c0_282 = arith.constant 0 : index
    %709 = vector.load %arg5[%c5, %c0_281, %c0_282] : memref<6x32x128xf32, #tpu.memory_space<vmem>>, vector<1x32x128xf32>
    %710 = vector.shape_cast %709 : vector<1x32x128xf32> to vector<32x128xf32>
    %c5_283 = arith.constant 5 : index
    %c0_284 = arith.constant 0 : index
    %c0_285 = arith.constant 0 : index
    %711 = vector.load %arg6[%c5_283, %c0_284, %c0_285] : memref<6x1x128xf32, #tpu.memory_space<vmem>>, vector<1x1x128xf32>
    %712 = vector.shape_cast %711 : vector<1x1x128xf32> to vector<1x128xf32>
    %cst_286 = arith.constant dense<0.000000e+00> : vector<16xf32>
    %713 = vector.multi_reduction <add>, %708, %cst_286 [1] : vector<16x32xf32> to vector<16xf32>
    %714 = vector.shape_cast %713 : vector<16xf32> to vector<16x1xf32>
    %cst_287 = arith.constant 3.200000e+01 : f32
    %715 = vector.broadcast %cst_287 : f32 to vector<16x1xf32>
    %716 = arith.divf %714, %715 : vector<16x1xf32>
    %717 = vector.broadcast %716 : vector<16x1xf32> to vector<16x32xf32>
    %718 = arith.subf %708, %717 : vector<16x32xf32>
    %719 = arith.mulf %718, %718 : vector<16x32xf32>
    %cst_288 = arith.constant dense<0.000000e+00> : vector<16xf32>
    %720 = vector.multi_reduction <add>, %719, %cst_288 [1] : vector<16x32xf32> to vector<16xf32>
    %721 = vector.shape_cast %720 : vector<16xf32> to vector<16x1xf32>
    %cst_289 = arith.constant 3.200000e+01 : f32
    %722 = vector.broadcast %cst_289 : f32 to vector<16x1xf32>
    %723 = arith.divf %721, %722 : vector<16x1xf32>
    %724 = vector.broadcast %716 : vector<16x1xf32> to vector<16x32xf32>
    %725 = arith.subf %708, %724 : vector<16x32xf32>
    %cst_290 = arith.constant 9.99999974E-6 : f32
    %726 = vector.broadcast %cst_290 : f32 to vector<16x1xf32>
    %727 = arith.addf %723, %726 : vector<16x1xf32>
    %728 = math.rsqrt %727 : vector<16x1xf32>
    %729 = vector.broadcast %728 : vector<16x1xf32> to vector<16x32xf32>
    %730 = arith.mulf %725, %729 : vector<16x32xf32>
    %731 = vector.extract_strided_slice %710 {offsets = [0, 0], sizes = [32, 32], strides = [1, 1]} : vector<32x128xf32> to vector<32x32xf32>
    %cst_291 = arith.constant dense<0.000000e+00> : vector<16x32xf32>
    %732 = tpu.matmul %730, %731, %cst_291 {dimension_numbers = #tpu.dot_dimension_numbers<[1], [0], [0], [1], [0, 0, 1, 1], [], []>} : vector<16x32xf32>, vector<32x32xf32>, vector<16x32xf32> -> vector<16x32xf32>
    %733 = vector.extract_strided_slice %712 {offsets = [0, 0], sizes = [1, 32], strides = [1, 1]} : vector<1x128xf32> to vector<1x32xf32>
    %734 = vector.broadcast %733 : vector<1x32xf32> to vector<16x32xf32>
    %735 = arith.addf %732, %734 : vector<16x32xf32>
    %736 = vector.extract_strided_slice %710 {offsets = [0, 32], sizes = [32, 64], strides = [1, 1]} : vector<32x128xf32> to vector<32x64xf32>
    %cst_292 = arith.constant dense<0.000000e+00> : vector<16x64xf32>
    %737 = tpu.matmul %327, %736, %cst_292 {dimension_numbers = #tpu.dot_dimension_numbers<[1], [0], [0], [1], [0, 0, 1, 1], [], []>} : vector<16x32xf32>, vector<32x64xf32>, vector<16x64xf32> -> vector<16x64xf32>
    %738 = vector.extract_strided_slice %712 {offsets = [0, 32], sizes = [1, 64], strides = [1, 1]} : vector<1x128xf32> to vector<1x64xf32>
    %739 = vector.broadcast %738 : vector<1x64xf32> to vector<16x64xf32>
    %740 = arith.addf %737, %739 : vector<16x64xf32>
    %741 = vector.extract_strided_slice %735 {offsets = [0, 0], sizes = [16, 8], strides = [1, 1]} : vector<16x32xf32> to vector<16x8xf32>
    %742 = vector.extract_strided_slice %740 {offsets = [0, 0], sizes = [16, 8], strides = [1, 1]} : vector<16x64xf32> to vector<16x8xf32>
    %743 = vector.extract_strided_slice %740 {offsets = [0, 32], sizes = [16, 8], strides = [1, 1]} : vector<16x64xf32> to vector<16x8xf32>
    %cst_293 = arith.constant dense<0.000000e+00> : vector<16x16xf32>
    %744 = tpu.matmul %741, %742, %cst_293 {dimension_numbers = #tpu.dot_dimension_numbers<[1], [1], [0], [0], [0, 0, 1, 0], [], []>} : vector<16x8xf32>, vector<16x8xf32>, vector<16x16xf32> -> vector<16x16xf32>
    %cst_294 = arith.constant 0.353553385 : f32
    %745 = vector.broadcast %cst_294 : f32 to vector<16x16xf32>
    %746 = arith.mulf %744, %745 : vector<16x16xf32>
    %747 = arith.addf %746, %2 : vector<16x16xf32>
    %cst_295 = arith.constant dense<0xFF800000> : vector<16xf32>
    %748 = vector.multi_reduction <maximumf>, %747, %cst_295 [1] : vector<16x16xf32> to vector<16xf32>
    %749 = vector.shape_cast %748 : vector<16xf32> to vector<16x1xf32>
    %750 = vector.broadcast %749 : vector<16x1xf32> to vector<16x16xf32>
    %751 = arith.subf %747, %750 : vector<16x16xf32>
    %752 = math.exp %751 : vector<16x16xf32>
    %cst_296 = arith.constant dense<0.000000e+00> : vector<16xf32>
    %753 = vector.multi_reduction <add>, %752, %cst_296 [1] : vector<16x16xf32> to vector<16xf32>
    %754 = vector.shape_cast %753 : vector<16xf32> to vector<16x1xf32>
    %755 = tpu.reciprocal %754 : vector<16x1xf32> -> vector<16x1xf32>
    %756 = vector.broadcast %755 : vector<16x1xf32> to vector<16x16xf32>
    %757 = arith.mulf %752, %756 : vector<16x16xf32>
    %cst_297 = arith.constant dense<0.000000e+00> : vector<16x8xf32>
    %758 = tpu.matmul %757, %743, %cst_297 {dimension_numbers = #tpu.dot_dimension_numbers<[1], [0], [0], [1], [0, 0, 1, 1], [], []>} : vector<16x16xf32>, vector<16x8xf32>, vector<16x8xf32> -> vector<16x8xf32>
    %c0_298 = arith.constant 0 : index
    %c0_299 = arith.constant 0 : index
    %759 = vector.load %arg14[%c0_298, %c0_299] : memref<16x32xf32, #tpu.memory_space<vmem>>, vector<16x8xf32>
    tpu.vector_store %arg14[%c0_298, %c0_299], %758 {strides = array<i32>} : memref<16x32xf32, #tpu.memory_space<vmem>>, vector<16x8xf32>,
    %760 = vector.extract_strided_slice %735 {offsets = [0, 8], sizes = [16, 8], strides = [1, 1]} : vector<16x32xf32> to vector<16x8xf32>
    %761 = vector.extract_strided_slice %740 {offsets = [0, 8], sizes = [16, 8], strides = [1, 1]} : vector<16x64xf32> to vector<16x8xf32>
    %762 = vector.extract_strided_slice %740 {offsets = [0, 40], sizes = [16, 8], strides = [1, 1]} : vector<16x64xf32> to vector<16x8xf32>
    %cst_300 = arith.constant dense<0.000000e+00> : vector<16x16xf32>
    %763 = tpu.matmul %760, %761, %cst_300 {dimension_numbers = #tpu.dot_dimension_numbers<[1], [1], [0], [0], [0, 0, 1, 0], [], []>} : vector<16x8xf32>, vector<16x8xf32>, vector<16x16xf32> -> vector<16x16xf32>
    %cst_301 = arith.constant 0.353553385 : f32
    %764 = vector.broadcast %cst_301 : f32 to vector<16x16xf32>
    %765 = arith.mulf %763, %764 : vector<16x16xf32>
    %766 = arith.addf %765, %2 : vector<16x16xf32>
    %cst_302 = arith.constant dense<0xFF800000> : vector<16xf32>
    %767 = vector.multi_reduction <maximumf>, %766, %cst_302 [1] : vector<16x16xf32> to vector<16xf32>
    %768 = vector.shape_cast %767 : vector<16xf32> to vector<16x1xf32>
    %769 = vector.broadcast %768 : vector<16x1xf32> to vector<16x16xf32>
    %770 = arith.subf %766, %769 : vector<16x16xf32>
    %771 = math.exp %770 : vector<16x16xf32>
    %cst_303 = arith.constant dense<0.000000e+00> : vector<16xf32>
    %772 = vector.multi_reduction <add>, %771, %cst_303 [1] : vector<16x16xf32> to vector<16xf32>
    %773 = vector.shape_cast %772 : vector<16xf32> to vector<16x1xf32>
    %774 = tpu.reciprocal %773 : vector<16x1xf32> -> vector<16x1xf32>
    %775 = vector.broadcast %774 : vector<16x1xf32> to vector<16x16xf32>
    %776 = arith.mulf %771, %775 : vector<16x16xf32>
    %cst_304 = arith.constant dense<0.000000e+00> : vector<16x8xf32>
    %777 = tpu.matmul %776, %762, %cst_304 {dimension_numbers = #tpu.dot_dimension_numbers<[1], [0], [0], [1], [0, 0, 1, 1], [], []>} : vector<16x16xf32>, vector<16x8xf32>, vector<16x8xf32> -> vector<16x8xf32>
    %c0_305 = arith.constant 0 : index
    %c8_306 = arith.constant 8 : index
    %778 = vector.load %arg14[%c0_305, %c8_306] : memref<16x32xf32, #tpu.memory_space<vmem>>, vector<16x8xf32>
    tpu.vector_store %arg14[%c0_305, %c8_306], %777 {strides = array<i32>} : memref<16x32xf32, #tpu.memory_space<vmem>>, vector<16x8xf32>,
    %779 = vector.extract_strided_slice %735 {offsets = [0, 16], sizes = [16, 8], strides = [1, 1]} : vector<16x32xf32> to vector<16x8xf32>
    %780 = vector.extract_strided_slice %740 {offsets = [0, 16], sizes = [16, 8], strides = [1, 1]} : vector<16x64xf32> to vector<16x8xf32>
    %781 = vector.extract_strided_slice %740 {offsets = [0, 48], sizes = [16, 8], strides = [1, 1]} : vector<16x64xf32> to vector<16x8xf32>
    %cst_307 = arith.constant dense<0.000000e+00> : vector<16x16xf32>
    %782 = tpu.matmul %779, %780, %cst_307 {dimension_numbers = #tpu.dot_dimension_numbers<[1], [1], [0], [0], [0, 0, 1, 0], [], []>} : vector<16x8xf32>, vector<16x8xf32>, vector<16x16xf32> -> vector<16x16xf32>
    %cst_308 = arith.constant 0.353553385 : f32
    %783 = vector.broadcast %cst_308 : f32 to vector<16x16xf32>
    %784 = arith.mulf %782, %783 : vector<16x16xf32>
    %785 = arith.addf %784, %2 : vector<16x16xf32>
    %cst_309 = arith.constant dense<0xFF800000> : vector<16xf32>
    %786 = vector.multi_reduction <maximumf>, %785, %cst_309 [1] : vector<16x16xf32> to vector<16xf32>
    %787 = vector.shape_cast %786 : vector<16xf32> to vector<16x1xf32>
    %788 = vector.broadcast %787 : vector<16x1xf32> to vector<16x16xf32>
    %789 = arith.subf %785, %788 : vector<16x16xf32>
    %790 = math.exp %789 : vector<16x16xf32>
    %cst_310 = arith.constant dense<0.000000e+00> : vector<16xf32>
    %791 = vector.multi_reduction <add>, %790, %cst_310 [1] : vector<16x16xf32> to vector<16xf32>
    %792 = vector.shape_cast %791 : vector<16xf32> to vector<16x1xf32>
    %793 = tpu.reciprocal %792 : vector<16x1xf32> -> vector<16x1xf32>
    %794 = vector.broadcast %793 : vector<16x1xf32> to vector<16x16xf32>
    %795 = arith.mulf %790, %794 : vector<16x16xf32>
    %cst_311 = arith.constant dense<0.000000e+00> : vector<16x8xf32>
    %796 = tpu.matmul %795, %781, %cst_311 {dimension_numbers = #tpu.dot_dimension_numbers<[1], [0], [0], [1], [0, 0, 1, 1], [], []>} : vector<16x16xf32>, vector<16x8xf32>, vector<16x8xf32> -> vector<16x8xf32>
    %c0_312 = arith.constant 0 : index
    %c16_313 = arith.constant 16 : index
    %797 = vector.load %arg14[%c0_312, %c16_313] : memref<16x32xf32, #tpu.memory_space<vmem>>, vector<16x8xf32>
    tpu.vector_store %arg14[%c0_312, %c16_313], %796 {strides = array<i32>} : memref<16x32xf32, #tpu.memory_space<vmem>>, vector<16x8xf32>,
    %798 = vector.extract_strided_slice %735 {offsets = [0, 24], sizes = [16, 8], strides = [1, 1]} : vector<16x32xf32> to vector<16x8xf32>
    %799 = vector.extract_strided_slice %740 {offsets = [0, 24], sizes = [16, 8], strides = [1, 1]} : vector<16x64xf32> to vector<16x8xf32>
    %800 = vector.extract_strided_slice %740 {offsets = [0, 56], sizes = [16, 8], strides = [1, 1]} : vector<16x64xf32> to vector<16x8xf32>
    %cst_314 = arith.constant dense<0.000000e+00> : vector<16x16xf32>
    %801 = tpu.matmul %798, %799, %cst_314 {dimension_numbers = #tpu.dot_dimension_numbers<[1], [1], [0], [0], [0, 0, 1, 0], [], []>} : vector<16x8xf32>, vector<16x8xf32>, vector<16x16xf32> -> vector<16x16xf32>
    %cst_315 = arith.constant 0.353553385 : f32
    %802 = vector.broadcast %cst_315 : f32 to vector<16x16xf32>
    %803 = arith.mulf %801, %802 : vector<16x16xf32>
    %804 = arith.addf %803, %2 : vector<16x16xf32>
    %cst_316 = arith.constant dense<0xFF800000> : vector<16xf32>
    %805 = vector.multi_reduction <maximumf>, %804, %cst_316 [1] : vector<16x16xf32> to vector<16xf32>
    %806 = vector.shape_cast %805 : vector<16xf32> to vector<16x1xf32>
    %807 = vector.broadcast %806 : vector<16x1xf32> to vector<16x16xf32>
    %808 = arith.subf %804, %807 : vector<16x16xf32>
    %809 = math.exp %808 : vector<16x16xf32>
    %cst_317 = arith.constant dense<0.000000e+00> : vector<16xf32>
    %810 = vector.multi_reduction <add>, %809, %cst_317 [1] : vector<16x16xf32> to vector<16xf32>
    %811 = vector.shape_cast %810 : vector<16xf32> to vector<16x1xf32>
    %812 = tpu.reciprocal %811 : vector<16x1xf32> -> vector<16x1xf32>
    %813 = vector.broadcast %812 : vector<16x1xf32> to vector<16x16xf32>
    %814 = arith.mulf %809, %813 : vector<16x16xf32>
    %cst_318 = arith.constant dense<0.000000e+00> : vector<16x8xf32>
    %815 = tpu.matmul %814, %800, %cst_318 {dimension_numbers = #tpu.dot_dimension_numbers<[1], [0], [0], [1], [0, 0, 1, 1], [], []>} : vector<16x16xf32>, vector<16x8xf32>, vector<16x8xf32> -> vector<16x8xf32>
    %c0_319 = arith.constant 0 : index
    %c24_320 = arith.constant 24 : index
    %816 = vector.load %arg14[%c0_319, %c24_320] : memref<16x32xf32, #tpu.memory_space<vmem>>, vector<16x8xf32>
    tpu.vector_store %arg14[%c0_319, %c24_320], %815 {strides = array<i32>} : memref<16x32xf32, #tpu.memory_space<vmem>>, vector<16x8xf32>,
    %c0_321 = arith.constant 0 : index
    %c0_322 = arith.constant 0 : index
    %817 = vector.load %arg14[%c0_321, %c0_322] : memref<16x32xf32, #tpu.memory_space<vmem>>, vector<16x32xf32>
    %818 = vector.extract_strided_slice %710 {offsets = [0, 96], sizes = [32, 32], strides = [1, 1]} : vector<32x128xf32> to vector<32x32xf32>
    %cst_323 = arith.constant dense<0.000000e+00> : vector<16x32xf32>
    %819 = tpu.matmul %817, %818, %cst_323 {dimension_numbers = #tpu.dot_dimension_numbers<[1], [0], [0], [1], [0, 0, 1, 1], [], []>} : vector<16x32xf32>, vector<32x32xf32>, vector<16x32xf32> -> vector<16x32xf32>
    %820 = vector.extract_strided_slice %712 {offsets = [0, 96], sizes = [1, 32], strides = [1, 1]} : vector<1x128xf32> to vector<1x32xf32>
    %821 = vector.broadcast %820 : vector<1x32xf32> to vector<16x32xf32>
    %822 = arith.addf %819, %821 : vector<16x32xf32>
    %823 = arith.addf %822, %708 : vector<16x32xf32>
    %cst_324 = arith.constant dense<0.000000e+00> : vector<16xf32>
    %824 = vector.multi_reduction <add>, %823, %cst_324 [1] : vector<16x32xf32> to vector<16xf32>
    %825 = vector.shape_cast %824 : vector<16xf32> to vector<16x1xf32>
    %cst_325 = arith.constant 3.200000e+01 : f32
    %826 = vector.broadcast %cst_325 : f32 to vector<16x1xf32>
    %827 = arith.divf %825, %826 : vector<16x1xf32>
    %828 = vector.broadcast %827 : vector<16x1xf32> to vector<16x32xf32>
    %829 = arith.subf %823, %828 : vector<16x32xf32>
    %830 = arith.mulf %829, %829 : vector<16x32xf32>
    %cst_326 = arith.constant dense<0.000000e+00> : vector<16xf32>
    %831 = vector.multi_reduction <add>, %830, %cst_326 [1] : vector<16x32xf32> to vector<16xf32>
    %832 = vector.shape_cast %831 : vector<16xf32> to vector<16x1xf32>
    %cst_327 = arith.constant 3.200000e+01 : f32
    %833 = vector.broadcast %cst_327 : f32 to vector<16x1xf32>
    %834 = arith.divf %832, %833 : vector<16x1xf32>
    %835 = vector.broadcast %827 : vector<16x1xf32> to vector<16x32xf32>
    %836 = arith.subf %823, %835 : vector<16x32xf32>
    %cst_328 = arith.constant 9.99999974E-6 : f32
    %837 = vector.broadcast %cst_328 : f32 to vector<16x1xf32>
    %838 = arith.addf %834, %837 : vector<16x1xf32>
    %839 = math.rsqrt %838 : vector<16x1xf32>
    %840 = vector.broadcast %839 : vector<16x1xf32> to vector<16x32xf32>
    %841 = arith.mulf %836, %840 : vector<16x32xf32>
    %c3_329 = arith.constant 3 : index
    %c0_330 = arith.constant 0 : index
    %c0_331 = arith.constant 0 : index
    %842 = vector.load %arg9[%c3_329, %c0_330, %c0_331] : memref<4x1x96xf32, #tpu.memory_space<vmem>>, vector<1x1x96xf32>
    %843 = vector.shape_cast %842 : vector<1x1x96xf32> to vector<1x96xf32>
    %c3_332 = arith.constant 3 : index
    %c0_333 = arith.constant 0 : index
    %c0_334 = arith.constant 0 : index
    %844 = vector.load %arg7[%c3_332, %c0_333, %c0_334] : memref<4x32x64xf32, #tpu.memory_space<vmem>>, vector<1x32x64xf32>
    %845 = vector.shape_cast %844 : vector<1x32x64xf32> to vector<32x64xf32>
    %cst_335 = arith.constant dense<0.000000e+00> : vector<16x64xf32>
    %846 = tpu.matmul %841, %845, %cst_335 {dimension_numbers = #tpu.dot_dimension_numbers<[1], [0], [0], [1], [0, 0, 1, 1], [], []>} : vector<16x32xf32>, vector<32x64xf32>, vector<16x64xf32> -> vector<16x64xf32>
    %847 = vector.extract_strided_slice %843 {offsets = [0, 0], sizes = [1, 64], strides = [1, 1]} : vector<1x96xf32> to vector<1x64xf32>
    %848 = vector.broadcast %847 : vector<1x64xf32> to vector<16x64xf32>
    %849 = arith.addf %846, %848 : vector<16x64xf32>
    %cst_336 = arith.constant 0.000000e+00 : f32
    %850 = vector.broadcast %cst_336 : f32 to vector<16x64xf32>
    %851 = arith.maximumf %849, %850 : vector<16x64xf32>
    %c3_337 = arith.constant 3 : index
    %c0_338 = arith.constant 0 : index
    %c0_339 = arith.constant 0 : index
    %852 = vector.load %arg8[%c3_337, %c0_338, %c0_339] : memref<4x64x32xf32, #tpu.memory_space<vmem>>, vector<1x64x32xf32>
    %853 = vector.shape_cast %852 : vector<1x64x32xf32> to vector<64x32xf32>
    %cst_340 = arith.constant dense<0.000000e+00> : vector<16x32xf32>
    %854 = tpu.matmul %851, %853, %cst_340 {dimension_numbers = #tpu.dot_dimension_numbers<[1], [0], [0], [1], [0, 0, 1, 1], [], []>} : vector<16x64xf32>, vector<64x32xf32>, vector<16x32xf32> -> vector<16x32xf32>
    %855 = vector.extract_strided_slice %843 {offsets = [0, 64], sizes = [1, 32], strides = [1, 1]} : vector<1x96xf32> to vector<1x32xf32>
    %856 = vector.broadcast %855 : vector<1x32xf32> to vector<16x32xf32>
    %857 = arith.addf %854, %856 : vector<16x32xf32>
    %858 = arith.addf %857, %823 : vector<16x32xf32>
    %cst_341 = arith.constant dense<0.000000e+00> : vector<16xf32>
    %859 = vector.multi_reduction <add>, %858, %cst_341 [1] : vector<16x32xf32> to vector<16xf32>
    %860 = vector.shape_cast %859 : vector<16xf32> to vector<16x1xf32>
    %cst_342 = arith.constant 3.200000e+01 : f32
    %861 = vector.broadcast %cst_342 : f32 to vector<16x1xf32>
    %862 = arith.divf %860, %861 : vector<16x1xf32>
    %863 = vector.broadcast %862 : vector<16x1xf32> to vector<16x32xf32>
    %864 = arith.subf %858, %863 : vector<16x32xf32>
    %865 = arith.mulf %864, %864 : vector<16x32xf32>
    %cst_343 = arith.constant dense<0.000000e+00> : vector<16xf32>
    %866 = vector.multi_reduction <add>, %865, %cst_343 [1] : vector<16x32xf32> to vector<16xf32>
    %867 = vector.shape_cast %866 : vector<16xf32> to vector<16x1xf32>
    %cst_344 = arith.constant 3.200000e+01 : f32
    %868 = vector.broadcast %cst_344 : f32 to vector<16x1xf32>
    %869 = arith.divf %867, %868 : vector<16x1xf32>
    %870 = vector.broadcast %862 : vector<16x1xf32> to vector<16x32xf32>
    %871 = arith.subf %858, %870 : vector<16x32xf32>
    %cst_345 = arith.constant 9.99999974E-6 : f32
    %872 = vector.broadcast %cst_345 : f32 to vector<16x1xf32>
    %873 = arith.addf %869, %872 : vector<16x1xf32>
    %874 = math.rsqrt %873 : vector<16x1xf32>
    %875 = vector.broadcast %874 : vector<16x1xf32> to vector<16x32xf32>
    %876 = arith.mulf %871, %875 : vector<16x32xf32>
    %c2_346 = arith.constant 2 : index
    %c0_347 = arith.constant 0 : index
    %877 = vector.load %arg10[%c2_346, %c0_347] : memref<4x32xf32, #tpu.memory_space<vmem>>, vector<1x32xf32>
    %878 = vector.broadcast %877 : vector<1x32xf32> to vector<16x32xf32>
    %879 = arith.mulf %876, %878 : vector<16x32xf32>
    %c3_348 = arith.constant 3 : index
    %c0_349 = arith.constant 0 : index
    %880 = vector.load %arg10[%c3_348, %c0_349] : memref<4x32xf32, #tpu.memory_space<vmem>>, vector<1x32xf32>
    %881 = vector.broadcast %880 : vector<1x32xf32> to vector<16x32xf32>
    %882 = arith.addf %879, %881 : vector<16x32xf32>
    %c0_350 = arith.constant 0 : index
    %c0_351 = arith.constant 0 : index
    %883 = vector.load %arg11[%c0_350, %c0_351] : memref<32x128xf32, #tpu.memory_space<vmem>>, vector<32x128xf32>
    %cst_352 = arith.constant dense<0.000000e+00> : vector<16x128xf32>
    %884 = tpu.matmul %882, %883, %cst_352 {dimension_numbers = #tpu.dot_dimension_numbers<[1], [0], [0], [1], [0, 0, 1, 1], [], []>} : vector<16x32xf32>, vector<32x128xf32>, vector<16x128xf32> -> vector<16x128xf32>
    %c0_353 = arith.constant 0 : index
    %c0_354 = arith.constant 0 : index
    %885 = vector.load %arg12[%c0_353, %c0_354] : memref<1x128xf32, #tpu.memory_space<vmem>>, vector<1x128xf32>
    %886 = vector.broadcast %885 : vector<1x128xf32> to vector<16x128xf32>
    %887 = arith.addf %884, %886 : vector<16x128xf32>
    %c0_355 = arith.constant 0 : index
    %c0_356 = arith.constant 0 : index
    %888 = vector.load %arg13[%c0_355, %c0_356] : memref<16x128xf32, #tpu.memory_space<vmem>>, vector<16x128xf32>
    tpu.vector_store %arg13[%c0_355, %c0_356], %887 {strides = array<i32>} : memref<16x128xf32, #tpu.memory_space<vmem>>, vector<16x128xf32>,
    return
  }
}

</mosaic_0001>

<llo_original>
// kernel: transformer_forward.1
$region0: #{transformer_forward.1}
  #allocation0 [shape = 'u32[]', space=smem, size = 0x4, offset = 0x4, fixed_abs, tag = 'smem constant byte address 0x4 - core index']
  #allocation1 [shape = 'u32[144,128]{1,0:T(1,128)}', space=vmem, size = 0x12000, scoped, tag = 'internal scratch']
  #allocation2 [shape = 'f32[16,32]{1,0:T(8,128)}', space=vmem, size = 0x2000, scoped, tag = 'scratch operand']
  %s0 = inlined_call_operand.vmem [shape: f32[16,32], index: 0, kind: input, shape index: {}]
  %s1 = inlined_call_operand.vmem [shape: f32[16,32], index: 1, kind: input, shape index: {}]
  %s2 = inlined_call_operand.vmem [shape: f32[16,16], index: 2, kind: input, shape index: {}, may-alias: {2,4}]
  %s3 = inlined_call_operand.vmem [shape: f32[16,16], index: 3, kind: input, shape index: {}]
  %s4 = inlined_call_operand.vmem [shape: f32[16,16], index: 4, kind: input, shape index: {}, may-alias: {2,4}]
  %s5 = inlined_call_operand.vmem [shape: f32[6,32,128], index: 5, kind: input, shape index: {}]
  %s6 = inlined_call_operand.vmem [shape: f32[6,1,128], index: 6, kind: input, shape index: {}]
  %s7 = inlined_call_operand.vmem [shape: f32[4,32,64], index: 7, kind: input, shape index: {}]
  %s8 = inlined_call_operand.vmem [shape: f32[4,64,32], index: 8, kind: input, shape index: {}]
  %s9 = inlined_call_operand.vmem [shape: f32[4,1,96], index: 9, kind: input, shape index: {}]
  %s10 = inlined_call_operand.vmem [shape: f32[4,32], index: 10, kind: input, shape index: {}]
  %s11 = inlined_call_operand.vmem [shape: f32[32,128], index: 11, kind: input, shape index: {}]
  %s12 = inlined_call_operand.vmem [shape: f32[1,128], index: 12, kind: input, shape index: {}]
  %s13 = inlined_call_operand.hbm [shape: f32[16,128], index: 13, kind: output, shape index: {}]
  %s14 = sld [smem:[#allocation0]]
  $region62: #{transformer_forward.1} parent=0
    _
  %s16 = ssub.s32 1, %s14
  %s17 = scalar_select 0, %s16, %s14
  $region1: #{transformer_forward.1} parent=0
    #allocation3 [shape = 'u8[8192]{0}', space=vmem, size = 0x2000, scoped, tag = 'output window, operand 0, single buffered']
    #allocation4 [shape = 's32[1]{0}', space=sflag, size = 0x4, scoped, tag = 'scoped memory for transformer_forward.1']
    %18 = vsyncpa [#allocation4], 0
    // Predicated region
    $region2: #{transformer_forward.1} parent=1 // pred_check
      _
    $region3: #{transformer_forward.1} parent=1 // pred_check_branch
      %20 = sbr.rel (0) target = $region5
    $region4: #{transformer_forward.1} parent=1 // pred_region
      _
    $region5: #{transformer_forward.1} parent=1 // pred_fallthru
      _
    // Predicated region
    $region6: #{transformer_forward.1} parent=1 // pred_check
      _
    $region7: #{transformer_forward.1} parent=1 // pred_check_branch
      %22 = sbr.rel (0) target = $region9
    $region8: #{transformer_forward.1} parent=1 // pred_region
      _
    $region9: #{transformer_forward.1} parent=1 // pred_fallthru
      _
    // Predicated region
    $region10: #{transformer_forward.1} parent=1 // pred_check
      _
    $region11: #{transformer_forward.1} parent=1 // pred_check_branch
      %24 = sbr.rel (0) target = $region13
    $region12: #{transformer_forward.1} parent=1 // pred_region
      _
    $region13: #{transformer_forward.1} parent=1 // pred_fallthru
      _
    // Predicated region
    $region14: #{transformer_forward.1} parent=1 // pred_check
      _
    $region15: #{transformer_forward.1} parent=1 // pred_check_branch
      %26 = sbr.rel (0) target = $region17
    $region16: #{transformer_forward.1} parent=1 // pred_region
      _
    $region17: #{transformer_forward.1} parent=1 // pred_fallthru
      _
    // Predicated region
    $region18: #{transformer_forward.1} parent=1 // pred_check
      _
    $region19: #{transformer_forward.1} parent=1 // pred_check_branch
      %28 = sbr.rel (0) target = $region21
    $region20: #{transformer_forward.1} parent=1 // pred_region
      _
    $region21: #{transformer_forward.1} parent=1 // pred_fallthru
      _
    // Predicated region
    $region22: #{transformer_forward.1} parent=1 // pred_check
      _
    $region23: #{transformer_forward.1} parent=1 // pred_check_branch
      %30 = sbr.rel (0) target = $region25
    $region24: #{transformer_forward.1} parent=1 // pred_region
      _
    $region25: #{transformer_forward.1} parent=1 // pred_fallthru
      _
    // Predicated region
    $region26: #{transformer_forward.1} parent=1 // pred_check
      _
    $region27: #{transformer_forward.1} parent=1 // pred_check_branch
      %32 = sbr.rel (0) target = $region29
    $region28: #{transformer_forward.1} parent=1 // pred_region
      _
    $region29: #{transformer_forward.1} parent=1 // pred_fallthru
      _
    // Predicated region
    $region30: #{transformer_forward.1} parent=1 // pred_check
      _
    $region31: #{transformer_forward.1} parent=1 // pred_check_branch
      %34 = sbr.rel (0) target = $region33
    $region32: #{transformer_forward.1} parent=1 // pred_region
      _
    $region33: #{transformer_forward.1} parent=1 // pred_fallthru
      _
    // Predicated region
    $region34: #{transformer_forward.1} parent=1 // pred_check
      _
    $region35: #{transformer_forward.1} parent=1 // pred_check_branch
      %36 = sbr.rel (0) target = $region37
    $region36: #{transformer_forward.1} parent=1 // pred_region
      _
    $region37: #{transformer_forward.1} parent=1 // pred_fallthru
      _
    // Predicated region
    $region38: #{transformer_forward.1} parent=1 // pred_check
      _
    $region39: #{transformer_forward.1} parent=1 // pred_check_branch
      %38 = sbr.rel (0) target = $region41
    $region40: #{transformer_forward.1} parent=1 // pred_region
      _
    $region41: #{transformer_forward.1} parent=1 // pred_fallthru
      _
    // Predicated region
    $region42: #{transformer_forward.1} parent=1 // pred_check
      _
    $region43: #{transformer_forward.1} parent=1 // pred_check_branch
      %40 = sbr.rel (0) target = $region45
    $region44: #{transformer_forward.1} parent=1 // pred_region
      _
    $region45: #{transformer_forward.1} parent=1 // pred_fallthru
      _
    // Predicated region
    $region46: #{transformer_forward.1} parent=1 // pred_check
      _
    $region47: #{transformer_forward.1} parent=1 // pred_check_branch
      %42 = sbr.rel (0) target = $region49
    $region48: #{transformer_forward.1} parent=1 // pred_region
      _
    $region49: #{transformer_forward.1} parent=1 // pred_fallthru
      _
    // Predicated region
    $region50: #{transformer_forward.1} parent=1 // pred_check
      _
    $region51: #{transformer_forward.1} parent=1 // pred_check_branch
      %44 = sbr.rel (0) target = $region53
    $region52: #{transformer_forward.1} parent=1 // pred_region
      _
    $region53: #{transformer_forward.1} parent=1 // pred_fallthru
      _
    %v45 = vld [vmem:[%s2] sm:$0xff]
    %v46 = vld [vmem:[%s2 + $0x8] sm:$0xff]
    %v47 = vld [vmem:[%s3] sm:$0xff]
    %v48 = vld [vmem:[%s3 + $0x8] sm:$0xff]
    %v49 = vld [vmem:[%s4] sm:$0xff]
    %v50 = vld [vmem:[%s4 + $0x8] sm:$0xff]
    %v51 = vld [vmem:[%s0] sm:$0xff]
    %v52 = vld [vmem:[%s0 + $0x8] sm:$0xff]
    %v53 = vld [vmem:[%s5] sm:$0xff]
    %v54 = vld [vmem:[%s5 + $0x8] sm:$0xff]
    %v55 = vld [vmem:[%s5 + $0x10] sm:$0xff]
    %v56 = vld [vmem:[%s5 + $0x18] sm:$0xff]
    %v57 = vld [vmem:[%s6] sm:$0x1]
    %vm58 = vcmask 261120
    %v59 = vsel %vm58, %v51, 0.0
    %60 = vadd.xlane.f32.xlu0 %v59
    %v61 = vpop.xlane.xlu0 %60
    %v62 = vsel %vm58, %v52, 0.0
    %63 = vadd.xlane.f32.xlu0 %v62
    %v64 = vpop.xlane.xlu0 %63
    %v65 = vrcp.pop 32.0
    %v66 = vmul.f32 %v61, %v65
    %v67 = vmul.f32 %v64, %v65
    %v68 = vsub.f32 %v51, %v66
    %v69 = vsub.f32 %v52, %v67
    %v70 = vmul.f32 %v68, %v68
    %v71 = vmul.f32 %v69, %v69
    %v72 = vsel %vm58, %v70, 0.0
    %73 = vadd.xlane.f32.xlu0 %v72
    %v74 = vpop.xlane.xlu0 %73
    %v75 = vsel %vm58, %v71, 0.0
    %76 = vadd.xlane.f32.xlu0 %v75
    %v77 = vpop.xlane.xlu0 %76
    %v78 = vmul.f32 %v74, %v65
    %v79 = vmul.f32 %v77, %v65
    %v80 = vadd.f32 %v78, 1e-05
    %v81 = vadd.f32 %v79, 1e-05
    %v82 = vrsqrt.pop %v80
    %v83 = vrsqrt.pop %v81
    %v84 = vmul.f32 %v68, %v82
    %v85 = vmul.f32 %v69, %v83
    %v87 = vlaneseq
    %v88 = vshrl.u32 %v87, 7
    %v89 = vsub.s32 0, %v88
    %v90 = vrot.slane %v57, %v89
    %v93 = vsel %vm58, %v84, 0
    %v96 = vsel %vm58, %v85, 0
    %98 = vmatprep.subr.mxu0 0.0
    %99 = vmatpush1.msra.mxu0 %v53
    %100 = vmatprep.subr.mxu0 0.0
    %101 = vmatpush1.msra.mxu0 %v54
    %102 = vmatprep.subr.mxu0 0.0
    %103 = vmatpush1.msra.mxu0 %v55
    %104 = vmatprep.subr.mxu0 0.0
    %105 = vmatpush1.msra.mxu0 %v56
    %106 = vmatprep.subr.mxu0 0.0
    %107 = vmatpush1.msra.mxu0 0.0
    %108 = vmatprep.subr.mxu0 0.0
    %109 = vmatpush1.msra.mxu0 0.0
    %110 = vmatprep.subr.mxu0 0.0
    %111 = vmatpush1.msra.mxu0 0.0
    %112 = vmatprep.subr.mxu0 0.0
    %113 = vmatpush1.msra.mxu0 0.0
    %114 = vmatprep.subr.mxu0 0.0
    %115 = vmatpush1.msra.mxu0 0.0
    %116 = vmatprep.subr.mxu0 0.0
    %117 = vmatpush1.msra.mxu0 0.0
    %118 = vmatprep.subr.mxu0 0.0
    %119 = vmatpush1.msra.mxu0 0.0
    %120 = vmatprep.subr.mxu0 0.0
    %121 = vmatpush1.msra.mxu0 0.0
    %122 = vmatprep.subr.mxu0 0.0
    %123 = vmatpush1.msra.mxu0 0.0
    %124 = vmatprep.subr.mxu0 0.0
    %125 = vmatpush1.msra.mxu0 0.0
    %126 = vmatprep.subr.mxu0 0.0
    %127 = vmatpush1.msra.mxu0 0.0
    %128 = vmatprep.subr.mxu0 0.0
    %129 = vmatpush1.msra.mxu0 0.0
    %130 = vmatprep.subr.mxu0 0.0
    %131 = vmatpush1.msra.mxu0 0.0
    %132 = vmatprep.subr.mxu0 0.0
    %133 = vmatpush1.msra.mxu0 0.0
    %134 = vmatprep.subr.mxu0 0.0
    %135 = vmatpush1.msra.mxu0 0.0
    %136 = vmatprep.subr.mxu0 0.0
    %137 = vmatpush1.msra.mxu0 0.0
    %138 = vmatprep.subr.mxu0 0.0
    %139 = vmatpush1.msra.mxu0 0.0
    %140 = vmatprep.subr.mxu0 0.0
    %141 = vmatpush1.msra.mxu0 0.0
    %142 = vmatprep.subr.mxu0 0.0
    %143 = vmatpush1.msra.mxu0 0.0
    %144 = vmatprep.subr.mxu0 0.0
    %145 = vmatpush1.msra.mxu0 0.0
    %146 = vmatprep.subr.mxu0 0.0
    %147 = vmatpush1.msra.mxu0 0.0
    %148 = vmatprep.subr.mxu0 0.0
    %149 = vmatpush1.msra.mxu0 0.0
    %150 = vmatprep.subr.mxu0 0.0
    %151 = vmatpush1.msra.mxu0 0.0
    %152 = vmatprep.subr.mxu0 0.0
    %153 = vmatpush1.msra.mxu0 0.0
    %154 = vmatprep.subr.mxu0 0.0
    %155 = vmatpush1.msra.mxu0 0.0
    %156 = vmatprep.subr.mxu0 0.0
    %157 = vmatpush1.msra.mxu0 0.0
    %158 = vmatprep.subr.mxu0 0.0
    %159 = vmatpush1.msra.mxu0 0.0
    %160 = vmatprep.subr.mxu0 0.0
    %161 = vmatpush1.msra.mxu0 0.0
    %162 = vmatprep.mubr.f32.mxu0 0.0
    %163 = vmatmul.mubr.f32.gmra.mrb[0].mxu0 %v93
    %v164 = vpop.f32.mrb[0].mxu0
    %v165 = vadd.f32 %v90, %v164
    %v166 = vpop.f32.mrb[0].mxu0
    %167 = vmatprep.mubr.f32.mxu0 0.0
    %168 = vmatmul.mubr.f32.gmra.mrb[0].mxu0 %v96
    %v169 = vpop.f32.mrb[0].mxu0
    %v170 = vadd.f32 %v90, %v169
    %v171 = vpop.f32.mrb[0].mxu0
    %172 = vdwg.mxu0
    %177 = vrot.lane.b32.xlu0 %v53, 96
    %v178 = vpop.permute.xlu0 %177
    %179 = vrot.lane.b32.xlu0 %v54, 96
    %v180 = vpop.permute.xlu0 %179
    %181 = vrot.lane.b32.xlu0 %v55, 96
    %v182 = vpop.permute.xlu0 %181
    %183 = vrot.lane.b32.xlu0 %v56, 96
    %v184 = vpop.permute.xlu0 %183
    %189 = vrot.lane.b32.xlu0 %v90, 96
    %v190 = vpop.permute.xlu0 %189
    %192 = vmatprep.subr.mxu0 0.0
    %193 = vmatpush1.msra.mxu0 %v178
    %194 = vmatprep.subr.mxu0 0.0
    %195 = vmatpush1.msra.mxu0 %v180
    %196 = vmatprep.subr.mxu0 0.0
    %197 = vmatpush1.msra.mxu0 %v182
    %198 = vmatprep.subr.mxu0 0.0
    %199 = vmatpush1.msra.mxu0 %v184
    %200 = vmatprep.subr.mxu0 0.0
    %201 = vmatpush1.msra.mxu0 0.0
    %202 = vmatprep.subr.mxu0 0.0
    %203 = vmatpush1.msra.mxu0 0.0
    %204 = vmatprep.subr.mxu0 0.0
    %205 = vmatpush1.msra.mxu0 0.0
    %206 = vmatprep.subr.mxu0 0.0
    %207 = vmatpush1.msra.mxu0 0.0
    %208 = vmatprep.subr.mxu0 0.0
    %209 = vmatpush1.msra.mxu0 0.0
    %210 = vmatprep.subr.mxu0 0.0
    %211 = vmatpush1.msra.mxu0 0.0
    %212 = vmatprep.subr.mxu0 0.0
    %213 = vmatpush1.msra.mxu0 0.0
    %214 = vmatprep.subr.mxu0 0.0
    %215 = vmatpush1.msra.mxu0 0.0
    %216 = vmatprep.subr.mxu0 0.0
    %217 = vmatpush1.msra.mxu0 0.0
    %218 = vmatprep.subr.mxu0 0.0
    %219 = vmatpush1.msra.mxu0 0.0
    %220 = vmatprep.subr.mxu0 0.0
    %221 = vmatpush1.msra.mxu0 0.0
    %222 = vmatprep.subr.mxu0 0.0
    %223 = vmatpush1.msra.mxu0 0.0
    %224 = vmatprep.subr.mxu0 0.0
    %225 = vmatpush1.msra.mxu0 0.0
    %226 = vmatprep.subr.mxu0 0.0
    %227 = vmatpush1.msra.mxu0 0.0
    %228 = vmatprep.subr.mxu0 0.0
    %229 = vmatpush1.msra.mxu0 0.0
    %230 = vmatprep.subr.mxu0 0.0
    %231 = vmatpush1.msra.mxu0 0.0
    %232 = vmatprep.subr.mxu0 0.0
    %233 = vmatpush1.msra.mxu0 0.0
    %234 = vmatprep.subr.mxu0 0.0
    %235 = vmatpush1.msra.mxu0 0.0
    %236 = vmatprep.subr.mxu0 0.0
    %237 = vmatpush1.msra.mxu0 0.0
    %238 = vmatprep.subr.mxu0 0.0
    %239 = vmatpush1.msra.mxu0 0.0
    %240 = vmatprep.subr.mxu0 0.0
    %241 = vmatpush1.msra.mxu0 0.0
    %242 = vmatprep.subr.mxu0 0.0
    %243 = vmatpush1.msra.mxu0 0.0
    %244 = vmatprep.subr.mxu0 0.0
    %245 = vmatpush1.msra.mxu0 0.0
    %246 = vmatprep.subr.mxu0 0.0
    %247 = vmatpush1.msra.mxu0 0.0
    %248 = vmatprep.subr.mxu0 0.0
    %249 = vmatpush1.msra.mxu0 0.0
    %250 = vmatprep.subr.mxu0 0.0
    %251 = vmatpush1.msra.mxu0 0.0
    %252 = vmatprep.subr.mxu0 0.0
    %253 = vmatpush1.msra.mxu0 0.0
    %254 = vmatprep.subr.mxu0 0.0
    %255 = vmatpush1.msra.mxu0 0.0
    %256 = vmatprep.mubr.f32.mxu0 0.0
    %257 = vmatmul.mubr.f32.gmra.mrb[0].mxu0 %v93
    %v258 = vpop.f32.mrb[0].mxu0
    %v259 = vadd.f32 %v190, %v258
    %v260 = vpop.f32.mrb[0].mxu0
    %261 = vmatprep.mubr.f32.mxu0 0.0
    %262 = vmatmul.mubr.f32.gmra.mrb[0].mxu0 %v96
    %v263 = vpop.f32.mrb[0].mxu0
    %v264 = vadd.f32 %v190, %v263
    %v265 = vpop.f32.mrb[0].mxu0
    %266 = vdwg.mxu0
    %vm267 = vcmask 64512
    %v269 = vsel %vm267, %v165, 0
    %v272 = vsel %vm267, %v170, 0
    %v275 = vsel %vm267, %v259, 0
    %v278 = vsel %vm267, %v264, 0
    %280 = vmatprep.subr.mxu0 0.0
    %281 = vmatpush1.xpose.msra.mxu0 %v275
    %282 = vmatprep.subr.mxu0 0.0
    %283 = vmatpush1.xpose.msra.mxu0 %v278
    %284 = vmatprep.subr.mxu0 0.0
    %285 = vmatpush1.xpose.msra.mxu0 0.0
    %286 = vmatprep.subr.mxu0 0.0
    %287 = vmatpush1.xpose.msra.mxu0 0.0
    %288 = vmatprep.subr.mxu0 0.0
    %289 = vmatpush1.xpose.msra.mxu0 0.0
    %290 = vmatprep.subr.mxu0 0.0
    %291 = vmatpush1.xpose.msra.mxu0 0.0
    %292 = vmatprep.subr.mxu0 0.0
    %293 = vmatpush1.xpose.msra.mxu0 0.0
    %294 = vmatprep.subr.mxu0 0.0
    %295 = vmatpush1.xpose.msra.mxu0 0.0
    %296 = vmatprep.subr.mxu0 0.0
    %297 = vmatpush1.xpose.msra.mxu0 0.0
    %298 = vmatprep.subr.mxu0 0.0
    %299 = vmatpush1.xpose.msra.mxu0 0.0
    %300 = vmatprep.subr.mxu0 0.0
    %301 = vmatpush1.xpose.msra.mxu0 0.0
    %302 = vmatprep.subr.mxu0 0.0
    %303 = vmatpush1.xpose.msra.mxu0 0.0
    %304 = vmatprep.subr.mxu0 0.0
    %305 = vmatpush1.xpose.msra.mxu0 0.0
    %306 = vmatprep.subr.mxu0 0.0
    %307 = vmatpush1.xpose.msra.mxu0 0.0
    %308 = vmatprep.subr.mxu0 0.0
    %309 = vmatpush1.xpose.msra.mxu0 0.0
    %310 = vmatprep.subr.mxu0 0.0
    %311 = vmatpush1.xpose.msra.mxu0 0.0
    %312 = vmatprep.subr.mxu0 0.0
    %313 = vmatpush1.xpose.msra.mxu0 0.0
    %314 = vmatprep.subr.mxu0 0.0
    %315 = vmatpush1.xpose.msra.mxu0 0.0
    %316 = vmatprep.subr.mxu0 0.0
    %317 = vmatpush1.xpose.msra.mxu0 0.0
    %318 = vmatprep.subr.mxu0 0.0
    %319 = vmatpush1.xpose.msra.mxu0 0.0
    %320 = vmatprep.subr.mxu0 0.0
    %321 = vmatpush1.xpose.msra.mxu0 0.0
    %322 = vmatprep.subr.mxu0 0.0
    %323 = vmatpush1.xpose.msra.mxu0 0.0
    %324 = vmatprep.subr.mxu0 0.0
    %325 = vmatpush1.xpose.msra.mxu0 0.0
    %326 = vmatprep.subr.mxu0 0.0
    %327 = vmatpush1.xpose.msra.mxu0 0.0
    %328 = vmatprep.subr.mxu0 0.0
    %329 = vmatpush1.xpose.msra.mxu0 0.0
    %330 = vmatprep.subr.mxu0 0.0
    %331 = vmatpush1.xpose.msra.mxu0 0.0
    %332 = vmatprep.subr.mxu0 0.0
    %333 = vmatpush1.xpose.msra.mxu0 0.0
    %334 = vmatprep.subr.mxu0 0.0
    %335 = vmatpush1.xpose.msra.mxu0 0.0
    %336 = vmatprep.subr.mxu0 0.0
    %337 = vmatpush1.xpose.msra.mxu0 0.0
    %338 = vmatprep.subr.mxu0 0.0
    %339 = vmatpush1.xpose.msra.mxu0 0.0
    %340 = vmatprep.subr.mxu0 0.0
    %341 = vmatpush1.xpose.msra.mxu0 0.0
    %342 = vmatprep.subr.mxu0 0.0
    %343 = vmatpush1.xpose.msra.mxu0 0.0
    %344 = vmatprep.mubr.f32.mxu0 0.0
    %345 = vmatmul.mubr.f32.gmra.mrb[0].mxu0 %v269
    %v346 = vpop.f32.mrb[0].mxu0
    %v347 = vadd.f32 0.0, %v346
    %v348 = vpop.f32.mrb[0].mxu0
    %349 = vmatprep.mubr.f32.mxu0 0.0
    %350 = vmatmul.mubr.f32.gmra.mrb[0].mxu0 %v272
    %v351 = vpop.f32.mrb[0].mxu0
    %v352 = vadd.f32 0.0, %v351
    %v353 = vpop.f32.mrb[0].mxu0
    %354 = vdwg.mxu0
    %v355 = vmul.f32 %v347, 0.35355338
    %v356 = vmul.f32 %v352, 0.35355338
    %v357 = vadd.f32 %v355, %v45
    %v358 = vadd.f32 %v356, %v46
    %vm359 = vcmask 130048
    %v360 = vsel %vm359, %v357, -inf
    %361 = vmax.xlane.f32.xlu0 %v360
    %v362 = vpop.xlane.xlu0 %361
    %v363 = vsel %vm359, %v358, -inf
    %364 = vmax.xlane.f32.xlu0 %v363
    %v365 = vpop.xlane.xlu0 %364
    %v366 = vsub.f32 %v357, %v362
    %v367 = vsub.f32 %v358, %v365
    %v368 = vmul.f32 %v366, 1.442695
    %v369 = vpow.pop %v368
    %v370 = vmul.f32 %v367, 1.442695
    %v371 = vpow.pop %v370
    %v372 = vsel %vm359, %v369, 0.0
    %373 = vadd.xlane.f32.xlu0 %v372
    %v374 = vpop.xlane.xlu0 %373
    %v375 = vsel %vm359, %v371, 0.0
    %376 = vadd.xlane.f32.xlu0 %v375
    %v377 = vpop.xlane.xlu0 %376
    %v378 = vrcp.pop %v374
    %v379 = vrcp.pop %v377
    %v380 = vmul.f32 %v369, %v378
    %v381 = vmul.f32 %v371, %v379
    %382 = vrot.lane.b32.xlu0 %v259, 96
    %v383 = vpop.permute.xlu0 %382
    %384 = vrot.lane.b32.xlu0 %v264, 96
    %v385 = vpop.permute.xlu0 %384
    %v389 = vsel %vm359, %v380, 0
    %v392 = vsel %vm359, %v381, 0
    %394 = vmatprep.subr.mxu0 0.0
    %395 = vmatpush1.msra.mxu0 %v383
    %396 = vmatprep.subr.mxu0 0.0
    %397 = vmatpush1.msra.mxu0 %v385
    %398 = vmatprep.subr.mxu0 0.0
    %399 = vmatpush1.msra.mxu0 0.0
    %400 = vmatprep.subr.mxu0 0.0
    %401 = vmatpush1.msra.mxu0 0.0
    %402 = vmatprep.subr.mxu0 0.0
    %403 = vmatpush1.msra.mxu0 0.0
    %404 = vmatprep.subr.mxu0 0.0
    %405 = vmatpush1.msra.mxu0 0.0
    %406 = vmatprep.subr.mxu0 0.0
    %407 = vmatpush1.msra.mxu0 0.0
    %408 = vmatprep.subr.mxu0 0.0
    %409 = vmatpush1.msra.mxu0 0.0
    %410 = vmatprep.subr.mxu0 0.0
    %411 = vmatpush1.msra.mxu0 0.0
    %412 = vmatprep.subr.mxu0 0.0
    %413 = vmatpush1.msra.mxu0 0.0
    %414 = vmatprep.subr.mxu0 0.0
    %415 = vmatpush1.msra.mxu0 0.0
    %416 = vmatprep.subr.mxu0 0.0
    %417 = vmatpush1.msra.mxu0 0.0
    %418 = vmatprep.subr.mxu0 0.0
    %419 = vmatpush1.msra.mxu0 0.0
    %420 = vmatprep.subr.mxu0 0.0
    %421 = vmatpush1.msra.mxu0 0.0
    %422 = vmatprep.subr.mxu0 0.0
    %423 = vmatpush1.msra.mxu0 0.0
    %424 = vmatprep.subr.mxu0 0.0
    %425 = vmatpush1.msra.mxu0 0.0
    %426 = vmatprep.subr.mxu0 0.0
    %427 = vmatpush1.msra.mxu0 0.0
    %428 = vmatprep.subr.mxu0 0.0
    %429 = vmatpush1.msra.mxu0 0.0
    %430 = vmatprep.subr.mxu0 0.0
    %431 = vmatpush1.msra.mxu0 0.0
    %432 = vmatprep.subr.mxu0 0.0
    %433 = vmatpush1.msra.mxu0 0.0
    %434 = vmatprep.subr.mxu0 0.0
    %435 = vmatpush1.msra.mxu0 0.0
    %436 = vmatprep.subr.mxu0 0.0
    %437 = vmatpush1.msra.mxu0 0.0
    %438 = vmatprep.subr.mxu0 0.0
    %439 = vmatpush1.msra.mxu0 0.0
    %440 = vmatprep.subr.mxu0 0.0
    %441 = vmatpush1.msra.mxu0 0.0
    %442 = vmatprep.subr.mxu0 0.0
    %443 = vmatpush1.msra.mxu0 0.0
    %444 = vmatprep.subr.mxu0 0.0
    %445 = vmatpush1.msra.mxu0 0.0
    %446 = vmatprep.subr.mxu0 0.0
    %447 = vmatpush1.msra.mxu0 0.0
    %448 = vmatprep.subr.mxu0 0.0
    %449 = vmatpush1.msra.mxu0 0.0
    %450 = vmatprep.subr.mxu0 0.0
    %451 = vmatpush1.msra.mxu0 0.0
    %452 = vmatprep.subr.mxu0 0.0
    %453 = vmatpush1.msra.mxu0 0.0
    %454 = vmatprep.subr.mxu0 0.0
    %455 = vmatpush1.msra.mxu0 0.0
    %456 = vmatprep.subr.mxu0 0.0
    %457 = vmatpush1.msra.mxu0 0.0
    %458 = vmatprep.mubr.f32.mxu0 0.0
    %459 = vmatmul.mubr.f32.gmra.mrb[0].mxu0 %v389
    %v460 = vpop.f32.mrb[0].mxu0
    %v461 = vadd.f32 0.0, %v460
    %v462 = vpop.f32.mrb[0].mxu0
    %463 = vmatprep.mubr.f32.mxu0 0.0
    %464 = vmatmul.mubr.f32.gmra.mrb[0].mxu0 %v392
    %v465 = vpop.f32.mrb[0].mxu0
    %v466 = vadd.f32 0.0, %v465
    %v467 = vpop.f32.mrb[0].mxu0
    %468 = vdwg.mxu0
    %469 = vst.msk [vmem:[#allocation2] sm:$0xff] %vm267, %v461
    %470 = vst.msk [vmem:[#allocation2 + $0x8] sm:$0xff] %vm267, %v466
    %471 = vrot.lane.b32.xlu0 %v165, 120
    %v472 = vpop.permute.xlu0 %471
    %473 = vrot.lane.b32.xlu0 %v170, 120
    %v474 = vpop.permute.xlu0 %473
    %475 = vrot.lane.b32.xlu0 %v259, 120
    %v476 = vpop.permute.xlu0 %475
    %477 = vrot.lane.b32.xlu0 %v264, 120
    %v478 = vpop.permute.xlu0 %477
    %v479 = vsel %vm267, %v472, 0
    %v481 = vsel %vm267, %v474, 0
    %v483 = vsel %vm267, %v476, 0
    %v485 = vsel %vm267, %v478, 0
    %487 = vmatprep.subr.mxu0 0.0
    %488 = vmatpush1.xpose.msra.mxu0 %v483
    %489 = vmatprep.subr.mxu0 0.0
    %490 = vmatpush1.xpose.msra.mxu0 %v485
    %491 = vmatprep.subr.mxu0 0.0
    %492 = vmatpush1.xpose.msra.mxu0 0.0
    %493 = vmatprep.subr.mxu0 0.0
    %494 = vmatpush1.xpose.msra.mxu0 0.0
    %495 = vmatprep.subr.mxu0 0.0
    %496 = vmatpush1.xpose.msra.mxu0 0.0
    %497 = vmatprep.subr.mxu0 0.0
    %498 = vmatpush1.xpose.msra.mxu0 0.0
    %499 = vmatprep.subr.mxu0 0.0
    %500 = vmatpush1.xpose.msra.mxu0 0.0
    %501 = vmatprep.subr.mxu0 0.0
    %502 = vmatpush1.xpose.msra.mxu0 0.0
    %503 = vmatprep.subr.mxu0 0.0
    %504 = vmatpush1.xpose.msra.mxu0 0.0
    %505 = vmatprep.subr.mxu0 0.0
    %506 = vmatpush1.xpose.msra.mxu0 0.0
    %507 = vmatprep.subr.mxu0 0.0
    %508 = vmatpush1.xpose.msra.mxu0 0.0
    %509 = vmatprep.subr.mxu0 0.0
    %510 = vmatpush1.xpose.msra.mxu0 0.0
    %511 = vmatprep.subr.mxu0 0.0
    %512 = vmatpush1.xpose.msra.mxu0 0.0
    %513 = vmatprep.subr.mxu0 0.0
    %514 = vmatpush1.xpose.msra.mxu0 0.0
    %515 = vmatprep.subr.mxu0 0.0
    %516 = vmatpush1.xpose.msra.mxu0 0.0
    %517 = vmatprep.subr.mxu0 0.0
    %518 = vmatpush1.xpose.msra.mxu0 0.0
    %519 = vmatprep.subr.mxu0 0.0
    %520 = vmatpush1.xpose.msra.mxu0 0.0
    %521 = vmatprep.subr.mxu0 0.0
    %522 = vmatpush1.xpose.msra.mxu0 0.0
    %523 = vmatprep.subr.mxu0 0.0
    %524 = vmatpush1.xpose.msra.mxu0 0.0
    %525 = vmatprep.subr.mxu0 0.0
    %526 = vmatpush1.xpose.msra.mxu0 0.0
    %527 = vmatprep.subr.mxu0 0.0
    %528 = vmatpush1.xpose.msra.mxu0 0.0
    %529 = vmatprep.subr.mxu0 0.0
    %530 = vmatpush1.xpose.msra.mxu0 0.0
    %531 = vmatprep.subr.mxu0 0.0
    %532 = vmatpush1.xpose.msra.mxu0 0.0
    %533 = vmatprep.subr.mxu0 0.0
    %534 = vmatpush1.xpose.msra.mxu0 0.0
    %535 = vmatprep.subr.mxu0 0.0
    %536 = vmatpush1.xpose.msra.mxu0 0.0
    %537 = vmatprep.subr.mxu0 0.0
    %538 = vmatpush1.xpose.msra.mxu0 0.0
    %539 = vmatprep.subr.mxu0 0.0
    %540 = vmatpush1.xpose.msra.mxu0 0.0
    %541 = vmatprep.subr.mxu0 0.0
    %542 = vmatpush1.xpose.msra.mxu0 0.0
    %543 = vmatprep.subr.mxu0 0.0
    %544 = vmatpush1.xpose.msra.mxu0 0.0
    %545 = vmatprep.subr.mxu0 0.0
    %546 = vmatpush1.xpose.msra.mxu0 0.0
    %547 = vmatprep.subr.mxu0 0.0
    %548 = vmatpush1.xpose.msra.mxu0 0.0
    %549 = vmatprep.subr.mxu0 0.0
    %550 = vmatpush1.xpose.msra.mxu0 0.0
    %551 = vmatprep.mubr.f32.mxu0 0.0
    %552 = vmatmul.mubr.f32.gmra.mrb[0].mxu0 %v479
    %v553 = vpop.f32.mrb[0].mxu0
    %v554 = vadd.f32 0.0, %v553
    %v555 = vpop.f32.mrb[0].mxu0
    %556 = vmatprep.mubr.f32.mxu0 0.0
    %557 = vmatmul.mubr.f32.gmra.mrb[0].mxu0 %v481
    %v558 = vpop.f32.mrb[0].mxu0
    %v559 = vadd.f32 0.0, %v558
    %v560 = vpop.f32.mrb[0].mxu0
    %561 = vdwg.mxu0
    %v562 = vmul.f32 %v554, 0.35355338
    %v563 = vmul.f32 %v559, 0.35355338
    %v564 = vadd.f32 %v562, %v45
    %v565 = vadd.f32 %v563, %v46
    %v566 = vsel %vm359, %v564, -inf
    %567 = vmax.xlane.f32.xlu0 %v566
    %v568 = vpop.xlane.xlu0 %567
    %v569 = vsel %vm359, %v565, -inf
    %570 = vmax.xlane.f32.xlu0 %v569
    %v571 = vpop.xlane.xlu0 %570
    %v572 = vsub.f32 %v564, %v568
    %v573 = vsub.f32 %v565, %v571
    %v574 = vmul.f32 %v572, 1.442695
    %v575 = vpow.pop %v574
    %v576 = vmul.f32 %v573, 1.442695
    %v577 = vpow.pop %v576
    %v578 = vsel %vm359, %v575, 0.0
    %579 = vadd.xlane.f32.xlu0 %v578
    %v580 = vpop.xlane.xlu0 %579
    %v581 = vsel %vm359, %v577, 0.0
    %582 = vadd.xlane.f32.xlu0 %v581
    %v583 = vpop.xlane.xlu0 %582
    %v584 = vrcp.pop %v580
    %v585 = vrcp.pop %v583
    %v586 = vmul.f32 %v575, %v584
    %v587 = vmul.f32 %v577, %v585
    %588 = vrot.lane.b32.xlu0 %v259, 88
    %v589 = vpop.permute.xlu0 %588
    %590 = vrot.lane.b32.xlu0 %v264, 88
    %v591 = vpop.permute.xlu0 %590
    %v595 = vsel %vm359, %v586, 0
    %v598 = vsel %vm359, %v587, 0
    %600 = vmatprep.subr.mxu0 0.0
    %601 = vmatpush1.msra.mxu0 %v589
    %602 = vmatprep.subr.mxu0 0.0
    %603 = vmatpush1.msra.mxu0 %v591
    %604 = vmatprep.subr.mxu0 0.0
    %605 = vmatpush1.msra.mxu0 0.0
    %606 = vmatprep.subr.mxu0 0.0
    %607 = vmatpush1.msra.mxu0 0.0
    %608 = vmatprep.subr.mxu0 0.0
    %609 = vmatpush1.msra.mxu0 0.0
    %610 = vmatprep.subr.mxu0 0.0
    %611 = vmatpush1.msra.mxu0 0.0
    %612 = vmatprep.subr.mxu0 0.0
    %613 = vmatpush1.msra.mxu0 0.0
    %614 = vmatprep.subr.mxu0 0.0
    %615 = vmatpush1.msra.mxu0 0.0
    %616 = vmatprep.subr.mxu0 0.0
    %617 = vmatpush1.msra.mxu0 0.0
    %618 = vmatprep.subr.mxu0 0.0
    %619 = vmatpush1.msra.mxu0 0.0
    %620 = vmatprep.subr.mxu0 0.0
    %621 = vmatpush1.msra.mxu0 0.0
    %622 = vmatprep.subr.mxu0 0.0
    %623 = vmatpush1.msra.mxu0 0.0
    %624 = vmatprep.subr.mxu0 0.0
    %625 = vmatpush1.msra.mxu0 0.0
    %626 = vmatprep.subr.mxu0 0.0
    %627 = vmatpush1.msra.mxu0 0.0
    %628 = vmatprep.subr.mxu0 0.0
    %629 = vmatpush1.msra.mxu0 0.0
    %630 = vmatprep.subr.mxu0 0.0
    %631 = vmatpush1.msra.mxu0 0.0
    %632 = vmatprep.subr.mxu0 0.0
    %633 = vmatpush1.msra.mxu0 0.0
    %634 = vmatprep.subr.mxu0 0.0
    %635 = vmatpush1.msra.mxu0 0.0
    %636 = vmatprep.subr.mxu0 0.0
    %637 = vmatpush1.msra.mxu0 0.0
    %638 = vmatprep.subr.mxu0 0.0
    %639 = vmatpush1.msra.mxu0 0.0
    %640 = vmatprep.subr.mxu0 0.0
    %641 = vmatpush1.msra.mxu0 0.0
    %642 = vmatprep.subr.mxu0 0.0
    %643 = vmatpush1.msra.mxu0 0.0
    %644 = vmatprep.subr.mxu0 0.0
    %645 = vmatpush1.msra.mxu0 0.0
    %646 = vmatprep.subr.mxu0 0.0
    %647 = vmatpush1.msra.mxu0 0.0
    %648 = vmatprep.subr.mxu0 0.0
    %649 = vmatpush1.msra.mxu0 0.0
    %650 = vmatprep.subr.mxu0 0.0
    %651 = vmatpush1.msra.mxu0 0.0
    %652 = vmatprep.subr.mxu0 0.0
    %653 = vmatpush1.msra.mxu0 0.0
    %654 = vmatprep.subr.mxu0 0.0
    %655 = vmatpush1.msra.mxu0 0.0
    %656 = vmatprep.subr.mxu0 0.0
    %657 = vmatpush1.msra.mxu0 0.0
    %658 = vmatprep.subr.mxu0 0.0
    %659 = vmatpush1.msra.mxu0 0.0
    %660 = vmatprep.subr.mxu0 0.0
    %661 = vmatpush1.msra.mxu0 0.0
    %662 = vmatprep.subr.mxu0 0.0
    %663 = vmatpush1.msra.mxu0 0.0
    %664 = vmatprep.mubr.f32.mxu0 0.0
    %665 = vmatmul.mubr.f32.gmra.mrb[0].mxu0 %v595
    %v666 = vpop.f32.mrb[0].mxu0
    %v667 = vadd.f32 0.0, %v666
    %v668 = vpop.f32.mrb[0].mxu0
    %669 = vmatprep.mubr.f32.mxu0 0.0
    %670 = vmatmul.mubr.f32.gmra.mrb[0].mxu0 %v598
    %v671 = vpop.f32.mrb[0].mxu0
    %v672 = vadd.f32 0.0, %v671
    %v673 = vpop.f32.mrb[0].mxu0
    %674 = vdwg.mxu0
    %677 = vrot.lane.b32.xlu0 %v667, 8
    %v678 = vpop.permute.xlu0 %677
    %679 = vrot.lane.b32.xlu0 %v672, 8
    %v680 = vpop.permute.xlu0 %679
    %vm683 = vcmask 130112
    %684 = vst.msk [vmem:[#allocation2] sm:$0xff] %vm683, %v678
    %685 = vst.msk [vmem:[#allocation2 + $0x8] sm:$0xff] %vm683, %v680
    %686 = vrot.lane.b32.xlu0 %v165, 112
    %v687 = vpop.permute.xlu0 %686
    %688 = vrot.lane.b32.xlu0 %v170, 112
    %v689 = vpop.permute.xlu0 %688
    %690 = vrot.lane.b32.xlu0 %v259, 112
    %v691 = vpop.permute.xlu0 %690
    %692 = vrot.lane.b32.xlu0 %v264, 112
    %v693 = vpop.permute.xlu0 %692
    %v694 = vsel %vm267, %v687, 0
    %v696 = vsel %vm267, %v689, 0
    %v698 = vsel %vm267, %v691, 0
    %v700 = vsel %vm267, %v693, 0
    %702 = vmatprep.subr.mxu0 0.0
    %703 = vmatpush1.xpose.msra.mxu0 %v698
    %704 = vmatprep.subr.mxu0 0.0
    %705 = vmatpush1.xpose.msra.mxu0 %v700
    %706 = vmatprep.subr.mxu0 0.0
    %707 = vmatpush1.xpose.msra.mxu0 0.0
    %708 = vmatprep.subr.mxu0 0.0
    %709 = vmatpush1.xpose.msra.mxu0 0.0
    %710 = vmatprep.subr.mxu0 0.0
    %711 = vmatpush1.xpose.msra.mxu0 0.0
    %712 = vmatprep.subr.mxu0 0.0
    %713 = vmatpush1.xpose.msra.mxu0 0.0
    %714 = vmatprep.subr.mxu0 0.0
    %715 = vmatpush1.xpose.msra.mxu0 0.0
    %716 = vmatprep.subr.mxu0 0.0
    %717 = vmatpush1.xpose.msra.mxu0 0.0
    %718 = vmatprep.subr.mxu0 0.0
    %719 = vmatpush1.xpose.msra.mxu0 0.0
    %720 = vmatprep.subr.mxu0 0.0
    %721 = vmatpush1.xpose.msra.mxu0 0.0
    %722 = vmatprep.subr.mxu0 0.0
    %723 = vmatpush1.xpose.msra.mxu0 0.0
    %724 = vmatprep.subr.mxu0 0.0
    %725 = vmatpush1.xpose.msra.mxu0 0.0
    %726 = vmatprep.subr.mxu0 0.0
    %727 = vmatpush1.xpose.msra.mxu0 0.0
    %728 = vmatprep.subr.mxu0 0.0
    %729 = vmatpush1.xpose.msra.mxu0 0.0
    %730 = vmatprep.subr.mxu0 0.0
    %731 = vmatpush1.xpose.msra.mxu0 0.0
    %732 = vmatprep.subr.mxu0 0.0
    %733 = vmatpush1.xpose.msra.mxu0 0.0
    %734 = vmatprep.subr.mxu0 0.0
    %735 = vmatpush1.xpose.msra.mxu0 0.0
    %736 = vmatprep.subr.mxu0 0.0
    %737 = vmatpush1.xpose.msra.mxu0 0.0
    %738 = vmatprep.subr.mxu0 0.0
    %739 = vmatpush1.xpose.msra.mxu0 0.0
    %740 = vmatprep.subr.mxu0 0.0
    %741 = vmatpush1.xpose.msra.mxu0 0.0
    %742 = vmatprep.subr.mxu0 0.0
    %743 = vmatpush1.xpose.msra.mxu0 0.0
    %744 = vmatprep.subr.mxu0 0.0
    %745 = vmatpush1.xpose.msra.mxu0 0.0
    %746 = vmatprep.subr.mxu0 0.0
    %747 = vmatpush1.xpose.msra.mxu0 0.0
    %748 = vmatprep.subr.mxu0 0.0
    %749 = vmatpush1.xpose.msra.mxu0 0.0
    %750 = vmatprep.subr.mxu0 0.0
    %751 = vmatpush1.xpose.msra.mxu0 0.0
    %752 = vmatprep.subr.mxu0 0.0
    %753 = vmatpush1.xpose.msra.mxu0 0.0
    %754 = vmatprep.subr.mxu0 0.0
    %755 = vmatpush1.xpose.msra.mxu0 0.0
    %756 = vmatprep.subr.mxu0 0.0
    %757 = vmatpush1.xpose.msra.mxu0 0.0
    %758 = vmatprep.subr.mxu0 0.0
    %759 = vmatpush1.xpose.msra.mxu0 0.0
    %760 = vmatprep.subr.mxu0 0.0
    %761 = vmatpush1.xpose.msra.mxu0 0.0
    %762 = vmatprep.subr.mxu0 0.0
    %763 = vmatpush1.xpose.msra.mxu0 0.0
    %764 = vmatprep.subr.mxu0 0.0
    %765 = vmatpush1.xpose.msra.mxu0 0.0
    %766 = vmatprep.mubr.f32.mxu0 0.0
    %767 = vmatmul.mubr.f32.gmra.mrb[0].mxu0 %v694
    %v768 = vpop.f32.mrb[0].mxu0
    %v769 = vadd.f32 0.0, %v768
    %v770 = vpop.f32.mrb[0].mxu0
    %771 = vmatprep.mubr.f32.mxu0 0.0
    %772 = vmatmul.mubr.f32.gmra.mrb[0].mxu0 %v696
    %v773 = vpop.f32.mrb[0].mxu0
    %v774 = vadd.f32 0.0, %v773
    %v775 = vpop.f32.mrb[0].mxu0
    %776 = vdwg.mxu0
    %v777 = vmul.f32 %v769, 0.35355338
    %v778 = vmul.f32 %v774, 0.35355338
    %v779 = vadd.f32 %v777, %v45
    %v780 = vadd.f32 %v778, %v46
    %v781 = vsel %vm359, %v779, -inf
    %782 = vmax.xlane.f32.xlu0 %v781
    %v783 = vpop.xlane.xlu0 %782
    %v784 = vsel %vm359, %v780, -inf
    %785 = vmax.xlane.f32.xlu0 %v784
    %v786 = vpop.xlane.xlu0 %785
    %v787 = vsub.f32 %v779, %v783
    %v788 = vsub.f32 %v780, %v786
    %v789 = vmul.f32 %v787, 1.442695
    %v790 = vpow.pop %v789
    %v791 = vmul.f32 %v788, 1.442695
    %v792 = vpow.pop %v791
    %v793 = vsel %vm359, %v790, 0.0
    %794 = vadd.xlane.f32.xlu0 %v793
    %v795 = vpop.xlane.xlu0 %794
    %v796 = vsel %vm359, %v792, 0.0
    %797 = vadd.xlane.f32.xlu0 %v796
    %v798 = vpop.xlane.xlu0 %797
    %v799 = vrcp.pop %v795
    %v800 = vrcp.pop %v798
    %v801 = vmul.f32 %v790, %v799
    %v802 = vmul.f32 %v792, %v800
    %803 = vrot.lane.b32.xlu0 %v259, 80
    %v804 = vpop.permute.xlu0 %803
    %805 = vrot.lane.b32.xlu0 %v264, 80
    %v806 = vpop.permute.xlu0 %805
    %v810 = vsel %vm359, %v801, 0
    %v813 = vsel %vm359, %v802, 0
    %815 = vmatprep.subr.mxu0 0.0
    %816 = vmatpush1.msra.mxu0 %v804
    %817 = vmatprep.subr.mxu0 0.0
    %818 = vmatpush1.msra.mxu0 %v806
    %819 = vmatprep.subr.mxu0 0.0
    %820 = vmatpush1.msra.mxu0 0.0
    %821 = vmatprep.subr.mxu0 0.0
    %822 = vmatpush1.msra.mxu0 0.0
    %823 = vmatprep.subr.mxu0 0.0
    %824 = vmatpush1.msra.mxu0 0.0
    %825 = vmatprep.subr.mxu0 0.0
    %826 = vmatpush1.msra.mxu0 0.0
    %827 = vmatprep.subr.mxu0 0.0
    %828 = vmatpush1.msra.mxu0 0.0
    %829 = vmatprep.subr.mxu0 0.0
    %830 = vmatpush1.msra.mxu0 0.0
    %831 = vmatprep.subr.mxu0 0.0
    %832 = vmatpush1.msra.mxu0 0.0
    %833 = vmatprep.subr.mxu0 0.0
    %834 = vmatpush1.msra.mxu0 0.0
    %835 = vmatprep.subr.mxu0 0.0
    %836 = vmatpush1.msra.mxu0 0.0
    %837 = vmatprep.subr.mxu0 0.0
    %838 = vmatpush1.msra.mxu0 0.0
    %839 = vmatprep.subr.mxu0 0.0
    %840 = vmatpush1.msra.mxu0 0.0
    %841 = vmatprep.subr.mxu0 0.0
    %842 = vmatpush1.msra.mxu0 0.0
    %843 = vmatprep.subr.mxu0 0.0
    %844 = vmatpush1.msra.mxu0 0.0
    %845 = vmatprep.subr.mxu0 0.0
    %846 = vmatpush1.msra.mxu0 0.0
    %847 = vmatprep.subr.mxu0 0.0
    %848 = vmatpush1.msra.mxu0 0.0
    %849 = vmatprep.subr.mxu0 0.0
    %850 = vmatpush1.msra.mxu0 0.0
    %851 = vmatprep.subr.mxu0 0.0
    %852 = vmatpush1.msra.mxu0 0.0
    %853 = vmatprep.subr.mxu0 0.0
    %854 = vmatpush1.msra.mxu0 0.0
    %855 = vmatprep.subr.mxu0 0.0
    %856 = vmatpush1.msra.mxu0 0.0
    %857 = vmatprep.subr.mxu0 0.0
    %858 = vmatpush1.msra.mxu0 0.0
    %859 = vmatprep.subr.mxu0 0.0
    %860 = vmatpush1.msra.mxu0 0.0
    %861 = vmatprep.subr.mxu0 0.0
    %862 = vmatpush1.msra.mxu0 0.0
    %863 = vmatprep.subr.mxu0 0.0
    %864 = vmatpush1.msra.mxu0 0.0
    %865 = vmatprep.subr.mxu0 0.0
    %866 = vmatpush1.msra.mxu0 0.0
    %867 = vmatprep.subr.mxu0 0.0
    %868 = vmatpush1.msra.mxu0 0.0
    %869 = vmatprep.subr.mxu0 0.0
    %870 = vmatpush1.msra.mxu0 0.0
    %871 = vmatprep.subr.mxu0 0.0
    %872 = vmatpush1.msra.mxu0 0.0
    %873 = vmatprep.subr.mxu0 0.0
    %874 = vmatpush1.msra.mxu0 0.0
    %875 = vmatprep.subr.mxu0 0.0
    %876 = vmatpush1.msra.mxu0 0.0
    %877 = vmatprep.subr.mxu0 0.0
    %878 = vmatpush1.msra.mxu0 0.0
    %879 = vmatprep.mubr.f32.mxu0 0.0
    %880 = vmatmul.mubr.f32.gmra.mrb[0].mxu0 %v810
    %v881 = vpop.f32.mrb[0].mxu0
    %v882 = vadd.f32 0.0, %v881
    %v883 = vpop.f32.mrb[0].mxu0
    %884 = vmatprep.mubr.f32.mxu0 0.0
    %885 = vmatmul.mubr.f32.gmra.mrb[0].mxu0 %v813
    %v886 = vpop.f32.mrb[0].mxu0
    %v887 = vadd.f32 0.0, %v886
    %v888 = vpop.f32.mrb[0].mxu0
    %889 = vdwg.mxu0
    %892 = vrot.lane.b32.xlu0 %v882, 16
    %v893 = vpop.permute.xlu0 %892
    %894 = vrot.lane.b32.xlu0 %v887, 16
    %v895 = vpop.permute.xlu0 %894
    %vm898 = vcmask 195712
    %899 = vst.msk [vmem:[#allocation2] sm:$0xff] %vm898, %v893
    %900 = vst.msk [vmem:[#allocation2 + $0x8] sm:$0xff] %vm898, %v895
    %901 = vrot.lane.b32.xlu0 %v165, 104
    %v902 = vpop.permute.xlu0 %901
    %903 = vrot.lane.b32.xlu0 %v170, 104
    %v904 = vpop.permute.xlu0 %903
    %905 = vrot.lane.b32.xlu0 %v259, 104
    %v906 = vpop.permute.xlu0 %905
    %907 = vrot.lane.b32.xlu0 %v264, 104
    %v908 = vpop.permute.xlu0 %907
    %v909 = vsel %vm267, %v902, 0
    %v911 = vsel %vm267, %v904, 0
    %v913 = vsel %vm267, %v906, 0
    %v915 = vsel %vm267, %v908, 0
    %917 = vmatprep.subr.mxu0 0.0
    %918 = vmatpush1.xpose.msra.mxu0 %v913
    %919 = vmatprep.subr.mxu0 0.0
    %920 = vmatpush1.xpose.msra.mxu0 %v915
    %921 = vmatprep.subr.mxu0 0.0
    %922 = vmatpush1.xpose.msra.mxu0 0.0
    %923 = vmatprep.subr.mxu0 0.0
    %924 = vmatpush1.xpose.msra.mxu0 0.0
    %925 = vmatprep.subr.mxu0 0.0
    %926 = vmatpush1.xpose.msra.mxu0 0.0
    %927 = vmatprep.subr.mxu0 0.0
    %928 = vmatpush1.xpose.msra.mxu0 0.0
    %929 = vmatprep.subr.mxu0 0.0
    %930 = vmatpush1.xpose.msra.mxu0 0.0
    %931 = vmatprep.subr.mxu0 0.0
    %932 = vmatpush1.xpose.msra.mxu0 0.0
    %933 = vmatprep.subr.mxu0 0.0
    %934 = vmatpush1.xpose.msra.mxu0 0.0
    %935 = vmatprep.subr.mxu0 0.0
    %936 = vmatpush1.xpose.msra.mxu0 0.0
    %937 = vmatprep.subr.mxu0 0.0
    %938 = vmatpush1.xpose.msra.mxu0 0.0
    %939 = vmatprep.subr.mxu0 0.0
    %940 = vmatpush1.xpose.msra.mxu0 0.0
    %941 = vmatprep.subr.mxu0 0.0
    %942 = vmatpush1.xpose.msra.mxu0 0.0
    %943 = vmatprep.subr.mxu0 0.0
    %944 = vmatpush1.xpose.msra.mxu0 0.0
    %945 = vmatprep.subr.mxu0 0.0
    %946 = vmatpush1.xpose.msra.mxu0 0.0
    %947 = vmatprep.subr.mxu0 0.0
    %948 = vmatpush1.xpose.msra.mxu0 0.0
    %949 = vmatprep.subr.mxu0 0.0
    %950 = vmatpush1.xpose.msra.mxu0 0.0
    %951 = vmatprep.subr.mxu0 0.0
    %952 = vmatpush1.xpose.msra.mxu0 0.0
    %953 = vmatprep.subr.mxu0 0.0
    %954 = vmatpush1.xpose.msra.mxu0 0.0
    %955 = vmatprep.subr.mxu0 0.0
    %956 = vmatpush1.xpose.msra.mxu0 0.0
    %957 = vmatprep.subr.mxu0 0.0
    %958 = vmatpush1.xpose.msra.mxu0 0.0
    %959 = vmatprep.subr.mxu0 0.0
    %960 = vmatpush1.xpose.msra.mxu0 0.0
    %961 = vmatprep.subr.mxu0 0.0
    %962 = vmatpush1.xpose.msra.mxu0 0.0
    %963 = vmatprep.subr.mxu0 0.0
    %964 = vmatpush1.xpose.msra.mxu0 0.0
    %965 = vmatprep.subr.mxu0 0.0
    %966 = vmatpush1.xpose.msra.mxu0 0.0
    %967 = vmatprep.subr.mxu0 0.0
    %968 = vmatpush1.xpose.msra.mxu0 0.0
    %969 = vmatprep.subr.mxu0 0.0
    %970 = vmatpush1.xpose.msra.mxu0 0.0
    %971 = vmatprep.subr.mxu0 0.0
    %972 = vmatpush1.xpose.msra.mxu0 0.0
    %973 = vmatprep.subr.mxu0 0.0
    %974 = vmatpush1.xpose.msra.mxu0 0.0
    %975 = vmatprep.subr.mxu0 0.0
    %976 = vmatpush1.xpose.msra.mxu0 0.0
    %977 = vmatprep.subr.mxu0 0.0
    %978 = vmatpush1.xpose.msra.mxu0 0.0
    %979 = vmatprep.subr.mxu0 0.0
    %980 = vmatpush1.xpose.msra.mxu0 0.0
    %981 = vmatprep.mubr.f32.mxu0 0.0
    %982 = vmatmul.mubr.f32.gmra.mrb[0].mxu0 %v909
    %v983 = vpop.f32.mrb[0].mxu0
    %v984 = vadd.f32 0.0, %v983
    %v985 = vpop.f32.mrb[0].mxu0
    %986 = vmatprep.mubr.f32.mxu0 0.0
    %987 = vmatmul.mubr.f32.gmra.mrb[0].mxu0 %v911
    %v988 = vpop.f32.mrb[0].mxu0
    %v989 = vadd.f32 0.0, %v988
    %v990 = vpop.f32.mrb[0].mxu0
    %991 = vdwg.mxu0
    %v992 = vmul.f32 %v984, 0.35355338
    %v993 = vmul.f32 %v989, 0.35355338
    %v994 = vadd.f32 %v992, %v45
    %v995 = vadd.f32 %v993, %v46
    %v996 = vsel %vm359, %v994, -inf
    %997 = vmax.xlane.f32.xlu0 %v996
    %v998 = vpop.xlane.xlu0 %997
    %v999 = vsel %vm359, %v995, -inf
    %1000 = vmax.xlane.f32.xlu0 %v999
    %v1001 = vpop.xlane.xlu0 %1000
    %v1002 = vsub.f32 %v994, %v998
    %v1003 = vsub.f32 %v995, %v1001
    %v1004 = vmul.f32 %v1002, 1.442695
    %v1005 = vpow.pop %v1004
    %v1006 = vmul.f32 %v1003, 1.442695
    %v1007 = vpow.pop %v1006
    %v1008 = vsel %vm359, %v1005, 0.0
    %1009 = vadd.xlane.f32.xlu0 %v1008
    %v1010 = vpop.xlane.xlu0 %1009
    %v1011 = vsel %vm359, %v1007, 0.0
    %1012 = vadd.xlane.f32.xlu0 %v1011
    %v1013 = vpop.xlane.xlu0 %1012
    %v1014 = vrcp.pop %v1010
    %v1015 = vrcp.pop %v1013
    %v1016 = vmul.f32 %v1005, %v1014
    %v1017 = vmul.f32 %v1007, %v1015
    %1018 = vrot.lane.b32.xlu0 %v259, 72
    %v1019 = vpop.permute.xlu0 %1018
    %1020 = vrot.lane.b32.xlu0 %v264, 72
    %v1021 = vpop.permute.xlu0 %1020
    %v1025 = vsel %vm359, %v1016, 0
    %v1028 = vsel %vm359, %v1017, 0
    %1030 = vmatprep.subr.mxu0 0.0
    %1031 = vmatpush1.msra.mxu0 %v1019
    %1032 = vmatprep.subr.mxu0 0.0
    %1033 = vmatpush1.msra.mxu0 %v1021
    %1034 = vmatprep.subr.mxu0 0.0
    %1035 = vmatpush1.msra.mxu0 0.0
    %1036 = vmatprep.subr.mxu0 0.0
    %1037 = vmatpush1.msra.mxu0 0.0
    %1038 = vmatprep.subr.mxu0 0.0
    %1039 = vmatpush1.msra.mxu0 0.0
    %1040 = vmatprep.subr.mxu0 0.0
    %1041 = vmatpush1.msra.mxu0 0.0
    %1042 = vmatprep.subr.mxu0 0.0
    %1043 = vmatpush1.msra.mxu0 0.0
    %1044 = vmatprep.subr.mxu0 0.0
    %1045 = vmatpush1.msra.mxu0 0.0
    %1046 = vmatprep.subr.mxu0 0.0
    %1047 = vmatpush1.msra.mxu0 0.0
    %1048 = vmatprep.subr.mxu0 0.0
    %1049 = vmatpush1.msra.mxu0 0.0
    %1050 = vmatprep.subr.mxu0 0.0
    %1051 = vmatpush1.msra.mxu0 0.0
    %1052 = vmatprep.subr.mxu0 0.0
    %1053 = vmatpush1.msra.mxu0 0.0
    %1054 = vmatprep.subr.mxu0 0.0
    %1055 = vmatpush1.msra.mxu0 0.0
    %1056 = vmatprep.subr.mxu0 0.0
    %1057 = vmatpush1.msra.mxu0 0.0
    %1058 = vmatprep.subr.mxu0 0.0
    %1059 = vmatpush1.msra.mxu0 0.0
    %1060 = vmatprep.subr.mxu0 0.0
    %1061 = vmatpush1.msra.mxu0 0.0
    %1062 = vmatprep.subr.mxu0 0.0
    %1063 = vmatpush1.msra.mxu0 0.0
    %1064 = vmatprep.subr.mxu0 0.0
    %1065 = vmatpush1.msra.mxu0 0.0
    %1066 = vmatprep.subr.mxu0 0.0
    %1067 = vmatpush1.msra.mxu0 0.0
    %1068 = vmatprep.subr.mxu0 0.0
    %1069 = vmatpush1.msra.mxu0 0.0
    %1070 = vmatprep.subr.mxu0 0.0
    %1071 = vmatpush1.msra.mxu0 0.0
    %1072 = vmatprep.subr.mxu0 0.0
    %1073 = vmatpush1.msra.mxu0 0.0
    %1074 = vmatprep.subr.mxu0 0.0
    %1075 = vmatpush1.msra.mxu0 0.0
    %1076 = vmatprep.subr.mxu0 0.0
    %1077 = vmatpush1.msra.mxu0 0.0
    %1078 = vmatprep.subr.mxu0 0.0
    %1079 = vmatpush1.msra.mxu0 0.0
    %1080 = vmatprep.subr.mxu0 0.0
    %1081 = vmatpush1.msra.mxu0 0.0
    %1082 = vmatprep.subr.mxu0 0.0
    %1083 = vmatpush1.msra.mxu0 0.0
    %1084 = vmatprep.subr.mxu0 0.0
    %1085 = vmatpush1.msra.mxu0 0.0
    %1086 = vmatprep.subr.mxu0 0.0
    %1087 = vmatpush1.msra.mxu0 0.0
    %1088 = vmatprep.subr.mxu0 0.0
    %1089 = vmatpush1.msra.mxu0 0.0
    %1090 = vmatprep.subr.mxu0 0.0
    %1091 = vmatpush1.msra.mxu0 0.0
    %1092 = vmatprep.subr.mxu0 0.0
    %1093 = vmatpush1.msra.mxu0 0.0
    %1094 = vmatprep.mubr.f32.mxu0 0.0
    %1095 = vmatmul.mubr.f32.gmra.mrb[0].mxu0 %v1025
    %v1096 = vpop.f32.mrb[0].mxu0
    %v1097 = vadd.f32 0.0, %v1096
    %v1098 = vpop.f32.mrb[0].mxu0
    %1099 = vmatprep.mubr.f32.mxu0 0.0
    %1100 = vmatmul.mubr.f32.gmra.mrb[0].mxu0 %v1028
    %v1101 = vpop.f32.mrb[0].mxu0
    %v1102 = vadd.f32 0.0, %v1101
    %v1103 = vpop.f32.mrb[0].mxu0
    %1104 = vdwg.mxu0
    %1107 = vrot.lane.b32.xlu0 %v1097, 24
    %v1108 = vpop.permute.xlu0 %1107
    %1109 = vrot.lane.b32.xlu0 %v1102, 24
    %v1110 = vpop.permute.xlu0 %1109
    %vm1113 = vcmask 261312
    %1114 = vst.msk [vmem:[#allocation2] sm:$0xff] %vm1113, %v1108
    %1115 = vst.msk [vmem:[#allocation2 + $0x8] sm:$0xff] %vm1113, %v1110
    %v1116 = vld [vmem:[#allocation2] sm:$0xff]
    %v1117 = vld [vmem:[#allocation2 + $0x8] sm:$0xff]
    %1118 = vrot.lane.b32.xlu0 %v53, 32
    %v1119 = vpop.permute.xlu0 %1118
    %1120 = vrot.lane.b32.xlu0 %v54, 32
    %v1121 = vpop.permute.xlu0 %1120
    %1122 = vrot.lane.b32.xlu0 %v55, 32
    %v1123 = vpop.permute.xlu0 %1122
    %1124 = vrot.lane.b32.xlu0 %v56, 32
    %v1125 = vpop.permute.xlu0 %1124
    %1130 = vrot.lane.b32.xlu0 %v90, 32
    %v1131 = vpop.permute.xlu0 %1130
    %v1134 = vsel %vm58, %v1116, 0
    %v1137 = vsel %vm58, %v1117, 0
    %1139 = vmatprep.subr.mxu0 0.0
    %1140 = vmatpush1.msra.mxu0 %v1119
    %1141 = vmatprep.subr.mxu0 0.0
    %1142 = vmatpush1.msra.mxu0 %v1121
    %1143 = vmatprep.subr.mxu0 0.0
    %1144 = vmatpush1.msra.mxu0 %v1123
    %1145 = vmatprep.subr.mxu0 0.0
    %1146 = vmatpush1.msra.mxu0 %v1125
    %1147 = vmatprep.subr.mxu0 0.0
    %1148 = vmatpush1.msra.mxu0 0.0
    %1149 = vmatprep.subr.mxu0 0.0
    %1150 = vmatpush1.msra.mxu0 0.0
    %1151 = vmatprep.subr.mxu0 0.0
    %1152 = vmatpush1.msra.mxu0 0.0
    %1153 = vmatprep.subr.mxu0 0.0
    %1154 = vmatpush1.msra.mxu0 0.0
    %1155 = vmatprep.subr.mxu0 0.0
    %1156 = vmatpush1.msra.mxu0 0.0
    %1157 = vmatprep.subr.mxu0 0.0
    %1158 = vmatpush1.msra.mxu0 0.0
    %1159 = vmatprep.subr.mxu0 0.0
    %1160 = vmatpush1.msra.mxu0 0.0
    %1161 = vmatprep.subr.mxu0 0.0
    %1162 = vmatpush1.msra.mxu0 0.0
    %1163 = vmatprep.subr.mxu0 0.0
    %1164 = vmatpush1.msra.mxu0 0.0
    %1165 = vmatprep.subr.mxu0 0.0
    %1166 = vmatpush1.msra.mxu0 0.0
    %1167 = vmatprep.subr.mxu0 0.0
    %1168 = vmatpush1.msra.mxu0 0.0
    %1169 = vmatprep.subr.mxu0 0.0
    %1170 = vmatpush1.msra.mxu0 0.0
    %1171 = vmatprep.subr.mxu0 0.0
    %1172 = vmatpush1.msra.mxu0 0.0
    %1173 = vmatprep.subr.mxu0 0.0
    %1174 = vmatpush1.msra.mxu0 0.0
    %1175 = vmatprep.subr.mxu0 0.0
    %1176 = vmatpush1.msra.mxu0 0.0
    %1177 = vmatprep.subr.mxu0 0.0
    %1178 = vmatpush1.msra.mxu0 0.0
    %1179 = vmatprep.subr.mxu0 0.0
    %1180 = vmatpush1.msra.mxu0 0.0
    %1181 = vmatprep.subr.mxu0 0.0
    %1182 = vmatpush1.msra.mxu0 0.0
    %1183 = vmatprep.subr.mxu0 0.0
    %1184 = vmatpush1.msra.mxu0 0.0
    %1185 = vmatprep.subr.mxu0 0.0
    %1186 = vmatpush1.msra.mxu0 0.0
    %1187 = vmatprep.subr.mxu0 0.0
    %1188 = vmatpush1.msra.mxu0 0.0
    %1189 = vmatprep.subr.mxu0 0.0
    %1190 = vmatpush1.msra.mxu0 0.0
    %1191 = vmatprep.subr.mxu0 0.0
    %1192 = vmatpush1.msra.mxu0 0.0
    %1193 = vmatprep.subr.mxu0 0.0
    %1194 = vmatpush1.msra.mxu0 0.0
    %1195 = vmatprep.subr.mxu0 0.0
    %1196 = vmatpush1.msra.mxu0 0.0
    %1197 = vmatprep.subr.mxu0 0.0
    %1198 = vmatpush1.msra.mxu0 0.0
    %1199 = vmatprep.subr.mxu0 0.0
    %1200 = vmatpush1.msra.mxu0 0.0
    %1201 = vmatprep.subr.mxu0 0.0
    %1202 = vmatpush1.msra.mxu0 0.0
    %1203 = vmatprep.mubr.f32.mxu0 0.0
    %1204 = vmatmul.mubr.f32.gmra.mrb[0].mxu0 %v1134
    %v1205 = vpop.f32.mrb[0].mxu0
    %v1206 = vadd.f32 %v1131, %v1205
    %v1207 = vpop.f32.mrb[0].mxu0
    %1208 = vmatprep.mubr.f32.mxu0 0.0
    %1209 = vmatmul.mubr.f32.gmra.mrb[0].mxu0 %v1137
    %v1210 = vpop.f32.mrb[0].mxu0
    %v1211 = vadd.f32 %v1131, %v1210
    %v1212 = vpop.f32.mrb[0].mxu0
    %1213 = vdwg.mxu0
    %v1214 = vadd.f32 %v1206, %v51
    %v1215 = vadd.f32 %v1211, %v52
    %v1216 = vsel %vm58, %v1214, 0.0
    %1217 = vadd.xlane.f32.xlu0 %v1216
    %v1218 = vpop.xlane.xlu0 %1217
    %v1219 = vsel %vm58, %v1215, 0.0
    %1220 = vadd.xlane.f32.xlu0 %v1219
    %v1221 = vpop.xlane.xlu0 %1220
    %v1222 = vmul.f32 %v1218, %v65
    %v1223 = vmul.f32 %v1221, %v65
    %v1224 = vsub.f32 %v1214, %v1222
    %v1225 = vsub.f32 %v1215, %v1223
    %v1226 = vmul.f32 %v1224, %v1224
    %v1227 = vmul.f32 %v1225, %v1225
    %v1228 = vsel %vm58, %v1226, 0.0
    %1229 = vadd.xlane.f32.xlu0 %v1228
    %v1230 = vpop.xlane.xlu0 %1229
    %v1231 = vsel %vm58, %v1227, 0.0
    %1232 = vadd.xlane.f32.xlu0 %v1231
    %v1233 = vpop.xlane.xlu0 %1232
    %v1234 = vmul.f32 %v1230, %v65
    %v1235 = vmul.f32 %v1233, %v65
    %v1236 = vadd.f32 %v1234, 1e-05
    %v1237 = vadd.f32 %v1235, 1e-05
    %v1238 = vrsqrt.pop %v1236
    %v1239 = vrsqrt.pop %v1237
    %v1240 = vmul.f32 %v1224, %v1238
    %v1241 = vmul.f32 %v1225, %v1239
    %v1242 = vld [vmem:[%s9] sm:$0x1]
    %v1243 = vld [vmem:[%s7] sm:$0xff]
    %v1244 = vld [vmem:[%s7 + $0x8] sm:$0xff]
    %v1245 = vld [vmem:[%s7 + $0x10] sm:$0xff]
    %v1246 = vld [vmem:[%s7 + $0x18] sm:$0xff]
    %v1248 = vlaneseq
    %v1249 = vshrl.u32 %v1248, 7
    %v1250 = vsub.s32 0, %v1249
    %v1251 = vrot.slane %v1242, %v1250
    %v1254 = vsel %vm58, %v1240, 0
    %v1257 = vsel %vm58, %v1241, 0
    %1259 = vmatprep.subr.mxu0 0.0
    %1260 = vmatpush1.msra.mxu0 %v1243
    %1261 = vmatprep.subr.mxu0 0.0
    %1262 = vmatpush1.msra.mxu0 %v1244
    %1263 = vmatprep.subr.mxu0 0.0
    %1264 = vmatpush1.msra.mxu0 %v1245
    %1265 = vmatprep.subr.mxu0 0.0
    %1266 = vmatpush1.msra.mxu0 %v1246
    %1267 = vmatprep.subr.mxu0 0.0
    %1268 = vmatpush1.msra.mxu0 0.0
    %1269 = vmatprep.subr.mxu0 0.0
    %1270 = vmatpush1.msra.mxu0 0.0
    %1271 = vmatprep.subr.mxu0 0.0
    %1272 = vmatpush1.msra.mxu0 0.0
    %1273 = vmatprep.subr.mxu0 0.0
    %1274 = vmatpush1.msra.mxu0 0.0
    %1275 = vmatprep.subr.mxu0 0.0
    %1276 = vmatpush1.msra.mxu0 0.0
    %1277 = vmatprep.subr.mxu0 0.0
    %1278 = vmatpush1.msra.mxu0 0.0
    %1279 = vmatprep.subr.mxu0 0.0
    %1280 = vmatpush1.msra.mxu0 0.0
    %1281 = vmatprep.subr.mxu0 0.0
    %1282 = vmatpush1.msra.mxu0 0.0
    %1283 = vmatprep.subr.mxu0 0.0
    %1284 = vmatpush1.msra.mxu0 0.0
    %1285 = vmatprep.subr.mxu0 0.0
    %1286 = vmatpush1.msra.mxu0 0.0
    %1287 = vmatprep.subr.mxu0 0.0
    %1288 = vmatpush1.msra.mxu0 0.0
    %1289 = vmatprep.subr.mxu0 0.0
    %1290 = vmatpush1.msra.mxu0 0.0
    %1291 = vmatprep.subr.mxu0 0.0
    %1292 = vmatpush1.msra.mxu0 0.0
    %1293 = vmatprep.subr.mxu0 0.0
    %1294 = vmatpush1.msra.mxu0 0.0
    %1295 = vmatprep.subr.mxu0 0.0
    %1296 = vmatpush1.msra.mxu0 0.0
    %1297 = vmatprep.subr.mxu0 0.0
    %1298 = vmatpush1.msra.mxu0 0.0
    %1299 = vmatprep.subr.mxu0 0.0
    %1300 = vmatpush1.msra.mxu0 0.0
    %1301 = vmatprep.subr.mxu0 0.0
    %1302 = vmatpush1.msra.mxu0 0.0
    %1303 = vmatprep.subr.mxu0 0.0
    %1304 = vmatpush1.msra.mxu0 0.0
    %1305 = vmatprep.subr.mxu0 0.0
    %1306 = vmatpush1.msra.mxu0 0.0
    %1307 = vmatprep.subr.mxu0 0.0
    %1308 = vmatpush1.msra.mxu0 0.0
    %1309 = vmatprep.subr.mxu0 0.0
    %1310 = vmatpush1.msra.mxu0 0.0
    %1311 = vmatprep.subr.mxu0 0.0
    %1312 = vmatpush1.msra.mxu0 0.0
    %1313 = vmatprep.subr.mxu0 0.0
    %1314 = vmatpush1.msra.mxu0 0.0
    %1315 = vmatprep.subr.mxu0 0.0
    %1316 = vmatpush1.msra.mxu0 0.0
    %1317 = vmatprep.subr.mxu0 0.0
    %1318 = vmatpush1.msra.mxu0 0.0
    %1319 = vmatprep.subr.mxu0 0.0
    %1320 = vmatpush1.msra.mxu0 0.0
    %1321 = vmatprep.subr.mxu0 0.0
    %1322 = vmatpush1.msra.mxu0 0.0
    %1323 = vmatprep.mubr.f32.mxu0 0.0
    %1324 = vmatmul.mubr.f32.gmra.mrb[0].mxu0 %v1254
    %v1325 = vpop.f32.mrb[0].mxu0
    %v1326 = vadd.f32 %v1251, %v1325
    %v1327 = vpop.f32.mrb[0].mxu0
    %1328 = vmatprep.mubr.f32.mxu0 0.0
    %1329 = vmatmul.mubr.f32.gmra.mrb[0].mxu0 %v1257
    %v1330 = vpop.f32.mrb[0].mxu0
    %v1331 = vadd.f32 %v1251, %v1330
    %v1332 = vpop.f32.mrb[0].mxu0
    %1333 = vdwg.mxu0
    %v1334 = vmax.f32 %v1326, 0.0
    %v1335 = vmax.f32 %v1331, 0.0
    %v1336 = vld [vmem:[%s8] sm:$0xff]
    %v1337 = vld [vmem:[%s8 + $0x8] sm:$0xff]
    %v1338 = vld [vmem:[%s8 + $0x10] sm:$0xff]
    %v1339 = vld [vmem:[%s8 + $0x18] sm:$0xff]
    %v1340 = vld [vmem:[%s8 + $0x20] sm:$0xff]
    %v1341 = vld [vmem:[%s8 + $0x28] sm:$0xff]
    %v1342 = vld [vmem:[%s8 + $0x30] sm:$0xff]
    %v1343 = vld [vmem:[%s8 + $0x38] sm:$0xff]
    %1344 = vrot.lane.b32.xlu0 %v1251, 64
    %v1345 = vpop.permute.xlu0 %1344
    %vm1347 = vcmask 523264
    %v1349 = vsel %vm1347, %v1334, 0
    %v1352 = vsel %vm1347, %v1335, 0
    %1354 = vmatprep.subr.mxu0 0.0
    %1355 = vmatpush1.msra.mxu0 %v1336
    %1356 = vmatprep.subr.mxu0 0.0
    %1357 = vmatpush1.msra.mxu0 %v1337
    %1358 = vmatprep.subr.mxu0 0.0
    %1359 = vmatpush1.msra.mxu0 %v1338
    %1360 = vmatprep.subr.mxu0 0.0
    %1361 = vmatpush1.msra.mxu0 %v1339
    %1362 = vmatprep.subr.mxu0 0.0
    %1363 = vmatpush1.msra.mxu0 %v1340
    %1364 = vmatprep.subr.mxu0 0.0
    %1365 = vmatpush1.msra.mxu0 %v1341
    %1366 = vmatprep.subr.mxu0 0.0
    %1367 = vmatpush1.msra.mxu0 %v1342
    %1368 = vmatprep.subr.mxu0 0.0
    %1369 = vmatpush1.msra.mxu0 %v1343
    %1370 = vmatprep.subr.mxu0 0.0
    %1371 = vmatpush1.msra.mxu0 0.0
    %1372 = vmatprep.subr.mxu0 0.0
    %1373 = vmatpush1.msra.mxu0 0.0
    %1374 = vmatprep.subr.mxu0 0.0
    %1375 = vmatpush1.msra.mxu0 0.0
    %1376 = vmatprep.subr.mxu0 0.0
    %1377 = vmatpush1.msra.mxu0 0.0
    %1378 = vmatprep.subr.mxu0 0.0
    %1379 = vmatpush1.msra.mxu0 0.0
    %1380 = vmatprep.subr.mxu0 0.0
    %1381 = vmatpush1.msra.mxu0 0.0
    %1382 = vmatprep.subr.mxu0 0.0
    %1383 = vmatpush1.msra.mxu0 0.0
    %1384 = vmatprep.subr.mxu0 0.0
    %1385 = vmatpush1.msra.mxu0 0.0
    %1386 = vmatprep.subr.mxu0 0.0
    %1387 = vmatpush1.msra.mxu0 0.0
    %1388 = vmatprep.subr.mxu0 0.0
    %1389 = vmatpush1.msra.mxu0 0.0
    %1390 = vmatprep.subr.mxu0 0.0
    %1391 = vmatpush1.msra.mxu0 0.0
    %1392 = vmatprep.subr.mxu0 0.0
    %1393 = vmatpush1.msra.mxu0 0.0
    %1394 = vmatprep.subr.mxu0 0.0
    %1395 = vmatpush1.msra.mxu0 0.0
    %1396 = vmatprep.subr.mxu0 0.0
    %1397 = vmatpush1.msra.mxu0 0.0
    %1398 = vmatprep.subr.mxu0 0.0
    %1399 = vmatpush1.msra.mxu0 0.0
    %1400 = vmatprep.subr.mxu0 0.0
    %1401 = vmatpush1.msra.mxu0 0.0
    %1402 = vmatprep.subr.mxu0 0.0
    %1403 = vmatpush1.msra.mxu0 0.0
    %1404 = vmatprep.subr.mxu0 0.0
    %1405 = vmatpush1.msra.mxu0 0.0
    %1406 = vmatprep.subr.mxu0 0.0
    %1407 = vmatpush1.msra.mxu0 0.0
    %1408 = vmatprep.subr.mxu0 0.0
    %1409 = vmatpush1.msra.mxu0 0.0
    %1410 = vmatprep.subr.mxu0 0.0
    %1411 = vmatpush1.msra.mxu0 0.0
    %1412 = vmatprep.subr.mxu0 0.0
    %1413 = vmatpush1.msra.mxu0 0.0
    %1414 = vmatprep.subr.mxu0 0.0
    %1415 = vmatpush1.msra.mxu0 0.0
    %1416 = vmatprep.subr.mxu0 0.0
    %1417 = vmatpush1.msra.mxu0 0.0
    %1418 = vmatprep.mubr.f32.mxu0 0.0
    %1419 = vmatmul.mubr.f32.gmra.mrb[0].mxu0 %v1349
    %v1420 = vpop.f32.mrb[0].mxu0
    %v1421 = vadd.f32 %v1345, %v1420
    %v1422 = vpop.f32.mrb[0].mxu0
    %1423 = vmatprep.mubr.f32.mxu0 0.0
    %1424 = vmatmul.mubr.f32.gmra.mrb[0].mxu0 %v1352
    %v1425 = vpop.f32.mrb[0].mxu0
    %v1426 = vadd.f32 %v1345, %v1425
    %v1427 = vpop.f32.mrb[0].mxu0
    %1428 = vdwg.mxu0
    %v1429 = vadd.f32 %v1421, %v1214
    %v1430 = vadd.f32 %v1426, %v1215
    %s1431 = scalar_lea.vmem %s5, 32
    %v1432 = vld [vmem:[%s1431] sm:$0xff]
    %v1433 = vld [vmem:[%s1431 + $0x8] sm:$0xff]
    %v1434 = vld [vmem:[%s1431 + $0x10] sm:$0xff]
    %v1435 = vld [vmem:[%s1431 + $0x18] sm:$0xff]
    %s1436 = scalar_lea.vmem %s6, 1
    %v1437 = vld [vmem:[%s1436] sm:$0x1]
    %v1438 = vsel %vm58, %v1429, 0.0
    %1439 = vadd.xlane.f32.xlu0 %v1438
    %v1440 = vpop.xlane.xlu0 %1439
    %v1441 = vsel %vm58, %v1430, 0.0
    %1442 = vadd.xlane.f32.xlu0 %v1441
    %v1443 = vpop.xlane.xlu0 %1442
    %v1444 = vmul.f32 %v1440, %v65
    %v1445 = vmul.f32 %v1443, %v65
    %v1446 = vsub.f32 %v1429, %v1444
    %v1447 = vsub.f32 %v1430, %v1445
    %v1448 = vmul.f32 %v1446, %v1446
    %v1449 = vmul.f32 %v1447, %v1447
    %v1450 = vsel %vm58, %v1448, 0.0
    %1451 = vadd.xlane.f32.xlu0 %v1450
    %v1452 = vpop.xlane.xlu0 %1451
    %v1453 = vsel %vm58, %v1449, 0.0
    %1454 = vadd.xlane.f32.xlu0 %v1453
    %v1455 = vpop.xlane.xlu0 %1454
    %v1456 = vmul.f32 %v1452, %v65
    %v1457 = vmul.f32 %v1455, %v65
    %v1458 = vadd.f32 %v1456, 1e-05
    %v1459 = vadd.f32 %v1457, 1e-05
    %v1460 = vrsqrt.pop %v1458
    %v1461 = vrsqrt.pop %v1459
    %v1462 = vmul.f32 %v1446, %v1460
    %v1463 = vmul.f32 %v1447, %v1461
    %v1465 = vlaneseq
    %v1466 = vshrl.u32 %v1465, 7
    %v1467 = vsub.s32 0, %v1466
    %v1468 = vrot.slane %v1437, %v1467
    %v1471 = vsel %vm58, %v1462, 0
    %v1474 = vsel %vm58, %v1463, 0
    %1476 = vmatprep.subr.mxu0 0.0
    %1477 = vmatpush1.msra.mxu0 %v1432
    %1478 = vmatprep.subr.mxu0 0.0
    %1479 = vmatpush1.msra.mxu0 %v1433
    %1480 = vmatprep.subr.mxu0 0.0
    %1481 = vmatpush1.msra.mxu0 %v1434
    %1482 = vmatprep.subr.mxu0 0.0
    %1483 = vmatpush1.msra.mxu0 %v1435
    %1484 = vmatprep.subr.mxu0 0.0
    %1485 = vmatpush1.msra.mxu0 0.0
    %1486 = vmatprep.subr.mxu0 0.0
    %1487 = vmatpush1.msra.mxu0 0.0
    %1488 = vmatprep.subr.mxu0 0.0
    %1489 = vmatpush1.msra.mxu0 0.0
    %1490 = vmatprep.subr.mxu0 0.0
    %1491 = vmatpush1.msra.mxu0 0.0
    %1492 = vmatprep.subr.mxu0 0.0
    %1493 = vmatpush1.msra.mxu0 0.0
    %1494 = vmatprep.subr.mxu0 0.0
    %1495 = vmatpush1.msra.mxu0 0.0
    %1496 = vmatprep.subr.mxu0 0.0
    %1497 = vmatpush1.msra.mxu0 0.0
    %1498 = vmatprep.subr.mxu0 0.0
    %1499 = vmatpush1.msra.mxu0 0.0
    %1500 = vmatprep.subr.mxu0 0.0
    %1501 = vmatpush1.msra.mxu0 0.0
    %1502 = vmatprep.subr.mxu0 0.0
    %1503 = vmatpush1.msra.mxu0 0.0
    %1504 = vmatprep.subr.mxu0 0.0
    %1505 = vmatpush1.msra.mxu0 0.0
    %1506 = vmatprep.subr.mxu0 0.0
    %1507 = vmatpush1.msra.mxu0 0.0
    %1508 = vmatprep.subr.mxu0 0.0
    %1509 = vmatpush1.msra.mxu0 0.0
    %1510 = vmatprep.subr.mxu0 0.0
    %1511 = vmatpush1.msra.mxu0 0.0
    %1512 = vmatprep.subr.mxu0 0.0
    %1513 = vmatpush1.msra.mxu0 0.0
    %1514 = vmatprep.subr.mxu0 0.0
    %1515 = vmatpush1.msra.mxu0 0.0
    %1516 = vmatprep.subr.mxu0 0.0
    %1517 = vmatpush1.msra.mxu0 0.0
    %1518 = vmatprep.subr.mxu0 0.0
    %1519 = vmatpush1.msra.mxu0 0.0
    %1520 = vmatprep.subr.mxu0 0.0
    %1521 = vmatpush1.msra.mxu0 0.0
    %1522 = vmatprep.subr.mxu0 0.0
    %1523 = vmatpush1.msra.mxu0 0.0
    %1524 = vmatprep.subr.mxu0 0.0
    %1525 = vmatpush1.msra.mxu0 0.0
    %1526 = vmatprep.subr.mxu0 0.0
    %1527 = vmatpush1.msra.mxu0 0.0
    %1528 = vmatprep.subr.mxu0 0.0
    %1529 = vmatpush1.msra.mxu0 0.0
    %1530 = vmatprep.subr.mxu0 0.0
    %1531 = vmatpush1.msra.mxu0 0.0
    %1532 = vmatprep.subr.mxu0 0.0
    %1533 = vmatpush1.msra.mxu0 0.0
    %1534 = vmatprep.subr.mxu0 0.0
    %1535 = vmatpush1.msra.mxu0 0.0
    %1536 = vmatprep.subr.mxu0 0.0
    %1537 = vmatpush1.msra.mxu0 0.0
    %1538 = vmatprep.subr.mxu0 0.0
    %1539 = vmatpush1.msra.mxu0 0.0
    %1540 = vmatprep.mubr.f32.mxu0 0.0
    %1541 = vmatmul.mubr.f32.gmra.mrb[0].mxu0 %v1471
    %v1542 = vpop.f32.mrb[0].mxu0
    %v1543 = vadd.f32 %v1468, %v1542
    %v1544 = vpop.f32.mrb[0].mxu0
    %1545 = vmatprep.mubr.f32.mxu0 0.0
    %1546 = vmatmul.mubr.f32.gmra.mrb[0].mxu0 %v1474
    %v1547 = vpop.f32.mrb[0].mxu0
    %v1548 = vadd.f32 %v1468, %v1547
    %v1549 = vpop.f32.mrb[0].mxu0
    %1550 = vdwg.mxu0
    %1555 = vrot.lane.b32.xlu0 %v1432, 96
    %v1556 = vpop.permute.xlu0 %1555
    %1557 = vrot.lane.b32.xlu0 %v1433, 96
    %v1558 = vpop.permute.xlu0 %1557
    %1559 = vrot.lane.b32.xlu0 %v1434, 96
    %v1560 = vpop.permute.xlu0 %1559
    %1561 = vrot.lane.b32.xlu0 %v1435, 96
    %v1562 = vpop.permute.xlu0 %1561
    %1567 = vrot.lane.b32.xlu0 %v1468, 96
    %v1568 = vpop.permute.xlu0 %1567
    %1570 = vmatprep.subr.mxu0 0.0
    %1571 = vmatpush1.msra.mxu0 %v1556
    %1572 = vmatprep.subr.mxu0 0.0
    %1573 = vmatpush1.msra.mxu0 %v1558
    %1574 = vmatprep.subr.mxu0 0.0
    %1575 = vmatpush1.msra.mxu0 %v1560
    %1576 = vmatprep.subr.mxu0 0.0
    %1577 = vmatpush1.msra.mxu0 %v1562
    %1578 = vmatprep.subr.mxu0 0.0
    %1579 = vmatpush1.msra.mxu0 0.0
    %1580 = vmatprep.subr.mxu0 0.0
    %1581 = vmatpush1.msra.mxu0 0.0
    %1582 = vmatprep.subr.mxu0 0.0
    %1583 = vmatpush1.msra.mxu0 0.0
    %1584 = vmatprep.subr.mxu0 0.0
    %1585 = vmatpush1.msra.mxu0 0.0
    %1586 = vmatprep.subr.mxu0 0.0
    %1587 = vmatpush1.msra.mxu0 0.0
    %1588 = vmatprep.subr.mxu0 0.0
    %1589 = vmatpush1.msra.mxu0 0.0
    %1590 = vmatprep.subr.mxu0 0.0
    %1591 = vmatpush1.msra.mxu0 0.0
    %1592 = vmatprep.subr.mxu0 0.0
    %1593 = vmatpush1.msra.mxu0 0.0
    %1594 = vmatprep.subr.mxu0 0.0
    %1595 = vmatpush1.msra.mxu0 0.0
    %1596 = vmatprep.subr.mxu0 0.0
    %1597 = vmatpush1.msra.mxu0 0.0
    %1598 = vmatprep.subr.mxu0 0.0
    %1599 = vmatpush1.msra.mxu0 0.0
    %1600 = vmatprep.subr.mxu0 0.0
    %1601 = vmatpush1.msra.mxu0 0.0
    %1602 = vmatprep.subr.mxu0 0.0
    %1603 = vmatpush1.msra.mxu0 0.0
    %1604 = vmatprep.subr.mxu0 0.0
    %1605 = vmatpush1.msra.mxu0 0.0
    %1606 = vmatprep.subr.mxu0 0.0
    %1607 = vmatpush1.msra.mxu0 0.0
    %1608 = vmatprep.subr.mxu0 0.0
    %1609 = vmatpush1.msra.mxu0 0.0
    %1610 = vmatprep.subr.mxu0 0.0
    %1611 = vmatpush1.msra.mxu0 0.0
    %1612 = vmatprep.subr.mxu0 0.0
    %1613 = vmatpush1.msra.mxu0 0.0
    %1614 = vmatprep.subr.mxu0 0.0
    %1615 = vmatpush1.msra.mxu0 0.0
    %1616 = vmatprep.subr.mxu0 0.0
    %1617 = vmatpush1.msra.mxu0 0.0
    %1618 = vmatprep.subr.mxu0 0.0
    %1619 = vmatpush1.msra.mxu0 0.0
    %1620 = vmatprep.subr.mxu0 0.0
    %1621 = vmatpush1.msra.mxu0 0.0
    %1622 = vmatprep.subr.mxu0 0.0
    %1623 = vmatpush1.msra.mxu0 0.0
    %1624 = vmatprep.subr.mxu0 0.0
    %1625 = vmatpush1.msra.mxu0 0.0
    %1626 = vmatprep.subr.mxu0 0.0
    %1627 = vmatpush1.msra.mxu0 0.0
    %1628 = vmatprep.subr.mxu0 0.0
    %1629 = vmatpush1.msra.mxu0 0.0
    %1630 = vmatprep.subr.mxu0 0.0
    %1631 = vmatpush1.msra.mxu0 0.0
    %1632 = vmatprep.subr.mxu0 0.0
    %1633 = vmatpush1.msra.mxu0 0.0
    %1634 = vmatprep.mubr.f32.mxu0 0.0
    %1635 = vmatmul.mubr.f32.gmra.mrb[0].mxu0 %v1471
    %v1636 = vpop.f32.mrb[0].mxu0
    %v1637 = vadd.f32 %v1568, %v1636
    %v1638 = vpop.f32.mrb[0].mxu0
    %1639 = vmatprep.mubr.f32.mxu0 0.0
    %1640 = vmatmul.mubr.f32.gmra.mrb[0].mxu0 %v1474
    %v1641 = vpop.f32.mrb[0].mxu0
    %v1642 = vadd.f32 %v1568, %v1641
    %v1643 = vpop.f32.mrb[0].mxu0
    %1644 = vdwg.mxu0
    %v1646 = vsel %vm267, %v1543, 0
    %v1649 = vsel %vm267, %v1548, 0
    %v1652 = vsel %vm267, %v1637, 0
    %v1655 = vsel %vm267, %v1642, 0
    %1657 = vmatprep.subr.mxu0 0.0
    %1658 = vmatpush1.xpose.msra.mxu0 %v1652
    %1659 = vmatprep.subr.mxu0 0.0
    %1660 = vmatpush1.xpose.msra.mxu0 %v1655
    %1661 = vmatprep.subr.mxu0 0.0
    %1662 = vmatpush1.xpose.msra.mxu0 0.0
    %1663 = vmatprep.subr.mxu0 0.0
    %1664 = vmatpush1.xpose.msra.mxu0 0.0
    %1665 = vmatprep.subr.mxu0 0.0
    %1666 = vmatpush1.xpose.msra.mxu0 0.0
    %1667 = vmatprep.subr.mxu0 0.0
    %1668 = vmatpush1.xpose.msra.mxu0 0.0
    %1669 = vmatprep.subr.mxu0 0.0
    %1670 = vmatpush1.xpose.msra.mxu0 0.0
    %1671 = vmatprep.subr.mxu0 0.0
    %1672 = vmatpush1.xpose.msra.mxu0 0.0
    %1673 = vmatprep.subr.mxu0 0.0
    %1674 = vmatpush1.xpose.msra.mxu0 0.0
    %1675 = vmatprep.subr.mxu0 0.0
    %1676 = vmatpush1.xpose.msra.mxu0 0.0
    %1677 = vmatprep.subr.mxu0 0.0
    %1678 = vmatpush1.xpose.msra.mxu0 0.0
    %1679 = vmatprep.subr.mxu0 0.0
    %1680 = vmatpush1.xpose.msra.mxu0 0.0
    %1681 = vmatprep.subr.mxu0 0.0
    %1682 = vmatpush1.xpose.msra.mxu0 0.0
    %1683 = vmatprep.subr.mxu0 0.0
    %1684 = vmatpush1.xpose.msra.mxu0 0.0
    %1685 = vmatprep.subr.mxu0 0.0
    %1686 = vmatpush1.xpose.msra.mxu0 0.0
    %1687 = vmatprep.subr.mxu0 0.0
    %1688 = vmatpush1.xpose.msra.mxu0 0.0
    %1689 = vmatprep.subr.mxu0 0.0
    %1690 = vmatpush1.xpose.msra.mxu0 0.0
    %1691 = vmatprep.subr.mxu0 0.0
    %1692 = vmatpush1.xpose.msra.mxu0 0.0
    %1693 = vmatprep.subr.mxu0 0.0
    %1694 = vmatpush1.xpose.msra.mxu0 0.0
    %1695 = vmatprep.subr.mxu0 0.0
    %1696 = vmatpush1.xpose.msra.mxu0 0.0
    %1697 = vmatprep.subr.mxu0 0.0
    %1698 = vmatpush1.xpose.msra.mxu0 0.0
    %1699 = vmatprep.subr.mxu0 0.0
    %1700 = vmatpush1.xpose.msra.mxu0 0.0
    %1701 = vmatprep.subr.mxu0 0.0
    %1702 = vmatpush1.xpose.msra.mxu0 0.0
    %1703 = vmatprep.subr.mxu0 0.0
    %1704 = vmatpush1.xpose.msra.mxu0 0.0
    %1705 = vmatprep.subr.mxu0 0.0
    %1706 = vmatpush1.xpose.msra.mxu0 0.0
    %1707 = vmatprep.subr.mxu0 0.0
    %1708 = vmatpush1.xpose.msra.mxu0 0.0
    %1709 = vmatprep.subr.mxu0 0.0
    %1710 = vmatpush1.xpose.msra.mxu0 0.0
    %1711 = vmatprep.subr.mxu0 0.0
    %1712 = vmatpush1.xpose.msra.mxu0 0.0
    %1713 = vmatprep.subr.mxu0 0.0
    %1714 = vmatpush1.xpose.msra.mxu0 0.0
    %1715 = vmatprep.subr.mxu0 0.0
    %1716 = vmatpush1.xpose.msra.mxu0 0.0
    %1717 = vmatprep.subr.mxu0 0.0
    %1718 = vmatpush1.xpose.msra.mxu0 0.0
    %1719 = vmatprep.subr.mxu0 0.0
    %1720 = vmatpush1.xpose.msra.mxu0 0.0
    %1721 = vmatprep.mubr.f32.mxu0 0.0
    %1722 = vmatmul.mubr.f32.gmra.mrb[0].mxu0 %v1646
    %v1723 = vpop.f32.mrb[0].mxu0
    %v1724 = vadd.f32 0.0, %v1723
    %v1725 = vpop.f32.mrb[0].mxu0
    %1726 = vmatprep.mubr.f32.mxu0 0.0
    %1727 = vmatmul.mubr.f32.gmra.mrb[0].mxu0 %v1649
    %v1728 = vpop.f32.mrb[0].mxu0
    %v1729 = vadd.f32 0.0, %v1728
    %v1730 = vpop.f32.mrb[0].mxu0
    %1731 = vdwg.mxu0
    %v1732 = vmul.f32 %v1724, 0.35355338
    %v1733 = vmul.f32 %v1729, 0.35355338
    %v1734 = vadd.f32 %v1732, %v45
    %v1735 = vadd.f32 %v1733, %v46
    %v1736 = vsel %vm359, %v1734, -inf
    %1737 = vmax.xlane.f32.xlu0 %v1736
    %v1738 = vpop.xlane.xlu0 %1737
    %v1739 = vsel %vm359, %v1735, -inf
    %1740 = vmax.xlane.f32.xlu0 %v1739
    %v1741 = vpop.xlane.xlu0 %1740
    %v1742 = vsub.f32 %v1734, %v1738
    %v1743 = vsub.f32 %v1735, %v1741
    %v1744 = vmul.f32 %v1742, 1.442695
    %v1745 = vpow.pop %v1744
    %v1746 = vmul.f32 %v1743, 1.442695
    %v1747 = vpow.pop %v1746
    %v1748 = vsel %vm359, %v1745, 0.0
    %1749 = vadd.xlane.f32.xlu0 %v1748
    %v1750 = vpop.xlane.xlu0 %1749
    %v1751 = vsel %vm359, %v1747, 0.0
    %1752 = vadd.xlane.f32.xlu0 %v1751
    %v1753 = vpop.xlane.xlu0 %1752
    %v1754 = vrcp.pop %v1750
    %v1755 = vrcp.pop %v1753
    %v1756 = vmul.f32 %v1745, %v1754
    %v1757 = vmul.f32 %v1747, %v1755
    %1758 = vrot.lane.b32.xlu0 %v1637, 96
    %v1759 = vpop.permute.xlu0 %1758
    %1760 = vrot.lane.b32.xlu0 %v1642, 96
    %v1761 = vpop.permute.xlu0 %1760
    %v1765 = vsel %vm359, %v1756, 0
    %v1768 = vsel %vm359, %v1757, 0
    %1770 = vmatprep.subr.mxu0 0.0
    %1771 = vmatpush1.msra.mxu0 %v1759
    %1772 = vmatprep.subr.mxu0 0.0
    %1773 = vmatpush1.msra.mxu0 %v1761
    %1774 = vmatprep.subr.mxu0 0.0
    %1775 = vmatpush1.msra.mxu0 0.0
    %1776 = vmatprep.subr.mxu0 0.0
    %1777 = vmatpush1.msra.mxu0 0.0
    %1778 = vmatprep.subr.mxu0 0.0
    %1779 = vmatpush1.msra.mxu0 0.0
    %1780 = vmatprep.subr.mxu0 0.0
    %1781 = vmatpush1.msra.mxu0 0.0
    %1782 = vmatprep.subr.mxu0 0.0
    %1783 = vmatpush1.msra.mxu0 0.0
    %1784 = vmatprep.subr.mxu0 0.0
    %1785 = vmatpush1.msra.mxu0 0.0
    %1786 = vmatprep.subr.mxu0 0.0
    %1787 = vmatpush1.msra.mxu0 0.0
    %1788 = vmatprep.subr.mxu0 0.0
    %1789 = vmatpush1.msra.mxu0 0.0
    %1790 = vmatprep.subr.mxu0 0.0
    %1791 = vmatpush1.msra.mxu0 0.0
    %1792 = vmatprep.subr.mxu0 0.0
    %1793 = vmatpush1.msra.mxu0 0.0
    %1794 = vmatprep.subr.mxu0 0.0
    %1795 = vmatpush1.msra.mxu0 0.0
    %1796 = vmatprep.subr.mxu0 0.0
    %1797 = vmatpush1.msra.mxu0 0.0
    %1798 = vmatprep.subr.mxu0 0.0
    %1799 = vmatpush1.msra.mxu0 0.0
    %1800 = vmatprep.subr.mxu0 0.0
    %1801 = vmatpush1.msra.mxu0 0.0
    %1802 = vmatprep.subr.mxu0 0.0
    %1803 = vmatpush1.msra.mxu0 0.0
    %1804 = vmatprep.subr.mxu0 0.0
    %1805 = vmatpush1.msra.mxu0 0.0
    %1806 = vmatprep.subr.mxu0 0.0
    %1807 = vmatpush1.msra.mxu0 0.0
    %1808 = vmatprep.subr.mxu0 0.0
    %1809 = vmatpush1.msra.mxu0 0.0
    %1810 = vmatprep.subr.mxu0 0.0
    %1811 = vmatpush1.msra.mxu0 0.0
    %1812 = vmatprep.subr.mxu0 0.0
    %1813 = vmatpush1.msra.mxu0 0.0
    %1814 = vmatprep.subr.mxu0 0.0
    %1815 = vmatpush1.msra.mxu0 0.0
    %1816 = vmatprep.subr.mxu0 0.0
    %1817 = vmatpush1.msra.mxu0 0.0
    %1818 = vmatprep.subr.mxu0 0.0
    %1819 = vmatpush1.msra.mxu0 0.0
    %1820 = vmatprep.subr.mxu0 0.0
    %1821 = vmatpush1.msra.mxu0 0.0
    %1822 = vmatprep.subr.mxu0 0.0
    %1823 = vmatpush1.msra.mxu0 0.0
    %1824 = vmatprep.subr.mxu0 0.0
    %1825 = vmatpush1.msra.mxu0 0.0
    %1826 = vmatprep.subr.mxu0 0.0
    %1827 = vmatpush1.msra.mxu0 0.0
    %1828 = vmatprep.subr.mxu0 0.0
    %1829 = vmatpush1.msra.mxu0 0.0
    %1830 = vmatprep.subr.mxu0 0.0
    %1831 = vmatpush1.msra.mxu0 0.0
    %1832 = vmatprep.subr.mxu0 0.0
    %1833 = vmatpush1.msra.mxu0 0.0
    %1834 = vmatprep.mubr.f32.mxu0 0.0
    %1835 = vmatmul.mubr.f32.gmra.mrb[0].mxu0 %v1765
    %v1836 = vpop.f32.mrb[0].mxu0
    %v1837 = vadd.f32 0.0, %v1836
    %v1838 = vpop.f32.mrb[0].mxu0
    %1839 = vmatprep.mubr.f32.mxu0 0.0
    %1840 = vmatmul.mubr.f32.gmra.mrb[0].mxu0 %v1768
    %v1841 = vpop.f32.mrb[0].mxu0
    %v1842 = vadd.f32 0.0, %v1841
    %v1843 = vpop.f32.mrb[0].mxu0
    %1844 = vdwg.mxu0
    %1845 = vst.msk [vmem:[#allocation2] sm:$0xff] %vm267, %v1837
    %1846 = vst.msk [vmem:[#allocation2 + $0x8] sm:$0xff] %vm267, %v1842
    %1847 = vrot.lane.b32.xlu0 %v1543, 120
    %v1848 = vpop.permute.xlu0 %1847
    %1849 = vrot.lane.b32.xlu0 %v1548, 120
    %v1850 = vpop.permute.xlu0 %1849
    %1851 = vrot.lane.b32.xlu0 %v1637, 120
    %v1852 = vpop.permute.xlu0 %1851
    %1853 = vrot.lane.b32.xlu0 %v1642, 120
    %v1854 = vpop.permute.xlu0 %1853
    %v1855 = vsel %vm267, %v1848, 0
    %v1857 = vsel %vm267, %v1850, 0
    %v1859 = vsel %vm267, %v1852, 0
    %v1861 = vsel %vm267, %v1854, 0
    %1863 = vmatprep.subr.mxu0 0.0
    %1864 = vmatpush1.xpose.msra.mxu0 %v1859
    %1865 = vmatprep.subr.mxu0 0.0
    %1866 = vmatpush1.xpose.msra.mxu0 %v1861
    %1867 = vmatprep.subr.mxu0 0.0
    %1868 = vmatpush1.xpose.msra.mxu0 0.0
    %1869 = vmatprep.subr.mxu0 0.0
    %1870 = vmatpush1.xpose.msra.mxu0 0.0
    %1871 = vmatprep.subr.mxu0 0.0
    %1872 = vmatpush1.xpose.msra.mxu0 0.0
    %1873 = vmatprep.subr.mxu0 0.0
    %1874 = vmatpush1.xpose.msra.mxu0 0.0
    %1875 = vmatprep.subr.mxu0 0.0
    %1876 = vmatpush1.xpose.msra.mxu0 0.0
    %1877 = vmatprep.subr.mxu0 0.0
    %1878 = vmatpush1.xpose.msra.mxu0 0.0
    %1879 = vmatprep.subr.mxu0 0.0
    %1880 = vmatpush1.xpose.msra.mxu0 0.0
    %1881 = vmatprep.subr.mxu0 0.0
    %1882 = vmatpush1.xpose.msra.mxu0 0.0
    %1883 = vmatprep.subr.mxu0 0.0
    %1884 = vmatpush1.xpose.msra.mxu0 0.0
    %1885 = vmatprep.subr.mxu0 0.0
    %1886 = vmatpush1.xpose.msra.mxu0 0.0
    %1887 = vmatprep.subr.mxu0 0.0
    %1888 = vmatpush1.xpose.msra.mxu0 0.0
    %1889 = vmatprep.subr.mxu0 0.0
    %1890 = vmatpush1.xpose.msra.mxu0 0.0
    %1891 = vmatprep.subr.mxu0 0.0
    %1892 = vmatpush1.xpose.msra.mxu0 0.0
    %1893 = vmatprep.subr.mxu0 0.0
    %1894 = vmatpush1.xpose.msra.mxu0 0.0
    %1895 = vmatprep.subr.mxu0 0.0
    %1896 = vmatpush1.xpose.msra.mxu0 0.0
    %1897 = vmatprep.subr.mxu0 0.0
    %1898 = vmatpush1.xpose.msra.mxu0 0.0
    %1899 = vmatprep.subr.mxu0 0.0
    %1900 = vmatpush1.xpose.msra.mxu0 0.0
    %1901 = vmatprep.subr.mxu0 0.0
    %1902 = vmatpush1.xpose.msra.mxu0 0.0
    %1903 = vmatprep.subr.mxu0 0.0
    %1904 = vmatpush1.xpose.msra.mxu0 0.0
    %1905 = vmatprep.subr.mxu0 0.0
    %1906 = vmatpush1.xpose.msra.mxu0 0.0
    %1907 = vmatprep.subr.mxu0 0.0
    %1908 = vmatpush1.xpose.msra.mxu0 0.0
    %1909 = vmatprep.subr.mxu0 0.0
    %1910 = vmatpush1.xpose.msra.mxu0 0.0
    %1911 = vmatprep.subr.mxu0 0.0
    %1912 = vmatpush1.xpose.msra.mxu0 0.0
    %1913 = vmatprep.subr.mxu0 0.0
    %1914 = vmatpush1.xpose.msra.mxu0 0.0
    %1915 = vmatprep.subr.mxu0 0.0
    %1916 = vmatpush1.xpose.msra.mxu0 0.0
    %1917 = vmatprep.subr.mxu0 0.0
    %1918 = vmatpush1.xpose.msra.mxu0 0.0
    %1919 = vmatprep.subr.mxu0 0.0
    %1920 = vmatpush1.xpose.msra.mxu0 0.0
    %1921 = vmatprep.subr.mxu0 0.0
    %1922 = vmatpush1.xpose.msra.mxu0 0.0
    %1923 = vmatprep.subr.mxu0 0.0
    %1924 = vmatpush1.xpose.msra.mxu0 0.0
    %1925 = vmatprep.subr.mxu0 0.0
    %1926 = vmatpush1.xpose.msra.mxu0 0.0
    %1927 = vmatprep.mubr.f32.mxu0 0.0
    %1928 = vmatmul.mubr.f32.gmra.mrb[0].mxu0 %v1855
    %v1929 = vpop.f32.mrb[0].mxu0
    %v1930 = vadd.f32 0.0, %v1929
    %v1931 = vpop.f32.mrb[0].mxu0
    %1932 = vmatprep.mubr.f32.mxu0 0.0
    %1933 = vmatmul.mubr.f32.gmra.mrb[0].mxu0 %v1857
    %v1934 = vpop.f32.mrb[0].mxu0
    %v1935 = vadd.f32 0.0, %v1934
    %v1936 = vpop.f32.mrb[0].mxu0
    %1937 = vdwg.mxu0
    %v1938 = vmul.f32 %v1930, 0.35355338
    %v1939 = vmul.f32 %v1935, 0.35355338
    %v1940 = vadd.f32 %v1938, %v45
    %v1941 = vadd.f32 %v1939, %v46
    %v1942 = vsel %vm359, %v1940, -inf
    %1943 = vmax.xlane.f32.xlu0 %v1942
    %v1944 = vpop.xlane.xlu0 %1943
    %v1945 = vsel %vm359, %v1941, -inf
    %1946 = vmax.xlane.f32.xlu0 %v1945
    %v1947 = vpop.xlane.xlu0 %1946
    %v1948 = vsub.f32 %v1940, %v1944
    %v1949 = vsub.f32 %v1941, %v1947
    %v1950 = vmul.f32 %v1948, 1.442695
    %v1951 = vpow.pop %v1950
    %v1952 = vmul.f32 %v1949, 1.442695
    %v1953 = vpow.pop %v1952
    %v1954 = vsel %vm359, %v1951, 0.0
    %1955 = vadd.xlane.f32.xlu0 %v1954
    %v1956 = vpop.xlane.xlu0 %1955
    %v1957 = vsel %vm359, %v1953, 0.0
    %1958 = vadd.xlane.f32.xlu0 %v1957
    %v1959 = vpop.xlane.xlu0 %1958
    %v1960 = vrcp.pop %v1956
    %v1961 = vrcp.pop %v1959
    %v1962 = vmul.f32 %v1951, %v1960
    %v1963 = vmul.f32 %v1953, %v1961
    %1964 = vrot.lane.b32.xlu0 %v1637, 88
    %v1965 = vpop.permute.xlu0 %1964
    %1966 = vrot.lane.b32.xlu0 %v1642, 88
    %v1967 = vpop.permute.xlu0 %1966
    %v1971 = vsel %vm359, %v1962, 0
    %v1974 = vsel %vm359, %v1963, 0
    %1976 = vmatprep.subr.mxu0 0.0
    %1977 = vmatpush1.msra.mxu0 %v1965
    %1978 = vmatprep.subr.mxu0 0.0
    %1979 = vmatpush1.msra.mxu0 %v1967
    %1980 = vmatprep.subr.mxu0 0.0
    %1981 = vmatpush1.msra.mxu0 0.0
    %1982 = vmatprep.subr.mxu0 0.0
    %1983 = vmatpush1.msra.mxu0 0.0
    %1984 = vmatprep.subr.mxu0 0.0
    %1985 = vmatpush1.msra.mxu0 0.0
    %1986 = vmatprep.subr.mxu0 0.0
    %1987 = vmatpush1.msra.mxu0 0.0
    %1988 = vmatprep.subr.mxu0 0.0
    %1989 = vmatpush1.msra.mxu0 0.0
    %1990 = vmatprep.subr.mxu0 0.0
    %1991 = vmatpush1.msra.mxu0 0.0
    %1992 = vmatprep.subr.mxu0 0.0
    %1993 = vmatpush1.msra.mxu0 0.0
    %1994 = vmatprep.subr.mxu0 0.0
    %1995 = vmatpush1.msra.mxu0 0.0
    %1996 = vmatprep.subr.mxu0 0.0
    %1997 = vmatpush1.msra.mxu0 0.0
    %1998 = vmatprep.subr.mxu0 0.0
    %1999 = vmatpush1.msra.mxu0 0.0
    %2000 = vmatprep.subr.mxu0 0.0
    %2001 = vmatpush1.msra.mxu0 0.0
    %2002 = vmatprep.subr.mxu0 0.0
    %2003 = vmatpush1.msra.mxu0 0.0
    %2004 = vmatprep.subr.mxu0 0.0
    %2005 = vmatpush1.msra.mxu0 0.0
    %2006 = vmatprep.subr.mxu0 0.0
    %2007 = vmatpush1.msra.mxu0 0.0
    %2008 = vmatprep.subr.mxu0 0.0
    %2009 = vmatpush1.msra.mxu0 0.0
    %2010 = vmatprep.subr.mxu0 0.0
    %2011 = vmatpush1.msra.mxu0 0.0
    %2012 = vmatprep.subr.mxu0 0.0
    %2013 = vmatpush1.msra.mxu0 0.0
    %2014 = vmatprep.subr.mxu0 0.0
    %2015 = vmatpush1.msra.mxu0 0.0
    %2016 = vmatprep.subr.mxu0 0.0
    %2017 = vmatpush1.msra.mxu0 0.0
    %2018 = vmatprep.subr.mxu0 0.0
    %2019 = vmatpush1.msra.mxu0 0.0
    %2020 = vmatprep.subr.mxu0 0.0
    %2021 = vmatpush1.msra.mxu0 0.0
    %2022 = vmatprep.subr.mxu0 0.0
    %2023 = vmatpush1.msra.mxu0 0.0
    %2024 = vmatprep.subr.mxu0 0.0
    %2025 = vmatpush1.msra.mxu0 0.0
    %2026 = vmatprep.subr.mxu0 0.0
    %2027 = vmatpush1.msra.mxu0 0.0
    %2028 = vmatprep.subr.mxu0 0.0
    %2029 = vmatpush1.msra.mxu0 0.0
    %2030 = vmatprep.subr.mxu0 0.0
    %2031 = vmatpush1.msra.mxu0 0.0
    %2032 = vmatprep.subr.mxu0 0.0
    %2033 = vmatpush1.msra.mxu0 0.0
    %2034 = vmatprep.subr.mxu0 0.0
    %2035 = vmatpush1.msra.mxu0 0.0
    %2036 = vmatprep.subr.mxu0 0.0
    %2037 = vmatpush1.msra.mxu0 0.0
    %2038 = vmatprep.subr.mxu0 0.0
    %2039 = vmatpush1.msra.mxu0 0.0
    %2040 = vmatprep.mubr.f32.mxu0 0.0
    %2041 = vmatmul.mubr.f32.gmra.mrb[0].mxu0 %v1971
    %v2042 = vpop.f32.mrb[0].mxu0
    %v2043 = vadd.f32 0.0, %v2042
    %v2044 = vpop.f32.mrb[0].mxu0
    %2045 = vmatprep.mubr.f32.mxu0 0.0
    %2046 = vmatmul.mubr.f32.gmra.mrb[0].mxu0 %v1974
    %v2047 = vpop.f32.mrb[0].mxu0
    %v2048 = vadd.f32 0.0, %v2047
    %v2049 = vpop.f32.mrb[0].mxu0
    %2050 = vdwg.mxu0
    %2053 = vrot.lane.b32.xlu0 %v2043, 8
    %v2054 = vpop.permute.xlu0 %2053
    %2055 = vrot.lane.b32.xlu0 %v2048, 8
    %v2056 = vpop.permute.xlu0 %2055
    %2059 = vst.msk [vmem:[#allocation2] sm:$0xff] %vm683, %v2054
    %2060 = vst.msk [vmem:[#allocation2 + $0x8] sm:$0xff] %vm683, %v2056
    %2061 = vrot.lane.b32.xlu0 %v1543, 112
    %v2062 = vpop.permute.xlu0 %2061
    %2063 = vrot.lane.b32.xlu0 %v1548, 112
    %v2064 = vpop.permute.xlu0 %2063
    %2065 = vrot.lane.b32.xlu0 %v1637, 112
    %v2066 = vpop.permute.xlu0 %2065
    %2067 = vrot.lane.b32.xlu0 %v1642, 112
    %v2068 = vpop.permute.xlu0 %2067
    %v2069 = vsel %vm267, %v2062, 0
    %v2071 = vsel %vm267, %v2064, 0
    %v2073 = vsel %vm267, %v2066, 0
    %v2075 = vsel %vm267, %v2068, 0
    %2077 = vmatprep.subr.mxu0 0.0
    %2078 = vmatpush1.xpose.msra.mxu0 %v2073
    %2079 = vmatprep.subr.mxu0 0.0
    %2080 = vmatpush1.xpose.msra.mxu0 %v2075
    %2081 = vmatprep.subr.mxu0 0.0
    %2082 = vmatpush1.xpose.msra.mxu0 0.0
    %2083 = vmatprep.subr.mxu0 0.0
    %2084 = vmatpush1.xpose.msra.mxu0 0.0
    %2085 = vmatprep.subr.mxu0 0.0
    %2086 = vmatpush1.xpose.msra.mxu0 0.0
    %2087 = vmatprep.subr.mxu0 0.0
    %2088 = vmatpush1.xpose.msra.mxu0 0.0
    %2089 = vmatprep.subr.mxu0 0.0
    %2090 = vmatpush1.xpose.msra.mxu0 0.0
    %2091 = vmatprep.subr.mxu0 0.0
    %2092 = vmatpush1.xpose.msra.mxu0 0.0
    %2093 = vmatprep.subr.mxu0 0.0
    %2094 = vmatpush1.xpose.msra.mxu0 0.0
    %2095 = vmatprep.subr.mxu0 0.0
    %2096 = vmatpush1.xpose.msra.mxu0 0.0
    %2097 = vmatprep.subr.mxu0 0.0
    %2098 = vmatpush1.xpose.msra.mxu0 0.0
    %2099 = vmatprep.subr.mxu0 0.0
    %2100 = vmatpush1.xpose.msra.mxu0 0.0
    %2101 = vmatprep.subr.mxu0 0.0
    %2102 = vmatpush1.xpose.msra.mxu0 0.0
    %2103 = vmatprep.subr.mxu0 0.0
    %2104 = vmatpush1.xpose.msra.mxu0 0.0
    %2105 = vmatprep.subr.mxu0 0.0
    %2106 = vmatpush1.xpose.msra.mxu0 0.0
    %2107 = vmatprep.subr.mxu0 0.0
    %2108 = vmatpush1.xpose.msra.mxu0 0.0
    %2109 = vmatprep.subr.mxu0 0.0
    %2110 = vmatpush1.xpose.msra.mxu0 0.0
    %2111 = vmatprep.subr.mxu0 0.0
    %2112 = vmatpush1.xpose.msra.mxu0 0.0
    %2113 = vmatprep.subr.mxu0 0.0
    %2114 = vmatpush1.xpose.msra.mxu0 0.0
    %2115 = vmatprep.subr.mxu0 0.0
    %2116 = vmatpush1.xpose.msra.mxu0 0.0
    %2117 = vmatprep.subr.mxu0 0.0
    %2118 = vmatpush1.xpose.msra.mxu0 0.0
    %2119 = vmatprep.subr.mxu0 0.0
    %2120 = vmatpush1.xpose.msra.mxu0 0.0
    %2121 = vmatprep.subr.mxu0 0.0
    %2122 = vmatpush1.xpose.msra.mxu0 0.0
    %2123 = vmatprep.subr.mxu0 0.0
    %2124 = vmatpush1.xpose.msra.mxu0 0.0
    %2125 = vmatprep.subr.mxu0 0.0
    %2126 = vmatpush1.xpose.msra.mxu0 0.0
    %2127 = vmatprep.subr.mxu0 0.0
    %2128 = vmatpush1.xpose.msra.mxu0 0.0
    %2129 = vmatprep.subr.mxu0 0.0
    %2130 = vmatpush1.xpose.msra.mxu0 0.0
    %2131 = vmatprep.subr.mxu0 0.0
    %2132 = vmatpush1.xpose.msra.mxu0 0.0
    %2133 = vmatprep.subr.mxu0 0.0
    %2134 = vmatpush1.xpose.msra.mxu0 0.0
    %2135 = vmatprep.subr.mxu0 0.0
    %2136 = vmatpush1.xpose.msra.mxu0 0.0
    %2137 = vmatprep.subr.mxu0 0.0
    %2138 = vmatpush1.xpose.msra.mxu0 0.0
    %2139 = vmatprep.subr.mxu0 0.0
    %2140 = vmatpush1.xpose.msra.mxu0 0.0
    %2141 = vmatprep.mubr.f32.mxu0 0.0
    %2142 = vmatmul.mubr.f32.gmra.mrb[0].mxu0 %v2069
    %v2143 = vpop.f32.mrb[0].mxu0
    %v2144 = vadd.f32 0.0, %v2143
    %v2145 = vpop.f32.mrb[0].mxu0
    %2146 = vmatprep.mubr.f32.mxu0 0.0
    %2147 = vmatmul.mubr.f32.gmra.mrb[0].mxu0 %v2071
    %v2148 = vpop.f32.mrb[0].mxu0
    %v2149 = vadd.f32 0.0, %v2148
    %v2150 = vpop.f32.mrb[0].mxu0
    %2151 = vdwg.mxu0
    %v2152 = vmul.f32 %v2144, 0.35355338
    %v2153 = vmul.f32 %v2149, 0.35355338
    %v2154 = vadd.f32 %v2152, %v45
    %v2155 = vadd.f32 %v2153, %v46
    %v2156 = vsel %vm359, %v2154, -inf
    %2157 = vmax.xlane.f32.xlu0 %v2156
    %v2158 = vpop.xlane.xlu0 %2157
    %v2159 = vsel %vm359, %v2155, -inf
    %2160 = vmax.xlane.f32.xlu0 %v2159
    %v2161 = vpop.xlane.xlu0 %2160
    %v2162 = vsub.f32 %v2154, %v2158
    %v2163 = vsub.f32 %v2155, %v2161
    %v2164 = vmul.f32 %v2162, 1.442695
    %v2165 = vpow.pop %v2164
    %v2166 = vmul.f32 %v2163, 1.442695
    %v2167 = vpow.pop %v2166
    %v2168 = vsel %vm359, %v2165, 0.0
    %2169 = vadd.xlane.f32.xlu0 %v2168
    %v2170 = vpop.xlane.xlu0 %2169
    %v2171 = vsel %vm359, %v2167, 0.0
    %2172 = vadd.xlane.f32.xlu0 %v2171
    %v2173 = vpop.xlane.xlu0 %2172
    %v2174 = vrcp.pop %v2170
    %v2175 = vrcp.pop %v2173
    %v2176 = vmul.f32 %v2165, %v2174
    %v2177 = vmul.f32 %v2167, %v2175
    %2178 = vrot.lane.b32.xlu0 %v1637, 80
    %v2179 = vpop.permute.xlu0 %2178
    %2180 = vrot.lane.b32.xlu0 %v1642, 80
    %v2181 = vpop.permute.xlu0 %2180
    %v2185 = vsel %vm359, %v2176, 0
    %v2188 = vsel %vm359, %v2177, 0
    %2190 = vmatprep.subr.mxu0 0.0
    %2191 = vmatpush1.msra.mxu0 %v2179
    %2192 = vmatprep.subr.mxu0 0.0
    %2193 = vmatpush1.msra.mxu0 %v2181
    %2194 = vmatprep.subr.mxu0 0.0
    %2195 = vmatpush1.msra.mxu0 0.0
    %2196 = vmatprep.subr.mxu0 0.0
    %2197 = vmatpush1.msra.mxu0 0.0
    %2198 = vmatprep.subr.mxu0 0.0
    %2199 = vmatpush1.msra.mxu0 0.0
    %2200 = vmatprep.subr.mxu0 0.0
    %2201 = vmatpush1.msra.mxu0 0.0
    %2202 = vmatprep.subr.mxu0 0.0
    %2203 = vmatpush1.msra.mxu0 0.0
    %2204 = vmatprep.subr.mxu0 0.0
    %2205 = vmatpush1.msra.mxu0 0.0
    %2206 = vmatprep.subr.mxu0 0.0
    %2207 = vmatpush1.msra.mxu0 0.0
    %2208 = vmatprep.subr.mxu0 0.0
    %2209 = vmatpush1.msra.mxu0 0.0
    %2210 = vmatprep.subr.mxu0 0.0
    %2211 = vmatpush1.msra.mxu0 0.0
    %2212 = vmatprep.subr.mxu0 0.0
    %2213 = vmatpush1.msra.mxu0 0.0
    %2214 = vmatprep.subr.mxu0 0.0
    %2215 = vmatpush1.msra.mxu0 0.0
    %2216 = vmatprep.subr.mxu0 0.0
    %2217 = vmatpush1.msra.mxu0 0.0
    %2218 = vmatprep.subr.mxu0 0.0
    %2219 = vmatpush1.msra.mxu0 0.0
    %2220 = vmatprep.subr.mxu0 0.0
    %2221 = vmatpush1.msra.mxu0 0.0
    %2222 = vmatprep.subr.mxu0 0.0
    %2223 = vmatpush1.msra.mxu0 0.0
    %2224 = vmatprep.subr.mxu0 0.0
    %2225 = vmatpush1.msra.mxu0 0.0
    %2226 = vmatprep.subr.mxu0 0.0
    %2227 = vmatpush1.msra.mxu0 0.0
    %2228 = vmatprep.subr.mxu0 0.0
    %2229 = vmatpush1.msra.mxu0 0.0
    %2230 = vmatprep.subr.mxu0 0.0
    %2231 = vmatpush1.msra.mxu0 0.0
    %2232 = vmatprep.subr.mxu0 0.0
    %2233 = vmatpush1.msra.mxu0 0.0
    %2234 = vmatprep.subr.mxu0 0.0
    %2235 = vmatpush1.msra.mxu0 0.0
    %2236 = vmatprep.subr.mxu0 0.0
    %2237 = vmatpush1.msra.mxu0 0.0
    %2238 = vmatprep.subr.mxu0 0.0
    %2239 = vmatpush1.msra.mxu0 0.0
    %2240 = vmatprep.subr.mxu0 0.0
    %2241 = vmatpush1.msra.mxu0 0.0
    %2242 = vmatprep.subr.mxu0 0.0
    %2243 = vmatpush1.msra.mxu0 0.0
    %2244 = vmatprep.subr.mxu0 0.0
    %2245 = vmatpush1.msra.mxu0 0.0
    %2246 = vmatprep.subr.mxu0 0.0
    %2247 = vmatpush1.msra.mxu0 0.0
    %2248 = vmatprep.subr.mxu0 0.0
    %2249 = vmatpush1.msra.mxu0 0.0
    %2250 = vmatprep.subr.mxu0 0.0
    %2251 = vmatpush1.msra.mxu0 0.0
    %2252 = vmatprep.subr.mxu0 0.0
    %2253 = vmatpush1.msra.mxu0 0.0
    %2254 = vmatprep.mubr.f32.mxu0 0.0
    %2255 = vmatmul.mubr.f32.gmra.mrb[0].mxu0 %v2185
    %v2256 = vpop.f32.mrb[0].mxu0
    %v2257 = vadd.f32 0.0, %v2256
    %v2258 = vpop.f32.mrb[0].mxu0
    %2259 = vmatprep.mubr.f32.mxu0 0.0
    %2260 = vmatmul.mubr.f32.gmra.mrb[0].mxu0 %v2188
    %v2261 = vpop.f32.mrb[0].mxu0
    %v2262 = vadd.f32 0.0, %v2261
    %v2263 = vpop.f32.mrb[0].mxu0
    %2264 = vdwg.mxu0
    %2267 = vrot.lane.b32.xlu0 %v2257, 16
    %v2268 = vpop.permute.xlu0 %2267
    %2269 = vrot.lane.b32.xlu0 %v2262, 16
    %v2270 = vpop.permute.xlu0 %2269
    %2273 = vst.msk [vmem:[#allocation2] sm:$0xff] %vm898, %v2268
    %2274 = vst.msk [vmem:[#allocation2 + $0x8] sm:$0xff] %vm898, %v2270
    %2275 = vrot.lane.b32.xlu0 %v1543, 104
    %v2276 = vpop.permute.xlu0 %2275
    %2277 = vrot.lane.b32.xlu0 %v1548, 104
    %v2278 = vpop.permute.xlu0 %2277
    %2279 = vrot.lane.b32.xlu0 %v1637, 104
    %v2280 = vpop.permute.xlu0 %2279
    %2281 = vrot.lane.b32.xlu0 %v1642, 104
    %v2282 = vpop.permute.xlu0 %2281
    %v2283 = vsel %vm267, %v2276, 0
    %v2285 = vsel %vm267, %v2278, 0
    %v2287 = vsel %vm267, %v2280, 0
    %v2289 = vsel %vm267, %v2282, 0
    %2291 = vmatprep.subr.mxu0 0.0
    %2292 = vmatpush1.xpose.msra.mxu0 %v2287
    %2293 = vmatprep.subr.mxu0 0.0
    %2294 = vmatpush1.xpose.msra.mxu0 %v2289
    %2295 = vmatprep.subr.mxu0 0.0
    %2296 = vmatpush1.xpose.msra.mxu0 0.0
    %2297 = vmatprep.subr.mxu0 0.0
    %2298 = vmatpush1.xpose.msra.mxu0 0.0
    %2299 = vmatprep.subr.mxu0 0.0
    %2300 = vmatpush1.xpose.msra.mxu0 0.0
    %2301 = vmatprep.subr.mxu0 0.0
    %2302 = vmatpush1.xpose.msra.mxu0 0.0
    %2303 = vmatprep.subr.mxu0 0.0
    %2304 = vmatpush1.xpose.msra.mxu0 0.0
    %2305 = vmatprep.subr.mxu0 0.0
    %2306 = vmatpush1.xpose.msra.mxu0 0.0
    %2307 = vmatprep.subr.mxu0 0.0
    %2308 = vmatpush1.xpose.msra.mxu0 0.0
    %2309 = vmatprep.subr.mxu0 0.0
    %2310 = vmatpush1.xpose.msra.mxu0 0.0
    %2311 = vmatprep.subr.mxu0 0.0
    %2312 = vmatpush1.xpose.msra.mxu0 0.0
    %2313 = vmatprep.subr.mxu0 0.0
    %2314 = vmatpush1.xpose.msra.mxu0 0.0
    %2315 = vmatprep.subr.mxu0 0.0
    %2316 = vmatpush1.xpose.msra.mxu0 0.0
    %2317 = vmatprep.subr.mxu0 0.0
    %2318 = vmatpush1.xpose.msra.mxu0 0.0
    %2319 = vmatprep.subr.mxu0 0.0
    %2320 = vmatpush1.xpose.msra.mxu0 0.0
    %2321 = vmatprep.subr.mxu0 0.0
    %2322 = vmatpush1.xpose.msra.mxu0 0.0
    %2323 = vmatprep.subr.mxu0 0.0
    %2324 = vmatpush1.xpose.msra.mxu0 0.0
    %2325 = vmatprep.subr.mxu0 0.0
    %2326 = vmatpush1.xpose.msra.mxu0 0.0
    %2327 = vmatprep.subr.mxu0 0.0
    %2328 = vmatpush1.xpose.msra.mxu0 0.0
    %2329 = vmatprep.subr.mxu0 0.0
    %2330 = vmatpush1.xpose.msra.mxu0 0.0
    %2331 = vmatprep.subr.mxu0 0.0
    %2332 = vmatpush1.xpose.msra.mxu0 0.0
    %2333 = vmatprep.subr.mxu0 0.0
    %2334 = vmatpush1.xpose.msra.mxu0 0.0
    %2335 = vmatprep.subr.mxu0 0.0
    %2336 = vmatpush1.xpose.msra.mxu0 0.0
    %2337 = vmatprep.subr.mxu0 0.0
    %2338 = vmatpush1.xpose.msra.mxu0 0.0
    %2339 = vmatprep.subr.mxu0 0.0
    %2340 = vmatpush1.xpose.msra.mxu0 0.0
    %2341 = vmatprep.subr.mxu0 0.0
    %2342 = vmatpush1.xpose.msra.mxu0 0.0
    %2343 = vmatprep.subr.mxu0 0.0
    %2344 = vmatpush1.xpose.msra.mxu0 0.0
    %2345 = vmatprep.subr.mxu0 0.0
    %2346 = vmatpush1.xpose.msra.mxu0 0.0
    %2347 = vmatprep.subr.mxu0 0.0
    %2348 = vmatpush1.xpose.msra.mxu0 0.0
    %2349 = vmatprep.subr.mxu0 0.0
    %2350 = vmatpush1.xpose.msra.mxu0 0.0
    %2351 = vmatprep.subr.mxu0 0.0
    %2352 = vmatpush1.xpose.msra.mxu0 0.0
    %2353 = vmatprep.subr.mxu0 0.0
    %2354 = vmatpush1.xpose.msra.mxu0 0.0
    %2355 = vmatprep.mubr.f32.mxu0 0.0
    %2356 = vmatmul.mubr.f32.gmra.mrb[0].mxu0 %v2283
    %v2357 = vpop.f32.mrb[0].mxu0
    %v2358 = vadd.f32 0.0, %v2357
    %v2359 = vpop.f32.mrb[0].mxu0
    %2360 = vmatprep.mubr.f32.mxu0 0.0
    %2361 = vmatmul.mubr.f32.gmra.mrb[0].mxu0 %v2285
    %v2362 = vpop.f32.mrb[0].mxu0
    %v2363 = vadd.f32 0.0, %v2362
    %v2364 = vpop.f32.mrb[0].mxu0
    %2365 = vdwg.mxu0
    %v2366 = vmul.f32 %v2358, 0.35355338
    %v2367 = vmul.f32 %v2363, 0.35355338
    %v2368 = vadd.f32 %v2366, %v45
    %v2369 = vadd.f32 %v2367, %v46
    %v2370 = vsel %vm359, %v2368, -inf
    %2371 = vmax.xlane.f32.xlu0 %v2370
    %v2372 = vpop.xlane.xlu0 %2371
    %v2373 = vsel %vm359, %v2369, -inf
    %2374 = vmax.xlane.f32.xlu0 %v2373
    %v2375 = vpop.xlane.xlu0 %2374
    %v2376 = vsub.f32 %v2368, %v2372
    %v2377 = vsub.f32 %v2369, %v2375
    %v2378 = vmul.f32 %v2376, 1.442695
    %v2379 = vpow.pop %v2378
    %v2380 = vmul.f32 %v2377, 1.442695
    %v2381 = vpow.pop %v2380
    %v2382 = vsel %vm359, %v2379, 0.0
    %2383 = vadd.xlane.f32.xlu0 %v2382
    %v2384 = vpop.xlane.xlu0 %2383
    %v2385 = vsel %vm359, %v2381, 0.0
    %2386 = vadd.xlane.f32.xlu0 %v2385
    %v2387 = vpop.xlane.xlu0 %2386
    %v2388 = vrcp.pop %v2384
    %v2389 = vrcp.pop %v2387
    %v2390 = vmul.f32 %v2379, %v2388
    %v2391 = vmul.f32 %v2381, %v2389
    %2392 = vrot.lane.b32.xlu0 %v1637, 72
    %v2393 = vpop.permute.xlu0 %2392
    %2394 = vrot.lane.b32.xlu0 %v1642, 72
    %v2395 = vpop.permute.xlu0 %2394
    %v2399 = vsel %vm359, %v2390, 0
    %v2402 = vsel %vm359, %v2391, 0
    %2404 = vmatprep.subr.mxu0 0.0
    %2405 = vmatpush1.msra.mxu0 %v2393
    %2406 = vmatprep.subr.mxu0 0.0
    %2407 = vmatpush1.msra.mxu0 %v2395
    %2408 = vmatprep.subr.mxu0 0.0
    %2409 = vmatpush1.msra.mxu0 0.0
    %2410 = vmatprep.subr.mxu0 0.0
    %2411 = vmatpush1.msra.mxu0 0.0
    %2412 = vmatprep.subr.mxu0 0.0
    %2413 = vmatpush1.msra.mxu0 0.0
    %2414 = vmatprep.subr.mxu0 0.0
    %2415 = vmatpush1.msra.mxu0 0.0
    %2416 = vmatprep.subr.mxu0 0.0
    %2417 = vmatpush1.msra.mxu0 0.0
    %2418 = vmatprep.subr.mxu0 0.0
    %2419 = vmatpush1.msra.mxu0 0.0
    %2420 = vmatprep.subr.mxu0 0.0
    %2421 = vmatpush1.msra.mxu0 0.0
    %2422 = vmatprep.subr.mxu0 0.0
    %2423 = vmatpush1.msra.mxu0 0.0
    %2424 = vmatprep.subr.mxu0 0.0
    %2425 = vmatpush1.msra.mxu0 0.0
    %2426 = vmatprep.subr.mxu0 0.0
    %2427 = vmatpush1.msra.mxu0 0.0
    %2428 = vmatprep.subr.mxu0 0.0
    %2429 = vmatpush1.msra.mxu0 0.0
    %2430 = vmatprep.subr.mxu0 0.0
    %2431 = vmatpush1.msra.mxu0 0.0
    %2432 = vmatprep.subr.mxu0 0.0
    %2433 = vmatpush1.msra.mxu0 0.0
    %2434 = vmatprep.subr.mxu0 0.0
    %2435 = vmatpush1.msra.mxu0 0.0
    %2436 = vmatprep.subr.mxu0 0.0
    %2437 = vmatpush1.msra.mxu0 0.0
    %2438 = vmatprep.subr.mxu0 0.0
    %2439 = vmatpush1.msra.mxu0 0.0
    %2440 = vmatprep.subr.mxu0 0.0
    %2441 = vmatpush1.msra.mxu0 0.0
    %2442 = vmatprep.subr.mxu0 0.0
    %2443 = vmatpush1.msra.mxu0 0.0
    %2444 = vmatprep.subr.mxu0 0.0
    %2445 = vmatpush1.msra.mxu0 0.0
    %2446 = vmatprep.subr.mxu0 0.0
    %2447 = vmatpush1.msra.mxu0 0.0
    %2448 = vmatprep.subr.mxu0 0.0
    %2449 = vmatpush1.msra.mxu0 0.0
    %2450 = vmatprep.subr.mxu0 0.0
    %2451 = vmatpush1.msra.mxu0 0.0
    %2452 = vmatprep.subr.mxu0 0.0
    %2453 = vmatpush1.msra.mxu0 0.0
    %2454 = vmatprep.subr.mxu0 0.0
    %2455 = vmatpush1.msra.mxu0 0.0
    %2456 = vmatprep.subr.mxu0 0.0
    %2457 = vmatpush1.msra.mxu0 0.0
    %2458 = vmatprep.subr.mxu0 0.0
    %2459 = vmatpush1.msra.mxu0 0.0
    %2460 = vmatprep.subr.mxu0 0.0
    %2461 = vmatpush1.msra.mxu0 0.0
    %2462 = vmatprep.subr.mxu0 0.0
    %2463 = vmatpush1.msra.mxu0 0.0
    %2464 = vmatprep.subr.mxu0 0.0
    %2465 = vmatpush1.msra.mxu0 0.0
    %2466 = vmatprep.subr.mxu0 0.0
    %2467 = vmatpush1.msra.mxu0 0.0
    %2468 = vmatprep.mubr.f32.mxu0 0.0
    %2469 = vmatmul.mubr.f32.gmra.mrb[0].mxu0 %v2399
    %v2470 = vpop.f32.mrb[0].mxu0
    %v2471 = vadd.f32 0.0, %v2470
    %v2472 = vpop.f32.mrb[0].mxu0
    %2473 = vmatprep.mubr.f32.mxu0 0.0
    %2474 = vmatmul.mubr.f32.gmra.mrb[0].mxu0 %v2402
    %v2475 = vpop.f32.mrb[0].mxu0
    %v2476 = vadd.f32 0.0, %v2475
    %v2477 = vpop.f32.mrb[0].mxu0
    %2478 = vdwg.mxu0
    %2481 = vrot.lane.b32.xlu0 %v2471, 24
    %v2482 = vpop.permute.xlu0 %2481
    %2483 = vrot.lane.b32.xlu0 %v2476, 24
    %v2484 = vpop.permute.xlu0 %2483
    %2487 = vst.msk [vmem:[#allocation2] sm:$0xff] %vm1113, %v2482
    %2488 = vst.msk [vmem:[#allocation2 + $0x8] sm:$0xff] %vm1113, %v2484
    %v2489 = vld [vmem:[#allocation2] sm:$0xff]
    %v2490 = vld [vmem:[#allocation2 + $0x8] sm:$0xff]
    %2491 = vrot.lane.b32.xlu0 %v1432, 32
    %v2492 = vpop.permute.xlu0 %2491
    %2493 = vrot.lane.b32.xlu0 %v1433, 32
    %v2494 = vpop.permute.xlu0 %2493
    %2495 = vrot.lane.b32.xlu0 %v1434, 32
    %v2496 = vpop.permute.xlu0 %2495
    %2497 = vrot.lane.b32.xlu0 %v1435, 32
    %v2498 = vpop.permute.xlu0 %2497
    %2503 = vrot.lane.b32.xlu0 %v1468, 32
    %v2504 = vpop.permute.xlu0 %2503
    %v2507 = vsel %vm58, %v2489, 0
    %v2510 = vsel %vm58, %v2490, 0
    %2512 = vmatprep.subr.mxu0 0.0
    %2513 = vmatpush1.msra.mxu0 %v2492
    %2514 = vmatprep.subr.mxu0 0.0
    %2515 = vmatpush1.msra.mxu0 %v2494
    %2516 = vmatprep.subr.mxu0 0.0
    %2517 = vmatpush1.msra.mxu0 %v2496
    %2518 = vmatprep.subr.mxu0 0.0
    %2519 = vmatpush1.msra.mxu0 %v2498
    %2520 = vmatprep.subr.mxu0 0.0
    %2521 = vmatpush1.msra.mxu0 0.0
    %2522 = vmatprep.subr.mxu0 0.0
    %2523 = vmatpush1.msra.mxu0 0.0
    %2524 = vmatprep.subr.mxu0 0.0
    %2525 = vmatpush1.msra.mxu0 0.0
    %2526 = vmatprep.subr.mxu0 0.0
    %2527 = vmatpush1.msra.mxu0 0.0
    %2528 = vmatprep.subr.mxu0 0.0
    %2529 = vmatpush1.msra.mxu0 0.0
    %2530 = vmatprep.subr.mxu0 0.0
    %2531 = vmatpush1.msra.mxu0 0.0
    %2532 = vmatprep.subr.mxu0 0.0
    %2533 = vmatpush1.msra.mxu0 0.0
    %2534 = vmatprep.subr.mxu0 0.0
    %2535 = vmatpush1.msra.mxu0 0.0
    %2536 = vmatprep.subr.mxu0 0.0
    %2537 = vmatpush1.msra.mxu0 0.0
    %2538 = vmatprep.subr.mxu0 0.0
    %2539 = vmatpush1.msra.mxu0 0.0
    %2540 = vmatprep.subr.mxu0 0.0
    %2541 = vmatpush1.msra.mxu0 0.0
    %2542 = vmatprep.subr.mxu0 0.0
    %2543 = vmatpush1.msra.mxu0 0.0
    %2544 = vmatprep.subr.mxu0 0.0
    %2545 = vmatpush1.msra.mxu0 0.0
    %2546 = vmatprep.subr.mxu0 0.0
    %2547 = vmatpush1.msra.mxu0 0.0
    %2548 = vmatprep.subr.mxu0 0.0
    %2549 = vmatpush1.msra.mxu0 0.0
    %2550 = vmatprep.subr.mxu0 0.0
    %2551 = vmatpush1.msra.mxu0 0.0
    %2552 = vmatprep.subr.mxu0 0.0
    %2553 = vmatpush1.msra.mxu0 0.0
    %2554 = vmatprep.subr.mxu0 0.0
    %2555 = vmatpush1.msra.mxu0 0.0
    %2556 = vmatprep.subr.mxu0 0.0
    %2557 = vmatpush1.msra.mxu0 0.0
    %2558 = vmatprep.subr.mxu0 0.0
    %2559 = vmatpush1.msra.mxu0 0.0
    %2560 = vmatprep.subr.mxu0 0.0
    %2561 = vmatpush1.msra.mxu0 0.0
    %2562 = vmatprep.subr.mxu0 0.0
    %2563 = vmatpush1.msra.mxu0 0.0
    %2564 = vmatprep.subr.mxu0 0.0
    %2565 = vmatpush1.msra.mxu0 0.0
    %2566 = vmatprep.subr.mxu0 0.0
    %2567 = vmatpush1.msra.mxu0 0.0
    %2568 = vmatprep.subr.mxu0 0.0
    %2569 = vmatpush1.msra.mxu0 0.0
    %2570 = vmatprep.subr.mxu0 0.0
    %2571 = vmatpush1.msra.mxu0 0.0
    %2572 = vmatprep.subr.mxu0 0.0
    %2573 = vmatpush1.msra.mxu0 0.0
    %2574 = vmatprep.subr.mxu0 0.0
    %2575 = vmatpush1.msra.mxu0 0.0
    %2576 = vmatprep.mubr.f32.mxu0 0.0
    %2577 = vmatmul.mubr.f32.gmra.mrb[0].mxu0 %v2507
    %v2578 = vpop.f32.mrb[0].mxu0
    %v2579 = vadd.f32 %v2504, %v2578
    %v2580 = vpop.f32.mrb[0].mxu0
    %2581 = vmatprep.mubr.f32.mxu0 0.0
    %2582 = vmatmul.mubr.f32.gmra.mrb[0].mxu0 %v2510
    %v2583 = vpop.f32.mrb[0].mxu0
    %v2584 = vadd.f32 %v2504, %v2583
    %v2585 = vpop.f32.mrb[0].mxu0
    %2586 = vdwg.mxu0
    %v2587 = vadd.f32 %v2579, %v1429
    %v2588 = vadd.f32 %v2584, %v1430
    %v2589 = vsel %vm58, %v2587, 0.0
    %2590 = vadd.xlane.f32.xlu0 %v2589
    %v2591 = vpop.xlane.xlu0 %2590
    %v2592 = vsel %vm58, %v2588, 0.0
    %2593 = vadd.xlane.f32.xlu0 %v2592
    %v2594 = vpop.xlane.xlu0 %2593
    %v2595 = vmul.f32 %v2591, %v65
    %v2596 = vmul.f32 %v2594, %v65
    %v2597 = vsub.f32 %v2587, %v2595
    %v2598 = vsub.f32 %v2588, %v2596
    %v2599 = vmul.f32 %v2597, %v2597
    %v2600 = vmul.f32 %v2598, %v2598
    %v2601 = vsel %vm58, %v2599, 0.0
    %2602 = vadd.xlane.f32.xlu0 %v2601
    %v2603 = vpop.xlane.xlu0 %2602
    %v2604 = vsel %vm58, %v2600, 0.0
    %2605 = vadd.xlane.f32.xlu0 %v2604
    %v2606 = vpop.xlane.xlu0 %2605
    %v2607 = vmul.f32 %v2603, %v65
    %v2608 = vmul.f32 %v2606, %v65
    %v2609 = vadd.f32 %v2607, 1e-05
    %v2610 = vadd.f32 %v2608, 1e-05
    %v2611 = vrsqrt.pop %v2609
    %v2612 = vrsqrt.pop %v2610
    %v2613 = vmul.f32 %v2597, %v2611
    %v2614 = vmul.f32 %v2598, %v2612
    %s2615 = scalar_lea.vmem %s9, 1
    %v2616 = vld [vmem:[%s2615] sm:$0x1]
    %s2617 = scalar_lea.vmem %s7, 32
    %v2618 = vld [vmem:[%s2617] sm:$0xff]
    %v2619 = vld [vmem:[%s2617 + $0x8] sm:$0xff]
    %v2620 = vld [vmem:[%s2617 + $0x10] sm:$0xff]
    %v2621 = vld [vmem:[%s2617 + $0x18] sm:$0xff]
    %v2623 = vlaneseq
    %v2624 = vshrl.u32 %v2623, 7
    %v2625 = vsub.s32 0, %v2624
    %v2626 = vrot.slane %v2616, %v2625
    %v2629 = vsel %vm58, %v2613, 0
    %v2632 = vsel %vm58, %v2614, 0
    %2634 = vmatprep.subr.mxu0 0.0
    %2635 = vmatpush1.msra.mxu0 %v2618
    %2636 = vmatprep.subr.mxu0 0.0
    %2637 = vmatpush1.msra.mxu0 %v2619
    %2638 = vmatprep.subr.mxu0 0.0
    %2639 = vmatpush1.msra.mxu0 %v2620
    %2640 = vmatprep.subr.mxu0 0.0
    %2641 = vmatpush1.msra.mxu0 %v2621
    %2642 = vmatprep.subr.mxu0 0.0
    %2643 = vmatpush1.msra.mxu0 0.0
    %2644 = vmatprep.subr.mxu0 0.0
    %2645 = vmatpush1.msra.mxu0 0.0
    %2646 = vmatprep.subr.mxu0 0.0
    %2647 = vmatpush1.msra.mxu0 0.0
    %2648 = vmatprep.subr.mxu0 0.0
    %2649 = vmatpush1.msra.mxu0 0.0
    %2650 = vmatprep.subr.mxu0 0.0
    %2651 = vmatpush1.msra.mxu0 0.0
    %2652 = vmatprep.subr.mxu0 0.0
    %2653 = vmatpush1.msra.mxu0 0.0
    %2654 = vmatprep.subr.mxu0 0.0
    %2655 = vmatpush1.msra.mxu0 0.0
    %2656 = vmatprep.subr.mxu0 0.0
    %2657 = vmatpush1.msra.mxu0 0.0
    %2658 = vmatprep.subr.mxu0 0.0
    %2659 = vmatpush1.msra.mxu0 0.0
    %2660 = vmatprep.subr.mxu0 0.0
    %2661 = vmatpush1.msra.mxu0 0.0
    %2662 = vmatprep.subr.mxu0 0.0
    %2663 = vmatpush1.msra.mxu0 0.0
    %2664 = vmatprep.subr.mxu0 0.0
    %2665 = vmatpush1.msra.mxu0 0.0
    %2666 = vmatprep.subr.mxu0 0.0
    %2667 = vmatpush1.msra.mxu0 0.0
    %2668 = vmatprep.subr.mxu0 0.0
    %2669 = vmatpush1.msra.mxu0 0.0
    %2670 = vmatprep.subr.mxu0 0.0
    %2671 = vmatpush1.msra.mxu0 0.0
    %2672 = vmatprep.subr.mxu0 0.0
    %2673 = vmatpush1.msra.mxu0 0.0
    %2674 = vmatprep.subr.mxu0 0.0
    %2675 = vmatpush1.msra.mxu0 0.0
    %2676 = vmatprep.subr.mxu0 0.0
    %2677 = vmatpush1.msra.mxu0 0.0
    %2678 = vmatprep.subr.mxu0 0.0
    %2679 = vmatpush1.msra.mxu0 0.0
    %2680 = vmatprep.subr.mxu0 0.0
    %2681 = vmatpush1.msra.mxu0 0.0
    %2682 = vmatprep.subr.mxu0 0.0
    %2683 = vmatpush1.msra.mxu0 0.0
    %2684 = vmatprep.subr.mxu0 0.0
    %2685 = vmatpush1.msra.mxu0 0.0
    %2686 = vmatprep.subr.mxu0 0.0
    %2687 = vmatpush1.msra.mxu0 0.0
    %2688 = vmatprep.subr.mxu0 0.0
    %2689 = vmatpush1.msra.mxu0 0.0
    %2690 = vmatprep.subr.mxu0 0.0
    %2691 = vmatpush1.msra.mxu0 0.0
    %2692 = vmatprep.subr.mxu0 0.0
    %2693 = vmatpush1.msra.mxu0 0.0
    %2694 = vmatprep.subr.mxu0 0.0
    %2695 = vmatpush1.msra.mxu0 0.0
    %2696 = vmatprep.subr.mxu0 0.0
    %2697 = vmatpush1.msra.mxu0 0.0
    %2698 = vmatprep.mubr.f32.mxu0 0.0
    %2699 = vmatmul.mubr.f32.gmra.mrb[0].mxu0 %v2629
    %v2700 = vpop.f32.mrb[0].mxu0
    %v2701 = vadd.f32 %v2626, %v2700
    %v2702 = vpop.f32.mrb[0].mxu0
    %2703 = vmatprep.mubr.f32.mxu0 0.0
    %2704 = vmatmul.mubr.f32.gmra.mrb[0].mxu0 %v2632
    %v2705 = vpop.f32.mrb[0].mxu0
    %v2706 = vadd.f32 %v2626, %v2705
    %v2707 = vpop.f32.mrb[0].mxu0
    %2708 = vdwg.mxu0
    %v2709 = vmax.f32 %v2701, 0.0
    %v2710 = vmax.f32 %v2706, 0.0
    %s2711 = scalar_lea.vmem %s8, 64
    %v2712 = vld [vmem:[%s2711] sm:$0xff]
    %v2713 = vld [vmem:[%s2711 + $0x8] sm:$0xff]
    %v2714 = vld [vmem:[%s2711 + $0x10] sm:$0xff]
    %v2715 = vld [vmem:[%s2711 + $0x18] sm:$0xff]
    %v2716 = vld [vmem:[%s2711 + $0x20] sm:$0xff]
    %v2717 = vld [vmem:[%s2711 + $0x28] sm:$0xff]
    %v2718 = vld [vmem:[%s2711 + $0x30] sm:$0xff]
    %v2719 = vld [vmem:[%s2711 + $0x38] sm:$0xff]
    %2720 = vrot.lane.b32.xlu0 %v2626, 64
    %v2721 = vpop.permute.xlu0 %2720
    %v2724 = vsel %vm1347, %v2709, 0
    %v2727 = vsel %vm1347, %v2710, 0
    %2729 = vmatprep.subr.mxu0 0.0
    %2730 = vmatpush1.msra.mxu0 %v2712
    %2731 = vmatprep.subr.mxu0 0.0
    %2732 = vmatpush1.msra.mxu0 %v2713
    %2733 = vmatprep.subr.mxu0 0.0
    %2734 = vmatpush1.msra.mxu0 %v2714
    %2735 = vmatprep.subr.mxu0 0.0
    %2736 = vmatpush1.msra.mxu0 %v2715
    %2737 = vmatprep.subr.mxu0 0.0
    %2738 = vmatpush1.msra.mxu0 %v2716
    %2739 = vmatprep.subr.mxu0 0.0
    %2740 = vmatpush1.msra.mxu0 %v2717
    %2741 = vmatprep.subr.mxu0 0.0
    %2742 = vmatpush1.msra.mxu0 %v2718
    %2743 = vmatprep.subr.mxu0 0.0
    %2744 = vmatpush1.msra.mxu0 %v2719
    %2745 = vmatprep.subr.mxu0 0.0
    %2746 = vmatpush1.msra.mxu0 0.0
    %2747 = vmatprep.subr.mxu0 0.0
    %2748 = vmatpush1.msra.mxu0 0.0
    %2749 = vmatprep.subr.mxu0 0.0
    %2750 = vmatpush1.msra.mxu0 0.0
    %2751 = vmatprep.subr.mxu0 0.0
    %2752 = vmatpush1.msra.mxu0 0.0
    %2753 = vmatprep.subr.mxu0 0.0
    %2754 = vmatpush1.msra.mxu0 0.0
    %2755 = vmatprep.subr.mxu0 0.0
    %2756 = vmatpush1.msra.mxu0 0.0
    %2757 = vmatprep.subr.mxu0 0.0
    %2758 = vmatpush1.msra.mxu0 0.0
    %2759 = vmatprep.subr.mxu0 0.0
    %2760 = vmatpush1.msra.mxu0 0.0
    %2761 = vmatprep.subr.mxu0 0.0
    %2762 = vmatpush1.msra.mxu0 0.0
    %2763 = vmatprep.subr.mxu0 0.0
    %2764 = vmatpush1.msra.mxu0 0.0
    %2765 = vmatprep.subr.mxu0 0.0
    %2766 = vmatpush1.msra.mxu0 0.0
    %2767 = vmatprep.subr.mxu0 0.0
    %2768 = vmatpush1.msra.mxu0 0.0
    %2769 = vmatprep.subr.mxu0 0.0
    %2770 = vmatpush1.msra.mxu0 0.0
    %2771 = vmatprep.subr.mxu0 0.0
    %2772 = vmatpush1.msra.mxu0 0.0
    %2773 = vmatprep.subr.mxu0 0.0
    %2774 = vmatpush1.msra.mxu0 0.0
    %2775 = vmatprep.subr.mxu0 0.0
    %2776 = vmatpush1.msra.mxu0 0.0
    %2777 = vmatprep.subr.mxu0 0.0
    %2778 = vmatpush1.msra.mxu0 0.0
    %2779 = vmatprep.subr.mxu0 0.0
    %2780 = vmatpush1.msra.mxu0 0.0
    %2781 = vmatprep.subr.mxu0 0.0
    %2782 = vmatpush1.msra.mxu0 0.0
    %2783 = vmatprep.subr.mxu0 0.0
    %2784 = vmatpush1.msra.mxu0 0.0
    %2785 = vmatprep.subr.mxu0 0.0
    %2786 = vmatpush1.msra.mxu0 0.0
    %2787 = vmatprep.subr.mxu0 0.0
    %2788 = vmatpush1.msra.mxu0 0.0
    %2789 = vmatprep.subr.mxu0 0.0
    %2790 = vmatpush1.msra.mxu0 0.0
    %2791 = vmatprep.subr.mxu0 0.0
    %2792 = vmatpush1.msra.mxu0 0.0
    %2793 = vmatprep.mubr.f32.mxu0 0.0
    %2794 = vmatmul.mubr.f32.gmra.mrb[0].mxu0 %v2724
    %v2795 = vpop.f32.mrb[0].mxu0
    %v2796 = vadd.f32 %v2721, %v2795
    %v2797 = vpop.f32.mrb[0].mxu0
    %2798 = vmatprep.mubr.f32.mxu0 0.0
    %2799 = vmatmul.mubr.f32.gmra.mrb[0].mxu0 %v2727
    %v2800 = vpop.f32.mrb[0].mxu0
    %v2801 = vadd.f32 %v2721, %v2800
    %v2802 = vpop.f32.mrb[0].mxu0
    %2803 = vdwg.mxu0
    %v2804 = vadd.f32 %v2796, %v2587
    %v2805 = vadd.f32 %v2801, %v2588
    %v2806 = vsel %vm58, %v2804, 0.0
    %2807 = vadd.xlane.f32.xlu0 %v2806
    %v2808 = vpop.xlane.xlu0 %2807
    %v2809 = vsel %vm58, %v2805, 0.0
    %2810 = vadd.xlane.f32.xlu0 %v2809
    %v2811 = vpop.xlane.xlu0 %2810
    %v2812 = vmul.f32 %v2808, %v65
    %v2813 = vmul.f32 %v2811, %v65
    %v2814 = vsub.f32 %v2804, %v2812
    %v2815 = vsub.f32 %v2805, %v2813
    %v2816 = vmul.f32 %v2814, %v2814
    %v2817 = vmul.f32 %v2815, %v2815
    %v2818 = vsel %vm58, %v2816, 0.0
    %2819 = vadd.xlane.f32.xlu0 %v2818
    %v2820 = vpop.xlane.xlu0 %2819
    %v2821 = vsel %vm58, %v2817, 0.0
    %2822 = vadd.xlane.f32.xlu0 %v2821
    %v2823 = vpop.xlane.xlu0 %2822
    %v2824 = vmul.f32 %v2820, %v65
    %v2825 = vmul.f32 %v2823, %v65
    %v2826 = vadd.f32 %v2824, 1e-05
    %v2827 = vadd.f32 %v2825, 1e-05
    %v2828 = vrsqrt.pop %v2826
    %v2829 = vrsqrt.pop %v2827
    %v2830 = vmul.f32 %v2814, %v2828
    %v2831 = vmul.f32 %v2815, %v2829
    %v2832 = vld [vmem:[%s10] sm:$0x1]
    %v2833 = vlaneseq
    %v2834 = vshrl.u32 %v2833, 7
    %v2835 = vsub.s32 0, %v2834
    %v2836 = vrot.slane %v2832, %v2835
    %v2837 = vmul.f32 %v2830, %v2836
    %v2838 = vmul.f32 %v2831, %v2836
    %v2839 = vld [vmem:[%s10 + $0x1] sm:$0x1]
    %v2840 = vlaneseq
    %v2841 = vshrl.u32 %v2840, 7
    %v2842 = vsub.s32 0, %v2841
    %v2843 = vrot.slane %v2839, %v2842
    %v2844 = vadd.f32 %v2837, %v2843
    %v2845 = vadd.f32 %v2838, %v2843
    %v2846 = vld [vmem:[%s1] sm:$0xff]
    %v2847 = vld [vmem:[%s1 + $0x8] sm:$0xff]
    %s2848 = scalar_lea.vmem %s5, 64
    %v2849 = vld [vmem:[%s2848] sm:$0xff]
    %v2850 = vld [vmem:[%s2848 + $0x8] sm:$0xff]
    %v2851 = vld [vmem:[%s2848 + $0x10] sm:$0xff]
    %v2852 = vld [vmem:[%s2848 + $0x18] sm:$0xff]
    %s2853 = scalar_lea.vmem %s6, 2
    %v2854 = vld [vmem:[%s2853] sm:$0x1]
    %v2855 = vsel %vm58, %v2846, 0.0
    %2856 = vadd.xlane.f32.xlu0 %v2855
    %v2857 = vpop.xlane.xlu0 %2856
    %v2858 = vsel %vm58, %v2847, 0.0
    %2859 = vadd.xlane.f32.xlu0 %v2858
    %v2860 = vpop.xlane.xlu0 %2859
    %v2861 = vmul.f32 %v2857, %v65
    %v2862 = vmul.f32 %v2860, %v65
    %v2863 = vsub.f32 %v2846, %v2861
    %v2864 = vsub.f32 %v2847, %v2862
    %v2865 = vmul.f32 %v2863, %v2863
    %v2866 = vmul.f32 %v2864, %v2864
    %v2867 = vsel %vm58, %v2865, 0.0
    %2868 = vadd.xlane.f32.xlu0 %v2867
    %v2869 = vpop.xlane.xlu0 %2868
    %v2870 = vsel %vm58, %v2866, 0.0
    %2871 = vadd.xlane.f32.xlu0 %v2870
    %v2872 = vpop.xlane.xlu0 %2871
    %v2873 = vmul.f32 %v2869, %v65
    %v2874 = vmul.f32 %v2872, %v65
    %v2875 = vadd.f32 %v2873, 1e-05
    %v2876 = vadd.f32 %v2874, 1e-05
    %v2877 = vrsqrt.pop %v2875
    %v2878 = vrsqrt.pop %v2876
    %v2879 = vmul.f32 %v2863, %v2877
    %v2880 = vmul.f32 %v2864, %v2878
    %v2882 = vlaneseq
    %v2883 = vshrl.u32 %v2882, 7
    %v2884 = vsub.s32 0, %v2883
    %v2885 = vrot.slane %v2854, %v2884
    %v2888 = vsel %vm58, %v2879, 0
    %v2891 = vsel %vm58, %v2880, 0
    %2893 = vmatprep.subr.mxu0 0.0
    %2894 = vmatpush1.msra.mxu0 %v2849
    %2895 = vmatprep.subr.mxu0 0.0
    %2896 = vmatpush1.msra.mxu0 %v2850
    %2897 = vmatprep.subr.mxu0 0.0
    %2898 = vmatpush1.msra.mxu0 %v2851
    %2899 = vmatprep.subr.mxu0 0.0
    %2900 = vmatpush1.msra.mxu0 %v2852
    %2901 = vmatprep.subr.mxu0 0.0
    %2902 = vmatpush1.msra.mxu0 0.0
    %2903 = vmatprep.subr.mxu0 0.0
    %2904 = vmatpush1.msra.mxu0 0.0
    %2905 = vmatprep.subr.mxu0 0.0
    %2906 = vmatpush1.msra.mxu0 0.0
    %2907 = vmatprep.subr.mxu0 0.0
    %2908 = vmatpush1.msra.mxu0 0.0
    %2909 = vmatprep.subr.mxu0 0.0
    %2910 = vmatpush1.msra.mxu0 0.0
    %2911 = vmatprep.subr.mxu0 0.0
    %2912 = vmatpush1.msra.mxu0 0.0
    %2913 = vmatprep.subr.mxu0 0.0
    %2914 = vmatpush1.msra.mxu0 0.0
    %2915 = vmatprep.subr.mxu0 0.0
    %2916 = vmatpush1.msra.mxu0 0.0
    %2917 = vmatprep.subr.mxu0 0.0
    %2918 = vmatpush1.msra.mxu0 0.0
    %2919 = vmatprep.subr.mxu0 0.0
    %2920 = vmatpush1.msra.mxu0 0.0
    %2921 = vmatprep.subr.mxu0 0.0
    %2922 = vmatpush1.msra.mxu0 0.0
    %2923 = vmatprep.subr.mxu0 0.0
    %2924 = vmatpush1.msra.mxu0 0.0
    %2925 = vmatprep.subr.mxu0 0.0
    %2926 = vmatpush1.msra.mxu0 0.0
    %2927 = vmatprep.subr.mxu0 0.0
    %2928 = vmatpush1.msra.mxu0 0.0
    %2929 = vmatprep.subr.mxu0 0.0
    %2930 = vmatpush1.msra.mxu0 0.0
    %2931 = vmatprep.subr.mxu0 0.0
    %2932 = vmatpush1.msra.mxu0 0.0
    %2933 = vmatprep.subr.mxu0 0.0
    %2934 = vmatpush1.msra.mxu0 0.0
    %2935 = vmatprep.subr.mxu0 0.0
    %2936 = vmatpush1.msra.mxu0 0.0
    %2937 = vmatprep.subr.mxu0 0.0
    %2938 = vmatpush1.msra.mxu0 0.0
    %2939 = vmatprep.subr.mxu0 0.0
    %2940 = vmatpush1.msra.mxu0 0.0
    %2941 = vmatprep.subr.mxu0 0.0
    %2942 = vmatpush1.msra.mxu0 0.0
    %2943 = vmatprep.subr.mxu0 0.0
    %2944 = vmatpush1.msra.mxu0 0.0
    %2945 = vmatprep.subr.mxu0 0.0
    %2946 = vmatpush1.msra.mxu0 0.0
    %2947 = vmatprep.subr.mxu0 0.0
    %2948 = vmatpush1.msra.mxu0 0.0
    %2949 = vmatprep.subr.mxu0 0.0
    %2950 = vmatpush1.msra.mxu0 0.0
    %2951 = vmatprep.subr.mxu0 0.0
    %2952 = vmatpush1.msra.mxu0 0.0
    %2953 = vmatprep.subr.mxu0 0.0
    %2954 = vmatpush1.msra.mxu0 0.0
    %2955 = vmatprep.subr.mxu0 0.0
    %2956 = vmatpush1.msra.mxu0 0.0
    %2957 = vmatprep.mubr.f32.mxu0 0.0
    %2958 = vmatmul.mubr.f32.gmra.mrb[0].mxu0 %v2888
    %v2959 = vpop.f32.mrb[0].mxu0
    %v2960 = vadd.f32 %v2885, %v2959
    %v2961 = vpop.f32.mrb[0].mxu0
    %2962 = vmatprep.mubr.f32.mxu0 0.0
    %2963 = vmatmul.mubr.f32.gmra.mrb[0].mxu0 %v2891
    %v2964 = vpop.f32.mrb[0].mxu0
    %v2965 = vadd.f32 %v2885, %v2964
    %v2966 = vpop.f32.mrb[0].mxu0
    %2967 = vdwg.mxu0
    %2972 = vrot.lane.b32.xlu0 %v2849, 96
    %v2973 = vpop.permute.xlu0 %2972
    %2974 = vrot.lane.b32.xlu0 %v2850, 96
    %v2975 = vpop.permute.xlu0 %2974
    %2976 = vrot.lane.b32.xlu0 %v2851, 96
    %v2977 = vpop.permute.xlu0 %2976
    %2978 = vrot.lane.b32.xlu0 %v2852, 96
    %v2979 = vpop.permute.xlu0 %2978
    %2984 = vrot.lane.b32.xlu0 %v2885, 96
    %v2985 = vpop.permute.xlu0 %2984
    %2987 = vmatprep.subr.mxu0 0.0
    %2988 = vmatpush1.msra.mxu0 %v2973
    %2989 = vmatprep.subr.mxu0 0.0
    %2990 = vmatpush1.msra.mxu0 %v2975
    %2991 = vmatprep.subr.mxu0 0.0
    %2992 = vmatpush1.msra.mxu0 %v2977
    %2993 = vmatprep.subr.mxu0 0.0
    %2994 = vmatpush1.msra.mxu0 %v2979
    %2995 = vmatprep.subr.mxu0 0.0
    %2996 = vmatpush1.msra.mxu0 0.0
    %2997 = vmatprep.subr.mxu0 0.0
    %2998 = vmatpush1.msra.mxu0 0.0
    %2999 = vmatprep.subr.mxu0 0.0
    %3000 = vmatpush1.msra.mxu0 0.0
    %3001 = vmatprep.subr.mxu0 0.0
    %3002 = vmatpush1.msra.mxu0 0.0
    %3003 = vmatprep.subr.mxu0 0.0
    %3004 = vmatpush1.msra.mxu0 0.0
    %3005 = vmatprep.subr.mxu0 0.0
    %3006 = vmatpush1.msra.mxu0 0.0
    %3007 = vmatprep.subr.mxu0 0.0
    %3008 = vmatpush1.msra.mxu0 0.0
    %3009 = vmatprep.subr.mxu0 0.0
    %3010 = vmatpush1.msra.mxu0 0.0
    %3011 = vmatprep.subr.mxu0 0.0
    %3012 = vmatpush1.msra.mxu0 0.0
    %3013 = vmatprep.subr.mxu0 0.0
    %3014 = vmatpush1.msra.mxu0 0.0
    %3015 = vmatprep.subr.mxu0 0.0
    %3016 = vmatpush1.msra.mxu0 0.0
    %3017 = vmatprep.subr.mxu0 0.0
    %3018 = vmatpush1.msra.mxu0 0.0
    %3019 = vmatprep.subr.mxu0 0.0
    %3020 = vmatpush1.msra.mxu0 0.0
    %3021 = vmatprep.subr.mxu0 0.0
    %3022 = vmatpush1.msra.mxu0 0.0
    %3023 = vmatprep.subr.mxu0 0.0
    %3024 = vmatpush1.msra.mxu0 0.0
    %3025 = vmatprep.subr.mxu0 0.0
    %3026 = vmatpush1.msra.mxu0 0.0
    %3027 = vmatprep.subr.mxu0 0.0
    %3028 = vmatpush1.msra.mxu0 0.0
    %3029 = vmatprep.subr.mxu0 0.0
    %3030 = vmatpush1.msra.mxu0 0.0
    %3031 = vmatprep.subr.mxu0 0.0
    %3032 = vmatpush1.msra.mxu0 0.0
    %3033 = vmatprep.subr.mxu0 0.0
    %3034 = vmatpush1.msra.mxu0 0.0
    %3035 = vmatprep.subr.mxu0 0.0
    %3036 = vmatpush1.msra.mxu0 0.0
    %3037 = vmatprep.subr.mxu0 0.0
    %3038 = vmatpush1.msra.mxu0 0.0
    %3039 = vmatprep.subr.mxu0 0.0
    %3040 = vmatpush1.msra.mxu0 0.0
    %3041 = vmatprep.subr.mxu0 0.0
    %3042 = vmatpush1.msra.mxu0 0.0
    %3043 = vmatprep.subr.mxu0 0.0
    %3044 = vmatpush1.msra.mxu0 0.0
    %3045 = vmatprep.subr.mxu0 0.0
    %3046 = vmatpush1.msra.mxu0 0.0
    %3047 = vmatprep.subr.mxu0 0.0
    %3048 = vmatpush1.msra.mxu0 0.0
    %3049 = vmatprep.subr.mxu0 0.0
    %3050 = vmatpush1.msra.mxu0 0.0
    %3051 = vmatprep.mubr.f32.mxu0 0.0
    %3052 = vmatmul.mubr.f32.gmra.mrb[0].mxu0 %v2888
    %v3053 = vpop.f32.mrb[0].mxu0
    %v3054 = vadd.f32 %v2985, %v3053
    %v3055 = vpop.f32.mrb[0].mxu0
    %3056 = vmatprep.mubr.f32.mxu0 0.0
    %3057 = vmatmul.mubr.f32.gmra.mrb[0].mxu0 %v2891
    %v3058 = vpop.f32.mrb[0].mxu0
    %v3059 = vadd.f32 %v2985, %v3058
    %v3060 = vpop.f32.mrb[0].mxu0
    %3061 = vdwg.mxu0
    %v3063 = vsel %vm267, %v2960, 0
    %v3066 = vsel %vm267, %v2965, 0
    %v3069 = vsel %vm267, %v3054, 0
    %v3072 = vsel %vm267, %v3059, 0
    %3074 = vmatprep.subr.mxu0 0.0
    %3075 = vmatpush1.xpose.msra.mxu0 %v3069
    %3076 = vmatprep.subr.mxu0 0.0
    %3077 = vmatpush1.xpose.msra.mxu0 %v3072
    %3078 = vmatprep.subr.mxu0 0.0
    %3079 = vmatpush1.xpose.msra.mxu0 0.0
    %3080 = vmatprep.subr.mxu0 0.0
    %3081 = vmatpush1.xpose.msra.mxu0 0.0
    %3082 = vmatprep.subr.mxu0 0.0
    %3083 = vmatpush1.xpose.msra.mxu0 0.0
    %3084 = vmatprep.subr.mxu0 0.0
    %3085 = vmatpush1.xpose.msra.mxu0 0.0
    %3086 = vmatprep.subr.mxu0 0.0
    %3087 = vmatpush1.xpose.msra.mxu0 0.0
    %3088 = vmatprep.subr.mxu0 0.0
    %3089 = vmatpush1.xpose.msra.mxu0 0.0
    %3090 = vmatprep.subr.mxu0 0.0
    %3091 = vmatpush1.xpose.msra.mxu0 0.0
    %3092 = vmatprep.subr.mxu0 0.0
    %3093 = vmatpush1.xpose.msra.mxu0 0.0
    %3094 = vmatprep.subr.mxu0 0.0
    %3095 = vmatpush1.xpose.msra.mxu0 0.0
    %3096 = vmatprep.subr.mxu0 0.0
    %3097 = vmatpush1.xpose.msra.mxu0 0.0
    %3098 = vmatprep.subr.mxu0 0.0
    %3099 = vmatpush1.xpose.msra.mxu0 0.0
    %3100 = vmatprep.subr.mxu0 0.0
    %3101 = vmatpush1.xpose.msra.mxu0 0.0
    %3102 = vmatprep.subr.mxu0 0.0
    %3103 = vmatpush1.xpose.msra.mxu0 0.0
    %3104 = vmatprep.subr.mxu0 0.0
    %3105 = vmatpush1.xpose.msra.mxu0 0.0
    %3106 = vmatprep.subr.mxu0 0.0
    %3107 = vmatpush1.xpose.msra.mxu0 0.0
    %3108 = vmatprep.subr.mxu0 0.0
    %3109 = vmatpush1.xpose.msra.mxu0 0.0
    %3110 = vmatprep.subr.mxu0 0.0
    %3111 = vmatpush1.xpose.msra.mxu0 0.0
    %3112 = vmatprep.subr.mxu0 0.0
    %3113 = vmatpush1.xpose.msra.mxu0 0.0
    %3114 = vmatprep.subr.mxu0 0.0
    %3115 = vmatpush1.xpose.msra.mxu0 0.0
    %3116 = vmatprep.subr.mxu0 0.0
    %3117 = vmatpush1.xpose.msra.mxu0 0.0
    %3118 = vmatprep.subr.mxu0 0.0
    %3119 = vmatpush1.xpose.msra.mxu0 0.0
    %3120 = vmatprep.subr.mxu0 0.0
    %3121 = vmatpush1.xpose.msra.mxu0 0.0
    %3122 = vmatprep.subr.mxu0 0.0
    %3123 = vmatpush1.xpose.msra.mxu0 0.0
    %3124 = vmatprep.subr.mxu0 0.0
    %3125 = vmatpush1.xpose.msra.mxu0 0.0
    %3126 = vmatprep.subr.mxu0 0.0
    %3127 = vmatpush1.xpose.msra.mxu0 0.0
    %3128 = vmatprep.subr.mxu0 0.0
    %3129 = vmatpush1.xpose.msra.mxu0 0.0
    %3130 = vmatprep.subr.mxu0 0.0
    %3131 = vmatpush1.xpose.msra.mxu0 0.0
    %3132 = vmatprep.subr.mxu0 0.0
    %3133 = vmatpush1.xpose.msra.mxu0 0.0
    %3134 = vmatprep.subr.mxu0 0.0
    %3135 = vmatpush1.xpose.msra.mxu0 0.0
    %3136 = vmatprep.subr.mxu0 0.0
    %3137 = vmatpush1.xpose.msra.mxu0 0.0
    %3138 = vmatprep.mubr.f32.mxu0 0.0
    %3139 = vmatmul.mubr.f32.gmra.mrb[0].mxu0 %v3063
    %v3140 = vpop.f32.mrb[0].mxu0
    %v3141 = vadd.f32 0.0, %v3140
    %v3142 = vpop.f32.mrb[0].mxu0
    %3143 = vmatprep.mubr.f32.mxu0 0.0
    %3144 = vmatmul.mubr.f32.gmra.mrb[0].mxu0 %v3066
    %v3145 = vpop.f32.mrb[0].mxu0
    %v3146 = vadd.f32 0.0, %v3145
    %v3147 = vpop.f32.mrb[0].mxu0
    %3148 = vdwg.mxu0
    %v3149 = vmul.f32 %v3141, 0.35355338
    %v3150 = vmul.f32 %v3146, 0.35355338
    %v3151 = vadd.f32 %v3149, %v47
    %v3152 = vadd.f32 %v3150, %v48
    %v3153 = vsel %vm359, %v3151, -inf
    %3154 = vmax.xlane.f32.xlu0 %v3153
    %v3155 = vpop.xlane.xlu0 %3154
    %v3156 = vsel %vm359, %v3152, -inf
    %3157 = vmax.xlane.f32.xlu0 %v3156
    %v3158 = vpop.xlane.xlu0 %3157
    %v3159 = vsub.f32 %v3151, %v3155
    %v3160 = vsub.f32 %v3152, %v3158
    %v3161 = vmul.f32 %v3159, 1.442695
    %v3162 = vpow.pop %v3161
    %v3163 = vmul.f32 %v3160, 1.442695
    %v3164 = vpow.pop %v3163
    %v3165 = vsel %vm359, %v3162, 0.0
    %3166 = vadd.xlane.f32.xlu0 %v3165
    %v3167 = vpop.xlane.xlu0 %3166
    %v3168 = vsel %vm359, %v3164, 0.0
    %3169 = vadd.xlane.f32.xlu0 %v3168
    %v3170 = vpop.xlane.xlu0 %3169
    %v3171 = vrcp.pop %v3167
    %v3172 = vrcp.pop %v3170
    %v3173 = vmul.f32 %v3162, %v3171
    %v3174 = vmul.f32 %v3164, %v3172
    %3175 = vrot.lane.b32.xlu0 %v3054, 96
    %v3176 = vpop.permute.xlu0 %3175
    %3177 = vrot.lane.b32.xlu0 %v3059, 96
    %v3178 = vpop.permute.xlu0 %3177
    %v3182 = vsel %vm359, %v3173, 0
    %v3185 = vsel %vm359, %v3174, 0
    %3187 = vmatprep.subr.mxu0 0.0
    %3188 = vmatpush1.msra.mxu0 %v3176
    %3189 = vmatprep.subr.mxu0 0.0
    %3190 = vmatpush1.msra.mxu0 %v3178
    %3191 = vmatprep.subr.mxu0 0.0
    %3192 = vmatpush1.msra.mxu0 0.0
    %3193 = vmatprep.subr.mxu0 0.0
    %3194 = vmatpush1.msra.mxu0 0.0
    %3195 = vmatprep.subr.mxu0 0.0
    %3196 = vmatpush1.msra.mxu0 0.0
    %3197 = vmatprep.subr.mxu0 0.0
    %3198 = vmatpush1.msra.mxu0 0.0
    %3199 = vmatprep.subr.mxu0 0.0
    %3200 = vmatpush1.msra.mxu0 0.0
    %3201 = vmatprep.subr.mxu0 0.0
    %3202 = vmatpush1.msra.mxu0 0.0
    %3203 = vmatprep.subr.mxu0 0.0
    %3204 = vmatpush1.msra.mxu0 0.0
    %3205 = vmatprep.subr.mxu0 0.0
    %3206 = vmatpush1.msra.mxu0 0.0
    %3207 = vmatprep.subr.mxu0 0.0
    %3208 = vmatpush1.msra.mxu0 0.0
    %3209 = vmatprep.subr.mxu0 0.0
    %3210 = vmatpush1.msra.mxu0 0.0
    %3211 = vmatprep.subr.mxu0 0.0
    %3212 = vmatpush1.msra.mxu0 0.0
    %3213 = vmatprep.subr.mxu0 0.0
    %3214 = vmatpush1.msra.mxu0 0.0
    %3215 = vmatprep.subr.mxu0 0.0
    %3216 = vmatpush1.msra.mxu0 0.0
    %3217 = vmatprep.subr.mxu0 0.0
    %3218 = vmatpush1.msra.mxu0 0.0
    %3219 = vmatprep.subr.mxu0 0.0
    %3220 = vmatpush1.msra.mxu0 0.0
    %3221 = vmatprep.subr.mxu0 0.0
    %3222 = vmatpush1.msra.mxu0 0.0
    %3223 = vmatprep.subr.mxu0 0.0
    %3224 = vmatpush1.msra.mxu0 0.0
    %3225 = vmatprep.subr.mxu0 0.0
    %3226 = vmatpush1.msra.mxu0 0.0
    %3227 = vmatprep.subr.mxu0 0.0
    %3228 = vmatpush1.msra.mxu0 0.0
    %3229 = vmatprep.subr.mxu0 0.0
    %3230 = vmatpush1.msra.mxu0 0.0
    %3231 = vmatprep.subr.mxu0 0.0
    %3232 = vmatpush1.msra.mxu0 0.0
    %3233 = vmatprep.subr.mxu0 0.0
    %3234 = vmatpush1.msra.mxu0 0.0
    %3235 = vmatprep.subr.mxu0 0.0
    %3236 = vmatpush1.msra.mxu0 0.0
    %3237 = vmatprep.subr.mxu0 0.0
    %3238 = vmatpush1.msra.mxu0 0.0
    %3239 = vmatprep.subr.mxu0 0.0
    %3240 = vmatpush1.msra.mxu0 0.0
    %3241 = vmatprep.subr.mxu0 0.0
    %3242 = vmatpush1.msra.mxu0 0.0
    %3243 = vmatprep.subr.mxu0 0.0
    %3244 = vmatpush1.msra.mxu0 0.0
    %3245 = vmatprep.subr.mxu0 0.0
    %3246 = vmatpush1.msra.mxu0 0.0
    %3247 = vmatprep.subr.mxu0 0.0
    %3248 = vmatpush1.msra.mxu0 0.0
    %3249 = vmatprep.subr.mxu0 0.0
    %3250 = vmatpush1.msra.mxu0 0.0
    %3251 = vmatprep.mubr.f32.mxu0 0.0
    %3252 = vmatmul.mubr.f32.gmra.mrb[0].mxu0 %v3182
    %v3253 = vpop.f32.mrb[0].mxu0
    %v3254 = vadd.f32 0.0, %v3253
    %v3255 = vpop.f32.mrb[0].mxu0
    %3256 = vmatprep.mubr.f32.mxu0 0.0
    %3257 = vmatmul.mubr.f32.gmra.mrb[0].mxu0 %v3185
    %v3258 = vpop.f32.mrb[0].mxu0
    %v3259 = vadd.f32 0.0, %v3258
    %v3260 = vpop.f32.mrb[0].mxu0
    %3261 = vdwg.mxu0
    %3262 = vst.msk [vmem:[#allocation2] sm:$0xff] %vm267, %v3254
    %3263 = vst.msk [vmem:[#allocation2 + $0x8] sm:$0xff] %vm267, %v3259
    %3264 = vrot.lane.b32.xlu0 %v2960, 120
    %v3265 = vpop.permute.xlu0 %3264
    %3266 = vrot.lane.b32.xlu0 %v2965, 120
    %v3267 = vpop.permute.xlu0 %3266
    %3268 = vrot.lane.b32.xlu0 %v3054, 120
    %v3269 = vpop.permute.xlu0 %3268
    %3270 = vrot.lane.b32.xlu0 %v3059, 120
    %v3271 = vpop.permute.xlu0 %3270
    %v3272 = vsel %vm267, %v3265, 0
    %v3274 = vsel %vm267, %v3267, 0
    %v3276 = vsel %vm267, %v3269, 0
    %v3278 = vsel %vm267, %v3271, 0
    %3280 = vmatprep.subr.mxu0 0.0
    %3281 = vmatpush1.xpose.msra.mxu0 %v3276
    %3282 = vmatprep.subr.mxu0 0.0
    %3283 = vmatpush1.xpose.msra.mxu0 %v3278
    %3284 = vmatprep.subr.mxu0 0.0
    %3285 = vmatpush1.xpose.msra.mxu0 0.0
    %3286 = vmatprep.subr.mxu0 0.0
    %3287 = vmatpush1.xpose.msra.mxu0 0.0
    %3288 = vmatprep.subr.mxu0 0.0
    %3289 = vmatpush1.xpose.msra.mxu0 0.0
    %3290 = vmatprep.subr.mxu0 0.0
    %3291 = vmatpush1.xpose.msra.mxu0 0.0
    %3292 = vmatprep.subr.mxu0 0.0
    %3293 = vmatpush1.xpose.msra.mxu0 0.0
    %3294 = vmatprep.subr.mxu0 0.0
    %3295 = vmatpush1.xpose.msra.mxu0 0.0
    %3296 = vmatprep.subr.mxu0 0.0
    %3297 = vmatpush1.xpose.msra.mxu0 0.0
    %3298 = vmatprep.subr.mxu0 0.0
    %3299 = vmatpush1.xpose.msra.mxu0 0.0
    %3300 = vmatprep.subr.mxu0 0.0
    %3301 = vmatpush1.xpose.msra.mxu0 0.0
    %3302 = vmatprep.subr.mxu0 0.0
    %3303 = vmatpush1.xpose.msra.mxu0 0.0
    %3304 = vmatprep.subr.mxu0 0.0
    %3305 = vmatpush1.xpose.msra.mxu0 0.0
    %3306 = vmatprep.subr.mxu0 0.0
    %3307 = vmatpush1.xpose.msra.mxu0 0.0
    %3308 = vmatprep.subr.mxu0 0.0
    %3309 = vmatpush1.xpose.msra.mxu0 0.0
    %3310 = vmatprep.subr.mxu0 0.0
    %3311 = vmatpush1.xpose.msra.mxu0 0.0
    %3312 = vmatprep.subr.mxu0 0.0
    %3313 = vmatpush1.xpose.msra.mxu0 0.0
    %3314 = vmatprep.subr.mxu0 0.0
    %3315 = vmatpush1.xpose.msra.mxu0 0.0
    %3316 = vmatprep.subr.mxu0 0.0
    %3317 = vmatpush1.xpose.msra.mxu0 0.0
    %3318 = vmatprep.subr.mxu0 0.0
    %3319 = vmatpush1.xpose.msra.mxu0 0.0
    %3320 = vmatprep.subr.mxu0 0.0
    %3321 = vmatpush1.xpose.msra.mxu0 0.0
    %3322 = vmatprep.subr.mxu0 0.0
    %3323 = vmatpush1.xpose.msra.mxu0 0.0
    %3324 = vmatprep.subr.mxu0 0.0
    %3325 = vmatpush1.xpose.msra.mxu0 0.0
    %3326 = vmatprep.subr.mxu0 0.0
    %3327 = vmatpush1.xpose.msra.mxu0 0.0
    %3328 = vmatprep.subr.mxu0 0.0
    %3329 = vmatpush1.xpose.msra.mxu0 0.0
    %3330 = vmatprep.subr.mxu0 0.0
    %3331 = vmatpush1.xpose.msra.mxu0 0.0
    %3332 = vmatprep.subr.mxu0 0.0
    %3333 = vmatpush1.xpose.msra.mxu0 0.0
    %3334 = vmatprep.subr.mxu0 0.0
    %3335 = vmatpush1.xpose.msra.mxu0 0.0
    %3336 = vmatprep.subr.mxu0 0.0
    %3337 = vmatpush1.xpose.msra.mxu0 0.0
    %3338 = vmatprep.subr.mxu0 0.0
    %3339 = vmatpush1.xpose.msra.mxu0 0.0
    %3340 = vmatprep.subr.mxu0 0.0
    %3341 = vmatpush1.xpose.msra.mxu0 0.0
    %3342 = vmatprep.subr.mxu0 0.0
    %3343 = vmatpush1.xpose.msra.mxu0 0.0
    %3344 = vmatprep.mubr.f32.mxu0 0.0
    %3345 = vmatmul.mubr.f32.gmra.mrb[0].mxu0 %v3272
    %v3346 = vpop.f32.mrb[0].mxu0
    %v3347 = vadd.f32 0.0, %v3346
    %v3348 = vpop.f32.mrb[0].mxu0
    %3349 = vmatprep.mubr.f32.mxu0 0.0
    %3350 = vmatmul.mubr.f32.gmra.mrb[0].mxu0 %v3274
    %v3351 = vpop.f32.mrb[0].mxu0
    %v3352 = vadd.f32 0.0, %v3351
    %v3353 = vpop.f32.mrb[0].mxu0
    %3354 = vdwg.mxu0
    %v3355 = vmul.f32 %v3347, 0.35355338
    %v3356 = vmul.f32 %v3352, 0.35355338
    %v3357 = vadd.f32 %v3355, %v47
    %v3358 = vadd.f32 %v3356, %v48
    %v3359 = vsel %vm359, %v3357, -inf
    %3360 = vmax.xlane.f32.xlu0 %v3359
    %v3361 = vpop.xlane.xlu0 %3360
    %v3362 = vsel %vm359, %v3358, -inf
    %3363 = vmax.xlane.f32.xlu0 %v3362
    %v3364 = vpop.xlane.xlu0 %3363
    %v3365 = vsub.f32 %v3357, %v3361
    %v3366 = vsub.f32 %v3358, %v3364
    %v3367 = vmul.f32 %v3365, 1.442695
    %v3368 = vpow.pop %v3367
    %v3369 = vmul.f32 %v3366, 1.442695
    %v3370 = vpow.pop %v3369
    %v3371 = vsel %vm359, %v3368, 0.0
    %3372 = vadd.xlane.f32.xlu0 %v3371
    %v3373 = vpop.xlane.xlu0 %3372
    %v3374 = vsel %vm359, %v3370, 0.0
    %3375 = vadd.xlane.f32.xlu0 %v3374
    %v3376 = vpop.xlane.xlu0 %3375
    %v3377 = vrcp.pop %v3373
    %v3378 = vrcp.pop %v3376
    %v3379 = vmul.f32 %v3368, %v3377
    %v3380 = vmul.f32 %v3370, %v3378
    %3381 = vrot.lane.b32.xlu0 %v3054, 88
    %v3382 = vpop.permute.xlu0 %3381
    %3383 = vrot.lane.b32.xlu0 %v3059, 88
    %v3384 = vpop.permute.xlu0 %3383
    %v3388 = vsel %vm359, %v3379, 0
    %v3391 = vsel %vm359, %v3380, 0
    %3393 = vmatprep.subr.mxu0 0.0
    %3394 = vmatpush1.msra.mxu0 %v3382
    %3395 = vmatprep.subr.mxu0 0.0
    %3396 = vmatpush1.msra.mxu0 %v3384
    %3397 = vmatprep.subr.mxu0 0.0
    %3398 = vmatpush1.msra.mxu0 0.0
    %3399 = vmatprep.subr.mxu0 0.0
    %3400 = vmatpush1.msra.mxu0 0.0
    %3401 = vmatprep.subr.mxu0 0.0
    %3402 = vmatpush1.msra.mxu0 0.0
    %3403 = vmatprep.subr.mxu0 0.0
    %3404 = vmatpush1.msra.mxu0 0.0
    %3405 = vmatprep.subr.mxu0 0.0
    %3406 = vmatpush1.msra.mxu0 0.0
    %3407 = vmatprep.subr.mxu0 0.0
    %3408 = vmatpush1.msra.mxu0 0.0
    %3409 = vmatprep.subr.mxu0 0.0
    %3410 = vmatpush1.msra.mxu0 0.0
    %3411 = vmatprep.subr.mxu0 0.0
    %3412 = vmatpush1.msra.mxu0 0.0
    %3413 = vmatprep.subr.mxu0 0.0
    %3414 = vmatpush1.msra.mxu0 0.0
    %3415 = vmatprep.subr.mxu0 0.0
    %3416 = vmatpush1.msra.mxu0 0.0
    %3417 = vmatprep.subr.mxu0 0.0
    %3418 = vmatpush1.msra.mxu0 0.0
    %3419 = vmatprep.subr.mxu0 0.0
    %3420 = vmatpush1.msra.mxu0 0.0
    %3421 = vmatprep.subr.mxu0 0.0
    %3422 = vmatpush1.msra.mxu0 0.0
    %3423 = vmatprep.subr.mxu0 0.0
    %3424 = vmatpush1.msra.mxu0 0.0
    %3425 = vmatprep.subr.mxu0 0.0
    %3426 = vmatpush1.msra.mxu0 0.0
    %3427 = vmatprep.subr.mxu0 0.0
    %3428 = vmatpush1.msra.mxu0 0.0
    %3429 = vmatprep.subr.mxu0 0.0
    %3430 = vmatpush1.msra.mxu0 0.0
    %3431 = vmatprep.subr.mxu0 0.0
    %3432 = vmatpush1.msra.mxu0 0.0
    %3433 = vmatprep.subr.mxu0 0.0
    %3434 = vmatpush1.msra.mxu0 0.0
    %3435 = vmatprep.subr.mxu0 0.0
    %3436 = vmatpush1.msra.mxu0 0.0
    %3437 = vmatprep.subr.mxu0 0.0
    %3438 = vmatpush1.msra.mxu0 0.0
    %3439 = vmatprep.subr.mxu0 0.0
    %3440 = vmatpush1.msra.mxu0 0.0
    %3441 = vmatprep.subr.mxu0 0.0
    %3442 = vmatpush1.msra.mxu0 0.0
    %3443 = vmatprep.subr.mxu0 0.0
    %3444 = vmatpush1.msra.mxu0 0.0
    %3445 = vmatprep.subr.mxu0 0.0
    %3446 = vmatpush1.msra.mxu0 0.0
    %3447 = vmatprep.subr.mxu0 0.0
    %3448 = vmatpush1.msra.mxu0 0.0
    %3449 = vmatprep.subr.mxu0 0.0
    %3450 = vmatpush1.msra.mxu0 0.0
    %3451 = vmatprep.subr.mxu0 0.0
    %3452 = vmatpush1.msra.mxu0 0.0
    %3453 = vmatprep.subr.mxu0 0.0
    %3454 = vmatpush1.msra.mxu0 0.0
    %3455 = vmatprep.subr.mxu0 0.0
    %3456 = vmatpush1.msra.mxu0 0.0
    %3457 = vmatprep.mubr.f32.mxu0 0.0
    %3458 = vmatmul.mubr.f32.gmra.mrb[0].mxu0 %v3388
    %v3459 = vpop.f32.mrb[0].mxu0
    %v3460 = vadd.f32 0.0, %v3459
    %v3461 = vpop.f32.mrb[0].mxu0
    %3462 = vmatprep.mubr.f32.mxu0 0.0
    %3463 = vmatmul.mubr.f32.gmra.mrb[0].mxu0 %v3391
    %v3464 = vpop.f32.mrb[0].mxu0
    %v3465 = vadd.f32 0.0, %v3464
    %v3466 = vpop.f32.mrb[0].mxu0
    %3467 = vdwg.mxu0
    %3470 = vrot.lane.b32.xlu0 %v3460, 8
    %v3471 = vpop.permute.xlu0 %3470
    %3472 = vrot.lane.b32.xlu0 %v3465, 8
    %v3473 = vpop.permute.xlu0 %3472
    %3476 = vst.msk [vmem:[#allocation2] sm:$0xff] %vm683, %v3471
    %3477 = vst.msk [vmem:[#allocation2 + $0x8] sm:$0xff] %vm683, %v3473
    %3478 = vrot.lane.b32.xlu0 %v2960, 112
    %v3479 = vpop.permute.xlu0 %3478
    %3480 = vrot.lane.b32.xlu0 %v2965, 112
    %v3481 = vpop.permute.xlu0 %3480
    %3482 = vrot.lane.b32.xlu0 %v3054, 112
    %v3483 = vpop.permute.xlu0 %3482
    %3484 = vrot.lane.b32.xlu0 %v3059, 112
    %v3485 = vpop.permute.xlu0 %3484
    %v3486 = vsel %vm267, %v3479, 0
    %v3488 = vsel %vm267, %v3481, 0
    %v3490 = vsel %vm267, %v3483, 0
    %v3492 = vsel %vm267, %v3485, 0
    %3494 = vmatprep.subr.mxu0 0.0
    %3495 = vmatpush1.xpose.msra.mxu0 %v3490
    %3496 = vmatprep.subr.mxu0 0.0
    %3497 = vmatpush1.xpose.msra.mxu0 %v3492
    %3498 = vmatprep.subr.mxu0 0.0
    %3499 = vmatpush1.xpose.msra.mxu0 0.0
    %3500 = vmatprep.subr.mxu0 0.0
    %3501 = vmatpush1.xpose.msra.mxu0 0.0
    %3502 = vmatprep.subr.mxu0 0.0
    %3503 = vmatpush1.xpose.msra.mxu0 0.0
    %3504 = vmatprep.subr.mxu0 0.0
    %3505 = vmatpush1.xpose.msra.mxu0 0.0
    %3506 = vmatprep.subr.mxu0 0.0
    %3507 = vmatpush1.xpose.msra.mxu0 0.0
    %3508 = vmatprep.subr.mxu0 0.0
    %3509 = vmatpush1.xpose.msra.mxu0 0.0
    %3510 = vmatprep.subr.mxu0 0.0
    %3511 = vmatpush1.xpose.msra.mxu0 0.0
    %3512 = vmatprep.subr.mxu0 0.0
    %3513 = vmatpush1.xpose.msra.mxu0 0.0
    %3514 = vmatprep.subr.mxu0 0.0
    %3515 = vmatpush1.xpose.msra.mxu0 0.0
    %3516 = vmatprep.subr.mxu0 0.0
    %3517 = vmatpush1.xpose.msra.mxu0 0.0
    %3518 = vmatprep.subr.mxu0 0.0
    %3519 = vmatpush1.xpose.msra.mxu0 0.0
    %3520 = vmatprep.subr.mxu0 0.0
    %3521 = vmatpush1.xpose.msra.mxu0 0.0
    %3522 = vmatprep.subr.mxu0 0.0
    %3523 = vmatpush1.xpose.msra.mxu0 0.0
    %3524 = vmatprep.subr.mxu0 0.0
    %3525 = vmatpush1.xpose.msra.mxu0 0.0
    %3526 = vmatprep.subr.mxu0 0.0
    %3527 = vmatpush1.xpose.msra.mxu0 0.0
    %3528 = vmatprep.subr.mxu0 0.0
    %3529 = vmatpush1.xpose.msra.mxu0 0.0
    %3530 = vmatprep.subr.mxu0 0.0
    %3531 = vmatpush1.xpose.msra.mxu0 0.0
    %3532 = vmatprep.subr.mxu0 0.0
    %3533 = vmatpush1.xpose.msra.mxu0 0.0
    %3534 = vmatprep.subr.mxu0 0.0
    %3535 = vmatpush1.xpose.msra.mxu0 0.0
    %3536 = vmatprep.subr.mxu0 0.0
    %3537 = vmatpush1.xpose.msra.mxu0 0.0
    %3538 = vmatprep.subr.mxu0 0.0
    %3539 = vmatpush1.xpose.msra.mxu0 0.0
    %3540 = vmatprep.subr.mxu0 0.0
    %3541 = vmatpush1.xpose.msra.mxu0 0.0
    %3542 = vmatprep.subr.mxu0 0.0
    %3543 = vmatpush1.xpose.msra.mxu0 0.0
    %3544 = vmatprep.subr.mxu0 0.0
    %3545 = vmatpush1.xpose.msra.mxu0 0.0
    %3546 = vmatprep.subr.mxu0 0.0
    %3547 = vmatpush1.xpose.msra.mxu0 0.0
    %3548 = vmatprep.subr.mxu0 0.0
    %3549 = vmatpush1.xpose.msra.mxu0 0.0
    %3550 = vmatprep.subr.mxu0 0.0
    %3551 = vmatpush1.xpose.msra.mxu0 0.0
    %3552 = vmatprep.subr.mxu0 0.0
    %3553 = vmatpush1.xpose.msra.mxu0 0.0
    %3554 = vmatprep.subr.mxu0 0.0
    %3555 = vmatpush1.xpose.msra.mxu0 0.0
    %3556 = vmatprep.subr.mxu0 0.0
    %3557 = vmatpush1.xpose.msra.mxu0 0.0
    %3558 = vmatprep.mubr.f32.mxu0 0.0
    %3559 = vmatmul.mubr.f32.gmra.mrb[0].mxu0 %v3486
    %v3560 = vpop.f32.mrb[0].mxu0
    %v3561 = vadd.f32 0.0, %v3560
    %v3562 = vpop.f32.mrb[0].mxu0
    %3563 = vmatprep.mubr.f32.mxu0 0.0
    %3564 = vmatmul.mubr.f32.gmra.mrb[0].mxu0 %v3488
    %v3565 = vpop.f32.mrb[0].mxu0
    %v3566 = vadd.f32 0.0, %v3565
    %v3567 = vpop.f32.mrb[0].mxu0
    %3568 = vdwg.mxu0
    %v3569 = vmul.f32 %v3561, 0.35355338
    %v3570 = vmul.f32 %v3566, 0.35355338
    %v3571 = vadd.f32 %v3569, %v47
    %v3572 = vadd.f32 %v3570, %v48
    %v3573 = vsel %vm359, %v3571, -inf
    %3574 = vmax.xlane.f32.xlu0 %v3573
    %v3575 = vpop.xlane.xlu0 %3574
    %v3576 = vsel %vm359, %v3572, -inf
    %3577 = vmax.xlane.f32.xlu0 %v3576
    %v3578 = vpop.xlane.xlu0 %3577
    %v3579 = vsub.f32 %v3571, %v3575
    %v3580 = vsub.f32 %v3572, %v3578
    %v3581 = vmul.f32 %v3579, 1.442695
    %v3582 = vpow.pop %v3581
    %v3583 = vmul.f32 %v3580, 1.442695
    %v3584 = vpow.pop %v3583
    %v3585 = vsel %vm359, %v3582, 0.0
    %3586 = vadd.xlane.f32.xlu0 %v3585
    %v3587 = vpop.xlane.xlu0 %3586
    %v3588 = vsel %vm359, %v3584, 0.0
    %3589 = vadd.xlane.f32.xlu0 %v3588
    %v3590 = vpop.xlane.xlu0 %3589
    %v3591 = vrcp.pop %v3587
    %v3592 = vrcp.pop %v3590
    %v3593 = vmul.f32 %v3582, %v3591
    %v3594 = vmul.f32 %v3584, %v3592
    %3595 = vrot.lane.b32.xlu0 %v3054, 80
    %v3596 = vpop.permute.xlu0 %3595
    %3597 = vrot.lane.b32.xlu0 %v3059, 80
    %v3598 = vpop.permute.xlu0 %3597
    %v3602 = vsel %vm359, %v3593, 0
    %v3605 = vsel %vm359, %v3594, 0
    %3607 = vmatprep.subr.mxu0 0.0
    %3608 = vmatpush1.msra.mxu0 %v3596
    %3609 = vmatprep.subr.mxu0 0.0
    %3610 = vmatpush1.msra.mxu0 %v3598
    %3611 = vmatprep.subr.mxu0 0.0
    %3612 = vmatpush1.msra.mxu0 0.0
    %3613 = vmatprep.subr.mxu0 0.0
    %3614 = vmatpush1.msra.mxu0 0.0
    %3615 = vmatprep.subr.mxu0 0.0
    %3616 = vmatpush1.msra.mxu0 0.0
    %3617 = vmatprep.subr.mxu0 0.0
    %3618 = vmatpush1.msra.mxu0 0.0
    %3619 = vmatprep.subr.mxu0 0.0
    %3620 = vmatpush1.msra.mxu0 0.0
    %3621 = vmatprep.subr.mxu0 0.0
    %3622 = vmatpush1.msra.mxu0 0.0
    %3623 = vmatprep.subr.mxu0 0.0
    %3624 = vmatpush1.msra.mxu0 0.0
    %3625 = vmatprep.subr.mxu0 0.0
    %3626 = vmatpush1.msra.mxu0 0.0
    %3627 = vmatprep.subr.mxu0 0.0
    %3628 = vmatpush1.msra.mxu0 0.0
    %3629 = vmatprep.subr.mxu0 0.0
    %3630 = vmatpush1.msra.mxu0 0.0
    %3631 = vmatprep.subr.mxu0 0.0
    %3632 = vmatpush1.msra.mxu0 0.0
    %3633 = vmatprep.subr.mxu0 0.0
    %3634 = vmatpush1.msra.mxu0 0.0
    %3635 = vmatprep.subr.mxu0 0.0
    %3636 = vmatpush1.msra.mxu0 0.0
    %3637 = vmatprep.subr.mxu0 0.0
    %3638 = vmatpush1.msra.mxu0 0.0
    %3639 = vmatprep.subr.mxu0 0.0
    %3640 = vmatpush1.msra.mxu0 0.0
    %3641 = vmatprep.subr.mxu0 0.0
    %3642 = vmatpush1.msra.mxu0 0.0
    %3643 = vmatprep.subr.mxu0 0.0
    %3644 = vmatpush1.msra.mxu0 0.0
    %3645 = vmatprep.subr.mxu0 0.0
    %3646 = vmatpush1.msra.mxu0 0.0
    %3647 = vmatprep.subr.mxu0 0.0
    %3648 = vmatpush1.msra.mxu0 0.0
    %3649 = vmatprep.subr.mxu0 0.0
    %3650 = vmatpush1.msra.mxu0 0.0
    %3651 = vmatprep.subr.mxu0 0.0
    %3652 = vmatpush1.msra.mxu0 0.0
    %3653 = vmatprep.subr.mxu0 0.0
    %3654 = vmatpush1.msra.mxu0 0.0
    %3655 = vmatprep.subr.mxu0 0.0
    %3656 = vmatpush1.msra.mxu0 0.0
    %3657 = vmatprep.subr.mxu0 0.0
    %3658 = vmatpush1.msra.mxu0 0.0
    %3659 = vmatprep.subr.mxu0 0.0
    %3660 = vmatpush1.msra.mxu0 0.0
    %3661 = vmatprep.subr.mxu0 0.0
    %3662 = vmatpush1.msra.mxu0 0.0
    %3663 = vmatprep.subr.mxu0 0.0
    %3664 = vmatpush1.msra.mxu0 0.0
    %3665 = vmatprep.subr.mxu0 0.0
    %3666 = vmatpush1.msra.mxu0 0.0
    %3667 = vmatprep.subr.mxu0 0.0
    %3668 = vmatpush1.msra.mxu0 0.0
    %3669 = vmatprep.subr.mxu0 0.0
    %3670 = vmatpush1.msra.mxu0 0.0
    %3671 = vmatprep.mubr.f32.mxu0 0.0
    %3672 = vmatmul.mubr.f32.gmra.mrb[0].mxu0 %v3602
    %v3673 = vpop.f32.mrb[0].mxu0
    %v3674 = vadd.f32 0.0, %v3673
    %v3675 = vpop.f32.mrb[0].mxu0
    %3676 = vmatprep.mubr.f32.mxu0 0.0
    %3677 = vmatmul.mubr.f32.gmra.mrb[0].mxu0 %v3605
    %v3678 = vpop.f32.mrb[0].mxu0
    %v3679 = vadd.f32 0.0, %v3678
    %v3680 = vpop.f32.mrb[0].mxu0
    %3681 = vdwg.mxu0
    %3684 = vrot.lane.b32.xlu0 %v3674, 16
    %v3685 = vpop.permute.xlu0 %3684
    %3686 = vrot.lane.b32.xlu0 %v3679, 16
    %v3687 = vpop.permute.xlu0 %3686
    %3690 = vst.msk [vmem:[#allocation2] sm:$0xff] %vm898, %v3685
    %3691 = vst.msk [vmem:[#allocation2 + $0x8] sm:$0xff] %vm898, %v3687
    %3692 = vrot.lane.b32.xlu0 %v2960, 104
    %v3693 = vpop.permute.xlu0 %3692
    %3694 = vrot.lane.b32.xlu0 %v2965, 104
    %v3695 = vpop.permute.xlu0 %3694
    %3696 = vrot.lane.b32.xlu0 %v3054, 104
    %v3697 = vpop.permute.xlu0 %3696
    %3698 = vrot.lane.b32.xlu0 %v3059, 104
    %v3699 = vpop.permute.xlu0 %3698
    %v3700 = vsel %vm267, %v3693, 0
    %v3702 = vsel %vm267, %v3695, 0
    %v3704 = vsel %vm267, %v3697, 0
    %v3706 = vsel %vm267, %v3699, 0
    %3708 = vmatprep.subr.mxu0 0.0
    %3709 = vmatpush1.xpose.msra.mxu0 %v3704
    %3710 = vmatprep.subr.mxu0 0.0
    %3711 = vmatpush1.xpose.msra.mxu0 %v3706
    %3712 = vmatprep.subr.mxu0 0.0
    %3713 = vmatpush1.xpose.msra.mxu0 0.0
    %3714 = vmatprep.subr.mxu0 0.0
    %3715 = vmatpush1.xpose.msra.mxu0 0.0
    %3716 = vmatprep.subr.mxu0 0.0
    %3717 = vmatpush1.xpose.msra.mxu0 0.0
    %3718 = vmatprep.subr.mxu0 0.0
    %3719 = vmatpush1.xpose.msra.mxu0 0.0
    %3720 = vmatprep.subr.mxu0 0.0
    %3721 = vmatpush1.xpose.msra.mxu0 0.0
    %3722 = vmatprep.subr.mxu0 0.0
    %3723 = vmatpush1.xpose.msra.mxu0 0.0
    %3724 = vmatprep.subr.mxu0 0.0
    %3725 = vmatpush1.xpose.msra.mxu0 0.0
    %3726 = vmatprep.subr.mxu0 0.0
    %3727 = vmatpush1.xpose.msra.mxu0 0.0
    %3728 = vmatprep.subr.mxu0 0.0
    %3729 = vmatpush1.xpose.msra.mxu0 0.0
    %3730 = vmatprep.subr.mxu0 0.0
    %3731 = vmatpush1.xpose.msra.mxu0 0.0
    %3732 = vmatprep.subr.mxu0 0.0
    %3733 = vmatpush1.xpose.msra.mxu0 0.0
    %3734 = vmatprep.subr.mxu0 0.0
    %3735 = vmatpush1.xpose.msra.mxu0 0.0
    %3736 = vmatprep.subr.mxu0 0.0
    %3737 = vmatpush1.xpose.msra.mxu0 0.0
    %3738 = vmatprep.subr.mxu0 0.0
    %3739 = vmatpush1.xpose.msra.mxu0 0.0
    %3740 = vmatprep.subr.mxu0 0.0
    %3741 = vmatpush1.xpose.msra.mxu0 0.0
    %3742 = vmatprep.subr.mxu0 0.0
    %3743 = vmatpush1.xpose.msra.mxu0 0.0
    %3744 = vmatprep.subr.mxu0 0.0
    %3745 = vmatpush1.xpose.msra.mxu0 0.0
    %3746 = vmatprep.subr.mxu0 0.0
    %3747 = vmatpush1.xpose.msra.mxu0 0.0
    %3748 = vmatprep.subr.mxu0 0.0
    %3749 = vmatpush1.xpose.msra.mxu0 0.0
    %3750 = vmatprep.subr.mxu0 0.0
    %3751 = vmatpush1.xpose.msra.mxu0 0.0
    %3752 = vmatprep.subr.mxu0 0.0
    %3753 = vmatpush1.xpose.msra.mxu0 0.0
    %3754 = vmatprep.subr.mxu0 0.0
    %3755 = vmatpush1.xpose.msra.mxu0 0.0
    %3756 = vmatprep.subr.mxu0 0.0
    %3757 = vmatpush1.xpose.msra.mxu0 0.0
    %3758 = vmatprep.subr.mxu0 0.0
    %3759 = vmatpush1.xpose.msra.mxu0 0.0
    %3760 = vmatprep.subr.mxu0 0.0
    %3761 = vmatpush1.xpose.msra.mxu0 0.0
    %3762 = vmatprep.subr.mxu0 0.0
    %3763 = vmatpush1.xpose.msra.mxu0 0.0
    %3764 = vmatprep.subr.mxu0 0.0
    %3765 = vmatpush1.xpose.msra.mxu0 0.0
    %3766 = vmatprep.subr.mxu0 0.0
    %3767 = vmatpush1.xpose.msra.mxu0 0.0
    %3768 = vmatprep.subr.mxu0 0.0
    %3769 = vmatpush1.xpose.msra.mxu0 0.0
    %3770 = vmatprep.subr.mxu0 0.0
    %3771 = vmatpush1.xpose.msra.mxu0 0.0
    %3772 = vmatprep.mubr.f32.mxu0 0.0
    %3773 = vmatmul.mubr.f32.gmra.mrb[0].mxu0 %v3700
    %v3774 = vpop.f32.mrb[0].mxu0
    %v3775 = vadd.f32 0.0, %v3774
    %v3776 = vpop.f32.mrb[0].mxu0
    %3777 = vmatprep.mubr.f32.mxu0 0.0
    %3778 = vmatmul.mubr.f32.gmra.mrb[0].mxu0 %v3702
    %v3779 = vpop.f32.mrb[0].mxu0
    %v3780 = vadd.f32 0.0, %v3779
    %v3781 = vpop.f32.mrb[0].mxu0
    %3782 = vdwg.mxu0
    %v3783 = vmul.f32 %v3775, 0.35355338
    %v3784 = vmul.f32 %v3780, 0.35355338
    %v3785 = vadd.f32 %v3783, %v47
    %v3786 = vadd.f32 %v3784, %v48
    %v3787 = vsel %vm359, %v3785, -inf
    %3788 = vmax.xlane.f32.xlu0 %v3787
    %v3789 = vpop.xlane.xlu0 %3788
    %v3790 = vsel %vm359, %v3786, -inf
    %3791 = vmax.xlane.f32.xlu0 %v3790
    %v3792 = vpop.xlane.xlu0 %3791
    %v3793 = vsub.f32 %v3785, %v3789
    %v3794 = vsub.f32 %v3786, %v3792
    %v3795 = vmul.f32 %v3793, 1.442695
    %v3796 = vpow.pop %v3795
    %v3797 = vmul.f32 %v3794, 1.442695
    %v3798 = vpow.pop %v3797
    %v3799 = vsel %vm359, %v3796, 0.0
    %3800 = vadd.xlane.f32.xlu0 %v3799
    %v3801 = vpop.xlane.xlu0 %3800
    %v3802 = vsel %vm359, %v3798, 0.0
    %3803 = vadd.xlane.f32.xlu0 %v3802
    %v3804 = vpop.xlane.xlu0 %3803
    %v3805 = vrcp.pop %v3801
    %v3806 = vrcp.pop %v3804
    %v3807 = vmul.f32 %v3796, %v3805
    %v3808 = vmul.f32 %v3798, %v3806
    %3809 = vrot.lane.b32.xlu0 %v3054, 72
    %v3810 = vpop.permute.xlu0 %3809
    %3811 = vrot.lane.b32.xlu0 %v3059, 72
    %v3812 = vpop.permute.xlu0 %3811
    %v3816 = vsel %vm359, %v3807, 0
    %v3819 = vsel %vm359, %v3808, 0
    %3821 = vmatprep.subr.mxu0 0.0
    %3822 = vmatpush1.msra.mxu0 %v3810
    %3823 = vmatprep.subr.mxu0 0.0
    %3824 = vmatpush1.msra.mxu0 %v3812
    %3825 = vmatprep.subr.mxu0 0.0
    %3826 = vmatpush1.msra.mxu0 0.0
    %3827 = vmatprep.subr.mxu0 0.0
    %3828 = vmatpush1.msra.mxu0 0.0
    %3829 = vmatprep.subr.mxu0 0.0
    %3830 = vmatpush1.msra.mxu0 0.0
    %3831 = vmatprep.subr.mxu0 0.0
    %3832 = vmatpush1.msra.mxu0 0.0
    %3833 = vmatprep.subr.mxu0 0.0
    %3834 = vmatpush1.msra.mxu0 0.0
    %3835 = vmatprep.subr.mxu0 0.0
    %3836 = vmatpush1.msra.mxu0 0.0
    %3837 = vmatprep.subr.mxu0 0.0
    %3838 = vmatpush1.msra.mxu0 0.0
    %3839 = vmatprep.subr.mxu0 0.0
    %3840 = vmatpush1.msra.mxu0 0.0
    %3841 = vmatprep.subr.mxu0 0.0
    %3842 = vmatpush1.msra.mxu0 0.0
    %3843 = vmatprep.subr.mxu0 0.0
    %3844 = vmatpush1.msra.mxu0 0.0
    %3845 = vmatprep.subr.mxu0 0.0
    %3846 = vmatpush1.msra.mxu0 0.0
    %3847 = vmatprep.subr.mxu0 0.0
    %3848 = vmatpush1.msra.mxu0 0.0
    %3849 = vmatprep.subr.mxu0 0.0
    %3850 = vmatpush1.msra.mxu0 0.0
    %3851 = vmatprep.subr.mxu0 0.0
    %3852 = vmatpush1.msra.mxu0 0.0
    %3853 = vmatprep.subr.mxu0 0.0
    %3854 = vmatpush1.msra.mxu0 0.0
    %3855 = vmatprep.subr.mxu0 0.0
    %3856 = vmatpush1.msra.mxu0 0.0
    %3857 = vmatprep.subr.mxu0 0.0
    %3858 = vmatpush1.msra.mxu0 0.0
    %3859 = vmatprep.subr.mxu0 0.0
    %3860 = vmatpush1.msra.mxu0 0.0
    %3861 = vmatprep.subr.mxu0 0.0
    %3862 = vmatpush1.msra.mxu0 0.0
    %3863 = vmatprep.subr.mxu0 0.0
    %3864 = vmatpush1.msra.mxu0 0.0
    %3865 = vmatprep.subr.mxu0 0.0
    %3866 = vmatpush1.msra.mxu0 0.0
    %3867 = vmatprep.subr.mxu0 0.0
    %3868 = vmatpush1.msra.mxu0 0.0
    %3869 = vmatprep.subr.mxu0 0.0
    %3870 = vmatpush1.msra.mxu0 0.0
    %3871 = vmatprep.subr.mxu0 0.0
    %3872 = vmatpush1.msra.mxu0 0.0
    %3873 = vmatprep.subr.mxu0 0.0
    %3874 = vmatpush1.msra.mxu0 0.0
    %3875 = vmatprep.subr.mxu0 0.0
    %3876 = vmatpush1.msra.mxu0 0.0
    %3877 = vmatprep.subr.mxu0 0.0
    %3878 = vmatpush1.msra.mxu0 0.0
    %3879 = vmatprep.subr.mxu0 0.0
    %3880 = vmatpush1.msra.mxu0 0.0
    %3881 = vmatprep.subr.mxu0 0.0
    %3882 = vmatpush1.msra.mxu0 0.0
    %3883 = vmatprep.subr.mxu0 0.0
    %3884 = vmatpush1.msra.mxu0 0.0
    %3885 = vmatprep.mubr.f32.mxu0 0.0
    %3886 = vmatmul.mubr.f32.gmra.mrb[0].mxu0 %v3816
    %v3887 = vpop.f32.mrb[0].mxu0
    %v3888 = vadd.f32 0.0, %v3887
    %v3889 = vpop.f32.mrb[0].mxu0
    %3890 = vmatprep.mubr.f32.mxu0 0.0
    %3891 = vmatmul.mubr.f32.gmra.mrb[0].mxu0 %v3819
    %v3892 = vpop.f32.mrb[0].mxu0
    %v3893 = vadd.f32 0.0, %v3892
    %v3894 = vpop.f32.mrb[0].mxu0
    %3895 = vdwg.mxu0
    %3898 = vrot.lane.b32.xlu0 %v3888, 24
    %v3899 = vpop.permute.xlu0 %3898
    %3900 = vrot.lane.b32.xlu0 %v3893, 24
    %v3901 = vpop.permute.xlu0 %3900
    %3904 = vst.msk [vmem:[#allocation2] sm:$0xff] %vm1113, %v3899
    %3905 = vst.msk [vmem:[#allocation2 + $0x8] sm:$0xff] %vm1113, %v3901
    %v3906 = vld [vmem:[#allocation2] sm:$0xff]
    %v3907 = vld [vmem:[#allocation2 + $0x8] sm:$0xff]
    %3908 = vrot.lane.b32.xlu0 %v2849, 32
    %v3909 = vpop.permute.xlu0 %3908
    %3910 = vrot.lane.b32.xlu0 %v2850, 32
    %v3911 = vpop.permute.xlu0 %3910
    %3912 = vrot.lane.b32.xlu0 %v2851, 32
    %v3913 = vpop.permute.xlu0 %3912
    %3914 = vrot.lane.b32.xlu0 %v2852, 32
    %v3915 = vpop.permute.xlu0 %3914
    %3920 = vrot.lane.b32.xlu0 %v2885, 32
    %v3921 = vpop.permute.xlu0 %3920
    %v3924 = vsel %vm58, %v3906, 0
    %v3927 = vsel %vm58, %v3907, 0
    %3929 = vmatprep.subr.mxu0 0.0
    %3930 = vmatpush1.msra.mxu0 %v3909
    %3931 = vmatprep.subr.mxu0 0.0
    %3932 = vmatpush1.msra.mxu0 %v3911
    %3933 = vmatprep.subr.mxu0 0.0
    %3934 = vmatpush1.msra.mxu0 %v3913
    %3935 = vmatprep.subr.mxu0 0.0
    %3936 = vmatpush1.msra.mxu0 %v3915
    %3937 = vmatprep.subr.mxu0 0.0
    %3938 = vmatpush1.msra.mxu0 0.0
    %3939 = vmatprep.subr.mxu0 0.0
    %3940 = vmatpush1.msra.mxu0 0.0
    %3941 = vmatprep.subr.mxu0 0.0
    %3942 = vmatpush1.msra.mxu0 0.0
    %3943 = vmatprep.subr.mxu0 0.0
    %3944 = vmatpush1.msra.mxu0 0.0
    %3945 = vmatprep.subr.mxu0 0.0
    %3946 = vmatpush1.msra.mxu0 0.0
    %3947 = vmatprep.subr.mxu0 0.0
    %3948 = vmatpush1.msra.mxu0 0.0
    %3949 = vmatprep.subr.mxu0 0.0
    %3950 = vmatpush1.msra.mxu0 0.0
    %3951 = vmatprep.subr.mxu0 0.0
    %3952 = vmatpush1.msra.mxu0 0.0
    %3953 = vmatprep.subr.mxu0 0.0
    %3954 = vmatpush1.msra.mxu0 0.0
    %3955 = vmatprep.subr.mxu0 0.0
    %3956 = vmatpush1.msra.mxu0 0.0
    %3957 = vmatprep.subr.mxu0 0.0
    %3958 = vmatpush1.msra.mxu0 0.0
    %3959 = vmatprep.subr.mxu0 0.0
    %3960 = vmatpush1.msra.mxu0 0.0
    %3961 = vmatprep.subr.mxu0 0.0
    %3962 = vmatpush1.msra.mxu0 0.0
    %3963 = vmatprep.subr.mxu0 0.0
    %3964 = vmatpush1.msra.mxu0 0.0
    %3965 = vmatprep.subr.mxu0 0.0
    %3966 = vmatpush1.msra.mxu0 0.0
    %3967 = vmatprep.subr.mxu0 0.0
    %3968 = vmatpush1.msra.mxu0 0.0
    %3969 = vmatprep.subr.mxu0 0.0
    %3970 = vmatpush1.msra.mxu0 0.0
    %3971 = vmatprep.subr.mxu0 0.0
    %3972 = vmatpush1.msra.mxu0 0.0
    %3973 = vmatprep.subr.mxu0 0.0
    %3974 = vmatpush1.msra.mxu0 0.0
    %3975 = vmatprep.subr.mxu0 0.0
    %3976 = vmatpush1.msra.mxu0 0.0
    %3977 = vmatprep.subr.mxu0 0.0
    %3978 = vmatpush1.msra.mxu0 0.0
    %3979 = vmatprep.subr.mxu0 0.0
    %3980 = vmatpush1.msra.mxu0 0.0
    %3981 = vmatprep.subr.mxu0 0.0
    %3982 = vmatpush1.msra.mxu0 0.0
    %3983 = vmatprep.subr.mxu0 0.0
    %3984 = vmatpush1.msra.mxu0 0.0
    %3985 = vmatprep.subr.mxu0 0.0
    %3986 = vmatpush1.msra.mxu0 0.0
    %3987 = vmatprep.subr.mxu0 0.0
    %3988 = vmatpush1.msra.mxu0 0.0
    %3989 = vmatprep.subr.mxu0 0.0
    %3990 = vmatpush1.msra.mxu0 0.0
    %3991 = vmatprep.subr.mxu0 0.0
    %3992 = vmatpush1.msra.mxu0 0.0
    %3993 = vmatprep.mubr.f32.mxu0 0.0
    %3994 = vmatmul.mubr.f32.gmra.mrb[0].mxu0 %v3924
    %v3995 = vpop.f32.mrb[0].mxu0
    %v3996 = vadd.f32 %v3921, %v3995
    %v3997 = vpop.f32.mrb[0].mxu0
    %3998 = vmatprep.mubr.f32.mxu0 0.0
    %3999 = vmatmul.mubr.f32.gmra.mrb[0].mxu0 %v3927
    %v4000 = vpop.f32.mrb[0].mxu0
    %v4001 = vadd.f32 %v3921, %v4000
    %v4002 = vpop.f32.mrb[0].mxu0
    %4003 = vdwg.mxu0
    %v4004 = vadd.f32 %v3996, %v2846
    %v4005 = vadd.f32 %v4001, %v2847
    %s4006 = scalar_lea.vmem %s5, 96
    %v4007 = vld [vmem:[%s4006] sm:$0xff]
    %v4008 = vld [vmem:[%s4006 + $0x8] sm:$0xff]
    %v4009 = vld [vmem:[%s4006 + $0x10] sm:$0xff]
    %v4010 = vld [vmem:[%s4006 + $0x18] sm:$0xff]
    %s4011 = scalar_lea.vmem %s6, 3
    %v4012 = vld [vmem:[%s4011] sm:$0x1]
    %v4013 = vsel %vm58, %v4004, 0.0
    %4014 = vadd.xlane.f32.xlu0 %v4013
    %v4015 = vpop.xlane.xlu0 %4014
    %v4016 = vsel %vm58, %v4005, 0.0
    %4017 = vadd.xlane.f32.xlu0 %v4016
    %v4018 = vpop.xlane.xlu0 %4017
    %v4019 = vmul.f32 %v4015, %v65
    %v4020 = vmul.f32 %v4018, %v65
    %v4021 = vsub.f32 %v4004, %v4019
    %v4022 = vsub.f32 %v4005, %v4020
    %v4023 = vmul.f32 %v4021, %v4021
    %v4024 = vmul.f32 %v4022, %v4022
    %v4025 = vsel %vm58, %v4023, 0.0
    %4026 = vadd.xlane.f32.xlu0 %v4025
    %v4027 = vpop.xlane.xlu0 %4026
    %v4028 = vsel %vm58, %v4024, 0.0
    %4029 = vadd.xlane.f32.xlu0 %v4028
    %v4030 = vpop.xlane.xlu0 %4029
    %v4031 = vmul.f32 %v4027, %v65
    %v4032 = vmul.f32 %v4030, %v65
    %v4033 = vadd.f32 %v4031, 1e-05
    %v4034 = vadd.f32 %v4032, 1e-05
    %v4035 = vrsqrt.pop %v4033
    %v4036 = vrsqrt.pop %v4034
    %v4037 = vmul.f32 %v4021, %v4035
    %v4038 = vmul.f32 %v4022, %v4036
    %v4040 = vlaneseq
    %v4041 = vshrl.u32 %v4040, 7
    %v4042 = vsub.s32 0, %v4041
    %v4043 = vrot.slane %v4012, %v4042
    %v4046 = vsel %vm58, %v4037, 0
    %v4049 = vsel %vm58, %v4038, 0
    %4051 = vmatprep.subr.mxu0 0.0
    %4052 = vmatpush1.msra.mxu0 %v4007
    %4053 = vmatprep.subr.mxu0 0.0
    %4054 = vmatpush1.msra.mxu0 %v4008
    %4055 = vmatprep.subr.mxu0 0.0
    %4056 = vmatpush1.msra.mxu0 %v4009
    %4057 = vmatprep.subr.mxu0 0.0
    %4058 = vmatpush1.msra.mxu0 %v4010
    %4059 = vmatprep.subr.mxu0 0.0
    %4060 = vmatpush1.msra.mxu0 0.0
    %4061 = vmatprep.subr.mxu0 0.0
    %4062 = vmatpush1.msra.mxu0 0.0
    %4063 = vmatprep.subr.mxu0 0.0
    %4064 = vmatpush1.msra.mxu0 0.0
    %4065 = vmatprep.subr.mxu0 0.0
    %4066 = vmatpush1.msra.mxu0 0.0
    %4067 = vmatprep.subr.mxu0 0.0
    %4068 = vmatpush1.msra.mxu0 0.0
    %4069 = vmatprep.subr.mxu0 0.0
    %4070 = vmatpush1.msra.mxu0 0.0
    %4071 = vmatprep.subr.mxu0 0.0
    %4072 = vmatpush1.msra.mxu0 0.0
    %4073 = vmatprep.subr.mxu0 0.0
    %4074 = vmatpush1.msra.mxu0 0.0
    %4075 = vmatprep.subr.mxu0 0.0
    %4076 = vmatpush1.msra.mxu0 0.0
    %4077 = vmatprep.subr.mxu0 0.0
    %4078 = vmatpush1.msra.mxu0 0.0
    %4079 = vmatprep.subr.mxu0 0.0
    %4080 = vmatpush1.msra.mxu0 0.0
    %4081 = vmatprep.subr.mxu0 0.0
    %4082 = vmatpush1.msra.mxu0 0.0
    %4083 = vmatprep.subr.mxu0 0.0
    %4084 = vmatpush1.msra.mxu0 0.0
    %4085 = vmatprep.subr.mxu0 0.0
    %4086 = vmatpush1.msra.mxu0 0.0
    %4087 = vmatprep.subr.mxu0 0.0
    %4088 = vmatpush1.msra.mxu0 0.0
    %4089 = vmatprep.subr.mxu0 0.0
    %4090 = vmatpush1.msra.mxu0 0.0
    %4091 = vmatprep.subr.mxu0 0.0
    %4092 = vmatpush1.msra.mxu0 0.0
    %4093 = vmatprep.subr.mxu0 0.0
    %4094 = vmatpush1.msra.mxu0 0.0
    %4095 = vmatprep.subr.mxu0 0.0
    %4096 = vmatpush1.msra.mxu0 0.0
    %4097 = vmatprep.subr.mxu0 0.0
    %4098 = vmatpush1.msra.mxu0 0.0
    %4099 = vmatprep.subr.mxu0 0.0
    %4100 = vmatpush1.msra.mxu0 0.0
    %4101 = vmatprep.subr.mxu0 0.0
    %4102 = vmatpush1.msra.mxu0 0.0
    %4103 = vmatprep.subr.mxu0 0.0
    %4104 = vmatpush1.msra.mxu0 0.0
    %4105 = vmatprep.subr.mxu0 0.0
    %4106 = vmatpush1.msra.mxu0 0.0
    %4107 = vmatprep.subr.mxu0 0.0
    %4108 = vmatpush1.msra.mxu0 0.0
    %4109 = vmatprep.subr.mxu0 0.0
    %4110 = vmatpush1.msra.mxu0 0.0
    %4111 = vmatprep.subr.mxu0 0.0
    %4112 = vmatpush1.msra.mxu0 0.0
    %4113 = vmatprep.subr.mxu0 0.0
    %4114 = vmatpush1.msra.mxu0 0.0
    %4115 = vmatprep.mubr.f32.mxu0 0.0
    %4116 = vmatmul.mubr.f32.gmra.mrb[0].mxu0 %v4046
    %v4117 = vpop.f32.mrb[0].mxu0
    %v4118 = vadd.f32 %v4043, %v4117
    %v4119 = vpop.f32.mrb[0].mxu0
    %4120 = vmatprep.mubr.f32.mxu0 0.0
    %4121 = vmatmul.mubr.f32.gmra.mrb[0].mxu0 %v4049
    %v4122 = vpop.f32.mrb[0].mxu0
    %v4123 = vadd.f32 %v4043, %v4122
    %v4124 = vpop.f32.mrb[0].mxu0
    %4125 = vdwg.mxu0
    %4130 = vrot.lane.b32.xlu0 %v4007, 96
    %v4131 = vpop.permute.xlu0 %4130
    %4132 = vrot.lane.b32.xlu0 %v4008, 96
    %v4133 = vpop.permute.xlu0 %4132
    %4134 = vrot.lane.b32.xlu0 %v4009, 96
    %v4135 = vpop.permute.xlu0 %4134
    %4136 = vrot.lane.b32.xlu0 %v4010, 96
    %v4137 = vpop.permute.xlu0 %4136
    %4142 = vrot.lane.b32.xlu0 %v4043, 96
    %v4143 = vpop.permute.xlu0 %4142
    %v4146 = vsel %vm58, %v2844, 0
    %v4149 = vsel %vm58, %v2845, 0
    %4151 = vmatprep.subr.mxu0 0.0
    %4152 = vmatpush1.msra.mxu0 %v4131
    %4153 = vmatprep.subr.mxu0 0.0
    %4154 = vmatpush1.msra.mxu0 %v4133
    %4155 = vmatprep.subr.mxu0 0.0
    %4156 = vmatpush1.msra.mxu0 %v4135
    %4157 = vmatprep.subr.mxu0 0.0
    %4158 = vmatpush1.msra.mxu0 %v4137
    %4159 = vmatprep.subr.mxu0 0.0
    %4160 = vmatpush1.msra.mxu0 0.0
    %4161 = vmatprep.subr.mxu0 0.0
    %4162 = vmatpush1.msra.mxu0 0.0
    %4163 = vmatprep.subr.mxu0 0.0
    %4164 = vmatpush1.msra.mxu0 0.0
    %4165 = vmatprep.subr.mxu0 0.0
    %4166 = vmatpush1.msra.mxu0 0.0
    %4167 = vmatprep.subr.mxu0 0.0
    %4168 = vmatpush1.msra.mxu0 0.0
    %4169 = vmatprep.subr.mxu0 0.0
    %4170 = vmatpush1.msra.mxu0 0.0
    %4171 = vmatprep.subr.mxu0 0.0
    %4172 = vmatpush1.msra.mxu0 0.0
    %4173 = vmatprep.subr.mxu0 0.0
    %4174 = vmatpush1.msra.mxu0 0.0
    %4175 = vmatprep.subr.mxu0 0.0
    %4176 = vmatpush1.msra.mxu0 0.0
    %4177 = vmatprep.subr.mxu0 0.0
    %4178 = vmatpush1.msra.mxu0 0.0
    %4179 = vmatprep.subr.mxu0 0.0
    %4180 = vmatpush1.msra.mxu0 0.0
    %4181 = vmatprep.subr.mxu0 0.0
    %4182 = vmatpush1.msra.mxu0 0.0
    %4183 = vmatprep.subr.mxu0 0.0
    %4184 = vmatpush1.msra.mxu0 0.0
    %4185 = vmatprep.subr.mxu0 0.0
    %4186 = vmatpush1.msra.mxu0 0.0
    %4187 = vmatprep.subr.mxu0 0.0
    %4188 = vmatpush1.msra.mxu0 0.0
    %4189 = vmatprep.subr.mxu0 0.0
    %4190 = vmatpush1.msra.mxu0 0.0
    %4191 = vmatprep.subr.mxu0 0.0
    %4192 = vmatpush1.msra.mxu0 0.0
    %4193 = vmatprep.subr.mxu0 0.0
    %4194 = vmatpush1.msra.mxu0 0.0
    %4195 = vmatprep.subr.mxu0 0.0
    %4196 = vmatpush1.msra.mxu0 0.0
    %4197 = vmatprep.subr.mxu0 0.0
    %4198 = vmatpush1.msra.mxu0 0.0
    %4199 = vmatprep.subr.mxu0 0.0
    %4200 = vmatpush1.msra.mxu0 0.0
    %4201 = vmatprep.subr.mxu0 0.0
    %4202 = vmatpush1.msra.mxu0 0.0
    %4203 = vmatprep.subr.mxu0 0.0
    %4204 = vmatpush1.msra.mxu0 0.0
    %4205 = vmatprep.subr.mxu0 0.0
    %4206 = vmatpush1.msra.mxu0 0.0
    %4207 = vmatprep.subr.mxu0 0.0
    %4208 = vmatpush1.msra.mxu0 0.0
    %4209 = vmatprep.subr.mxu0 0.0
    %4210 = vmatpush1.msra.mxu0 0.0
    %4211 = vmatprep.subr.mxu0 0.0
    %4212 = vmatpush1.msra.mxu0 0.0
    %4213 = vmatprep.subr.mxu0 0.0
    %4214 = vmatpush1.msra.mxu0 0.0
    %4215 = vmatprep.mubr.f32.mxu0 0.0
    %4216 = vmatmul.mubr.f32.gmra.mrb[0].mxu0 %v4146
    %v4217 = vpop.f32.mrb[0].mxu0
    %v4218 = vadd.f32 %v4143, %v4217
    %v4219 = vpop.f32.mrb[0].mxu0
    %4220 = vmatprep.mubr.f32.mxu0 0.0
    %4221 = vmatmul.mubr.f32.gmra.mrb[0].mxu0 %v4149
    %v4222 = vpop.f32.mrb[0].mxu0
    %v4223 = vadd.f32 %v4143, %v4222
    %v4224 = vpop.f32.mrb[0].mxu0
    %4225 = vdwg.mxu0
    %v4227 = vsel %vm267, %v4118, 0
    %v4230 = vsel %vm267, %v4123, 0
    %v4233 = vsel %vm267, %v4218, 0
    %v4236 = vsel %vm267, %v4223, 0
    %4238 = vmatprep.subr.mxu0 0.0
    %4239 = vmatpush1.xpose.msra.mxu0 %v4233
    %4240 = vmatprep.subr.mxu0 0.0
    %4241 = vmatpush1.xpose.msra.mxu0 %v4236
    %4242 = vmatprep.subr.mxu0 0.0
    %4243 = vmatpush1.xpose.msra.mxu0 0.0
    %4244 = vmatprep.subr.mxu0 0.0
    %4245 = vmatpush1.xpose.msra.mxu0 0.0
    %4246 = vmatprep.subr.mxu0 0.0
    %4247 = vmatpush1.xpose.msra.mxu0 0.0
    %4248 = vmatprep.subr.mxu0 0.0
    %4249 = vmatpush1.xpose.msra.mxu0 0.0
    %4250 = vmatprep.subr.mxu0 0.0
    %4251 = vmatpush1.xpose.msra.mxu0 0.0
    %4252 = vmatprep.subr.mxu0 0.0
    %4253 = vmatpush1.xpose.msra.mxu0 0.0
    %4254 = vmatprep.subr.mxu0 0.0
    %4255 = vmatpush1.xpose.msra.mxu0 0.0
    %4256 = vmatprep.subr.mxu0 0.0
    %4257 = vmatpush1.xpose.msra.mxu0 0.0
    %4258 = vmatprep.subr.mxu0 0.0
    %4259 = vmatpush1.xpose.msra.mxu0 0.0
    %4260 = vmatprep.subr.mxu0 0.0
    %4261 = vmatpush1.xpose.msra.mxu0 0.0
    %4262 = vmatprep.subr.mxu0 0.0
    %4263 = vmatpush1.xpose.msra.mxu0 0.0
    %4264 = vmatprep.subr.mxu0 0.0
    %4265 = vmatpush1.xpose.msra.mxu0 0.0
    %4266 = vmatprep.subr.mxu0 0.0
    %4267 = vmatpush1.xpose.msra.mxu0 0.0
    %4268 = vmatprep.subr.mxu0 0.0
    %4269 = vmatpush1.xpose.msra.mxu0 0.0
    %4270 = vmatprep.subr.mxu0 0.0
    %4271 = vmatpush1.xpose.msra.mxu0 0.0
    %4272 = vmatprep.subr.mxu0 0.0
    %4273 = vmatpush1.xpose.msra.mxu0 0.0
    %4274 = vmatprep.subr.mxu0 0.0
    %4275 = vmatpush1.xpose.msra.mxu0 0.0
    %4276 = vmatprep.subr.mxu0 0.0
    %4277 = vmatpush1.xpose.msra.mxu0 0.0
    %4278 = vmatprep.subr.mxu0 0.0
    %4279 = vmatpush1.xpose.msra.mxu0 0.0
    %4280 = vmatprep.subr.mxu0 0.0
    %4281 = vmatpush1.xpose.msra.mxu0 0.0
    %4282 = vmatprep.subr.mxu0 0.0
    %4283 = vmatpush1.xpose.msra.mxu0 0.0
    %4284 = vmatprep.subr.mxu0 0.0
    %4285 = vmatpush1.xpose.msra.mxu0 0.0
    %4286 = vmatprep.subr.mxu0 0.0
    %4287 = vmatpush1.xpose.msra.mxu0 0.0
    %4288 = vmatprep.subr.mxu0 0.0
    %4289 = vmatpush1.xpose.msra.mxu0 0.0
    %4290 = vmatprep.subr.mxu0 0.0
    %4291 = vmatpush1.xpose.msra.mxu0 0.0
    %4292 = vmatprep.subr.mxu0 0.0
    %4293 = vmatpush1.xpose.msra.mxu0 0.0
    %4294 = vmatprep.subr.mxu0 0.0
    %4295 = vmatpush1.xpose.msra.mxu0 0.0
    %4296 = vmatprep.subr.mxu0 0.0
    %4297 = vmatpush1.xpose.msra.mxu0 0.0
    %4298 = vmatprep.subr.mxu0 0.0
    %4299 = vmatpush1.xpose.msra.mxu0 0.0
    %4300 = vmatprep.subr.mxu0 0.0
    %4301 = vmatpush1.xpose.msra.mxu0 0.0
    %4302 = vmatprep.mubr.f32.mxu0 0.0
    %4303 = vmatmul.mubr.f32.gmra.mrb[0].mxu0 %v4227
    %v4304 = vpop.f32.mrb[0].mxu0
    %v4305 = vadd.f32 0.0, %v4304
    %v4306 = vpop.f32.mrb[0].mxu0
    %4307 = vmatprep.mubr.f32.mxu0 0.0
    %4308 = vmatmul.mubr.f32.gmra.mrb[0].mxu0 %v4230
    %v4309 = vpop.f32.mrb[0].mxu0
    %v4310 = vadd.f32 0.0, %v4309
    %v4311 = vpop.f32.mrb[0].mxu0
    %4312 = vdwg.mxu0
    %v4313 = vmul.f32 %v4305, 0.35355338
    %v4314 = vmul.f32 %v4310, 0.35355338
    %v4315 = vadd.f32 %v4313, %v49
    %v4316 = vadd.f32 %v4314, %v50
    %v4317 = vsel %vm359, %v4315, -inf
    %4318 = vmax.xlane.f32.xlu0 %v4317
    %v4319 = vpop.xlane.xlu0 %4318
    %v4320 = vsel %vm359, %v4316, -inf
    %4321 = vmax.xlane.f32.xlu0 %v4320
    %v4322 = vpop.xlane.xlu0 %4321
    %v4323 = vsub.f32 %v4315, %v4319
    %v4324 = vsub.f32 %v4316, %v4322
    %v4325 = vmul.f32 %v4323, 1.442695
    %v4326 = vpow.pop %v4325
    %v4327 = vmul.f32 %v4324, 1.442695
    %v4328 = vpow.pop %v4327
    %v4329 = vsel %vm359, %v4326, 0.0
    %4330 = vadd.xlane.f32.xlu0 %v4329
    %v4331 = vpop.xlane.xlu0 %4330
    %v4332 = vsel %vm359, %v4328, 0.0
    %4333 = vadd.xlane.f32.xlu0 %v4332
    %v4334 = vpop.xlane.xlu0 %4333
    %v4335 = vrcp.pop %v4331
    %v4336 = vrcp.pop %v4334
    %v4337 = vmul.f32 %v4326, %v4335
    %v4338 = vmul.f32 %v4328, %v4336
    %4339 = vrot.lane.b32.xlu0 %v4218, 96
    %v4340 = vpop.permute.xlu0 %4339
    %4341 = vrot.lane.b32.xlu0 %v4223, 96
    %v4342 = vpop.permute.xlu0 %4341
    %v4346 = vsel %vm359, %v4337, 0
    %v4349 = vsel %vm359, %v4338, 0
    %4351 = vmatprep.subr.mxu0 0.0
    %4352 = vmatpush1.msra.mxu0 %v4340
    %4353 = vmatprep.subr.mxu0 0.0
    %4354 = vmatpush1.msra.mxu0 %v4342
    %4355 = vmatprep.subr.mxu0 0.0
    %4356 = vmatpush1.msra.mxu0 0.0
    %4357 = vmatprep.subr.mxu0 0.0
    %4358 = vmatpush1.msra.mxu0 0.0
    %4359 = vmatprep.subr.mxu0 0.0
    %4360 = vmatpush1.msra.mxu0 0.0
    %4361 = vmatprep.subr.mxu0 0.0
    %4362 = vmatpush1.msra.mxu0 0.0
    %4363 = vmatprep.subr.mxu0 0.0
    %4364 = vmatpush1.msra.mxu0 0.0
    %4365 = vmatprep.subr.mxu0 0.0
    %4366 = vmatpush1.msra.mxu0 0.0
    %4367 = vmatprep.subr.mxu0 0.0
    %4368 = vmatpush1.msra.mxu0 0.0
    %4369 = vmatprep.subr.mxu0 0.0
    %4370 = vmatpush1.msra.mxu0 0.0
    %4371 = vmatprep.subr.mxu0 0.0
    %4372 = vmatpush1.msra.mxu0 0.0
    %4373 = vmatprep.subr.mxu0 0.0
    %4374 = vmatpush1.msra.mxu0 0.0
    %4375 = vmatprep.subr.mxu0 0.0
    %4376 = vmatpush1.msra.mxu0 0.0
    %4377 = vmatprep.subr.mxu0 0.0
    %4378 = vmatpush1.msra.mxu0 0.0
    %4379 = vmatprep.subr.mxu0 0.0
    %4380 = vmatpush1.msra.mxu0 0.0
    %4381 = vmatprep.subr.mxu0 0.0
    %4382 = vmatpush1.msra.mxu0 0.0
    %4383 = vmatprep.subr.mxu0 0.0
    %4384 = vmatpush1.msra.mxu0 0.0
    %4385 = vmatprep.subr.mxu0 0.0
    %4386 = vmatpush1.msra.mxu0 0.0
    %4387 = vmatprep.subr.mxu0 0.0
    %4388 = vmatpush1.msra.mxu0 0.0
    %4389 = vmatprep.subr.mxu0 0.0
    %4390 = vmatpush1.msra.mxu0 0.0
    %4391 = vmatprep.subr.mxu0 0.0
    %4392 = vmatpush1.msra.mxu0 0.0
    %4393 = vmatprep.subr.mxu0 0.0
    %4394 = vmatpush1.msra.mxu0 0.0
    %4395 = vmatprep.subr.mxu0 0.0
    %4396 = vmatpush1.msra.mxu0 0.0
    %4397 = vmatprep.subr.mxu0 0.0
    %4398 = vmatpush1.msra.mxu0 0.0
    %4399 = vmatprep.subr.mxu0 0.0
    %4400 = vmatpush1.msra.mxu0 0.0
    %4401 = vmatprep.subr.mxu0 0.0
    %4402 = vmatpush1.msra.mxu0 0.0
    %4403 = vmatprep.subr.mxu0 0.0
    %4404 = vmatpush1.msra.mxu0 0.0
    %4405 = vmatprep.subr.mxu0 0.0
    %4406 = vmatpush1.msra.mxu0 0.0
    %4407 = vmatprep.subr.mxu0 0.0
    %4408 = vmatpush1.msra.mxu0 0.0
    %4409 = vmatprep.subr.mxu0 0.0
    %4410 = vmatpush1.msra.mxu0 0.0
    %4411 = vmatprep.subr.mxu0 0.0
    %4412 = vmatpush1.msra.mxu0 0.0
    %4413 = vmatprep.subr.mxu0 0.0
    %4414 = vmatpush1.msra.mxu0 0.0
    %4415 = vmatprep.mubr.f32.mxu0 0.0
    %4416 = vmatmul.mubr.f32.gmra.mrb[0].mxu0 %v4346
    %v4417 = vpop.f32.mrb[0].mxu0
    %v4418 = vadd.f32 0.0, %v4417
    %v4419 = vpop.f32.mrb[0].mxu0
    %4420 = vmatprep.mubr.f32.mxu0 0.0
    %4421 = vmatmul.mubr.f32.gmra.mrb[0].mxu0 %v4349
    %v4422 = vpop.f32.mrb[0].mxu0
    %v4423 = vadd.f32 0.0, %v4422
    %v4424 = vpop.f32.mrb[0].mxu0
    %4425 = vdwg.mxu0
    %4426 = vst.msk [vmem:[#allocation2] sm:$0xff] %vm267, %v4418
    %4427 = vst.msk [vmem:[#allocation2 + $0x8] sm:$0xff] %vm267, %v4423
    %4428 = vrot.lane.b32.xlu0 %v4118, 120
    %v4429 = vpop.permute.xlu0 %4428
    %4430 = vrot.lane.b32.xlu0 %v4123, 120
    %v4431 = vpop.permute.xlu0 %4430
    %4432 = vrot.lane.b32.xlu0 %v4218, 120
    %v4433 = vpop.permute.xlu0 %4432
    %4434 = vrot.lane.b32.xlu0 %v4223, 120
    %v4435 = vpop.permute.xlu0 %4434
    %v4436 = vsel %vm267, %v4429, 0
    %v4438 = vsel %vm267, %v4431, 0
    %v4440 = vsel %vm267, %v4433, 0
    %v4442 = vsel %vm267, %v4435, 0
    %4444 = vmatprep.subr.mxu0 0.0
    %4445 = vmatpush1.xpose.msra.mxu0 %v4440
    %4446 = vmatprep.subr.mxu0 0.0
    %4447 = vmatpush1.xpose.msra.mxu0 %v4442
    %4448 = vmatprep.subr.mxu0 0.0
    %4449 = vmatpush1.xpose.msra.mxu0 0.0
    %4450 = vmatprep.subr.mxu0 0.0
    %4451 = vmatpush1.xpose.msra.mxu0 0.0
    %4452 = vmatprep.subr.mxu0 0.0
    %4453 = vmatpush1.xpose.msra.mxu0 0.0
    %4454 = vmatprep.subr.mxu0 0.0
    %4455 = vmatpush1.xpose.msra.mxu0 0.0
    %4456 = vmatprep.subr.mxu0 0.0
    %4457 = vmatpush1.xpose.msra.mxu0 0.0
    %4458 = vmatprep.subr.mxu0 0.0
    %4459 = vmatpush1.xpose.msra.mxu0 0.0
    %4460 = vmatprep.subr.mxu0 0.0
    %4461 = vmatpush1.xpose.msra.mxu0 0.0
    %4462 = vmatprep.subr.mxu0 0.0
    %4463 = vmatpush1.xpose.msra.mxu0 0.0
    %4464 = vmatprep.subr.mxu0 0.0
    %4465 = vmatpush1.xpose.msra.mxu0 0.0
    %4466 = vmatprep.subr.mxu0 0.0
    %4467 = vmatpush1.xpose.msra.mxu0 0.0
    %4468 = vmatprep.subr.mxu0 0.0
    %4469 = vmatpush1.xpose.msra.mxu0 0.0
    %4470 = vmatprep.subr.mxu0 0.0
    %4471 = vmatpush1.xpose.msra.mxu0 0.0
    %4472 = vmatprep.subr.mxu0 0.0
    %4473 = vmatpush1.xpose.msra.mxu0 0.0
    %4474 = vmatprep.subr.mxu0 0.0
    %4475 = vmatpush1.xpose.msra.mxu0 0.0
    %4476 = vmatprep.subr.mxu0 0.0
    %4477 = vmatpush1.xpose.msra.mxu0 0.0
    %4478 = vmatprep.subr.mxu0 0.0
    %4479 = vmatpush1.xpose.msra.mxu0 0.0
    %4480 = vmatprep.subr.mxu0 0.0
    %4481 = vmatpush1.xpose.msra.mxu0 0.0
    %4482 = vmatprep.subr.mxu0 0.0
    %4483 = vmatpush1.xpose.msra.mxu0 0.0
    %4484 = vmatprep.subr.mxu0 0.0
    %4485 = vmatpush1.xpose.msra.mxu0 0.0
    %4486 = vmatprep.subr.mxu0 0.0
    %4487 = vmatpush1.xpose.msra.mxu0 0.0
    %4488 = vmatprep.subr.mxu0 0.0
    %4489 = vmatpush1.xpose.msra.mxu0 0.0
    %4490 = vmatprep.subr.mxu0 0.0
    %4491 = vmatpush1.xpose.msra.mxu0 0.0
    %4492 = vmatprep.subr.mxu0 0.0
    %4493 = vmatpush1.xpose.msra.mxu0 0.0
    %4494 = vmatprep.subr.mxu0 0.0
    %4495 = vmatpush1.xpose.msra.mxu0 0.0
    %4496 = vmatprep.subr.mxu0 0.0
    %4497 = vmatpush1.xpose.msra.mxu0 0.0
    %4498 = vmatprep.subr.mxu0 0.0
    %4499 = vmatpush1.xpose.msra.mxu0 0.0
    %4500 = vmatprep.subr.mxu0 0.0
    %4501 = vmatpush1.xpose.msra.mxu0 0.0
    %4502 = vmatprep.subr.mxu0 0.0
    %4503 = vmatpush1.xpose.msra.mxu0 0.0
    %4504 = vmatprep.subr.mxu0 0.0
    %4505 = vmatpush1.xpose.msra.mxu0 0.0
    %4506 = vmatprep.subr.mxu0 0.0
    %4507 = vmatpush1.xpose.msra.mxu0 0.0
    %4508 = vmatprep.mubr.f32.mxu0 0.0
    %4509 = vmatmul.mubr.f32.gmra.mrb[0].mxu0 %v4436
    %v4510 = vpop.f32.mrb[0].mxu0
    %v4511 = vadd.f32 0.0, %v4510
    %v4512 = vpop.f32.mrb[0].mxu0
    %4513 = vmatprep.mubr.f32.mxu0 0.0
    %4514 = vmatmul.mubr.f32.gmra.mrb[0].mxu0 %v4438
    %v4515 = vpop.f32.mrb[0].mxu0
    %v4516 = vadd.f32 0.0, %v4515
    %v4517 = vpop.f32.mrb[0].mxu0
    %4518 = vdwg.mxu0
    %v4519 = vmul.f32 %v4511, 0.35355338
    %v4520 = vmul.f32 %v4516, 0.35355338
    %v4521 = vadd.f32 %v4519, %v49
    %v4522 = vadd.f32 %v4520, %v50
    %v4523 = vsel %vm359, %v4521, -inf
    %4524 = vmax.xlane.f32.xlu0 %v4523
    %v4525 = vpop.xlane.xlu0 %4524
    %v4526 = vsel %vm359, %v4522, -inf
    %4527 = vmax.xlane.f32.xlu0 %v4526
    %v4528 = vpop.xlane.xlu0 %4527
    %v4529 = vsub.f32 %v4521, %v4525
    %v4530 = vsub.f32 %v4522, %v4528
    %v4531 = vmul.f32 %v4529, 1.442695
    %v4532 = vpow.pop %v4531
    %v4533 = vmul.f32 %v4530, 1.442695
    %v4534 = vpow.pop %v4533
    %v4535 = vsel %vm359, %v4532, 0.0
    %4536 = vadd.xlane.f32.xlu0 %v4535
    %v4537 = vpop.xlane.xlu0 %4536
    %v4538 = vsel %vm359, %v4534, 0.0
    %4539 = vadd.xlane.f32.xlu0 %v4538
    %v4540 = vpop.xlane.xlu0 %4539
    %v4541 = vrcp.pop %v4537
    %v4542 = vrcp.pop %v4540
    %v4543 = vmul.f32 %v4532, %v4541
    %v4544 = vmul.f32 %v4534, %v4542
    %4545 = vrot.lane.b32.xlu0 %v4218, 88
    %v4546 = vpop.permute.xlu0 %4545
    %4547 = vrot.lane.b32.xlu0 %v4223, 88
    %v4548 = vpop.permute.xlu0 %4547
    %v4552 = vsel %vm359, %v4543, 0
    %v4555 = vsel %vm359, %v4544, 0
    %4557 = vmatprep.subr.mxu0 0.0
    %4558 = vmatpush1.msra.mxu0 %v4546
    %4559 = vmatprep.subr.mxu0 0.0
    %4560 = vmatpush1.msra.mxu0 %v4548
    %4561 = vmatprep.subr.mxu0 0.0
    %4562 = vmatpush1.msra.mxu0 0.0
    %4563 = vmatprep.subr.mxu0 0.0
    %4564 = vmatpush1.msra.mxu0 0.0
    %4565 = vmatprep.subr.mxu0 0.0
    %4566 = vmatpush1.msra.mxu0 0.0
    %4567 = vmatprep.subr.mxu0 0.0
    %4568 = vmatpush1.msra.mxu0 0.0
    %4569 = vmatprep.subr.mxu0 0.0
    %4570 = vmatpush1.msra.mxu0 0.0
    %4571 = vmatprep.subr.mxu0 0.0
    %4572 = vmatpush1.msra.mxu0 0.0
    %4573 = vmatprep.subr.mxu0 0.0
    %4574 = vmatpush1.msra.mxu0 0.0
    %4575 = vmatprep.subr.mxu0 0.0
    %4576 = vmatpush1.msra.mxu0 0.0
    %4577 = vmatprep.subr.mxu0 0.0
    %4578 = vmatpush1.msra.mxu0 0.0
    %4579 = vmatprep.subr.mxu0 0.0
    %4580 = vmatpush1.msra.mxu0 0.0
    %4581 = vmatprep.subr.mxu0 0.0
    %4582 = vmatpush1.msra.mxu0 0.0
    %4583 = vmatprep.subr.mxu0 0.0
    %4584 = vmatpush1.msra.mxu0 0.0
    %4585 = vmatprep.subr.mxu0 0.0
    %4586 = vmatpush1.msra.mxu0 0.0
    %4587 = vmatprep.subr.mxu0 0.0
    %4588 = vmatpush1.msra.mxu0 0.0
    %4589 = vmatprep.subr.mxu0 0.0
    %4590 = vmatpush1.msra.mxu0 0.0
    %4591 = vmatprep.subr.mxu0 0.0
    %4592 = vmatpush1.msra.mxu0 0.0
    %4593 = vmatprep.subr.mxu0 0.0
    %4594 = vmatpush1.msra.mxu0 0.0
    %4595 = vmatprep.subr.mxu0 0.0
    %4596 = vmatpush1.msra.mxu0 0.0
    %4597 = vmatprep.subr.mxu0 0.0
    %4598 = vmatpush1.msra.mxu0 0.0
    %4599 = vmatprep.subr.mxu0 0.0
    %4600 = vmatpush1.msra.mxu0 0.0
    %4601 = vmatprep.subr.mxu0 0.0
    %4602 = vmatpush1.msra.mxu0 0.0
    %4603 = vmatprep.subr.mxu0 0.0
    %4604 = vmatpush1.msra.mxu0 0.0
    %4605 = vmatprep.subr.mxu0 0.0
    %4606 = vmatpush1.msra.mxu0 0.0
    %4607 = vmatprep.subr.mxu0 0.0
    %4608 = vmatpush1.msra.mxu0 0.0
    %4609 = vmatprep.subr.mxu0 0.0
    %4610 = vmatpush1.msra.mxu0 0.0
    %4611 = vmatprep.subr.mxu0 0.0
    %4612 = vmatpush1.msra.mxu0 0.0
    %4613 = vmatprep.subr.mxu0 0.0
    %4614 = vmatpush1.msra.mxu0 0.0
    %4615 = vmatprep.subr.mxu0 0.0
    %4616 = vmatpush1.msra.mxu0 0.0
    %4617 = vmatprep.subr.mxu0 0.0
    %4618 = vmatpush1.msra.mxu0 0.0
    %4619 = vmatprep.subr.mxu0 0.0
    %4620 = vmatpush1.msra.mxu0 0.0
    %4621 = vmatprep.mubr.f32.mxu0 0.0
    %4622 = vmatmul.mubr.f32.gmra.mrb[0].mxu0 %v4552
    %v4623 = vpop.f32.mrb[0].mxu0
    %v4624 = vadd.f32 0.0, %v4623
    %v4625 = vpop.f32.mrb[0].mxu0
    %4626 = vmatprep.mubr.f32.mxu0 0.0
    %4627 = vmatmul.mubr.f32.gmra.mrb[0].mxu0 %v4555
    %v4628 = vpop.f32.mrb[0].mxu0
    %v4629 = vadd.f32 0.0, %v4628
    %v4630 = vpop.f32.mrb[0].mxu0
    %4631 = vdwg.mxu0
    %4634 = vrot.lane.b32.xlu0 %v4624, 8
    %v4635 = vpop.permute.xlu0 %4634
    %4636 = vrot.lane.b32.xlu0 %v4629, 8
    %v4637 = vpop.permute.xlu0 %4636
    %4640 = vst.msk [vmem:[#allocation2] sm:$0xff] %vm683, %v4635
    %4641 = vst.msk [vmem:[#allocation2 + $0x8] sm:$0xff] %vm683, %v4637
    %4642 = vrot.lane.b32.xlu0 %v4118, 112
    %v4643 = vpop.permute.xlu0 %4642
    %4644 = vrot.lane.b32.xlu0 %v4123, 112
    %v4645 = vpop.permute.xlu0 %4644
    %4646 = vrot.lane.b32.xlu0 %v4218, 112
    %v4647 = vpop.permute.xlu0 %4646
    %4648 = vrot.lane.b32.xlu0 %v4223, 112
    %v4649 = vpop.permute.xlu0 %4648
    %v4650 = vsel %vm267, %v4643, 0
    %v4652 = vsel %vm267, %v4645, 0
    %v4654 = vsel %vm267, %v4647, 0
    %v4656 = vsel %vm267, %v4649, 0
    %4658 = vmatprep.subr.mxu0 0.0
    %4659 = vmatpush1.xpose.msra.mxu0 %v4654
    %4660 = vmatprep.subr.mxu0 0.0
    %4661 = vmatpush1.xpose.msra.mxu0 %v4656
    %4662 = vmatprep.subr.mxu0 0.0
    %4663 = vmatpush1.xpose.msra.mxu0 0.0
    %4664 = vmatprep.subr.mxu0 0.0
    %4665 = vmatpush1.xpose.msra.mxu0 0.0
    %4666 = vmatprep.subr.mxu0 0.0
    %4667 = vmatpush1.xpose.msra.mxu0 0.0
    %4668 = vmatprep.subr.mxu0 0.0
    %4669 = vmatpush1.xpose.msra.mxu0 0.0
    %4670 = vmatprep.subr.mxu0 0.0
    %4671 = vmatpush1.xpose.msra.mxu0 0.0
    %4672 = vmatprep.subr.mxu0 0.0
    %4673 = vmatpush1.xpose.msra.mxu0 0.0
    %4674 = vmatprep.subr.mxu0 0.0
    %4675 = vmatpush1.xpose.msra.mxu0 0.0
    %4676 = vmatprep.subr.mxu0 0.0
    %4677 = vmatpush1.xpose.msra.mxu0 0.0
    %4678 = vmatprep.subr.mxu0 0.0
    %4679 = vmatpush1.xpose.msra.mxu0 0.0
    %4680 = vmatprep.subr.mxu0 0.0
    %4681 = vmatpush1.xpose.msra.mxu0 0.0
    %4682 = vmatprep.subr.mxu0 0.0
    %4683 = vmatpush1.xpose.msra.mxu0 0.0
    %4684 = vmatprep.subr.mxu0 0.0
    %4685 = vmatpush1.xpose.msra.mxu0 0.0
    %4686 = vmatprep.subr.mxu0 0.0
    %4687 = vmatpush1.xpose.msra.mxu0 0.0
    %4688 = vmatprep.subr.mxu0 0.0
    %4689 = vmatpush1.xpose.msra.mxu0 0.0
    %4690 = vmatprep.subr.mxu0 0.0
    %4691 = vmatpush1.xpose.msra.mxu0 0.0
    %4692 = vmatprep.subr.mxu0 0.0
    %4693 = vmatpush1.xpose.msra.mxu0 0.0
    %4694 = vmatprep.subr.mxu0 0.0
    %4695 = vmatpush1.xpose.msra.mxu0 0.0
    %4696 = vmatprep.subr.mxu0 0.0
    %4697 = vmatpush1.xpose.msra.mxu0 0.0
    %4698 = vmatprep.subr.mxu0 0.0
    %4699 = vmatpush1.xpose.msra.mxu0 0.0
    %4700 = vmatprep.subr.mxu0 0.0
    %4701 = vmatpush1.xpose.msra.mxu0 0.0
    %4702 = vmatprep.subr.mxu0 0.0
    %4703 = vmatpush1.xpose.msra.mxu0 0.0
    %4704 = vmatprep.subr.mxu0 0.0
    %4705 = vmatpush1.xpose.msra.mxu0 0.0
    %4706 = vmatprep.subr.mxu0 0.0
    %4707 = vmatpush1.xpose.msra.mxu0 0.0
    %4708 = vmatprep.subr.mxu0 0.0
    %4709 = vmatpush1.xpose.msra.mxu0 0.0
    %4710 = vmatprep.subr.mxu0 0.0
    %4711 = vmatpush1.xpose.msra.mxu0 0.0
    %4712 = vmatprep.subr.mxu0 0.0
    %4713 = vmatpush1.xpose.msra.mxu0 0.0
    %4714 = vmatprep.subr.mxu0 0.0
    %4715 = vmatpush1.xpose.msra.mxu0 0.0
    %4716 = vmatprep.subr.mxu0 0.0
    %4717 = vmatpush1.xpose.msra.mxu0 0.0
    %4718 = vmatprep.subr.mxu0 0.0
    %4719 = vmatpush1.xpose.msra.mxu0 0.0
    %4720 = vmatprep.subr.mxu0 0.0
    %4721 = vmatpush1.xpose.msra.mxu0 0.0
    %4722 = vmatprep.mubr.f32.mxu0 0.0
    %4723 = vmatmul.mubr.f32.gmra.mrb[0].mxu0 %v4650
    %v4724 = vpop.f32.mrb[0].mxu0
    %v4725 = vadd.f32 0.0, %v4724
    %v4726 = vpop.f32.mrb[0].mxu0
    %4727 = vmatprep.mubr.f32.mxu0 0.0
    %4728 = vmatmul.mubr.f32.gmra.mrb[0].mxu0 %v4652
    %v4729 = vpop.f32.mrb[0].mxu0
    %v4730 = vadd.f32 0.0, %v4729
    %v4731 = vpop.f32.mrb[0].mxu0
    %4732 = vdwg.mxu0
    %v4733 = vmul.f32 %v4725, 0.35355338
    %v4734 = vmul.f32 %v4730, 0.35355338
    %v4735 = vadd.f32 %v4733, %v49
    %v4736 = vadd.f32 %v4734, %v50
    %v4737 = vsel %vm359, %v4735, -inf
    %4738 = vmax.xlane.f32.xlu0 %v4737
    %v4739 = vpop.xlane.xlu0 %4738
    %v4740 = vsel %vm359, %v4736, -inf
    %4741 = vmax.xlane.f32.xlu0 %v4740
    %v4742 = vpop.xlane.xlu0 %4741
    %v4743 = vsub.f32 %v4735, %v4739
    %v4744 = vsub.f32 %v4736, %v4742
    %v4745 = vmul.f32 %v4743, 1.442695
    %v4746 = vpow.pop %v4745
    %v4747 = vmul.f32 %v4744, 1.442695
    %v4748 = vpow.pop %v4747
    %v4749 = vsel %vm359, %v4746, 0.0
    %4750 = vadd.xlane.f32.xlu0 %v4749
    %v4751 = vpop.xlane.xlu0 %4750
    %v4752 = vsel %vm359, %v4748, 0.0
    %4753 = vadd.xlane.f32.xlu0 %v4752
    %v4754 = vpop.xlane.xlu0 %4753
    %v4755 = vrcp.pop %v4751
    %v4756 = vrcp.pop %v4754
    %v4757 = vmul.f32 %v4746, %v4755
    %v4758 = vmul.f32 %v4748, %v4756
    %4759 = vrot.lane.b32.xlu0 %v4218, 80
    %v4760 = vpop.permute.xlu0 %4759
    %4761 = vrot.lane.b32.xlu0 %v4223, 80
    %v4762 = vpop.permute.xlu0 %4761
    %v4766 = vsel %vm359, %v4757, 0
    %v4769 = vsel %vm359, %v4758, 0
    %4771 = vmatprep.subr.mxu0 0.0
    %4772 = vmatpush1.msra.mxu0 %v4760
    %4773 = vmatprep.subr.mxu0 0.0
    %4774 = vmatpush1.msra.mxu0 %v4762
    %4775 = vmatprep.subr.mxu0 0.0
    %4776 = vmatpush1.msra.mxu0 0.0
    %4777 = vmatprep.subr.mxu0 0.0
    %4778 = vmatpush1.msra.mxu0 0.0
    %4779 = vmatprep.subr.mxu0 0.0
    %4780 = vmatpush1.msra.mxu0 0.0
    %4781 = vmatprep.subr.mxu0 0.0
    %4782 = vmatpush1.msra.mxu0 0.0
    %4783 = vmatprep.subr.mxu0 0.0
    %4784 = vmatpush1.msra.mxu0 0.0
    %4785 = vmatprep.subr.mxu0 0.0
    %4786 = vmatpush1.msra.mxu0 0.0
    %4787 = vmatprep.subr.mxu0 0.0
    %4788 = vmatpush1.msra.mxu0 0.0
    %4789 = vmatprep.subr.mxu0 0.0
    %4790 = vmatpush1.msra.mxu0 0.0
    %4791 = vmatprep.subr.mxu0 0.0
    %4792 = vmatpush1.msra.mxu0 0.0
    %4793 = vmatprep.subr.mxu0 0.0
    %4794 = vmatpush1.msra.mxu0 0.0
    %4795 = vmatprep.subr.mxu0 0.0
    %4796 = vmatpush1.msra.mxu0 0.0
    %4797 = vmatprep.subr.mxu0 0.0
    %4798 = vmatpush1.msra.mxu0 0.0
    %4799 = vmatprep.subr.mxu0 0.0
    %4800 = vmatpush1.msra.mxu0 0.0
    %4801 = vmatprep.subr.mxu0 0.0
    %4802 = vmatpush1.msra.mxu0 0.0
    %4803 = vmatprep.subr.mxu0 0.0
    %4804 = vmatpush1.msra.mxu0 0.0
    %4805 = vmatprep.subr.mxu0 0.0
    %4806 = vmatpush1.msra.mxu0 0.0
    %4807 = vmatprep.subr.mxu0 0.0
    %4808 = vmatpush1.msra.mxu0 0.0
    %4809 = vmatprep.subr.mxu0 0.0
    %4810 = vmatpush1.msra.mxu0 0.0
    %4811 = vmatprep.subr.mxu0 0.0
    %4812 = vmatpush1.msra.mxu0 0.0
    %4813 = vmatprep.subr.mxu0 0.0
    %4814 = vmatpush1.msra.mxu0 0.0
    %4815 = vmatprep.subr.mxu0 0.0
    %4816 = vmatpush1.msra.mxu0 0.0
    %4817 = vmatprep.subr.mxu0 0.0
    %4818 = vmatpush1.msra.mxu0 0.0
    %4819 = vmatprep.subr.mxu0 0.0
    %4820 = vmatpush1.msra.mxu0 0.0
    %4821 = vmatprep.subr.mxu0 0.0
    %4822 = vmatpush1.msra.mxu0 0.0
    %4823 = vmatprep.subr.mxu0 0.0
    %4824 = vmatpush1.msra.mxu0 0.0
    %4825 = vmatprep.subr.mxu0 0.0
    %4826 = vmatpush1.msra.mxu0 0.0
    %4827 = vmatprep.subr.mxu0 0.0
    %4828 = vmatpush1.msra.mxu0 0.0
    %4829 = vmatprep.subr.mxu0 0.0
    %4830 = vmatpush1.msra.mxu0 0.0
    %4831 = vmatprep.subr.mxu0 0.0
    %4832 = vmatpush1.msra.mxu0 0.0
    %4833 = vmatprep.subr.mxu0 0.0
    %4834 = vmatpush1.msra.mxu0 0.0
    %4835 = vmatprep.mubr.f32.mxu0 0.0
    %4836 = vmatmul.mubr.f32.gmra.mrb[0].mxu0 %v4766
    %v4837 = vpop.f32.mrb[0].mxu0
    %v4838 = vadd.f32 0.0, %v4837
    %v4839 = vpop.f32.mrb[0].mxu0
    %4840 = vmatprep.mubr.f32.mxu0 0.0
    %4841 = vmatmul.mubr.f32.gmra.mrb[0].mxu0 %v4769
    %v4842 = vpop.f32.mrb[0].mxu0
    %v4843 = vadd.f32 0.0, %v4842
    %v4844 = vpop.f32.mrb[0].mxu0
    %4845 = vdwg.mxu0
    %4848 = vrot.lane.b32.xlu0 %v4838, 16
    %v4849 = vpop.permute.xlu0 %4848
    %4850 = vrot.lane.b32.xlu0 %v4843, 16
    %v4851 = vpop.permute.xlu0 %4850
    %4854 = vst.msk [vmem:[#allocation2] sm:$0xff] %vm898, %v4849
    %4855 = vst.msk [vmem:[#allocation2 + $0x8] sm:$0xff] %vm898, %v4851
    %4856 = vrot.lane.b32.xlu0 %v4118, 104
    %v4857 = vpop.permute.xlu0 %4856
    %4858 = vrot.lane.b32.xlu0 %v4123, 104
    %v4859 = vpop.permute.xlu0 %4858
    %4860 = vrot.lane.b32.xlu0 %v4218, 104
    %v4861 = vpop.permute.xlu0 %4860
    %4862 = vrot.lane.b32.xlu0 %v4223, 104
    %v4863 = vpop.permute.xlu0 %4862
    %v4864 = vsel %vm267, %v4857, 0
    %v4866 = vsel %vm267, %v4859, 0
    %v4868 = vsel %vm267, %v4861, 0
    %v4870 = vsel %vm267, %v4863, 0
    %4872 = vmatprep.subr.mxu0 0.0
    %4873 = vmatpush1.xpose.msra.mxu0 %v4868
    %4874 = vmatprep.subr.mxu0 0.0
    %4875 = vmatpush1.xpose.msra.mxu0 %v4870
    %4876 = vmatprep.subr.mxu0 0.0
    %4877 = vmatpush1.xpose.msra.mxu0 0.0
    %4878 = vmatprep.subr.mxu0 0.0
    %4879 = vmatpush1.xpose.msra.mxu0 0.0
    %4880 = vmatprep.subr.mxu0 0.0
    %4881 = vmatpush1.xpose.msra.mxu0 0.0
    %4882 = vmatprep.subr.mxu0 0.0
    %4883 = vmatpush1.xpose.msra.mxu0 0.0
    %4884 = vmatprep.subr.mxu0 0.0
    %4885 = vmatpush1.xpose.msra.mxu0 0.0
    %4886 = vmatprep.subr.mxu0 0.0
    %4887 = vmatpush1.xpose.msra.mxu0 0.0
    %4888 = vmatprep.subr.mxu0 0.0
    %4889 = vmatpush1.xpose.msra.mxu0 0.0
    %4890 = vmatprep.subr.mxu0 0.0
    %4891 = vmatpush1.xpose.msra.mxu0 0.0
    %4892 = vmatprep.subr.mxu0 0.0
    %4893 = vmatpush1.xpose.msra.mxu0 0.0
    %4894 = vmatprep.subr.mxu0 0.0
    %4895 = vmatpush1.xpose.msra.mxu0 0.0
    %4896 = vmatprep.subr.mxu0 0.0
    %4897 = vmatpush1.xpose.msra.mxu0 0.0
    %4898 = vmatprep.subr.mxu0 0.0
    %4899 = vmatpush1.xpose.msra.mxu0 0.0
    %4900 = vmatprep.subr.mxu0 0.0
    %4901 = vmatpush1.xpose.msra.mxu0 0.0
    %4902 = vmatprep.subr.mxu0 0.0
    %4903 = vmatpush1.xpose.msra.mxu0 0.0
    %4904 = vmatprep.subr.mxu0 0.0
    %4905 = vmatpush1.xpose.msra.mxu0 0.0
    %4906 = vmatprep.subr.mxu0 0.0
    %4907 = vmatpush1.xpose.msra.mxu0 0.0
    %4908 = vmatprep.subr.mxu0 0.0
    %4909 = vmatpush1.xpose.msra.mxu0 0.0
    %4910 = vmatprep.subr.mxu0 0.0
    %4911 = vmatpush1.xpose.msra.mxu0 0.0
    %4912 = vmatprep.subr.mxu0 0.0
    %4913 = vmatpush1.xpose.msra.mxu0 0.0
    %4914 = vmatprep.subr.mxu0 0.0
    %4915 = vmatpush1.xpose.msra.mxu0 0.0
    %4916 = vmatprep.subr.mxu0 0.0
    %4917 = vmatpush1.xpose.msra.mxu0 0.0
    %4918 = vmatprep.subr.mxu0 0.0
    %4919 = vmatpush1.xpose.msra.mxu0 0.0
    %4920 = vmatprep.subr.mxu0 0.0
    %4921 = vmatpush1.xpose.msra.mxu0 0.0
    %4922 = vmatprep.subr.mxu0 0.0
    %4923 = vmatpush1.xpose.msra.mxu0 0.0
    %4924 = vmatprep.subr.mxu0 0.0
    %4925 = vmatpush1.xpose.msra.mxu0 0.0
    %4926 = vmatprep.subr.mxu0 0.0
    %4927 = vmatpush1.xpose.msra.mxu0 0.0
    %4928 = vmatprep.subr.mxu0 0.0
    %4929 = vmatpush1.xpose.msra.mxu0 0.0
    %4930 = vmatprep.subr.mxu0 0.0
    %4931 = vmatpush1.xpose.msra.mxu0 0.0
    %4932 = vmatprep.subr.mxu0 0.0
    %4933 = vmatpush1.xpose.msra.mxu0 0.0
    %4934 = vmatprep.subr.mxu0 0.0
    %4935 = vmatpush1.xpose.msra.mxu0 0.0
    %4936 = vmatprep.mubr.f32.mxu0 0.0
    %4937 = vmatmul.mubr.f32.gmra.mrb[0].mxu0 %v4864
    %v4938 = vpop.f32.mrb[0].mxu0
    %v4939 = vadd.f32 0.0, %v4938
    %v4940 = vpop.f32.mrb[0].mxu0
    %4941 = vmatprep.mubr.f32.mxu0 0.0
    %4942 = vmatmul.mubr.f32.gmra.mrb[0].mxu0 %v4866
    %v4943 = vpop.f32.mrb[0].mxu0
    %v4944 = vadd.f32 0.0, %v4943
    %v4945 = vpop.f32.mrb[0].mxu0
    %4946 = vdwg.mxu0
    %v4947 = vmul.f32 %v4939, 0.35355338
    %v4948 = vmul.f32 %v4944, 0.35355338
    %v4949 = vadd.f32 %v4947, %v49
    %v4950 = vadd.f32 %v4948, %v50
    %v4951 = vsel %vm359, %v4949, -inf
    %4952 = vmax.xlane.f32.xlu0 %v4951
    %v4953 = vpop.xlane.xlu0 %4952
    %v4954 = vsel %vm359, %v4950, -inf
    %4955 = vmax.xlane.f32.xlu0 %v4954
    %v4956 = vpop.xlane.xlu0 %4955
    %v4957 = vsub.f32 %v4949, %v4953
    %v4958 = vsub.f32 %v4950, %v4956
    %v4959 = vmul.f32 %v4957, 1.442695
    %v4960 = vpow.pop %v4959
    %v4961 = vmul.f32 %v4958, 1.442695
    %v4962 = vpow.pop %v4961
    %v4963 = vsel %vm359, %v4960, 0.0
    %4964 = vadd.xlane.f32.xlu0 %v4963
    %v4965 = vpop.xlane.xlu0 %4964
    %v4966 = vsel %vm359, %v4962, 0.0
    %4967 = vadd.xlane.f32.xlu0 %v4966
    %v4968 = vpop.xlane.xlu0 %4967
    %v4969 = vrcp.pop %v4965
    %v4970 = vrcp.pop %v4968
    %v4971 = vmul.f32 %v4960, %v4969
    %v4972 = vmul.f32 %v4962, %v4970
    %4973 = vrot.lane.b32.xlu0 %v4218, 72
    %v4974 = vpop.permute.xlu0 %4973
    %4975 = vrot.lane.b32.xlu0 %v4223, 72
    %v4976 = vpop.permute.xlu0 %4975
    %v4980 = vsel %vm359, %v4971, 0
    %v4983 = vsel %vm359, %v4972, 0
    %4985 = vmatprep.subr.mxu0 0.0
    %4986 = vmatpush1.msra.mxu0 %v4974
    %4987 = vmatprep.subr.mxu0 0.0
    %4988 = vmatpush1.msra.mxu0 %v4976
    %4989 = vmatprep.subr.mxu0 0.0
    %4990 = vmatpush1.msra.mxu0 0.0
    %4991 = vmatprep.subr.mxu0 0.0
    %4992 = vmatpush1.msra.mxu0 0.0
    %4993 = vmatprep.subr.mxu0 0.0
    %4994 = vmatpush1.msra.mxu0 0.0
    %4995 = vmatprep.subr.mxu0 0.0
    %4996 = vmatpush1.msra.mxu0 0.0
    %4997 = vmatprep.subr.mxu0 0.0
    %4998 = vmatpush1.msra.mxu0 0.0
    %4999 = vmatprep.subr.mxu0 0.0
    %5000 = vmatpush1.msra.mxu0 0.0
    %5001 = vmatprep.subr.mxu0 0.0
    %5002 = vmatpush1.msra.mxu0 0.0
    %5003 = vmatprep.subr.mxu0 0.0
    %5004 = vmatpush1.msra.mxu0 0.0
    %5005 = vmatprep.subr.mxu0 0.0
    %5006 = vmatpush1.msra.mxu0 0.0
    %5007 = vmatprep.subr.mxu0 0.0
    %5008 = vmatpush1.msra.mxu0 0.0
    %5009 = vmatprep.subr.mxu0 0.0
    %5010 = vmatpush1.msra.mxu0 0.0
    %5011 = vmatprep.subr.mxu0 0.0
    %5012 = vmatpush1.msra.mxu0 0.0
    %5013 = vmatprep.subr.mxu0 0.0
    %5014 = vmatpush1.msra.mxu0 0.0
    %5015 = vmatprep.subr.mxu0 0.0
    %5016 = vmatpush1.msra.mxu0 0.0
    %5017 = vmatprep.subr.mxu0 0.0
    %5018 = vmatpush1.msra.mxu0 0.0
    %5019 = vmatprep.subr.mxu0 0.0
    %5020 = vmatpush1.msra.mxu0 0.0
    %5021 = vmatprep.subr.mxu0 0.0
    %5022 = vmatpush1.msra.mxu0 0.0
    %5023 = vmatprep.subr.mxu0 0.0
    %5024 = vmatpush1.msra.mxu0 0.0
    %5025 = vmatprep.subr.mxu0 0.0
    %5026 = vmatpush1.msra.mxu0 0.0
    %5027 = vmatprep.subr.mxu0 0.0
    %5028 = vmatpush1.msra.mxu0 0.0
    %5029 = vmatprep.subr.mxu0 0.0
    %5030 = vmatpush1.msra.mxu0 0.0
    %5031 = vmatprep.subr.mxu0 0.0
    %5032 = vmatpush1.msra.mxu0 0.0
    %5033 = vmatprep.subr.mxu0 0.0
    %5034 = vmatpush1.msra.mxu0 0.0
    %5035 = vmatprep.subr.mxu0 0.0
    %5036 = vmatpush1.msra.mxu0 0.0
    %5037 = vmatprep.subr.mxu0 0.0
    %5038 = vmatpush1.msra.mxu0 0.0
    %5039 = vmatprep.subr.mxu0 0.0
    %5040 = vmatpush1.msra.mxu0 0.0
    %5041 = vmatprep.subr.mxu0 0.0
    %5042 = vmatpush1.msra.mxu0 0.0
    %5043 = vmatprep.subr.mxu0 0.0
    %5044 = vmatpush1.msra.mxu0 0.0
    %5045 = vmatprep.subr.mxu0 0.0
    %5046 = vmatpush1.msra.mxu0 0.0
    %5047 = vmatprep.subr.mxu0 0.0
    %5048 = vmatpush1.msra.mxu0 0.0
    %5049 = vmatprep.mubr.f32.mxu0 0.0
    %5050 = vmatmul.mubr.f32.gmra.mrb[0].mxu0 %v4980
    %v5051 = vpop.f32.mrb[0].mxu0
    %v5052 = vadd.f32 0.0, %v5051
    %v5053 = vpop.f32.mrb[0].mxu0
    %5054 = vmatprep.mubr.f32.mxu0 0.0
    %5055 = vmatmul.mubr.f32.gmra.mrb[0].mxu0 %v4983
    %v5056 = vpop.f32.mrb[0].mxu0
    %v5057 = vadd.f32 0.0, %v5056
    %v5058 = vpop.f32.mrb[0].mxu0
    %5059 = vdwg.mxu0
    %5062 = vrot.lane.b32.xlu0 %v5052, 24
    %v5063 = vpop.permute.xlu0 %5062
    %5064 = vrot.lane.b32.xlu0 %v5057, 24
    %v5065 = vpop.permute.xlu0 %5064
    %5068 = vst.msk [vmem:[#allocation2] sm:$0xff] %vm1113, %v5063
    %5069 = vst.msk [vmem:[#allocation2 + $0x8] sm:$0xff] %vm1113, %v5065
    %v5070 = vld [vmem:[#allocation2] sm:$0xff]
    %v5071 = vld [vmem:[#allocation2 + $0x8] sm:$0xff]
    %5072 = vrot.lane.b32.xlu0 %v4007, 32
    %v5073 = vpop.permute.xlu0 %5072
    %5074 = vrot.lane.b32.xlu0 %v4008, 32
    %v5075 = vpop.permute.xlu0 %5074
    %5076 = vrot.lane.b32.xlu0 %v4009, 32
    %v5077 = vpop.permute.xlu0 %5076
    %5078 = vrot.lane.b32.xlu0 %v4010, 32
    %v5079 = vpop.permute.xlu0 %5078
    %5084 = vrot.lane.b32.xlu0 %v4043, 32
    %v5085 = vpop.permute.xlu0 %5084
    %v5088 = vsel %vm58, %v5070, 0
    %v5091 = vsel %vm58, %v5071, 0
    %5093 = vmatprep.subr.mxu0 0.0
    %5094 = vmatpush1.msra.mxu0 %v5073
    %5095 = vmatprep.subr.mxu0 0.0
    %5096 = vmatpush1.msra.mxu0 %v5075
    %5097 = vmatprep.subr.mxu0 0.0
    %5098 = vmatpush1.msra.mxu0 %v5077
    %5099 = vmatprep.subr.mxu0 0.0
    %5100 = vmatpush1.msra.mxu0 %v5079
    %5101 = vmatprep.subr.mxu0 0.0
    %5102 = vmatpush1.msra.mxu0 0.0
    %5103 = vmatprep.subr.mxu0 0.0
    %5104 = vmatpush1.msra.mxu0 0.0
    %5105 = vmatprep.subr.mxu0 0.0
    %5106 = vmatpush1.msra.mxu0 0.0
    %5107 = vmatprep.subr.mxu0 0.0
    %5108 = vmatpush1.msra.mxu0 0.0
    %5109 = vmatprep.subr.mxu0 0.0
    %5110 = vmatpush1.msra.mxu0 0.0
    %5111 = vmatprep.subr.mxu0 0.0
    %5112 = vmatpush1.msra.mxu0 0.0
    %5113 = vmatprep.subr.mxu0 0.0
    %5114 = vmatpush1.msra.mxu0 0.0
    %5115 = vmatprep.subr.mxu0 0.0
    %5116 = vmatpush1.msra.mxu0 0.0
    %5117 = vmatprep.subr.mxu0 0.0
    %5118 = vmatpush1.msra.mxu0 0.0
    %5119 = vmatprep.subr.mxu0 0.0
    %5120 = vmatpush1.msra.mxu0 0.0
    %5121 = vmatprep.subr.mxu0 0.0
    %5122 = vmatpush1.msra.mxu0 0.0
    %5123 = vmatprep.subr.mxu0 0.0
    %5124 = vmatpush1.msra.mxu0 0.0
    %5125 = vmatprep.subr.mxu0 0.0
    %5126 = vmatpush1.msra.mxu0 0.0
    %5127 = vmatprep.subr.mxu0 0.0
    %5128 = vmatpush1.msra.mxu0 0.0
    %5129 = vmatprep.subr.mxu0 0.0
    %5130 = vmatpush1.msra.mxu0 0.0
    %5131 = vmatprep.subr.mxu0 0.0
    %5132 = vmatpush1.msra.mxu0 0.0
    %5133 = vmatprep.subr.mxu0 0.0
    %5134 = vmatpush1.msra.mxu0 0.0
    %5135 = vmatprep.subr.mxu0 0.0
    %5136 = vmatpush1.msra.mxu0 0.0
    %5137 = vmatprep.subr.mxu0 0.0
    %5138 = vmatpush1.msra.mxu0 0.0
    %5139 = vmatprep.subr.mxu0 0.0
    %5140 = vmatpush1.msra.mxu0 0.0
    %5141 = vmatprep.subr.mxu0 0.0
    %5142 = vmatpush1.msra.mxu0 0.0
    %5143 = vmatprep.subr.mxu0 0.0
    %5144 = vmatpush1.msra.mxu0 0.0
    %5145 = vmatprep.subr.mxu0 0.0
    %5146 = vmatpush1.msra.mxu0 0.0
    %5147 = vmatprep.subr.mxu0 0.0
    %5148 = vmatpush1.msra.mxu0 0.0
    %5149 = vmatprep.subr.mxu0 0.0
    %5150 = vmatpush1.msra.mxu0 0.0
    %5151 = vmatprep.subr.mxu0 0.0
    %5152 = vmatpush1.msra.mxu0 0.0
    %5153 = vmatprep.subr.mxu0 0.0
    %5154 = vmatpush1.msra.mxu0 0.0
    %5155 = vmatprep.subr.mxu0 0.0
    %5156 = vmatpush1.msra.mxu0 0.0
    %5157 = vmatprep.mubr.f32.mxu0 0.0
    %5158 = vmatmul.mubr.f32.gmra.mrb[0].mxu0 %v5088
    %v5159 = vpop.f32.mrb[0].mxu0
    %v5160 = vadd.f32 %v5085, %v5159
    %v5161 = vpop.f32.mrb[0].mxu0
    %5162 = vmatprep.mubr.f32.mxu0 0.0
    %5163 = vmatmul.mubr.f32.gmra.mrb[0].mxu0 %v5091
    %v5164 = vpop.f32.mrb[0].mxu0
    %v5165 = vadd.f32 %v5085, %v5164
    %v5166 = vpop.f32.mrb[0].mxu0
    %5167 = vdwg.mxu0
    %v5168 = vadd.f32 %v5160, %v4004
    %v5169 = vadd.f32 %v5165, %v4005
    %v5170 = vsel %vm58, %v5168, 0.0
    %5171 = vadd.xlane.f32.xlu0 %v5170
    %v5172 = vpop.xlane.xlu0 %5171
    %v5173 = vsel %vm58, %v5169, 0.0
    %5174 = vadd.xlane.f32.xlu0 %v5173
    %v5175 = vpop.xlane.xlu0 %5174
    %v5176 = vmul.f32 %v5172, %v65
    %v5177 = vmul.f32 %v5175, %v65
    %v5178 = vsub.f32 %v5168, %v5176
    %v5179 = vsub.f32 %v5169, %v5177
    %v5180 = vmul.f32 %v5178, %v5178
    %v5181 = vmul.f32 %v5179, %v5179
    %v5182 = vsel %vm58, %v5180, 0.0
    %5183 = vadd.xlane.f32.xlu0 %v5182
    %v5184 = vpop.xlane.xlu0 %5183
    %v5185 = vsel %vm58, %v5181, 0.0
    %5186 = vadd.xlane.f32.xlu0 %v5185
    %v5187 = vpop.xlane.xlu0 %5186
    %v5188 = vmul.f32 %v5184, %v65
    %v5189 = vmul.f32 %v5187, %v65
    %v5190 = vadd.f32 %v5188, 1e-05
    %v5191 = vadd.f32 %v5189, 1e-05
    %v5192 = vrsqrt.pop %v5190
    %v5193 = vrsqrt.pop %v5191
    %v5194 = vmul.f32 %v5178, %v5192
    %v5195 = vmul.f32 %v5179, %v5193
    %s5196 = scalar_lea.vmem %s9, 2
    %v5197 = vld [vmem:[%s5196] sm:$0x1]
    %s5198 = scalar_lea.vmem %s7, 64
    %v5199 = vld [vmem:[%s5198] sm:$0xff]
    %v5200 = vld [vmem:[%s5198 + $0x8] sm:$0xff]
    %v5201 = vld [vmem:[%s5198 + $0x10] sm:$0xff]
    %v5202 = vld [vmem:[%s5198 + $0x18] sm:$0xff]
    %v5204 = vlaneseq
    %v5205 = vshrl.u32 %v5204, 7
    %v5206 = vsub.s32 0, %v5205
    %v5207 = vrot.slane %v5197, %v5206
    %v5210 = vsel %vm58, %v5194, 0
    %v5213 = vsel %vm58, %v5195, 0
    %5215 = vmatprep.subr.mxu0 0.0
    %5216 = vmatpush1.msra.mxu0 %v5199
    %5217 = vmatprep.subr.mxu0 0.0
    %5218 = vmatpush1.msra.mxu0 %v5200
    %5219 = vmatprep.subr.mxu0 0.0
    %5220 = vmatpush1.msra.mxu0 %v5201
    %5221 = vmatprep.subr.mxu0 0.0
    %5222 = vmatpush1.msra.mxu0 %v5202
    %5223 = vmatprep.subr.mxu0 0.0
    %5224 = vmatpush1.msra.mxu0 0.0
    %5225 = vmatprep.subr.mxu0 0.0
    %5226 = vmatpush1.msra.mxu0 0.0
    %5227 = vmatprep.subr.mxu0 0.0
    %5228 = vmatpush1.msra.mxu0 0.0
    %5229 = vmatprep.subr.mxu0 0.0
    %5230 = vmatpush1.msra.mxu0 0.0
    %5231 = vmatprep.subr.mxu0 0.0
    %5232 = vmatpush1.msra.mxu0 0.0
    %5233 = vmatprep.subr.mxu0 0.0
    %5234 = vmatpush1.msra.mxu0 0.0
    %5235 = vmatprep.subr.mxu0 0.0
    %5236 = vmatpush1.msra.mxu0 0.0
    %5237 = vmatprep.subr.mxu0 0.0
    %5238 = vmatpush1.msra.mxu0 0.0
    %5239 = vmatprep.subr.mxu0 0.0
    %5240 = vmatpush1.msra.mxu0 0.0
    %5241 = vmatprep.subr.mxu0 0.0
    %5242 = vmatpush1.msra.mxu0 0.0
    %5243 = vmatprep.subr.mxu0 0.0
    %5244 = vmatpush1.msra.mxu0 0.0
    %5245 = vmatprep.subr.mxu0 0.0
    %5246 = vmatpush1.msra.mxu0 0.0
    %5247 = vmatprep.subr.mxu0 0.0
    %5248 = vmatpush1.msra.mxu0 0.0
    %5249 = vmatprep.subr.mxu0 0.0
    %5250 = vmatpush1.msra.mxu0 0.0
    %5251 = vmatprep.subr.mxu0 0.0
    %5252 = vmatpush1.msra.mxu0 0.0
    %5253 = vmatprep.subr.mxu0 0.0
    %5254 = vmatpush1.msra.mxu0 0.0
    %5255 = vmatprep.subr.mxu0 0.0
    %5256 = vmatpush1.msra.mxu0 0.0
    %5257 = vmatprep.subr.mxu0 0.0
    %5258 = vmatpush1.msra.mxu0 0.0
    %5259 = vmatprep.subr.mxu0 0.0
    %5260 = vmatpush1.msra.mxu0 0.0
    %5261 = vmatprep.subr.mxu0 0.0
    %5262 = vmatpush1.msra.mxu0 0.0
    %5263 = vmatprep.subr.mxu0 0.0
    %5264 = vmatpush1.msra.mxu0 0.0
    %5265 = vmatprep.subr.mxu0 0.0
    %5266 = vmatpush1.msra.mxu0 0.0
    %5267 = vmatprep.subr.mxu0 0.0
    %5268 = vmatpush1.msra.mxu0 0.0
    %5269 = vmatprep.subr.mxu0 0.0
    %5270 = vmatpush1.msra.mxu0 0.0
    %5271 = vmatprep.subr.mxu0 0.0
    %5272 = vmatpush1.msra.mxu0 0.0
    %5273 = vmatprep.subr.mxu0 0.0
    %5274 = vmatpush1.msra.mxu0 0.0
    %5275 = vmatprep.subr.mxu0 0.0
    %5276 = vmatpush1.msra.mxu0 0.0
    %5277 = vmatprep.subr.mxu0 0.0
    %5278 = vmatpush1.msra.mxu0 0.0
    %5279 = vmatprep.mubr.f32.mxu0 0.0
    %5280 = vmatmul.mubr.f32.gmra.mrb[0].mxu0 %v5210
    %v5281 = vpop.f32.mrb[0].mxu0
    %v5282 = vadd.f32 %v5207, %v5281
    %v5283 = vpop.f32.mrb[0].mxu0
    %5284 = vmatprep.mubr.f32.mxu0 0.0
    %5285 = vmatmul.mubr.f32.gmra.mrb[0].mxu0 %v5213
    %v5286 = vpop.f32.mrb[0].mxu0
    %v5287 = vadd.f32 %v5207, %v5286
    %v5288 = vpop.f32.mrb[0].mxu0
    %5289 = vdwg.mxu0
    %v5290 = vmax.f32 %v5282, 0.0
    %v5291 = vmax.f32 %v5287, 0.0
    %s5292 = scalar_lea.vmem %s8, 128
    %v5293 = vld [vmem:[%s5292] sm:$0xff]
    %v5294 = vld [vmem:[%s5292 + $0x8] sm:$0xff]
    %v5295 = vld [vmem:[%s5292 + $0x10] sm:$0xff]
    %v5296 = vld [vmem:[%s5292 + $0x18] sm:$0xff]
    %v5297 = vld [vmem:[%s5292 + $0x20] sm:$0xff]
    %v5298 = vld [vmem:[%s5292 + $0x28] sm:$0xff]
    %v5299 = vld [vmem:[%s5292 + $0x30] sm:$0xff]
    %v5300 = vld [vmem:[%s5292 + $0x38] sm:$0xff]
    %5301 = vrot.lane.b32.xlu0 %v5207, 64
    %v5302 = vpop.permute.xlu0 %5301
    %v5305 = vsel %vm1347, %v5290, 0
    %v5308 = vsel %vm1347, %v5291, 0
    %5310 = vmatprep.subr.mxu0 0.0
    %5311 = vmatpush1.msra.mxu0 %v5293
    %5312 = vmatprep.subr.mxu0 0.0
    %5313 = vmatpush1.msra.mxu0 %v5294
    %5314 = vmatprep.subr.mxu0 0.0
    %5315 = vmatpush1.msra.mxu0 %v5295
    %5316 = vmatprep.subr.mxu0 0.0
    %5317 = vmatpush1.msra.mxu0 %v5296
    %5318 = vmatprep.subr.mxu0 0.0
    %5319 = vmatpush1.msra.mxu0 %v5297
    %5320 = vmatprep.subr.mxu0 0.0
    %5321 = vmatpush1.msra.mxu0 %v5298
    %5322 = vmatprep.subr.mxu0 0.0
    %5323 = vmatpush1.msra.mxu0 %v5299
    %5324 = vmatprep.subr.mxu0 0.0
    %5325 = vmatpush1.msra.mxu0 %v5300
    %5326 = vmatprep.subr.mxu0 0.0
    %5327 = vmatpush1.msra.mxu0 0.0
    %5328 = vmatprep.subr.mxu0 0.0
    %5329 = vmatpush1.msra.mxu0 0.0
    %5330 = vmatprep.subr.mxu0 0.0
    %5331 = vmatpush1.msra.mxu0 0.0
    %5332 = vmatprep.subr.mxu0 0.0
    %5333 = vmatpush1.msra.mxu0 0.0
    %5334 = vmatprep.subr.mxu0 0.0
    %5335 = vmatpush1.msra.mxu0 0.0
    %5336 = vmatprep.subr.mxu0 0.0
    %5337 = vmatpush1.msra.mxu0 0.0
    %5338 = vmatprep.subr.mxu0 0.0
    %5339 = vmatpush1.msra.mxu0 0.0
    %5340 = vmatprep.subr.mxu0 0.0
    %5341 = vmatpush1.msra.mxu0 0.0
    %5342 = vmatprep.subr.mxu0 0.0
    %5343 = vmatpush1.msra.mxu0 0.0
    %5344 = vmatprep.subr.mxu0 0.0
    %5345 = vmatpush1.msra.mxu0 0.0
    %5346 = vmatprep.subr.mxu0 0.0
    %5347 = vmatpush1.msra.mxu0 0.0
    %5348 = vmatprep.subr.mxu0 0.0
    %5349 = vmatpush1.msra.mxu0 0.0
    %5350 = vmatprep.subr.mxu0 0.0
    %5351 = vmatpush1.msra.mxu0 0.0
    %5352 = vmatprep.subr.mxu0 0.0
    %5353 = vmatpush1.msra.mxu0 0.0
    %5354 = vmatprep.subr.mxu0 0.0
    %5355 = vmatpush1.msra.mxu0 0.0
    %5356 = vmatprep.subr.mxu0 0.0
    %5357 = vmatpush1.msra.mxu0 0.0
    %5358 = vmatprep.subr.mxu0 0.0
    %5359 = vmatpush1.msra.mxu0 0.0
    %5360 = vmatprep.subr.mxu0 0.0
    %5361 = vmatpush1.msra.mxu0 0.0
    %5362 = vmatprep.subr.mxu0 0.0
    %5363 = vmatpush1.msra.mxu0 0.0
    %5364 = vmatprep.subr.mxu0 0.0
    %5365 = vmatpush1.msra.mxu0 0.0
    %5366 = vmatprep.subr.mxu0 0.0
    %5367 = vmatpush1.msra.mxu0 0.0
    %5368 = vmatprep.subr.mxu0 0.0
    %5369 = vmatpush1.msra.mxu0 0.0
    %5370 = vmatprep.subr.mxu0 0.0
    %5371 = vmatpush1.msra.mxu0 0.0
    %5372 = vmatprep.subr.mxu0 0.0
    %5373 = vmatpush1.msra.mxu0 0.0
    %5374 = vmatprep.mubr.f32.mxu0 0.0
    %5375 = vmatmul.mubr.f32.gmra.mrb[0].mxu0 %v5305
    %v5376 = vpop.f32.mrb[0].mxu0
    %v5377 = vadd.f32 %v5302, %v5376
    %v5378 = vpop.f32.mrb[0].mxu0
    %5379 = vmatprep.mubr.f32.mxu0 0.0
    %5380 = vmatmul.mubr.f32.gmra.mrb[0].mxu0 %v5308
    %v5381 = vpop.f32.mrb[0].mxu0
    %v5382 = vadd.f32 %v5302, %v5381
    %v5383 = vpop.f32.mrb[0].mxu0
    %5384 = vdwg.mxu0
    %v5385 = vadd.f32 %v5377, %v5168
    %v5386 = vadd.f32 %v5382, %v5169
    %s5387 = scalar_lea.vmem %s5, 128
    %v5388 = vld [vmem:[%s5387] sm:$0xff]
    %v5389 = vld [vmem:[%s5387 + $0x8] sm:$0xff]
    %v5390 = vld [vmem:[%s5387 + $0x10] sm:$0xff]
    %v5391 = vld [vmem:[%s5387 + $0x18] sm:$0xff]
    %s5392 = scalar_lea.vmem %s6, 4
    %v5393 = vld [vmem:[%s5392] sm:$0x1]
    %v5394 = vsel %vm58, %v5385, 0.0
    %5395 = vadd.xlane.f32.xlu0 %v5394
    %v5396 = vpop.xlane.xlu0 %5395
    %v5397 = vsel %vm58, %v5386, 0.0
    %5398 = vadd.xlane.f32.xlu0 %v5397
    %v5399 = vpop.xlane.xlu0 %5398
    %v5400 = vmul.f32 %v5396, %v65
    %v5401 = vmul.f32 %v5399, %v65
    %v5402 = vsub.f32 %v5385, %v5400
    %v5403 = vsub.f32 %v5386, %v5401
    %v5404 = vmul.f32 %v5402, %v5402
    %v5405 = vmul.f32 %v5403, %v5403
    %v5406 = vsel %vm58, %v5404, 0.0
    %5407 = vadd.xlane.f32.xlu0 %v5406
    %v5408 = vpop.xlane.xlu0 %5407
    %v5409 = vsel %vm58, %v5405, 0.0
    %5410 = vadd.xlane.f32.xlu0 %v5409
    %v5411 = vpop.xlane.xlu0 %5410
    %v5412 = vmul.f32 %v5408, %v65
    %v5413 = vmul.f32 %v5411, %v65
    %v5414 = vadd.f32 %v5412, 1e-05
    %v5415 = vadd.f32 %v5413, 1e-05
    %v5416 = vrsqrt.pop %v5414
    %v5417 = vrsqrt.pop %v5415
    %v5418 = vmul.f32 %v5402, %v5416
    %v5419 = vmul.f32 %v5403, %v5417
    %v5421 = vlaneseq
    %v5422 = vshrl.u32 %v5421, 7
    %v5423 = vsub.s32 0, %v5422
    %v5424 = vrot.slane %v5393, %v5423
    %v5427 = vsel %vm58, %v5418, 0
    %v5430 = vsel %vm58, %v5419, 0
    %5432 = vmatprep.subr.mxu0 0.0
    %5433 = vmatpush1.msra.mxu0 %v5388
    %5434 = vmatprep.subr.mxu0 0.0
    %5435 = vmatpush1.msra.mxu0 %v5389
    %5436 = vmatprep.subr.mxu0 0.0
    %5437 = vmatpush1.msra.mxu0 %v5390
    %5438 = vmatprep.subr.mxu0 0.0
    %5439 = vmatpush1.msra.mxu0 %v5391
    %5440 = vmatprep.subr.mxu0 0.0
    %5441 = vmatpush1.msra.mxu0 0.0
    %5442 = vmatprep.subr.mxu0 0.0
    %5443 = vmatpush1.msra.mxu0 0.0
    %5444 = vmatprep.subr.mxu0 0.0
    %5445 = vmatpush1.msra.mxu0 0.0
    %5446 = vmatprep.subr.mxu0 0.0
    %5447 = vmatpush1.msra.mxu0 0.0
    %5448 = vmatprep.subr.mxu0 0.0
    %5449 = vmatpush1.msra.mxu0 0.0
    %5450 = vmatprep.subr.mxu0 0.0
    %5451 = vmatpush1.msra.mxu0 0.0
    %5452 = vmatprep.subr.mxu0 0.0
    %5453 = vmatpush1.msra.mxu0 0.0
    %5454 = vmatprep.subr.mxu0 0.0
    %5455 = vmatpush1.msra.mxu0 0.0
    %5456 = vmatprep.subr.mxu0 0.0
    %5457 = vmatpush1.msra.mxu0 0.0
    %5458 = vmatprep.subr.mxu0 0.0
    %5459 = vmatpush1.msra.mxu0 0.0
    %5460 = vmatprep.subr.mxu0 0.0
    %5461 = vmatpush1.msra.mxu0 0.0
    %5462 = vmatprep.subr.mxu0 0.0
    %5463 = vmatpush1.msra.mxu0 0.0
    %5464 = vmatprep.subr.mxu0 0.0
    %5465 = vmatpush1.msra.mxu0 0.0
    %5466 = vmatprep.subr.mxu0 0.0
    %5467 = vmatpush1.msra.mxu0 0.0
    %5468 = vmatprep.subr.mxu0 0.0
    %5469 = vmatpush1.msra.mxu0 0.0
    %5470 = vmatprep.subr.mxu0 0.0
    %5471 = vmatpush1.msra.mxu0 0.0
    %5472 = vmatprep.subr.mxu0 0.0
    %5473 = vmatpush1.msra.mxu0 0.0
    %5474 = vmatprep.subr.mxu0 0.0
    %5475 = vmatpush1.msra.mxu0 0.0
    %5476 = vmatprep.subr.mxu0 0.0
    %5477 = vmatpush1.msra.mxu0 0.0
    %5478 = vmatprep.subr.mxu0 0.0
    %5479 = vmatpush1.msra.mxu0 0.0
    %5480 = vmatprep.subr.mxu0 0.0
    %5481 = vmatpush1.msra.mxu0 0.0
    %5482 = vmatprep.subr.mxu0 0.0
    %5483 = vmatpush1.msra.mxu0 0.0
    %5484 = vmatprep.subr.mxu0 0.0
    %5485 = vmatpush1.msra.mxu0 0.0
    %5486 = vmatprep.subr.mxu0 0.0
    %5487 = vmatpush1.msra.mxu0 0.0
    %5488 = vmatprep.subr.mxu0 0.0
    %5489 = vmatpush1.msra.mxu0 0.0
    %5490 = vmatprep.subr.mxu0 0.0
    %5491 = vmatpush1.msra.mxu0 0.0
    %5492 = vmatprep.subr.mxu0 0.0
    %5493 = vmatpush1.msra.mxu0 0.0
    %5494 = vmatprep.subr.mxu0 0.0
    %5495 = vmatpush1.msra.mxu0 0.0
    %5496 = vmatprep.mubr.f32.mxu0 0.0
    %5497 = vmatmul.mubr.f32.gmra.mrb[0].mxu0 %v5427
    %v5498 = vpop.f32.mrb[0].mxu0
    %v5499 = vadd.f32 %v5424, %v5498
    %v5500 = vpop.f32.mrb[0].mxu0
    %5501 = vmatprep.mubr.f32.mxu0 0.0
    %5502 = vmatmul.mubr.f32.gmra.mrb[0].mxu0 %v5430
    %v5503 = vpop.f32.mrb[0].mxu0
    %v5504 = vadd.f32 %v5424, %v5503
    %v5505 = vpop.f32.mrb[0].mxu0
    %5506 = vdwg.mxu0
    %5511 = vrot.lane.b32.xlu0 %v5388, 96
    %v5512 = vpop.permute.xlu0 %5511
    %5513 = vrot.lane.b32.xlu0 %v5389, 96
    %v5514 = vpop.permute.xlu0 %5513
    %5515 = vrot.lane.b32.xlu0 %v5390, 96
    %v5516 = vpop.permute.xlu0 %5515
    %5517 = vrot.lane.b32.xlu0 %v5391, 96
    %v5518 = vpop.permute.xlu0 %5517
    %5523 = vrot.lane.b32.xlu0 %v5424, 96
    %v5524 = vpop.permute.xlu0 %5523
    %5526 = vmatprep.subr.mxu0 0.0
    %5527 = vmatpush1.msra.mxu0 %v5512
    %5528 = vmatprep.subr.mxu0 0.0
    %5529 = vmatpush1.msra.mxu0 %v5514
    %5530 = vmatprep.subr.mxu0 0.0
    %5531 = vmatpush1.msra.mxu0 %v5516
    %5532 = vmatprep.subr.mxu0 0.0
    %5533 = vmatpush1.msra.mxu0 %v5518
    %5534 = vmatprep.subr.mxu0 0.0
    %5535 = vmatpush1.msra.mxu0 0.0
    %5536 = vmatprep.subr.mxu0 0.0
    %5537 = vmatpush1.msra.mxu0 0.0
    %5538 = vmatprep.subr.mxu0 0.0
    %5539 = vmatpush1.msra.mxu0 0.0
    %5540 = vmatprep.subr.mxu0 0.0
    %5541 = vmatpush1.msra.mxu0 0.0
    %5542 = vmatprep.subr.mxu0 0.0
    %5543 = vmatpush1.msra.mxu0 0.0
    %5544 = vmatprep.subr.mxu0 0.0
    %5545 = vmatpush1.msra.mxu0 0.0
    %5546 = vmatprep.subr.mxu0 0.0
    %5547 = vmatpush1.msra.mxu0 0.0
    %5548 = vmatprep.subr.mxu0 0.0
    %5549 = vmatpush1.msra.mxu0 0.0
    %5550 = vmatprep.subr.mxu0 0.0
    %5551 = vmatpush1.msra.mxu0 0.0
    %5552 = vmatprep.subr.mxu0 0.0
    %5553 = vmatpush1.msra.mxu0 0.0
    %5554 = vmatprep.subr.mxu0 0.0
    %5555 = vmatpush1.msra.mxu0 0.0
    %5556 = vmatprep.subr.mxu0 0.0
    %5557 = vmatpush1.msra.mxu0 0.0
    %5558 = vmatprep.subr.mxu0 0.0
    %5559 = vmatpush1.msra.mxu0 0.0
    %5560 = vmatprep.subr.mxu0 0.0
    %5561 = vmatpush1.msra.mxu0 0.0
    %5562 = vmatprep.subr.mxu0 0.0
    %5563 = vmatpush1.msra.mxu0 0.0
    %5564 = vmatprep.subr.mxu0 0.0
    %5565 = vmatpush1.msra.mxu0 0.0
    %5566 = vmatprep.subr.mxu0 0.0
    %5567 = vmatpush1.msra.mxu0 0.0
    %5568 = vmatprep.subr.mxu0 0.0
    %5569 = vmatpush1.msra.mxu0 0.0
    %5570 = vmatprep.subr.mxu0 0.0
    %5571 = vmatpush1.msra.mxu0 0.0
    %5572 = vmatprep.subr.mxu0 0.0
    %5573 = vmatpush1.msra.mxu0 0.0
    %5574 = vmatprep.subr.mxu0 0.0
    %5575 = vmatpush1.msra.mxu0 0.0
    %5576 = vmatprep.subr.mxu0 0.0
    %5577 = vmatpush1.msra.mxu0 0.0
    %5578 = vmatprep.subr.mxu0 0.0
    %5579 = vmatpush1.msra.mxu0 0.0
    %5580 = vmatprep.subr.mxu0 0.0
    %5581 = vmatpush1.msra.mxu0 0.0
    %5582 = vmatprep.subr.mxu0 0.0
    %5583 = vmatpush1.msra.mxu0 0.0
    %5584 = vmatprep.subr.mxu0 0.0
    %5585 = vmatpush1.msra.mxu0 0.0
    %5586 = vmatprep.subr.mxu0 0.0
    %5587 = vmatpush1.msra.mxu0 0.0
    %5588 = vmatprep.subr.mxu0 0.0
    %5589 = vmatpush1.msra.mxu0 0.0
    %5590 = vmatprep.mubr.f32.mxu0 0.0
    %5591 = vmatmul.mubr.f32.gmra.mrb[0].mxu0 %v5427
    %v5592 = vpop.f32.mrb[0].mxu0
    %v5593 = vadd.f32 %v5524, %v5592
    %v5594 = vpop.f32.mrb[0].mxu0
    %5595 = vmatprep.mubr.f32.mxu0 0.0
    %5596 = vmatmul.mubr.f32.gmra.mrb[0].mxu0 %v5430
    %v5597 = vpop.f32.mrb[0].mxu0
    %v5598 = vadd.f32 %v5524, %v5597
    %v5599 = vpop.f32.mrb[0].mxu0
    %5600 = vdwg.mxu0
    %v5602 = vsel %vm267, %v5499, 0
    %v5605 = vsel %vm267, %v5504, 0
    %v5608 = vsel %vm267, %v5593, 0
    %v5611 = vsel %vm267, %v5598, 0
    %5613 = vmatprep.subr.mxu0 0.0
    %5614 = vmatpush1.xpose.msra.mxu0 %v5608
    %5615 = vmatprep.subr.mxu0 0.0
    %5616 = vmatpush1.xpose.msra.mxu0 %v5611
    %5617 = vmatprep.subr.mxu0 0.0
    %5618 = vmatpush1.xpose.msra.mxu0 0.0
    %5619 = vmatprep.subr.mxu0 0.0
    %5620 = vmatpush1.xpose.msra.mxu0 0.0
    %5621 = vmatprep.subr.mxu0 0.0
    %5622 = vmatpush1.xpose.msra.mxu0 0.0
    %5623 = vmatprep.subr.mxu0 0.0
    %5624 = vmatpush1.xpose.msra.mxu0 0.0
    %5625 = vmatprep.subr.mxu0 0.0
    %5626 = vmatpush1.xpose.msra.mxu0 0.0
    %5627 = vmatprep.subr.mxu0 0.0
    %5628 = vmatpush1.xpose.msra.mxu0 0.0
    %5629 = vmatprep.subr.mxu0 0.0
    %5630 = vmatpush1.xpose.msra.mxu0 0.0
    %5631 = vmatprep.subr.mxu0 0.0
    %5632 = vmatpush1.xpose.msra.mxu0 0.0
    %5633 = vmatprep.subr.mxu0 0.0
    %5634 = vmatpush1.xpose.msra.mxu0 0.0
    %5635 = vmatprep.subr.mxu0 0.0
    %5636 = vmatpush1.xpose.msra.mxu0 0.0
    %5637 = vmatprep.subr.mxu0 0.0
    %5638 = vmatpush1.xpose.msra.mxu0 0.0
    %5639 = vmatprep.subr.mxu0 0.0
    %5640 = vmatpush1.xpose.msra.mxu0 0.0
    %5641 = vmatprep.subr.mxu0 0.0
    %5642 = vmatpush1.xpose.msra.mxu0 0.0
    %5643 = vmatprep.subr.mxu0 0.0
    %5644 = vmatpush1.xpose.msra.mxu0 0.0
    %5645 = vmatprep.subr.mxu0 0.0
    %5646 = vmatpush1.xpose.msra.mxu0 0.0
    %5647 = vmatprep.subr.mxu0 0.0
    %5648 = vmatpush1.xpose.msra.mxu0 0.0
    %5649 = vmatprep.subr.mxu0 0.0
    %5650 = vmatpush1.xpose.msra.mxu0 0.0
    %5651 = vmatprep.subr.mxu0 0.0
    %5652 = vmatpush1.xpose.msra.mxu0 0.0
    %5653 = vmatprep.subr.mxu0 0.0
    %5654 = vmatpush1.xpose.msra.mxu0 0.0
    %5655 = vmatprep.subr.mxu0 0.0
    %5656 = vmatpush1.xpose.msra.mxu0 0.0
    %5657 = vmatprep.subr.mxu0 0.0
    %5658 = vmatpush1.xpose.msra.mxu0 0.0
    %5659 = vmatprep.subr.mxu0 0.0
    %5660 = vmatpush1.xpose.msra.mxu0 0.0
    %5661 = vmatprep.subr.mxu0 0.0
    %5662 = vmatpush1.xpose.msra.mxu0 0.0
    %5663 = vmatprep.subr.mxu0 0.0
    %5664 = vmatpush1.xpose.msra.mxu0 0.0
    %5665 = vmatprep.subr.mxu0 0.0
    %5666 = vmatpush1.xpose.msra.mxu0 0.0
    %5667 = vmatprep.subr.mxu0 0.0
    %5668 = vmatpush1.xpose.msra.mxu0 0.0
    %5669 = vmatprep.subr.mxu0 0.0
    %5670 = vmatpush1.xpose.msra.mxu0 0.0
    %5671 = vmatprep.subr.mxu0 0.0
    %5672 = vmatpush1.xpose.msra.mxu0 0.0
    %5673 = vmatprep.subr.mxu0 0.0
    %5674 = vmatpush1.xpose.msra.mxu0 0.0
    %5675 = vmatprep.subr.mxu0 0.0
    %5676 = vmatpush1.xpose.msra.mxu0 0.0
    %5677 = vmatprep.mubr.f32.mxu0 0.0
    %5678 = vmatmul.mubr.f32.gmra.mrb[0].mxu0 %v5602
    %v5679 = vpop.f32.mrb[0].mxu0
    %v5680 = vadd.f32 0.0, %v5679
    %v5681 = vpop.f32.mrb[0].mxu0
    %5682 = vmatprep.mubr.f32.mxu0 0.0
    %5683 = vmatmul.mubr.f32.gmra.mrb[0].mxu0 %v5605
    %v5684 = vpop.f32.mrb[0].mxu0
    %v5685 = vadd.f32 0.0, %v5684
    %v5686 = vpop.f32.mrb[0].mxu0
    %5687 = vdwg.mxu0
    %v5688 = vmul.f32 %v5680, 0.35355338
    %v5689 = vmul.f32 %v5685, 0.35355338
    %v5690 = vadd.f32 %v5688, %v47
    %v5691 = vadd.f32 %v5689, %v48
    %v5692 = vsel %vm359, %v5690, -inf
    %5693 = vmax.xlane.f32.xlu0 %v5692
    %v5694 = vpop.xlane.xlu0 %5693
    %v5695 = vsel %vm359, %v5691, -inf
    %5696 = vmax.xlane.f32.xlu0 %v5695
    %v5697 = vpop.xlane.xlu0 %5696
    %v5698 = vsub.f32 %v5690, %v5694
    %v5699 = vsub.f32 %v5691, %v5697
    %v5700 = vmul.f32 %v5698, 1.442695
    %v5701 = vpow.pop %v5700
    %v5702 = vmul.f32 %v5699, 1.442695
    %v5703 = vpow.pop %v5702
    %v5704 = vsel %vm359, %v5701, 0.0
    %5705 = vadd.xlane.f32.xlu0 %v5704
    %v5706 = vpop.xlane.xlu0 %5705
    %v5707 = vsel %vm359, %v5703, 0.0
    %5708 = vadd.xlane.f32.xlu0 %v5707
    %v5709 = vpop.xlane.xlu0 %5708
    %v5710 = vrcp.pop %v5706
    %v5711 = vrcp.pop %v5709
    %v5712 = vmul.f32 %v5701, %v5710
    %v5713 = vmul.f32 %v5703, %v5711
    %5714 = vrot.lane.b32.xlu0 %v5593, 96
    %v5715 = vpop.permute.xlu0 %5714
    %5716 = vrot.lane.b32.xlu0 %v5598, 96
    %v5717 = vpop.permute.xlu0 %5716
    %v5721 = vsel %vm359, %v5712, 0
    %v5724 = vsel %vm359, %v5713, 0
    %5726 = vmatprep.subr.mxu0 0.0
    %5727 = vmatpush1.msra.mxu0 %v5715
    %5728 = vmatprep.subr.mxu0 0.0
    %5729 = vmatpush1.msra.mxu0 %v5717
    %5730 = vmatprep.subr.mxu0 0.0
    %5731 = vmatpush1.msra.mxu0 0.0
    %5732 = vmatprep.subr.mxu0 0.0
    %5733 = vmatpush1.msra.mxu0 0.0
    %5734 = vmatprep.subr.mxu0 0.0
    %5735 = vmatpush1.msra.mxu0 0.0
    %5736 = vmatprep.subr.mxu0 0.0
    %5737 = vmatpush1.msra.mxu0 0.0
    %5738 = vmatprep.subr.mxu0 0.0
    %5739 = vmatpush1.msra.mxu0 0.0
    %5740 = vmatprep.subr.mxu0 0.0
    %5741 = vmatpush1.msra.mxu0 0.0
    %5742 = vmatprep.subr.mxu0 0.0
    %5743 = vmatpush1.msra.mxu0 0.0
    %5744 = vmatprep.subr.mxu0 0.0
    %5745 = vmatpush1.msra.mxu0 0.0
    %5746 = vmatprep.subr.mxu0 0.0
    %5747 = vmatpush1.msra.mxu0 0.0
    %5748 = vmatprep.subr.mxu0 0.0
    %5749 = vmatpush1.msra.mxu0 0.0
    %5750 = vmatprep.subr.mxu0 0.0
    %5751 = vmatpush1.msra.mxu0 0.0
    %5752 = vmatprep.subr.mxu0 0.0
    %5753 = vmatpush1.msra.mxu0 0.0
    %5754 = vmatprep.subr.mxu0 0.0
    %5755 = vmatpush1.msra.mxu0 0.0
    %5756 = vmatprep.subr.mxu0 0.0
    %5757 = vmatpush1.msra.mxu0 0.0
    %5758 = vmatprep.subr.mxu0 0.0
    %5759 = vmatpush1.msra.mxu0 0.0
    %5760 = vmatprep.subr.mxu0 0.0
    %5761 = vmatpush1.msra.mxu0 0.0
    %5762 = vmatprep.subr.mxu0 0.0
    %5763 = vmatpush1.msra.mxu0 0.0
    %5764 = vmatprep.subr.mxu0 0.0
    %5765 = vmatpush1.msra.mxu0 0.0
    %5766 = vmatprep.subr.mxu0 0.0
    %5767 = vmatpush1.msra.mxu0 0.0
    %5768 = vmatprep.subr.mxu0 0.0
    %5769 = vmatpush1.msra.mxu0 0.0
    %5770 = vmatprep.subr.mxu0 0.0
    %5771 = vmatpush1.msra.mxu0 0.0
    %5772 = vmatprep.subr.mxu0 0.0
    %5773 = vmatpush1.msra.mxu0 0.0
    %5774 = vmatprep.subr.mxu0 0.0
    %5775 = vmatpush1.msra.mxu0 0.0
    %5776 = vmatprep.subr.mxu0 0.0
    %5777 = vmatpush1.msra.mxu0 0.0
    %5778 = vmatprep.subr.mxu0 0.0
    %5779 = vmatpush1.msra.mxu0 0.0
    %5780 = vmatprep.subr.mxu0 0.0
    %5781 = vmatpush1.msra.mxu0 0.0
    %5782 = vmatprep.subr.mxu0 0.0
    %5783 = vmatpush1.msra.mxu0 0.0
    %5784 = vmatprep.subr.mxu0 0.0
    %5785 = vmatpush1.msra.mxu0 0.0
    %5786 = vmatprep.subr.mxu0 0.0
    %5787 = vmatpush1.msra.mxu0 0.0
    %5788 = vmatprep.subr.mxu0 0.0
    %5789 = vmatpush1.msra.mxu0 0.0
    %5790 = vmatprep.mubr.f32.mxu0 0.0
    %5791 = vmatmul.mubr.f32.gmra.mrb[0].mxu0 %v5721
    %v5792 = vpop.f32.mrb[0].mxu0
    %v5793 = vadd.f32 0.0, %v5792
    %v5794 = vpop.f32.mrb[0].mxu0
    %5795 = vmatprep.mubr.f32.mxu0 0.0
    %5796 = vmatmul.mubr.f32.gmra.mrb[0].mxu0 %v5724
    %v5797 = vpop.f32.mrb[0].mxu0
    %v5798 = vadd.f32 0.0, %v5797
    %v5799 = vpop.f32.mrb[0].mxu0
    %5800 = vdwg.mxu0
    %5801 = vst.msk [vmem:[#allocation2] sm:$0xff] %vm267, %v5793
    %5802 = vst.msk [vmem:[#allocation2 + $0x8] sm:$0xff] %vm267, %v5798
    %5803 = vrot.lane.b32.xlu0 %v5499, 120
    %v5804 = vpop.permute.xlu0 %5803
    %5805 = vrot.lane.b32.xlu0 %v5504, 120
    %v5806 = vpop.permute.xlu0 %5805
    %5807 = vrot.lane.b32.xlu0 %v5593, 120
    %v5808 = vpop.permute.xlu0 %5807
    %5809 = vrot.lane.b32.xlu0 %v5598, 120
    %v5810 = vpop.permute.xlu0 %5809
    %v5811 = vsel %vm267, %v5804, 0
    %v5813 = vsel %vm267, %v5806, 0
    %v5815 = vsel %vm267, %v5808, 0
    %v5817 = vsel %vm267, %v5810, 0
    %5819 = vmatprep.subr.mxu0 0.0
    %5820 = vmatpush1.xpose.msra.mxu0 %v5815
    %5821 = vmatprep.subr.mxu0 0.0
    %5822 = vmatpush1.xpose.msra.mxu0 %v5817
    %5823 = vmatprep.subr.mxu0 0.0
    %5824 = vmatpush1.xpose.msra.mxu0 0.0
    %5825 = vmatprep.subr.mxu0 0.0
    %5826 = vmatpush1.xpose.msra.mxu0 0.0
    %5827 = vmatprep.subr.mxu0 0.0
    %5828 = vmatpush1.xpose.msra.mxu0 0.0
    %5829 = vmatprep.subr.mxu0 0.0
    %5830 = vmatpush1.xpose.msra.mxu0 0.0
    %5831 = vmatprep.subr.mxu0 0.0
    %5832 = vmatpush1.xpose.msra.mxu0 0.0
    %5833 = vmatprep.subr.mxu0 0.0
    %5834 = vmatpush1.xpose.msra.mxu0 0.0
    %5835 = vmatprep.subr.mxu0 0.0
    %5836 = vmatpush1.xpose.msra.mxu0 0.0
    %5837 = vmatprep.subr.mxu0 0.0
    %5838 = vmatpush1.xpose.msra.mxu0 0.0
    %5839 = vmatprep.subr.mxu0 0.0
    %5840 = vmatpush1.xpose.msra.mxu0 0.0
    %5841 = vmatprep.subr.mxu0 0.0
    %5842 = vmatpush1.xpose.msra.mxu0 0.0
    %5843 = vmatprep.subr.mxu0 0.0
    %5844 = vmatpush1.xpose.msra.mxu0 0.0
    %5845 = vmatprep.subr.mxu0 0.0
    %5846 = vmatpush1.xpose.msra.mxu0 0.0
    %5847 = vmatprep.subr.mxu0 0.0
    %5848 = vmatpush1.xpose.msra.mxu0 0.0
    %5849 = vmatprep.subr.mxu0 0.0
    %5850 = vmatpush1.xpose.msra.mxu0 0.0
    %5851 = vmatprep.subr.mxu0 0.0
    %5852 = vmatpush1.xpose.msra.mxu0 0.0
    %5853 = vmatprep.subr.mxu0 0.0
    %5854 = vmatpush1.xpose.msra.mxu0 0.0
    %5855 = vmatprep.subr.mxu0 0.0
    %5856 = vmatpush1.xpose.msra.mxu0 0.0
    %5857 = vmatprep.subr.mxu0 0.0
    %5858 = vmatpush1.xpose.msra.mxu0 0.0
    %5859 = vmatprep.subr.mxu0 0.0
    %5860 = vmatpush1.xpose.msra.mxu0 0.0
    %5861 = vmatprep.subr.mxu0 0.0
    %5862 = vmatpush1.xpose.msra.mxu0 0.0
    %5863 = vmatprep.subr.mxu0 0.0
    %5864 = vmatpush1.xpose.msra.mxu0 0.0
    %5865 = vmatprep.subr.mxu0 0.0
    %5866 = vmatpush1.xpose.msra.mxu0 0.0
    %5867 = vmatprep.subr.mxu0 0.0
    %5868 = vmatpush1.xpose.msra.mxu0 0.0
    %5869 = vmatprep.subr.mxu0 0.0
    %5870 = vmatpush1.xpose.msra.mxu0 0.0
    %5871 = vmatprep.subr.mxu0 0.0
    %5872 = vmatpush1.xpose.msra.mxu0 0.0
    %5873 = vmatprep.subr.mxu0 0.0
    %5874 = vmatpush1.xpose.msra.mxu0 0.0
    %5875 = vmatprep.subr.mxu0 0.0
    %5876 = vmatpush1.xpose.msra.mxu0 0.0
    %5877 = vmatprep.subr.mxu0 0.0
    %5878 = vmatpush1.xpose.msra.mxu0 0.0
    %5879 = vmatprep.subr.mxu0 0.0
    %5880 = vmatpush1.xpose.msra.mxu0 0.0
    %5881 = vmatprep.subr.mxu0 0.0
    %5882 = vmatpush1.xpose.msra.mxu0 0.0
    %5883 = vmatprep.mubr.f32.mxu0 0.0
    %5884 = vmatmul.mubr.f32.gmra.mrb[0].mxu0 %v5811
    %v5885 = vpop.f32.mrb[0].mxu0
    %v5886 = vadd.f32 0.0, %v5885
    %v5887 = vpop.f32.mrb[0].mxu0
    %5888 = vmatprep.mubr.f32.mxu0 0.0
    %5889 = vmatmul.mubr.f32.gmra.mrb[0].mxu0 %v5813
    %v5890 = vpop.f32.mrb[0].mxu0
    %v5891 = vadd.f32 0.0, %v5890
    %v5892 = vpop.f32.mrb[0].mxu0
    %5893 = vdwg.mxu0
    %v5894 = vmul.f32 %v5886, 0.35355338
    %v5895 = vmul.f32 %v5891, 0.35355338
    %v5896 = vadd.f32 %v5894, %v47
    %v5897 = vadd.f32 %v5895, %v48
    %v5898 = vsel %vm359, %v5896, -inf
    %5899 = vmax.xlane.f32.xlu0 %v5898
    %v5900 = vpop.xlane.xlu0 %5899
    %v5901 = vsel %vm359, %v5897, -inf
    %5902 = vmax.xlane.f32.xlu0 %v5901
    %v5903 = vpop.xlane.xlu0 %5902
    %v5904 = vsub.f32 %v5896, %v5900
    %v5905 = vsub.f32 %v5897, %v5903
    %v5906 = vmul.f32 %v5904, 1.442695
    %v5907 = vpow.pop %v5906
    %v5908 = vmul.f32 %v5905, 1.442695
    %v5909 = vpow.pop %v5908
    %v5910 = vsel %vm359, %v5907, 0.0
    %5911 = vadd.xlane.f32.xlu0 %v5910
    %v5912 = vpop.xlane.xlu0 %5911
    %v5913 = vsel %vm359, %v5909, 0.0
    %5914 = vadd.xlane.f32.xlu0 %v5913
    %v5915 = vpop.xlane.xlu0 %5914
    %v5916 = vrcp.pop %v5912
    %v5917 = vrcp.pop %v5915
    %v5918 = vmul.f32 %v5907, %v5916
    %v5919 = vmul.f32 %v5909, %v5917
    %5920 = vrot.lane.b32.xlu0 %v5593, 88
    %v5921 = vpop.permute.xlu0 %5920
    %5922 = vrot.lane.b32.xlu0 %v5598, 88
    %v5923 = vpop.permute.xlu0 %5922
    %v5927 = vsel %vm359, %v5918, 0
    %v5930 = vsel %vm359, %v5919, 0
    %5932 = vmatprep.subr.mxu0 0.0
    %5933 = vmatpush1.msra.mxu0 %v5921
    %5934 = vmatprep.subr.mxu0 0.0
    %5935 = vmatpush1.msra.mxu0 %v5923
    %5936 = vmatprep.subr.mxu0 0.0
    %5937 = vmatpush1.msra.mxu0 0.0
    %5938 = vmatprep.subr.mxu0 0.0
    %5939 = vmatpush1.msra.mxu0 0.0
    %5940 = vmatprep.subr.mxu0 0.0
    %5941 = vmatpush1.msra.mxu0 0.0
    %5942 = vmatprep.subr.mxu0 0.0
    %5943 = vmatpush1.msra.mxu0 0.0
    %5944 = vmatprep.subr.mxu0 0.0
    %5945 = vmatpush1.msra.mxu0 0.0
    %5946 = vmatprep.subr.mxu0 0.0
    %5947 = vmatpush1.msra.mxu0 0.0
    %5948 = vmatprep.subr.mxu0 0.0
    %5949 = vmatpush1.msra.mxu0 0.0
    %5950 = vmatprep.subr.mxu0 0.0
    %5951 = vmatpush1.msra.mxu0 0.0
    %5952 = vmatprep.subr.mxu0 0.0
    %5953 = vmatpush1.msra.mxu0 0.0
    %5954 = vmatprep.subr.mxu0 0.0
    %5955 = vmatpush1.msra.mxu0 0.0
    %5956 = vmatprep.subr.mxu0 0.0
    %5957 = vmatpush1.msra.mxu0 0.0
    %5958 = vmatprep.subr.mxu0 0.0
    %5959 = vmatpush1.msra.mxu0 0.0
    %5960 = vmatprep.subr.mxu0 0.0
    %5961 = vmatpush1.msra.mxu0 0.0
    %5962 = vmatprep.subr.mxu0 0.0
    %5963 = vmatpush1.msra.mxu0 0.0
    %5964 = vmatprep.subr.mxu0 0.0
    %5965 = vmatpush1.msra.mxu0 0.0
    %5966 = vmatprep.subr.mxu0 0.0
    %5967 = vmatpush1.msra.mxu0 0.0
    %5968 = vmatprep.subr.mxu0 0.0
    %5969 = vmatpush1.msra.mxu0 0.0
    %5970 = vmatprep.subr.mxu0 0.0
    %5971 = vmatpush1.msra.mxu0 0.0
    %5972 = vmatprep.subr.mxu0 0.0
    %5973 = vmatpush1.msra.mxu0 0.0
    %5974 = vmatprep.subr.mxu0 0.0
    %5975 = vmatpush1.msra.mxu0 0.0
    %5976 = vmatprep.subr.mxu0 0.0
    %5977 = vmatpush1.msra.mxu0 0.0
    %5978 = vmatprep.subr.mxu0 0.0
    %5979 = vmatpush1.msra.mxu0 0.0
    %5980 = vmatprep.subr.mxu0 0.0
    %5981 = vmatpush1.msra.mxu0 0.0
    %5982 = vmatprep.subr.mxu0 0.0
    %5983 = vmatpush1.msra.mxu0 0.0
    %5984 = vmatprep.subr.mxu0 0.0
    %5985 = vmatpush1.msra.mxu0 0.0
    %5986 = vmatprep.subr.mxu0 0.0
    %5987 = vmatpush1.msra.mxu0 0.0
    %5988 = vmatprep.subr.mxu0 0.0
    %5989 = vmatpush1.msra.mxu0 0.0
    %5990 = vmatprep.subr.mxu0 0.0
    %5991 = vmatpush1.msra.mxu0 0.0
    %5992 = vmatprep.subr.mxu0 0.0
    %5993 = vmatpush1.msra.mxu0 0.0
    %5994 = vmatprep.subr.mxu0 0.0
    %5995 = vmatpush1.msra.mxu0 0.0
    %5996 = vmatprep.mubr.f32.mxu0 0.0
    %5997 = vmatmul.mubr.f32.gmra.mrb[0].mxu0 %v5927
    %v5998 = vpop.f32.mrb[0].mxu0
    %v5999 = vadd.f32 0.0, %v5998
    %v6000 = vpop.f32.mrb[0].mxu0
    %6001 = vmatprep.mubr.f32.mxu0 0.0
    %6002 = vmatmul.mubr.f32.gmra.mrb[0].mxu0 %v5930
    %v6003 = vpop.f32.mrb[0].mxu0
    %v6004 = vadd.f32 0.0, %v6003
    %v6005 = vpop.f32.mrb[0].mxu0
    %6006 = vdwg.mxu0
    %6009 = vrot.lane.b32.xlu0 %v5999, 8
    %v6010 = vpop.permute.xlu0 %6009
    %6011 = vrot.lane.b32.xlu0 %v6004, 8
    %v6012 = vpop.permute.xlu0 %6011
    %6015 = vst.msk [vmem:[#allocation2] sm:$0xff] %vm683, %v6010
    %6016 = vst.msk [vmem:[#allocation2 + $0x8] sm:$0xff] %vm683, %v6012
    %6017 = vrot.lane.b32.xlu0 %v5499, 112
    %v6018 = vpop.permute.xlu0 %6017
    %6019 = vrot.lane.b32.xlu0 %v5504, 112
    %v6020 = vpop.permute.xlu0 %6019
    %6021 = vrot.lane.b32.xlu0 %v5593, 112
    %v6022 = vpop.permute.xlu0 %6021
    %6023 = vrot.lane.b32.xlu0 %v5598, 112
    %v6024 = vpop.permute.xlu0 %6023
    %v6025 = vsel %vm267, %v6018, 0
    %v6027 = vsel %vm267, %v6020, 0
    %v6029 = vsel %vm267, %v6022, 0
    %v6031 = vsel %vm267, %v6024, 0
    %6033 = vmatprep.subr.mxu0 0.0
    %6034 = vmatpush1.xpose.msra.mxu0 %v6029
    %6035 = vmatprep.subr.mxu0 0.0
    %6036 = vmatpush1.xpose.msra.mxu0 %v6031
    %6037 = vmatprep.subr.mxu0 0.0
    %6038 = vmatpush1.xpose.msra.mxu0 0.0
    %6039 = vmatprep.subr.mxu0 0.0
    %6040 = vmatpush1.xpose.msra.mxu0 0.0
    %6041 = vmatprep.subr.mxu0 0.0
    %6042 = vmatpush1.xpose.msra.mxu0 0.0
    %6043 = vmatprep.subr.mxu0 0.0
    %6044 = vmatpush1.xpose.msra.mxu0 0.0
    %6045 = vmatprep.subr.mxu0 0.0
    %6046 = vmatpush1.xpose.msra.mxu0 0.0
    %6047 = vmatprep.subr.mxu0 0.0
    %6048 = vmatpush1.xpose.msra.mxu0 0.0
    %6049 = vmatprep.subr.mxu0 0.0
    %6050 = vmatpush1.xpose.msra.mxu0 0.0
    %6051 = vmatprep.subr.mxu0 0.0
    %6052 = vmatpush1.xpose.msra.mxu0 0.0
    %6053 = vmatprep.subr.mxu0 0.0
    %6054 = vmatpush1.xpose.msra.mxu0 0.0
    %6055 = vmatprep.subr.mxu0 0.0
    %6056 = vmatpush1.xpose.msra.mxu0 0.0
    %6057 = vmatprep.subr.mxu0 0.0
    %6058 = vmatpush1.xpose.msra.mxu0 0.0
    %6059 = vmatprep.subr.mxu0 0.0
    %6060 = vmatpush1.xpose.msra.mxu0 0.0
    %6061 = vmatprep.subr.mxu0 0.0
    %6062 = vmatpush1.xpose.msra.mxu0 0.0
    %6063 = vmatprep.subr.mxu0 0.0
    %6064 = vmatpush1.xpose.msra.mxu0 0.0
    %6065 = vmatprep.subr.mxu0 0.0
    %6066 = vmatpush1.xpose.msra.mxu0 0.0
    %6067 = vmatprep.subr.mxu0 0.0
    %6068 = vmatpush1.xpose.msra.mxu0 0.0
    %6069 = vmatprep.subr.mxu0 0.0
    %6070 = vmatpush1.xpose.msra.mxu0 0.0
    %6071 = vmatprep.subr.mxu0 0.0
    %6072 = vmatpush1.xpose.msra.mxu0 0.0
    %6073 = vmatprep.subr.mxu0 0.0
    %6074 = vmatpush1.xpose.msra.mxu0 0.0
    %6075 = vmatprep.subr.mxu0 0.0
    %6076 = vmatpush1.xpose.msra.mxu0 0.0
    %6077 = vmatprep.subr.mxu0 0.0
    %6078 = vmatpush1.xpose.msra.mxu0 0.0
    %6079 = vmatprep.subr.mxu0 0.0
    %6080 = vmatpush1.xpose.msra.mxu0 0.0
    %6081 = vmatprep.subr.mxu0 0.0
    %6082 = vmatpush1.xpose.msra.mxu0 0.0
    %6083 = vmatprep.subr.mxu0 0.0
    %6084 = vmatpush1.xpose.msra.mxu0 0.0
    %6085 = vmatprep.subr.mxu0 0.0
    %6086 = vmatpush1.xpose.msra.mxu0 0.0
    %6087 = vmatprep.subr.mxu0 0.0
    %6088 = vmatpush1.xpose.msra.mxu0 0.0
    %6089 = vmatprep.subr.mxu0 0.0
    %6090 = vmatpush1.xpose.msra.mxu0 0.0
    %6091 = vmatprep.subr.mxu0 0.0
    %6092 = vmatpush1.xpose.msra.mxu0 0.0
    %6093 = vmatprep.subr.mxu0 0.0
    %6094 = vmatpush1.xpose.msra.mxu0 0.0
    %6095 = vmatprep.subr.mxu0 0.0
    %6096 = vmatpush1.xpose.msra.mxu0 0.0
    %6097 = vmatprep.mubr.f32.mxu0 0.0
    %6098 = vmatmul.mubr.f32.gmra.mrb[0].mxu0 %v6025
    %v6099 = vpop.f32.mrb[0].mxu0
    %v6100 = vadd.f32 0.0, %v6099
    %v6101 = vpop.f32.mrb[0].mxu0
    %6102 = vmatprep.mubr.f32.mxu0 0.0
    %6103 = vmatmul.mubr.f32.gmra.mrb[0].mxu0 %v6027
    %v6104 = vpop.f32.mrb[0].mxu0
    %v6105 = vadd.f32 0.0, %v6104
    %v6106 = vpop.f32.mrb[0].mxu0
    %6107 = vdwg.mxu0
    %v6108 = vmul.f32 %v6100, 0.35355338
    %v6109 = vmul.f32 %v6105, 0.35355338
    %v6110 = vadd.f32 %v6108, %v47
    %v6111 = vadd.f32 %v6109, %v48
    %v6112 = vsel %vm359, %v6110, -inf
    %6113 = vmax.xlane.f32.xlu0 %v6112
    %v6114 = vpop.xlane.xlu0 %6113
    %v6115 = vsel %vm359, %v6111, -inf
    %6116 = vmax.xlane.f32.xlu0 %v6115
    %v6117 = vpop.xlane.xlu0 %6116
    %v6118 = vsub.f32 %v6110, %v6114
    %v6119 = vsub.f32 %v6111, %v6117
    %v6120 = vmul.f32 %v6118, 1.442695
    %v6121 = vpow.pop %v6120
    %v6122 = vmul.f32 %v6119, 1.442695
    %v6123 = vpow.pop %v6122
    %v6124 = vsel %vm359, %v6121, 0.0
    %6125 = vadd.xlane.f32.xlu0 %v6124
    %v6126 = vpop.xlane.xlu0 %6125
    %v6127 = vsel %vm359, %v6123, 0.0
    %6128 = vadd.xlane.f32.xlu0 %v6127
    %v6129 = vpop.xlane.xlu0 %6128
    %v6130 = vrcp.pop %v6126
    %v6131 = vrcp.pop %v6129
    %v6132 = vmul.f32 %v6121, %v6130
    %v6133 = vmul.f32 %v6123, %v6131
    %6134 = vrot.lane.b32.xlu0 %v5593, 80
    %v6135 = vpop.permute.xlu0 %6134
    %6136 = vrot.lane.b32.xlu0 %v5598, 80
    %v6137 = vpop.permute.xlu0 %6136
    %v6141 = vsel %vm359, %v6132, 0
    %v6144 = vsel %vm359, %v6133, 0
    %6146 = vmatprep.subr.mxu0 0.0
    %6147 = vmatpush1.msra.mxu0 %v6135
    %6148 = vmatprep.subr.mxu0 0.0
    %6149 = vmatpush1.msra.mxu0 %v6137
    %6150 = vmatprep.subr.mxu0 0.0
    %6151 = vmatpush1.msra.mxu0 0.0
    %6152 = vmatprep.subr.mxu0 0.0
    %6153 = vmatpush1.msra.mxu0 0.0
    %6154 = vmatprep.subr.mxu0 0.0
    %6155 = vmatpush1.msra.mxu0 0.0
    %6156 = vmatprep.subr.mxu0 0.0
    %6157 = vmatpush1.msra.mxu0 0.0
    %6158 = vmatprep.subr.mxu0 0.0
    %6159 = vmatpush1.msra.mxu0 0.0
    %6160 = vmatprep.subr.mxu0 0.0
    %6161 = vmatpush1.msra.mxu0 0.0
    %6162 = vmatprep.subr.mxu0 0.0
    %6163 = vmatpush1.msra.mxu0 0.0
    %6164 = vmatprep.subr.mxu0 0.0
    %6165 = vmatpush1.msra.mxu0 0.0
    %6166 = vmatprep.subr.mxu0 0.0
    %6167 = vmatpush1.msra.mxu0 0.0
    %6168 = vmatprep.subr.mxu0 0.0
    %6169 = vmatpush1.msra.mxu0 0.0
    %6170 = vmatprep.subr.mxu0 0.0
    %6171 = vmatpush1.msra.mxu0 0.0
    %6172 = vmatprep.subr.mxu0 0.0
    %6173 = vmatpush1.msra.mxu0 0.0
    %6174 = vmatprep.subr.mxu0 0.0
    %6175 = vmatpush1.msra.mxu0 0.0
    %6176 = vmatprep.subr.mxu0 0.0
    %6177 = vmatpush1.msra.mxu0 0.0
    %6178 = vmatprep.subr.mxu0 0.0
    %6179 = vmatpush1.msra.mxu0 0.0
    %6180 = vmatprep.subr.mxu0 0.0
    %6181 = vmatpush1.msra.mxu0 0.0
    %6182 = vmatprep.subr.mxu0 0.0
    %6183 = vmatpush1.msra.mxu0 0.0
    %6184 = vmatprep.subr.mxu0 0.0
    %6185 = vmatpush1.msra.mxu0 0.0
    %6186 = vmatprep.subr.mxu0 0.0
    %6187 = vmatpush1.msra.mxu0 0.0
    %6188 = vmatprep.subr.mxu0 0.0
    %6189 = vmatpush1.msra.mxu0 0.0
    %6190 = vmatprep.subr.mxu0 0.0
    %6191 = vmatpush1.msra.mxu0 0.0
    %6192 = vmatprep.subr.mxu0 0.0
    %6193 = vmatpush1.msra.mxu0 0.0
    %6194 = vmatprep.subr.mxu0 0.0
    %6195 = vmatpush1.msra.mxu0 0.0
    %6196 = vmatprep.subr.mxu0 0.0
    %6197 = vmatpush1.msra.mxu0 0.0
    %6198 = vmatprep.subr.mxu0 0.0
    %6199 = vmatpush1.msra.mxu0 0.0
    %6200 = vmatprep.subr.mxu0 0.0
    %6201 = vmatpush1.msra.mxu0 0.0
    %6202 = vmatprep.subr.mxu0 0.0
    %6203 = vmatpush1.msra.mxu0 0.0
    %6204 = vmatprep.subr.mxu0 0.0
    %6205 = vmatpush1.msra.mxu0 0.0
    %6206 = vmatprep.subr.mxu0 0.0
    %6207 = vmatpush1.msra.mxu0 0.0
    %6208 = vmatprep.subr.mxu0 0.0
    %6209 = vmatpush1.msra.mxu0 0.0
    %6210 = vmatprep.mubr.f32.mxu0 0.0
    %6211 = vmatmul.mubr.f32.gmra.mrb[0].mxu0 %v6141
    %v6212 = vpop.f32.mrb[0].mxu0
    %v6213 = vadd.f32 0.0, %v6212
    %v6214 = vpop.f32.mrb[0].mxu0
    %6215 = vmatprep.mubr.f32.mxu0 0.0
    %6216 = vmatmul.mubr.f32.gmra.mrb[0].mxu0 %v6144
    %v6217 = vpop.f32.mrb[0].mxu0
    %v6218 = vadd.f32 0.0, %v6217
    %v6219 = vpop.f32.mrb[0].mxu0
    %6220 = vdwg.mxu0
    %6223 = vrot.lane.b32.xlu0 %v6213, 16
    %v6224 = vpop.permute.xlu0 %6223
    %6225 = vrot.lane.b32.xlu0 %v6218, 16
    %v6226 = vpop.permute.xlu0 %6225
    %6229 = vst.msk [vmem:[#allocation2] sm:$0xff] %vm898, %v6224
    %6230 = vst.msk [vmem:[#allocation2 + $0x8] sm:$0xff] %vm898, %v6226
    %6231 = vrot.lane.b32.xlu0 %v5499, 104
    %v6232 = vpop.permute.xlu0 %6231
    %6233 = vrot.lane.b32.xlu0 %v5504, 104
    %v6234 = vpop.permute.xlu0 %6233
    %6235 = vrot.lane.b32.xlu0 %v5593, 104
    %v6236 = vpop.permute.xlu0 %6235
    %6237 = vrot.lane.b32.xlu0 %v5598, 104
    %v6238 = vpop.permute.xlu0 %6237
    %v6239 = vsel %vm267, %v6232, 0
    %v6241 = vsel %vm267, %v6234, 0
    %v6243 = vsel %vm267, %v6236, 0
    %v6245 = vsel %vm267, %v6238, 0
    %6247 = vmatprep.subr.mxu0 0.0
    %6248 = vmatpush1.xpose.msra.mxu0 %v6243
    %6249 = vmatprep.subr.mxu0 0.0
    %6250 = vmatpush1.xpose.msra.mxu0 %v6245
    %6251 = vmatprep.subr.mxu0 0.0
    %6252 = vmatpush1.xpose.msra.mxu0 0.0
    %6253 = vmatprep.subr.mxu0 0.0
    %6254 = vmatpush1.xpose.msra.mxu0 0.0
    %6255 = vmatprep.subr.mxu0 0.0
    %6256 = vmatpush1.xpose.msra.mxu0 0.0
    %6257 = vmatprep.subr.mxu0 0.0
    %6258 = vmatpush1.xpose.msra.mxu0 0.0
    %6259 = vmatprep.subr.mxu0 0.0
    %6260 = vmatpush1.xpose.msra.mxu0 0.0
    %6261 = vmatprep.subr.mxu0 0.0
    %6262 = vmatpush1.xpose.msra.mxu0 0.0
    %6263 = vmatprep.subr.mxu0 0.0
    %6264 = vmatpush1.xpose.msra.mxu0 0.0
    %6265 = vmatprep.subr.mxu0 0.0
    %6266 = vmatpush1.xpose.msra.mxu0 0.0
    %6267 = vmatprep.subr.mxu0 0.0
    %6268 = vmatpush1.xpose.msra.mxu0 0.0
    %6269 = vmatprep.subr.mxu0 0.0
    %6270 = vmatpush1.xpose.msra.mxu0 0.0
    %6271 = vmatprep.subr.mxu0 0.0
    %6272 = vmatpush1.xpose.msra.mxu0 0.0
    %6273 = vmatprep.subr.mxu0 0.0
    %6274 = vmatpush1.xpose.msra.mxu0 0.0
    %6275 = vmatprep.subr.mxu0 0.0
    %6276 = vmatpush1.xpose.msra.mxu0 0.0
    %6277 = vmatprep.subr.mxu0 0.0
    %6278 = vmatpush1.xpose.msra.mxu0 0.0
    %6279 = vmatprep.subr.mxu0 0.0
    %6280 = vmatpush1.xpose.msra.mxu0 0.0
    %6281 = vmatprep.subr.mxu0 0.0
    %6282 = vmatpush1.xpose.msra.mxu0 0.0
    %6283 = vmatprep.subr.mxu0 0.0
    %6284 = vmatpush1.xpose.msra.mxu0 0.0
    %6285 = vmatprep.subr.mxu0 0.0
    %6286 = vmatpush1.xpose.msra.mxu0 0.0
    %6287 = vmatprep.subr.mxu0 0.0
    %6288 = vmatpush1.xpose.msra.mxu0 0.0
    %6289 = vmatprep.subr.mxu0 0.0
    %6290 = vmatpush1.xpose.msra.mxu0 0.0
    %6291 = vmatprep.subr.mxu0 0.0
    %6292 = vmatpush1.xpose.msra.mxu0 0.0
    %6293 = vmatprep.subr.mxu0 0.0
    %6294 = vmatpush1.xpose.msra.mxu0 0.0
    %6295 = vmatprep.subr.mxu0 0.0
    %6296 = vmatpush1.xpose.msra.mxu0 0.0
    %6297 = vmatprep.subr.mxu0 0.0
    %6298 = vmatpush1.xpose.msra.mxu0 0.0
    %6299 = vmatprep.subr.mxu0 0.0
    %6300 = vmatpush1.xpose.msra.mxu0 0.0
    %6301 = vmatprep.subr.mxu0 0.0
    %6302 = vmatpush1.xpose.msra.mxu0 0.0
    %6303 = vmatprep.subr.mxu0 0.0
    %6304 = vmatpush1.xpose.msra.mxu0 0.0
    %6305 = vmatprep.subr.mxu0 0.0
    %6306 = vmatpush1.xpose.msra.mxu0 0.0
    %6307 = vmatprep.subr.mxu0 0.0
    %6308 = vmatpush1.xpose.msra.mxu0 0.0
    %6309 = vmatprep.subr.mxu0 0.0
    %6310 = vmatpush1.xpose.msra.mxu0 0.0
    %6311 = vmatprep.mubr.f32.mxu0 0.0
    %6312 = vmatmul.mubr.f32.gmra.mrb[0].mxu0 %v6239
    %v6313 = vpop.f32.mrb[0].mxu0
    %v6314 = vadd.f32 0.0, %v6313
    %v6315 = vpop.f32.mrb[0].mxu0
    %6316 = vmatprep.mubr.f32.mxu0 0.0
    %6317 = vmatmul.mubr.f32.gmra.mrb[0].mxu0 %v6241
    %v6318 = vpop.f32.mrb[0].mxu0
    %v6319 = vadd.f32 0.0, %v6318
    %v6320 = vpop.f32.mrb[0].mxu0
    %6321 = vdwg.mxu0
    %v6322 = vmul.f32 %v6314, 0.35355338
    %v6323 = vmul.f32 %v6319, 0.35355338
    %v6324 = vadd.f32 %v6322, %v47
    %v6325 = vadd.f32 %v6323, %v48
    %v6326 = vsel %vm359, %v6324, -inf
    %6327 = vmax.xlane.f32.xlu0 %v6326
    %v6328 = vpop.xlane.xlu0 %6327
    %v6329 = vsel %vm359, %v6325, -inf
    %6330 = vmax.xlane.f32.xlu0 %v6329
    %v6331 = vpop.xlane.xlu0 %6330
    %v6332 = vsub.f32 %v6324, %v6328
    %v6333 = vsub.f32 %v6325, %v6331
    %v6334 = vmul.f32 %v6332, 1.442695
    %v6335 = vpow.pop %v6334
    %v6336 = vmul.f32 %v6333, 1.442695
    %v6337 = vpow.pop %v6336
    %v6338 = vsel %vm359, %v6335, 0.0
    %6339 = vadd.xlane.f32.xlu0 %v6338
    %v6340 = vpop.xlane.xlu0 %6339
    %v6341 = vsel %vm359, %v6337, 0.0
    %6342 = vadd.xlane.f32.xlu0 %v6341
    %v6343 = vpop.xlane.xlu0 %6342
    %v6344 = vrcp.pop %v6340
    %v6345 = vrcp.pop %v6343
    %v6346 = vmul.f32 %v6335, %v6344
    %v6347 = vmul.f32 %v6337, %v6345
    %6348 = vrot.lane.b32.xlu0 %v5593, 72
    %v6349 = vpop.permute.xlu0 %6348
    %6350 = vrot.lane.b32.xlu0 %v5598, 72
    %v6351 = vpop.permute.xlu0 %6350
    %v6355 = vsel %vm359, %v6346, 0
    %v6358 = vsel %vm359, %v6347, 0
    %6360 = vmatprep.subr.mxu0 0.0
    %6361 = vmatpush1.msra.mxu0 %v6349
    %6362 = vmatprep.subr.mxu0 0.0
    %6363 = vmatpush1.msra.mxu0 %v6351
    %6364 = vmatprep.subr.mxu0 0.0
    %6365 = vmatpush1.msra.mxu0 0.0
    %6366 = vmatprep.subr.mxu0 0.0
    %6367 = vmatpush1.msra.mxu0 0.0
    %6368 = vmatprep.subr.mxu0 0.0
    %6369 = vmatpush1.msra.mxu0 0.0
    %6370 = vmatprep.subr.mxu0 0.0
    %6371 = vmatpush1.msra.mxu0 0.0
    %6372 = vmatprep.subr.mxu0 0.0
    %6373 = vmatpush1.msra.mxu0 0.0
    %6374 = vmatprep.subr.mxu0 0.0
    %6375 = vmatpush1.msra.mxu0 0.0
    %6376 = vmatprep.subr.mxu0 0.0
    %6377 = vmatpush1.msra.mxu0 0.0
    %6378 = vmatprep.subr.mxu0 0.0
    %6379 = vmatpush1.msra.mxu0 0.0
    %6380 = vmatprep.subr.mxu0 0.0
    %6381 = vmatpush1.msra.mxu0 0.0
    %6382 = vmatprep.subr.mxu0 0.0
    %6383 = vmatpush1.msra.mxu0 0.0
    %6384 = vmatprep.subr.mxu0 0.0
    %6385 = vmatpush1.msra.mxu0 0.0
    %6386 = vmatprep.subr.mxu0 0.0
    %6387 = vmatpush1.msra.mxu0 0.0
    %6388 = vmatprep.subr.mxu0 0.0
    %6389 = vmatpush1.msra.mxu0 0.0
    %6390 = vmatprep.subr.mxu0 0.0
    %6391 = vmatpush1.msra.mxu0 0.0
    %6392 = vmatprep.subr.mxu0 0.0
    %6393 = vmatpush1.msra.mxu0 0.0
    %6394 = vmatprep.subr.mxu0 0.0
    %6395 = vmatpush1.msra.mxu0 0.0
    %6396 = vmatprep.subr.mxu0 0.0
    %6397 = vmatpush1.msra.mxu0 0.0
    %6398 = vmatprep.subr.mxu0 0.0
    %6399 = vmatpush1.msra.mxu0 0.0
    %6400 = vmatprep.subr.mxu0 0.0
    %6401 = vmatpush1.msra.mxu0 0.0
    %6402 = vmatprep.subr.mxu0 0.0
    %6403 = vmatpush1.msra.mxu0 0.0
    %6404 = vmatprep.subr.mxu0 0.0
    %6405 = vmatpush1.msra.mxu0 0.0
    %6406 = vmatprep.subr.mxu0 0.0
    %6407 = vmatpush1.msra.mxu0 0.0
    %6408 = vmatprep.subr.mxu0 0.0
    %6409 = vmatpush1.msra.mxu0 0.0
    %6410 = vmatprep.subr.mxu0 0.0
    %6411 = vmatpush1.msra.mxu0 0.0
    %6412 = vmatprep.subr.mxu0 0.0
    %6413 = vmatpush1.msra.mxu0 0.0
    %6414 = vmatprep.subr.mxu0 0.0
    %6415 = vmatpush1.msra.mxu0 0.0
    %6416 = vmatprep.subr.mxu0 0.0
    %6417 = vmatpush1.msra.mxu0 0.0
    %6418 = vmatprep.subr.mxu0 0.0
    %6419 = vmatpush1.msra.mxu0 0.0
    %6420 = vmatprep.subr.mxu0 0.0
    %6421 = vmatpush1.msra.mxu0 0.0
    %6422 = vmatprep.subr.mxu0 0.0
    %6423 = vmatpush1.msra.mxu0 0.0
    %6424 = vmatprep.mubr.f32.mxu0 0.0
    %6425 = vmatmul.mubr.f32.gmra.mrb[0].mxu0 %v6355
    %v6426 = vpop.f32.mrb[0].mxu0
    %v6427 = vadd.f32 0.0, %v6426
    %v6428 = vpop.f32.mrb[0].mxu0
    %6429 = vmatprep.mubr.f32.mxu0 0.0
    %6430 = vmatmul.mubr.f32.gmra.mrb[0].mxu0 %v6358
    %v6431 = vpop.f32.mrb[0].mxu0
    %v6432 = vadd.f32 0.0, %v6431
    %v6433 = vpop.f32.mrb[0].mxu0
    %6434 = vdwg.mxu0
    %6437 = vrot.lane.b32.xlu0 %v6427, 24
    %v6438 = vpop.permute.xlu0 %6437
    %6439 = vrot.lane.b32.xlu0 %v6432, 24
    %v6440 = vpop.permute.xlu0 %6439
    %6443 = vst.msk [vmem:[#allocation2] sm:$0xff] %vm1113, %v6438
    %6444 = vst.msk [vmem:[#allocation2 + $0x8] sm:$0xff] %vm1113, %v6440
    %v6445 = vld [vmem:[#allocation2] sm:$0xff]
    %v6446 = vld [vmem:[#allocation2 + $0x8] sm:$0xff]
    %6447 = vrot.lane.b32.xlu0 %v5388, 32
    %v6448 = vpop.permute.xlu0 %6447
    %6449 = vrot.lane.b32.xlu0 %v5389, 32
    %v6450 = vpop.permute.xlu0 %6449
    %6451 = vrot.lane.b32.xlu0 %v5390, 32
    %v6452 = vpop.permute.xlu0 %6451
    %6453 = vrot.lane.b32.xlu0 %v5391, 32
    %v6454 = vpop.permute.xlu0 %6453
    %6459 = vrot.lane.b32.xlu0 %v5424, 32
    %v6460 = vpop.permute.xlu0 %6459
    %v6463 = vsel %vm58, %v6445, 0
    %v6466 = vsel %vm58, %v6446, 0
    %6468 = vmatprep.subr.mxu0 0.0
    %6469 = vmatpush1.msra.mxu0 %v6448
    %6470 = vmatprep.subr.mxu0 0.0
    %6471 = vmatpush1.msra.mxu0 %v6450
    %6472 = vmatprep.subr.mxu0 0.0
    %6473 = vmatpush1.msra.mxu0 %v6452
    %6474 = vmatprep.subr.mxu0 0.0
    %6475 = vmatpush1.msra.mxu0 %v6454
    %6476 = vmatprep.subr.mxu0 0.0
    %6477 = vmatpush1.msra.mxu0 0.0
    %6478 = vmatprep.subr.mxu0 0.0
    %6479 = vmatpush1.msra.mxu0 0.0
    %6480 = vmatprep.subr.mxu0 0.0
    %6481 = vmatpush1.msra.mxu0 0.0
    %6482 = vmatprep.subr.mxu0 0.0
    %6483 = vmatpush1.msra.mxu0 0.0
    %6484 = vmatprep.subr.mxu0 0.0
    %6485 = vmatpush1.msra.mxu0 0.0
    %6486 = vmatprep.subr.mxu0 0.0
    %6487 = vmatpush1.msra.mxu0 0.0
    %6488 = vmatprep.subr.mxu0 0.0
    %6489 = vmatpush1.msra.mxu0 0.0
    %6490 = vmatprep.subr.mxu0 0.0
    %6491 = vmatpush1.msra.mxu0 0.0
    %6492 = vmatprep.subr.mxu0 0.0
    %6493 = vmatpush1.msra.mxu0 0.0
    %6494 = vmatprep.subr.mxu0 0.0
    %6495 = vmatpush1.msra.mxu0 0.0
    %6496 = vmatprep.subr.mxu0 0.0
    %6497 = vmatpush1.msra.mxu0 0.0
    %6498 = vmatprep.subr.mxu0 0.0
    %6499 = vmatpush1.msra.mxu0 0.0
    %6500 = vmatprep.subr.mxu0 0.0
    %6501 = vmatpush1.msra.mxu0 0.0
    %6502 = vmatprep.subr.mxu0 0.0
    %6503 = vmatpush1.msra.mxu0 0.0
    %6504 = vmatprep.subr.mxu0 0.0
    %6505 = vmatpush1.msra.mxu0 0.0
    %6506 = vmatprep.subr.mxu0 0.0
    %6507 = vmatpush1.msra.mxu0 0.0
    %6508 = vmatprep.subr.mxu0 0.0
    %6509 = vmatpush1.msra.mxu0 0.0
    %6510 = vmatprep.subr.mxu0 0.0
    %6511 = vmatpush1.msra.mxu0 0.0
    %6512 = vmatprep.subr.mxu0 0.0
    %6513 = vmatpush1.msra.mxu0 0.0
    %6514 = vmatprep.subr.mxu0 0.0
    %6515 = vmatpush1.msra.mxu0 0.0
    %6516 = vmatprep.subr.mxu0 0.0
    %6517 = vmatpush1.msra.mxu0 0.0
    %6518 = vmatprep.subr.mxu0 0.0
    %6519 = vmatpush1.msra.mxu0 0.0
    %6520 = vmatprep.subr.mxu0 0.0
    %6521 = vmatpush1.msra.mxu0 0.0
    %6522 = vmatprep.subr.mxu0 0.0
    %6523 = vmatpush1.msra.mxu0 0.0
    %6524 = vmatprep.subr.mxu0 0.0
    %6525 = vmatpush1.msra.mxu0 0.0
    %6526 = vmatprep.subr.mxu0 0.0
    %6527 = vmatpush1.msra.mxu0 0.0
    %6528 = vmatprep.subr.mxu0 0.0
    %6529 = vmatpush1.msra.mxu0 0.0
    %6530 = vmatprep.subr.mxu0 0.0
    %6531 = vmatpush1.msra.mxu0 0.0
    %6532 = vmatprep.mubr.f32.mxu0 0.0
    %6533 = vmatmul.mubr.f32.gmra.mrb[0].mxu0 %v6463
    %v6534 = vpop.f32.mrb[0].mxu0
    %v6535 = vadd.f32 %v6460, %v6534
    %v6536 = vpop.f32.mrb[0].mxu0
    %6537 = vmatprep.mubr.f32.mxu0 0.0
    %6538 = vmatmul.mubr.f32.gmra.mrb[0].mxu0 %v6466
    %v6539 = vpop.f32.mrb[0].mxu0
    %v6540 = vadd.f32 %v6460, %v6539
    %v6541 = vpop.f32.mrb[0].mxu0
    %6542 = vdwg.mxu0
    %v6543 = vadd.f32 %v6535, %v5385
    %v6544 = vadd.f32 %v6540, %v5386
    %s6545 = scalar_lea.vmem %s5, 160
    %v6546 = vld [vmem:[%s6545] sm:$0xff]
    %v6547 = vld [vmem:[%s6545 + $0x8] sm:$0xff]
    %v6548 = vld [vmem:[%s6545 + $0x10] sm:$0xff]
    %v6549 = vld [vmem:[%s6545 + $0x18] sm:$0xff]
    %s6550 = scalar_lea.vmem %s6, 5
    %v6551 = vld [vmem:[%s6550] sm:$0x1]
    %v6552 = vsel %vm58, %v6543, 0.0
    %6553 = vadd.xlane.f32.xlu0 %v6552
    %v6554 = vpop.xlane.xlu0 %6553
    %v6555 = vsel %vm58, %v6544, 0.0
    %6556 = vadd.xlane.f32.xlu0 %v6555
    %v6557 = vpop.xlane.xlu0 %6556
    %v6558 = vmul.f32 %v6554, %v65
    %v6559 = vmul.f32 %v6557, %v65
    %v6560 = vsub.f32 %v6543, %v6558
    %v6561 = vsub.f32 %v6544, %v6559
    %v6562 = vmul.f32 %v6560, %v6560
    %v6563 = vmul.f32 %v6561, %v6561
    %v6564 = vsel %vm58, %v6562, 0.0
    %6565 = vadd.xlane.f32.xlu0 %v6564
    %v6566 = vpop.xlane.xlu0 %6565
    %v6567 = vsel %vm58, %v6563, 0.0
    %6568 = vadd.xlane.f32.xlu0 %v6567
    %v6569 = vpop.xlane.xlu0 %6568
    %v6570 = vmul.f32 %v6566, %v65
    %v6571 = vmul.f32 %v6569, %v65
    %v6572 = vadd.f32 %v6570, 1e-05
    %v6573 = vadd.f32 %v6571, 1e-05
    %v6574 = vrsqrt.pop %v6572
    %v6575 = vrsqrt.pop %v6573
    %v6576 = vmul.f32 %v6560, %v6574
    %v6577 = vmul.f32 %v6561, %v6575
    %v6579 = vlaneseq
    %v6580 = vshrl.u32 %v6579, 7
    %v6581 = vsub.s32 0, %v6580
    %v6582 = vrot.slane %v6551, %v6581
    %v6585 = vsel %vm58, %v6576, 0
    %v6588 = vsel %vm58, %v6577, 0
    %6590 = vmatprep.subr.mxu0 0.0
    %6591 = vmatpush1.msra.mxu0 %v6546
    %6592 = vmatprep.subr.mxu0 0.0
    %6593 = vmatpush1.msra.mxu0 %v6547
    %6594 = vmatprep.subr.mxu0 0.0
    %6595 = vmatpush1.msra.mxu0 %v6548
    %6596 = vmatprep.subr.mxu0 0.0
    %6597 = vmatpush1.msra.mxu0 %v6549
    %6598 = vmatprep.subr.mxu0 0.0
    %6599 = vmatpush1.msra.mxu0 0.0
    %6600 = vmatprep.subr.mxu0 0.0
    %6601 = vmatpush1.msra.mxu0 0.0
    %6602 = vmatprep.subr.mxu0 0.0
    %6603 = vmatpush1.msra.mxu0 0.0
    %6604 = vmatprep.subr.mxu0 0.0
    %6605 = vmatpush1.msra.mxu0 0.0
    %6606 = vmatprep.subr.mxu0 0.0
    %6607 = vmatpush1.msra.mxu0 0.0
    %6608 = vmatprep.subr.mxu0 0.0
    %6609 = vmatpush1.msra.mxu0 0.0
    %6610 = vmatprep.subr.mxu0 0.0
    %6611 = vmatpush1.msra.mxu0 0.0
    %6612 = vmatprep.subr.mxu0 0.0
    %6613 = vmatpush1.msra.mxu0 0.0
    %6614 = vmatprep.subr.mxu0 0.0
    %6615 = vmatpush1.msra.mxu0 0.0
    %6616 = vmatprep.subr.mxu0 0.0
    %6617 = vmatpush1.msra.mxu0 0.0
    %6618 = vmatprep.subr.mxu0 0.0
    %6619 = vmatpush1.msra.mxu0 0.0
    %6620 = vmatprep.subr.mxu0 0.0
    %6621 = vmatpush1.msra.mxu0 0.0
    %6622 = vmatprep.subr.mxu0 0.0
    %6623 = vmatpush1.msra.mxu0 0.0
    %6624 = vmatprep.subr.mxu0 0.0
    %6625 = vmatpush1.msra.mxu0 0.0
    %6626 = vmatprep.subr.mxu0 0.0
    %6627 = vmatpush1.msra.mxu0 0.0
    %6628 = vmatprep.subr.mxu0 0.0
    %6629 = vmatpush1.msra.mxu0 0.0
    %6630 = vmatprep.subr.mxu0 0.0
    %6631 = vmatpush1.msra.mxu0 0.0
    %6632 = vmatprep.subr.mxu0 0.0
    %6633 = vmatpush1.msra.mxu0 0.0
    %6634 = vmatprep.subr.mxu0 0.0
    %6635 = vmatpush1.msra.mxu0 0.0
    %6636 = vmatprep.subr.mxu0 0.0
    %6637 = vmatpush1.msra.mxu0 0.0
    %6638 = vmatprep.subr.mxu0 0.0
    %6639 = vmatpush1.msra.mxu0 0.0
    %6640 = vmatprep.subr.mxu0 0.0
    %6641 = vmatpush1.msra.mxu0 0.0
    %6642 = vmatprep.subr.mxu0 0.0
    %6643 = vmatpush1.msra.mxu0 0.0
    %6644 = vmatprep.subr.mxu0 0.0
    %6645 = vmatpush1.msra.mxu0 0.0
    %6646 = vmatprep.subr.mxu0 0.0
    %6647 = vmatpush1.msra.mxu0 0.0
    %6648 = vmatprep.subr.mxu0 0.0
    %6649 = vmatpush1.msra.mxu0 0.0
    %6650 = vmatprep.subr.mxu0 0.0
    %6651 = vmatpush1.msra.mxu0 0.0
    %6652 = vmatprep.subr.mxu0 0.0
    %6653 = vmatpush1.msra.mxu0 0.0
    %6654 = vmatprep.mubr.f32.mxu0 0.0
    %6655 = vmatmul.mubr.f32.gmra.mrb[0].mxu0 %v6585
    %v6656 = vpop.f32.mrb[0].mxu0
    %v6657 = vadd.f32 %v6582, %v6656
    %v6658 = vpop.f32.mrb[0].mxu0
    %6659 = vmatprep.mubr.f32.mxu0 0.0
    %6660 = vmatmul.mubr.f32.gmra.mrb[0].mxu0 %v6588
    %v6661 = vpop.f32.mrb[0].mxu0
    %v6662 = vadd.f32 %v6582, %v6661
    %v6663 = vpop.f32.mrb[0].mxu0
    %6664 = vdwg.mxu0
    %6669 = vrot.lane.b32.xlu0 %v6546, 96
    %v6670 = vpop.permute.xlu0 %6669
    %6671 = vrot.lane.b32.xlu0 %v6547, 96
    %v6672 = vpop.permute.xlu0 %6671
    %6673 = vrot.lane.b32.xlu0 %v6548, 96
    %v6674 = vpop.permute.xlu0 %6673
    %6675 = vrot.lane.b32.xlu0 %v6549, 96
    %v6676 = vpop.permute.xlu0 %6675
    %6681 = vrot.lane.b32.xlu0 %v6582, 96
    %v6682 = vpop.permute.xlu0 %6681
    %6684 = vmatprep.subr.mxu0 0.0
    %6685 = vmatpush1.msra.mxu0 %v6670
    %6686 = vmatprep.subr.mxu0 0.0
    %6687 = vmatpush1.msra.mxu0 %v6672
    %6688 = vmatprep.subr.mxu0 0.0
    %6689 = vmatpush1.msra.mxu0 %v6674
    %6690 = vmatprep.subr.mxu0 0.0
    %6691 = vmatpush1.msra.mxu0 %v6676
    %6692 = vmatprep.subr.mxu0 0.0
    %6693 = vmatpush1.msra.mxu0 0.0
    %6694 = vmatprep.subr.mxu0 0.0
    %6695 = vmatpush1.msra.mxu0 0.0
    %6696 = vmatprep.subr.mxu0 0.0
    %6697 = vmatpush1.msra.mxu0 0.0
    %6698 = vmatprep.subr.mxu0 0.0
    %6699 = vmatpush1.msra.mxu0 0.0
    %6700 = vmatprep.subr.mxu0 0.0
    %6701 = vmatpush1.msra.mxu0 0.0
    %6702 = vmatprep.subr.mxu0 0.0
    %6703 = vmatpush1.msra.mxu0 0.0
    %6704 = vmatprep.subr.mxu0 0.0
    %6705 = vmatpush1.msra.mxu0 0.0
    %6706 = vmatprep.subr.mxu0 0.0
    %6707 = vmatpush1.msra.mxu0 0.0
    %6708 = vmatprep.subr.mxu0 0.0
    %6709 = vmatpush1.msra.mxu0 0.0
    %6710 = vmatprep.subr.mxu0 0.0
    %6711 = vmatpush1.msra.mxu0 0.0
    %6712 = vmatprep.subr.mxu0 0.0
    %6713 = vmatpush1.msra.mxu0 0.0
    %6714 = vmatprep.subr.mxu0 0.0
    %6715 = vmatpush1.msra.mxu0 0.0
    %6716 = vmatprep.subr.mxu0 0.0
    %6717 = vmatpush1.msra.mxu0 0.0
    %6718 = vmatprep.subr.mxu0 0.0
    %6719 = vmatpush1.msra.mxu0 0.0
    %6720 = vmatprep.subr.mxu0 0.0
    %6721 = vmatpush1.msra.mxu0 0.0
    %6722 = vmatprep.subr.mxu0 0.0
    %6723 = vmatpush1.msra.mxu0 0.0
    %6724 = vmatprep.subr.mxu0 0.0
    %6725 = vmatpush1.msra.mxu0 0.0
    %6726 = vmatprep.subr.mxu0 0.0
    %6727 = vmatpush1.msra.mxu0 0.0
    %6728 = vmatprep.subr.mxu0 0.0
    %6729 = vmatpush1.msra.mxu0 0.0
    %6730 = vmatprep.subr.mxu0 0.0
    %6731 = vmatpush1.msra.mxu0 0.0
    %6732 = vmatprep.subr.mxu0 0.0
    %6733 = vmatpush1.msra.mxu0 0.0
    %6734 = vmatprep.subr.mxu0 0.0
    %6735 = vmatpush1.msra.mxu0 0.0
    %6736 = vmatprep.subr.mxu0 0.0
    %6737 = vmatpush1.msra.mxu0 0.0
    %6738 = vmatprep.subr.mxu0 0.0
    %6739 = vmatpush1.msra.mxu0 0.0
    %6740 = vmatprep.subr.mxu0 0.0
    %6741 = vmatpush1.msra.mxu0 0.0
    %6742 = vmatprep.subr.mxu0 0.0
    %6743 = vmatpush1.msra.mxu0 0.0
    %6744 = vmatprep.subr.mxu0 0.0
    %6745 = vmatpush1.msra.mxu0 0.0
    %6746 = vmatprep.subr.mxu0 0.0
    %6747 = vmatpush1.msra.mxu0 0.0
    %6748 = vmatprep.mubr.f32.mxu0 0.0
    %6749 = vmatmul.mubr.f32.gmra.mrb[0].mxu0 %v4146
    %v6750 = vpop.f32.mrb[0].mxu0
    %v6751 = vadd.f32 %v6682, %v6750
    %v6752 = vpop.f32.mrb[0].mxu0
    %6753 = vmatprep.mubr.f32.mxu0 0.0
    %6754 = vmatmul.mubr.f32.gmra.mrb[0].mxu0 %v4149
    %v6755 = vpop.f32.mrb[0].mxu0
    %v6756 = vadd.f32 %v6682, %v6755
    %v6757 = vpop.f32.mrb[0].mxu0
    %6758 = vdwg.mxu0
    %v6760 = vsel %vm267, %v6657, 0
    %v6763 = vsel %vm267, %v6662, 0
    %v6766 = vsel %vm267, %v6751, 0
    %v6769 = vsel %vm267, %v6756, 0
    %6771 = vmatprep.subr.mxu0 0.0
    %6772 = vmatpush1.xpose.msra.mxu0 %v6766
    %6773 = vmatprep.subr.mxu0 0.0
    %6774 = vmatpush1.xpose.msra.mxu0 %v6769
    %6775 = vmatprep.subr.mxu0 0.0
    %6776 = vmatpush1.xpose.msra.mxu0 0.0
    %6777 = vmatprep.subr.mxu0 0.0
    %6778 = vmatpush1.xpose.msra.mxu0 0.0
    %6779 = vmatprep.subr.mxu0 0.0
    %6780 = vmatpush1.xpose.msra.mxu0 0.0
    %6781 = vmatprep.subr.mxu0 0.0
    %6782 = vmatpush1.xpose.msra.mxu0 0.0
    %6783 = vmatprep.subr.mxu0 0.0
    %6784 = vmatpush1.xpose.msra.mxu0 0.0
    %6785 = vmatprep.subr.mxu0 0.0
    %6786 = vmatpush1.xpose.msra.mxu0 0.0
    %6787 = vmatprep.subr.mxu0 0.0
    %6788 = vmatpush1.xpose.msra.mxu0 0.0
    %6789 = vmatprep.subr.mxu0 0.0
    %6790 = vmatpush1.xpose.msra.mxu0 0.0
    %6791 = vmatprep.subr.mxu0 0.0
    %6792 = vmatpush1.xpose.msra.mxu0 0.0
    %6793 = vmatprep.subr.mxu0 0.0
    %6794 = vmatpush1.xpose.msra.mxu0 0.0
    %6795 = vmatprep.subr.mxu0 0.0
    %6796 = vmatpush1.xpose.msra.mxu0 0.0
    %6797 = vmatprep.subr.mxu0 0.0
    %6798 = vmatpush1.xpose.msra.mxu0 0.0
    %6799 = vmatprep.subr.mxu0 0.0
    %6800 = vmatpush1.xpose.msra.mxu0 0.0
    %6801 = vmatprep.subr.mxu0 0.0
    %6802 = vmatpush1.xpose.msra.mxu0 0.0
    %6803 = vmatprep.subr.mxu0 0.0
    %6804 = vmatpush1.xpose.msra.mxu0 0.0
    %6805 = vmatprep.subr.mxu0 0.0
    %6806 = vmatpush1.xpose.msra.mxu0 0.0
    %6807 = vmatprep.subr.mxu0 0.0
    %6808 = vmatpush1.xpose.msra.mxu0 0.0
    %6809 = vmatprep.subr.mxu0 0.0
    %6810 = vmatpush1.xpose.msra.mxu0 0.0
    %6811 = vmatprep.subr.mxu0 0.0
    %6812 = vmatpush1.xpose.msra.mxu0 0.0
    %6813 = vmatprep.subr.mxu0 0.0
    %6814 = vmatpush1.xpose.msra.mxu0 0.0
    %6815 = vmatprep.subr.mxu0 0.0
    %6816 = vmatpush1.xpose.msra.mxu0 0.0
    %6817 = vmatprep.subr.mxu0 0.0
    %6818 = vmatpush1.xpose.msra.mxu0 0.0
    %6819 = vmatprep.subr.mxu0 0.0
    %6820 = vmatpush1.xpose.msra.mxu0 0.0
    %6821 = vmatprep.subr.mxu0 0.0
    %6822 = vmatpush1.xpose.msra.mxu0 0.0
    %6823 = vmatprep.subr.mxu0 0.0
    %6824 = vmatpush1.xpose.msra.mxu0 0.0
    %6825 = vmatprep.subr.mxu0 0.0
    %6826 = vmatpush1.xpose.msra.mxu0 0.0
    %6827 = vmatprep.subr.mxu0 0.0
    %6828 = vmatpush1.xpose.msra.mxu0 0.0
    %6829 = vmatprep.subr.mxu0 0.0
    %6830 = vmatpush1.xpose.msra.mxu0 0.0
    %6831 = vmatprep.subr.mxu0 0.0
    %6832 = vmatpush1.xpose.msra.mxu0 0.0
    %6833 = vmatprep.subr.mxu0 0.0
    %6834 = vmatpush1.xpose.msra.mxu0 0.0
    %6835 = vmatprep.mubr.f32.mxu0 0.0
    %6836 = vmatmul.mubr.f32.gmra.mrb[0].mxu0 %v6760
    %v6837 = vpop.f32.mrb[0].mxu0
    %v6838 = vadd.f32 0.0, %v6837
    %v6839 = vpop.f32.mrb[0].mxu0
    %6840 = vmatprep.mubr.f32.mxu0 0.0
    %6841 = vmatmul.mubr.f32.gmra.mrb[0].mxu0 %v6763
    %v6842 = vpop.f32.mrb[0].mxu0
    %v6843 = vadd.f32 0.0, %v6842
    %v6844 = vpop.f32.mrb[0].mxu0
    %6845 = vdwg.mxu0
    %v6846 = vmul.f32 %v6838, 0.35355338
    %v6847 = vmul.f32 %v6843, 0.35355338
    %v6848 = vadd.f32 %v6846, %v49
    %v6849 = vadd.f32 %v6847, %v50
    %v6850 = vsel %vm359, %v6848, -inf
    %6851 = vmax.xlane.f32.xlu0 %v6850
    %v6852 = vpop.xlane.xlu0 %6851
    %v6853 = vsel %vm359, %v6849, -inf
    %6854 = vmax.xlane.f32.xlu0 %v6853
    %v6855 = vpop.xlane.xlu0 %6854
    %v6856 = vsub.f32 %v6848, %v6852
    %v6857 = vsub.f32 %v6849, %v6855
    %v6858 = vmul.f32 %v6856, 1.442695
    %v6859 = vpow.pop %v6858
    %v6860 = vmul.f32 %v6857, 1.442695
    %v6861 = vpow.pop %v6860
    %v6862 = vsel %vm359, %v6859, 0.0
    %6863 = vadd.xlane.f32.xlu0 %v6862
    %v6864 = vpop.xlane.xlu0 %6863
    %v6865 = vsel %vm359, %v6861, 0.0
    %6866 = vadd.xlane.f32.xlu0 %v6865
    %v6867 = vpop.xlane.xlu0 %6866
    %v6868 = vrcp.pop %v6864
    %v6869 = vrcp.pop %v6867
    %v6870 = vmul.f32 %v6859, %v6868
    %v6871 = vmul.f32 %v6861, %v6869
    %6872 = vrot.lane.b32.xlu0 %v6751, 96
    %v6873 = vpop.permute.xlu0 %6872
    %6874 = vrot.lane.b32.xlu0 %v6756, 96
    %v6875 = vpop.permute.xlu0 %6874
    %v6879 = vsel %vm359, %v6870, 0
    %v6882 = vsel %vm359, %v6871, 0
    %6884 = vmatprep.subr.mxu0 0.0
    %6885 = vmatpush1.msra.mxu0 %v6873
    %6886 = vmatprep.subr.mxu0 0.0
    %6887 = vmatpush1.msra.mxu0 %v6875
    %6888 = vmatprep.subr.mxu0 0.0
    %6889 = vmatpush1.msra.mxu0 0.0
    %6890 = vmatprep.subr.mxu0 0.0
    %6891 = vmatpush1.msra.mxu0 0.0
    %6892 = vmatprep.subr.mxu0 0.0
    %6893 = vmatpush1.msra.mxu0 0.0
    %6894 = vmatprep.subr.mxu0 0.0
    %6895 = vmatpush1.msra.mxu0 0.0
    %6896 = vmatprep.subr.mxu0 0.0
    %6897 = vmatpush1.msra.mxu0 0.0
    %6898 = vmatprep.subr.mxu0 0.0
    %6899 = vmatpush1.msra.mxu0 0.0
    %6900 = vmatprep.subr.mxu0 0.0
    %6901 = vmatpush1.msra.mxu0 0.0
    %6902 = vmatprep.subr.mxu0 0.0
    %6903 = vmatpush1.msra.mxu0 0.0
    %6904 = vmatprep.subr.mxu0 0.0
    %6905 = vmatpush1.msra.mxu0 0.0
    %6906 = vmatprep.subr.mxu0 0.0
    %6907 = vmatpush1.msra.mxu0 0.0
    %6908 = vmatprep.subr.mxu0 0.0
    %6909 = vmatpush1.msra.mxu0 0.0
    %6910 = vmatprep.subr.mxu0 0.0
    %6911 = vmatpush1.msra.mxu0 0.0
    %6912 = vmatprep.subr.mxu0 0.0
    %6913 = vmatpush1.msra.mxu0 0.0
    %6914 = vmatprep.subr.mxu0 0.0
    %6915 = vmatpush1.msra.mxu0 0.0
    %6916 = vmatprep.subr.mxu0 0.0
    %6917 = vmatpush1.msra.mxu0 0.0
    %6918 = vmatprep.subr.mxu0 0.0
    %6919 = vmatpush1.msra.mxu0 0.0
    %6920 = vmatprep.subr.mxu0 0.0
    %6921 = vmatpush1.msra.mxu0 0.0
    %6922 = vmatprep.subr.mxu0 0.0
    %6923 = vmatpush1.msra.mxu0 0.0
    %6924 = vmatprep.subr.mxu0 0.0
    %6925 = vmatpush1.msra.mxu0 0.0
    %6926 = vmatprep.subr.mxu0 0.0
    %6927 = vmatpush1.msra.mxu0 0.0
    %6928 = vmatprep.subr.mxu0 0.0
    %6929 = vmatpush1.msra.mxu0 0.0
    %6930 = vmatprep.subr.mxu0 0.0
    %6931 = vmatpush1.msra.mxu0 0.0
    %6932 = vmatprep.subr.mxu0 0.0
    %6933 = vmatpush1.msra.mxu0 0.0
    %6934 = vmatprep.subr.mxu0 0.0
    %6935 = vmatpush1.msra.mxu0 0.0
    %6936 = vmatprep.subr.mxu0 0.0
    %6937 = vmatpush1.msra.mxu0 0.0
    %6938 = vmatprep.subr.mxu0 0.0
    %6939 = vmatpush1.msra.mxu0 0.0
    %6940 = vmatprep.subr.mxu0 0.0
    %6941 = vmatpush1.msra.mxu0 0.0
    %6942 = vmatprep.subr.mxu0 0.0
    %6943 = vmatpush1.msra.mxu0 0.0
    %6944 = vmatprep.subr.mxu0 0.0
    %6945 = vmatpush1.msra.mxu0 0.0
    %6946 = vmatprep.subr.mxu0 0.0
    %6947 = vmatpush1.msra.mxu0 0.0
    %6948 = vmatprep.mubr.f32.mxu0 0.0
    %6949 = vmatmul.mubr.f32.gmra.mrb[0].mxu0 %v6879
    %v6950 = vpop.f32.mrb[0].mxu0
    %v6951 = vadd.f32 0.0, %v6950
    %v6952 = vpop.f32.mrb[0].mxu0
    %6953 = vmatprep.mubr.f32.mxu0 0.0
    %6954 = vmatmul.mubr.f32.gmra.mrb[0].mxu0 %v6882
    %v6955 = vpop.f32.mrb[0].mxu0
    %v6956 = vadd.f32 0.0, %v6955
    %v6957 = vpop.f32.mrb[0].mxu0
    %6958 = vdwg.mxu0
    %6959 = vst.msk [vmem:[#allocation2] sm:$0xff] %vm267, %v6951
    %6960 = vst.msk [vmem:[#allocation2 + $0x8] sm:$0xff] %vm267, %v6956
    %6961 = vrot.lane.b32.xlu0 %v6657, 120
    %v6962 = vpop.permute.xlu0 %6961
    %6963 = vrot.lane.b32.xlu0 %v6662, 120
    %v6964 = vpop.permute.xlu0 %6963
    %6965 = vrot.lane.b32.xlu0 %v6751, 120
    %v6966 = vpop.permute.xlu0 %6965
    %6967 = vrot.lane.b32.xlu0 %v6756, 120
    %v6968 = vpop.permute.xlu0 %6967
    %v6969 = vsel %vm267, %v6962, 0
    %v6971 = vsel %vm267, %v6964, 0
    %v6973 = vsel %vm267, %v6966, 0
    %v6975 = vsel %vm267, %v6968, 0
    %6977 = vmatprep.subr.mxu0 0.0
    %6978 = vmatpush1.xpose.msra.mxu0 %v6973
    %6979 = vmatprep.subr.mxu0 0.0
    %6980 = vmatpush1.xpose.msra.mxu0 %v6975
    %6981 = vmatprep.subr.mxu0 0.0
    %6982 = vmatpush1.xpose.msra.mxu0 0.0
    %6983 = vmatprep.subr.mxu0 0.0
    %6984 = vmatpush1.xpose.msra.mxu0 0.0
    %6985 = vmatprep.subr.mxu0 0.0
    %6986 = vmatpush1.xpose.msra.mxu0 0.0
    %6987 = vmatprep.subr.mxu0 0.0
    %6988 = vmatpush1.xpose.msra.mxu0 0.0
    %6989 = vmatprep.subr.mxu0 0.0
    %6990 = vmatpush1.xpose.msra.mxu0 0.0
    %6991 = vmatprep.subr.mxu0 0.0
    %6992 = vmatpush1.xpose.msra.mxu0 0.0
    %6993 = vmatprep.subr.mxu0 0.0
    %6994 = vmatpush1.xpose.msra.mxu0 0.0
    %6995 = vmatprep.subr.mxu0 0.0
    %6996 = vmatpush1.xpose.msra.mxu0 0.0
    %6997 = vmatprep.subr.mxu0 0.0
    %6998 = vmatpush1.xpose.msra.mxu0 0.0
    %6999 = vmatprep.subr.mxu0 0.0
    %7000 = vmatpush1.xpose.msra.mxu0 0.0
    %7001 = vmatprep.subr.mxu0 0.0
    %7002 = vmatpush1.xpose.msra.mxu0 0.0
    %7003 = vmatprep.subr.mxu0 0.0
    %7004 = vmatpush1.xpose.msra.mxu0 0.0
    %7005 = vmatprep.subr.mxu0 0.0
    %7006 = vmatpush1.xpose.msra.mxu0 0.0
    %7007 = vmatprep.subr.mxu0 0.0
    %7008 = vmatpush1.xpose.msra.mxu0 0.0
    %7009 = vmatprep.subr.mxu0 0.0
    %7010 = vmatpush1.xpose.msra.mxu0 0.0
    %7011 = vmatprep.subr.mxu0 0.0
    %7012 = vmatpush1.xpose.msra.mxu0 0.0
    %7013 = vmatprep.subr.mxu0 0.0
    %7014 = vmatpush1.xpose.msra.mxu0 0.0
    %7015 = vmatprep.subr.mxu0 0.0
    %7016 = vmatpush1.xpose.msra.mxu0 0.0
    %7017 = vmatprep.subr.mxu0 0.0
    %7018 = vmatpush1.xpose.msra.mxu0 0.0
    %7019 = vmatprep.subr.mxu0 0.0
    %7020 = vmatpush1.xpose.msra.mxu0 0.0
    %7021 = vmatprep.subr.mxu0 0.0
    %7022 = vmatpush1.xpose.msra.mxu0 0.0
    %7023 = vmatprep.subr.mxu0 0.0
    %7024 = vmatpush1.xpose.msra.mxu0 0.0
    %7025 = vmatprep.subr.mxu0 0.0
    %7026 = vmatpush1.xpose.msra.mxu0 0.0
    %7027 = vmatprep.subr.mxu0 0.0
    %7028 = vmatpush1.xpose.msra.mxu0 0.0
    %7029 = vmatprep.subr.mxu0 0.0
    %7030 = vmatpush1.xpose.msra.mxu0 0.0
    %7031 = vmatprep.subr.mxu0 0.0
    %7032 = vmatpush1.xpose.msra.mxu0 0.0
    %7033 = vmatprep.subr.mxu0 0.0
    %7034 = vmatpush1.xpose.msra.mxu0 0.0
    %7035 = vmatprep.subr.mxu0 0.0
    %7036 = vmatpush1.xpose.msra.mxu0 0.0
    %7037 = vmatprep.subr.mxu0 0.0
    %7038 = vmatpush1.xpose.msra.mxu0 0.0
    %7039 = vmatprep.subr.mxu0 0.0
    %7040 = vmatpush1.xpose.msra.mxu0 0.0
    %7041 = vmatprep.mubr.f32.mxu0 0.0
    %7042 = vmatmul.mubr.f32.gmra.mrb[0].mxu0 %v6969
    %v7043 = vpop.f32.mrb[0].mxu0
    %v7044 = vadd.f32 0.0, %v7043
    %v7045 = vpop.f32.mrb[0].mxu0
    %7046 = vmatprep.mubr.f32.mxu0 0.0
    %7047 = vmatmul.mubr.f32.gmra.mrb[0].mxu0 %v6971
    %v7048 = vpop.f32.mrb[0].mxu0
    %v7049 = vadd.f32 0.0, %v7048
    %v7050 = vpop.f32.mrb[0].mxu0
    %7051 = vdwg.mxu0
    %v7052 = vmul.f32 %v7044, 0.35355338
    %v7053 = vmul.f32 %v7049, 0.35355338
    %v7054 = vadd.f32 %v7052, %v49
    %v7055 = vadd.f32 %v7053, %v50
    %v7056 = vsel %vm359, %v7054, -inf
    %7057 = vmax.xlane.f32.xlu0 %v7056
    %v7058 = vpop.xlane.xlu0 %7057
    %v7059 = vsel %vm359, %v7055, -inf
    %7060 = vmax.xlane.f32.xlu0 %v7059
    %v7061 = vpop.xlane.xlu0 %7060
    %v7062 = vsub.f32 %v7054, %v7058
    %v7063 = vsub.f32 %v7055, %v7061
    %v7064 = vmul.f32 %v7062, 1.442695
    %v7065 = vpow.pop %v7064
    %v7066 = vmul.f32 %v7063, 1.442695
    %v7067 = vpow.pop %v7066
    %v7068 = vsel %vm359, %v7065, 0.0
    %7069 = vadd.xlane.f32.xlu0 %v7068
    %v7070 = vpop.xlane.xlu0 %7069
    %v7071 = vsel %vm359, %v7067, 0.0
    %7072 = vadd.xlane.f32.xlu0 %v7071
    %v7073 = vpop.xlane.xlu0 %7072
    %v7074 = vrcp.pop %v7070
    %v7075 = vrcp.pop %v7073
    %v7076 = vmul.f32 %v7065, %v7074
    %v7077 = vmul.f32 %v7067, %v7075
    %7078 = vrot.lane.b32.xlu0 %v6751, 88
    %v7079 = vpop.permute.xlu0 %7078
    %7080 = vrot.lane.b32.xlu0 %v6756, 88
    %v7081 = vpop.permute.xlu0 %7080
    %v7085 = vsel %vm359, %v7076, 0
    %v7088 = vsel %vm359, %v7077, 0
    %7090 = vmatprep.subr.mxu0 0.0
    %7091 = vmatpush1.msra.mxu0 %v7079
    %7092 = vmatprep.subr.mxu0 0.0
    %7093 = vmatpush1.msra.mxu0 %v7081
    %7094 = vmatprep.subr.mxu0 0.0
    %7095 = vmatpush1.msra.mxu0 0.0
    %7096 = vmatprep.subr.mxu0 0.0
    %7097 = vmatpush1.msra.mxu0 0.0
    %7098 = vmatprep.subr.mxu0 0.0
    %7099 = vmatpush1.msra.mxu0 0.0
    %7100 = vmatprep.subr.mxu0 0.0
    %7101 = vmatpush1.msra.mxu0 0.0
    %7102 = vmatprep.subr.mxu0 0.0
    %7103 = vmatpush1.msra.mxu0 0.0
    %7104 = vmatprep.subr.mxu0 0.0
    %7105 = vmatpush1.msra.mxu0 0.0
    %7106 = vmatprep.subr.mxu0 0.0
    %7107 = vmatpush1.msra.mxu0 0.0
    %7108 = vmatprep.subr.mxu0 0.0
    %7109 = vmatpush1.msra.mxu0 0.0
    %7110 = vmatprep.subr.mxu0 0.0
    %7111 = vmatpush1.msra.mxu0 0.0
    %7112 = vmatprep.subr.mxu0 0.0
    %7113 = vmatpush1.msra.mxu0 0.0
    %7114 = vmatprep.subr.mxu0 0.0
    %7115 = vmatpush1.msra.mxu0 0.0
    %7116 = vmatprep.subr.mxu0 0.0
    %7117 = vmatpush1.msra.mxu0 0.0
    %7118 = vmatprep.subr.mxu0 0.0
    %7119 = vmatpush1.msra.mxu0 0.0
    %7120 = vmatprep.subr.mxu0 0.0
    %7121 = vmatpush1.msra.mxu0 0.0
    %7122 = vmatprep.subr.mxu0 0.0
    %7123 = vmatpush1.msra.mxu0 0.0
    %7124 = vmatprep.subr.mxu0 0.0
    %7125 = vmatpush1.msra.mxu0 0.0
    %7126 = vmatprep.subr.mxu0 0.0
    %7127 = vmatpush1.msra.mxu0 0.0
    %7128 = vmatprep.subr.mxu0 0.0
    %7129 = vmatpush1.msra.mxu0 0.0
    %7130 = vmatprep.subr.mxu0 0.0
    %7131 = vmatpush1.msra.mxu0 0.0
    %7132 = vmatprep.subr.mxu0 0.0
    %7133 = vmatpush1.msra.mxu0 0.0
    %7134 = vmatprep.subr.mxu0 0.0
    %7135 = vmatpush1.msra.mxu0 0.0
    %7136 = vmatprep.subr.mxu0 0.0
    %7137 = vmatpush1.msra.mxu0 0.0
    %7138 = vmatprep.subr.mxu0 0.0
    %7139 = vmatpush1.msra.mxu0 0.0
    %7140 = vmatprep.subr.mxu0 0.0
    %7141 = vmatpush1.msra.mxu0 0.0
    %7142 = vmatprep.subr.mxu0 0.0
    %7143 = vmatpush1.msra.mxu0 0.0
    %7144 = vmatprep.subr.mxu0 0.0
    %7145 = vmatpush1.msra.mxu0 0.0
    %7146 = vmatprep.subr.mxu0 0.0
    %7147 = vmatpush1.msra.mxu0 0.0
    %7148 = vmatprep.subr.mxu0 0.0
    %7149 = vmatpush1.msra.mxu0 0.0
    %7150 = vmatprep.subr.mxu0 0.0
    %7151 = vmatpush1.msra.mxu0 0.0
    %7152 = vmatprep.subr.mxu0 0.0
    %7153 = vmatpush1.msra.mxu0 0.0
    %7154 = vmatprep.mubr.f32.mxu0 0.0
    %7155 = vmatmul.mubr.f32.gmra.mrb[0].mxu0 %v7085
    %v7156 = vpop.f32.mrb[0].mxu0
    %v7157 = vadd.f32 0.0, %v7156
    %v7158 = vpop.f32.mrb[0].mxu0
    %7159 = vmatprep.mubr.f32.mxu0 0.0
    %7160 = vmatmul.mubr.f32.gmra.mrb[0].mxu0 %v7088
    %v7161 = vpop.f32.mrb[0].mxu0
    %v7162 = vadd.f32 0.0, %v7161
    %v7163 = vpop.f32.mrb[0].mxu0
    %7164 = vdwg.mxu0
    %7167 = vrot.lane.b32.xlu0 %v7157, 8
    %v7168 = vpop.permute.xlu0 %7167
    %7169 = vrot.lane.b32.xlu0 %v7162, 8
    %v7170 = vpop.permute.xlu0 %7169
    %7173 = vst.msk [vmem:[#allocation2] sm:$0xff] %vm683, %v7168
    %7174 = vst.msk [vmem:[#allocation2 + $0x8] sm:$0xff] %vm683, %v7170
    %7175 = vrot.lane.b32.xlu0 %v6657, 112
    %v7176 = vpop.permute.xlu0 %7175
    %7177 = vrot.lane.b32.xlu0 %v6662, 112
    %v7178 = vpop.permute.xlu0 %7177
    %7179 = vrot.lane.b32.xlu0 %v6751, 112
    %v7180 = vpop.permute.xlu0 %7179
    %7181 = vrot.lane.b32.xlu0 %v6756, 112
    %v7182 = vpop.permute.xlu0 %7181
    %v7183 = vsel %vm267, %v7176, 0
    %v7185 = vsel %vm267, %v7178, 0
    %v7187 = vsel %vm267, %v7180, 0
    %v7189 = vsel %vm267, %v7182, 0
    %7191 = vmatprep.subr.mxu0 0.0
    %7192 = vmatpush1.xpose.msra.mxu0 %v7187
    %7193 = vmatprep.subr.mxu0 0.0
    %7194 = vmatpush1.xpose.msra.mxu0 %v7189
    %7195 = vmatprep.subr.mxu0 0.0
    %7196 = vmatpush1.xpose.msra.mxu0 0.0
    %7197 = vmatprep.subr.mxu0 0.0
    %7198 = vmatpush1.xpose.msra.mxu0 0.0
    %7199 = vmatprep.subr.mxu0 0.0
    %7200 = vmatpush1.xpose.msra.mxu0 0.0
    %7201 = vmatprep.subr.mxu0 0.0
    %7202 = vmatpush1.xpose.msra.mxu0 0.0
    %7203 = vmatprep.subr.mxu0 0.0
    %7204 = vmatpush1.xpose.msra.mxu0 0.0
    %7205 = vmatprep.subr.mxu0 0.0
    %7206 = vmatpush1.xpose.msra.mxu0 0.0
    %7207 = vmatprep.subr.mxu0 0.0
    %7208 = vmatpush1.xpose.msra.mxu0 0.0
    %7209 = vmatprep.subr.mxu0 0.0
    %7210 = vmatpush1.xpose.msra.mxu0 0.0
    %7211 = vmatprep.subr.mxu0 0.0
    %7212 = vmatpush1.xpose.msra.mxu0 0.0
    %7213 = vmatprep.subr.mxu0 0.0
    %7214 = vmatpush1.xpose.msra.mxu0 0.0
    %7215 = vmatprep.subr.mxu0 0.0
    %7216 = vmatpush1.xpose.msra.mxu0 0.0
    %7217 = vmatprep.subr.mxu0 0.0
    %7218 = vmatpush1.xpose.msra.mxu0 0.0
    %7219 = vmatprep.subr.mxu0 0.0
    %7220 = vmatpush1.xpose.msra.mxu0 0.0
    %7221 = vmatprep.subr.mxu0 0.0
    %7222 = vmatpush1.xpose.msra.mxu0 0.0
    %7223 = vmatprep.subr.mxu0 0.0
    %7224 = vmatpush1.xpose.msra.mxu0 0.0
    %7225 = vmatprep.subr.mxu0 0.0
    %7226 = vmatpush1.xpose.msra.mxu0 0.0
    %7227 = vmatprep.subr.mxu0 0.0
    %7228 = vmatpush1.xpose.msra.mxu0 0.0
    %7229 = vmatprep.subr.mxu0 0.0
    %7230 = vmatpush1.xpose.msra.mxu0 0.0
    %7231 = vmatprep.subr.mxu0 0.0
    %7232 = vmatpush1.xpose.msra.mxu0 0.0
    %7233 = vmatprep.subr.mxu0 0.0
    %7234 = vmatpush1.xpose.msra.mxu0 0.0
    %7235 = vmatprep.subr.mxu0 0.0
    %7236 = vmatpush1.xpose.msra.mxu0 0.0
    %7237 = vmatprep.subr.mxu0 0.0
    %7238 = vmatpush1.xpose.msra.mxu0 0.0
    %7239 = vmatprep.subr.mxu0 0.0
    %7240 = vmatpush1.xpose.msra.mxu0 0.0
    %7241 = vmatprep.subr.mxu0 0.0
    %7242 = vmatpush1.xpose.msra.mxu0 0.0
    %7243 = vmatprep.subr.mxu0 0.0
    %7244 = vmatpush1.xpose.msra.mxu0 0.0
    %7245 = vmatprep.subr.mxu0 0.0
    %7246 = vmatpush1.xpose.msra.mxu0 0.0
    %7247 = vmatprep.subr.mxu0 0.0
    %7248 = vmatpush1.xpose.msra.mxu0 0.0
    %7249 = vmatprep.subr.mxu0 0.0
    %7250 = vmatpush1.xpose.msra.mxu0 0.0
    %7251 = vmatprep.subr.mxu0 0.0
    %7252 = vmatpush1.xpose.msra.mxu0 0.0
    %7253 = vmatprep.subr.mxu0 0.0
    %7254 = vmatpush1.xpose.msra.mxu0 0.0
    %7255 = vmatprep.mubr.f32.mxu0 0.0
    %7256 = vmatmul.mubr.f32.gmra.mrb[0].mxu0 %v7183
    %v7257 = vpop.f32.mrb[0].mxu0
    %v7258 = vadd.f32 0.0, %v7257
    %v7259 = vpop.f32.mrb[0].mxu0
    %7260 = vmatprep.mubr.f32.mxu0 0.0
    %7261 = vmatmul.mubr.f32.gmra.mrb[0].mxu0 %v7185
    %v7262 = vpop.f32.mrb[0].mxu0
    %v7263 = vadd.f32 0.0, %v7262
    %v7264 = vpop.f32.mrb[0].mxu0
    %7265 = vdwg.mxu0
    %v7266 = vmul.f32 %v7258, 0.35355338
    %v7267 = vmul.f32 %v7263, 0.35355338
    %v7268 = vadd.f32 %v7266, %v49
    %v7269 = vadd.f32 %v7267, %v50
    %v7270 = vsel %vm359, %v7268, -inf
    %7271 = vmax.xlane.f32.xlu0 %v7270
    %v7272 = vpop.xlane.xlu0 %7271
    %v7273 = vsel %vm359, %v7269, -inf
    %7274 = vmax.xlane.f32.xlu0 %v7273
    %v7275 = vpop.xlane.xlu0 %7274
    %v7276 = vsub.f32 %v7268, %v7272
    %v7277 = vsub.f32 %v7269, %v7275
    %v7278 = vmul.f32 %v7276, 1.442695
    %v7279 = vpow.pop %v7278
    %v7280 = vmul.f32 %v7277, 1.442695
    %v7281 = vpow.pop %v7280
    %v7282 = vsel %vm359, %v7279, 0.0
    %7283 = vadd.xlane.f32.xlu0 %v7282
    %v7284 = vpop.xlane.xlu0 %7283
    %v7285 = vsel %vm359, %v7281, 0.0
    %7286 = vadd.xlane.f32.xlu0 %v7285
    %v7287 = vpop.xlane.xlu0 %7286
    %v7288 = vrcp.pop %v7284
    %v7289 = vrcp.pop %v7287
    %v7290 = vmul.f32 %v7279, %v7288
    %v7291 = vmul.f32 %v7281, %v7289
    %7292 = vrot.lane.b32.xlu0 %v6751, 80
    %v7293 = vpop.permute.xlu0 %7292
    %7294 = vrot.lane.b32.xlu0 %v6756, 80
    %v7295 = vpop.permute.xlu0 %7294
    %v7299 = vsel %vm359, %v7290, 0
    %v7302 = vsel %vm359, %v7291, 0
    %7304 = vmatprep.subr.mxu0 0.0
    %7305 = vmatpush1.msra.mxu0 %v7293
    %7306 = vmatprep.subr.mxu0 0.0
    %7307 = vmatpush1.msra.mxu0 %v7295
    %7308 = vmatprep.subr.mxu0 0.0
    %7309 = vmatpush1.msra.mxu0 0.0
    %7310 = vmatprep.subr.mxu0 0.0
    %7311 = vmatpush1.msra.mxu0 0.0
    %7312 = vmatprep.subr.mxu0 0.0
    %7313 = vmatpush1.msra.mxu0 0.0
    %7314 = vmatprep.subr.mxu0 0.0
    %7315 = vmatpush1.msra.mxu0 0.0
    %7316 = vmatprep.subr.mxu0 0.0
    %7317 = vmatpush1.msra.mxu0 0.0
    %7318 = vmatprep.subr.mxu0 0.0
    %7319 = vmatpush1.msra.mxu0 0.0
    %7320 = vmatprep.subr.mxu0 0.0
    %7321 = vmatpush1.msra.mxu0 0.0
    %7322 = vmatprep.subr.mxu0 0.0
    %7323 = vmatpush1.msra.mxu0 0.0
    %7324 = vmatprep.subr.mxu0 0.0
    %7325 = vmatpush1.msra.mxu0 0.0
    %7326 = vmatprep.subr.mxu0 0.0
    %7327 = vmatpush1.msra.mxu0 0.0
    %7328 = vmatprep.subr.mxu0 0.0
    %7329 = vmatpush1.msra.mxu0 0.0
    %7330 = vmatprep.subr.mxu0 0.0
    %7331 = vmatpush1.msra.mxu0 0.0
    %7332 = vmatprep.subr.mxu0 0.0
    %7333 = vmatpush1.msra.mxu0 0.0
    %7334 = vmatprep.subr.mxu0 0.0
    %7335 = vmatpush1.msra.mxu0 0.0
    %7336 = vmatprep.subr.mxu0 0.0
    %7337 = vmatpush1.msra.mxu0 0.0
    %7338 = vmatprep.subr.mxu0 0.0
    %7339 = vmatpush1.msra.mxu0 0.0
    %7340 = vmatprep.subr.mxu0 0.0
    %7341 = vmatpush1.msra.mxu0 0.0
    %7342 = vmatprep.subr.mxu0 0.0
    %7343 = vmatpush1.msra.mxu0 0.0
    %7344 = vmatprep.subr.mxu0 0.0
    %7345 = vmatpush1.msra.mxu0 0.0
    %7346 = vmatprep.subr.mxu0 0.0
    %7347 = vmatpush1.msra.mxu0 0.0
    %7348 = vmatprep.subr.mxu0 0.0
    %7349 = vmatpush1.msra.mxu0 0.0
    %7350 = vmatprep.subr.mxu0 0.0
    %7351 = vmatpush1.msra.mxu0 0.0
    %7352 = vmatprep.subr.mxu0 0.0
    %7353 = vmatpush1.msra.mxu0 0.0
    %7354 = vmatprep.subr.mxu0 0.0
    %7355 = vmatpush1.msra.mxu0 0.0
    %7356 = vmatprep.subr.mxu0 0.0
    %7357 = vmatpush1.msra.mxu0 0.0
    %7358 = vmatprep.subr.mxu0 0.0
    %7359 = vmatpush1.msra.mxu0 0.0
    %7360 = vmatprep.subr.mxu0 0.0
    %7361 = vmatpush1.msra.mxu0 0.0
    %7362 = vmatprep.subr.mxu0 0.0
    %7363 = vmatpush1.msra.mxu0 0.0
    %7364 = vmatprep.subr.mxu0 0.0
    %7365 = vmatpush1.msra.mxu0 0.0
    %7366 = vmatprep.subr.mxu0 0.0
    %7367 = vmatpush1.msra.mxu0 0.0
    %7368 = vmatprep.mubr.f32.mxu0 0.0
    %7369 = vmatmul.mubr.f32.gmra.mrb[0].mxu0 %v7299
    %v7370 = vpop.f32.mrb[0].mxu0
    %v7371 = vadd.f32 0.0, %v7370
    %v7372 = vpop.f32.mrb[0].mxu0
    %7373 = vmatprep.mubr.f32.mxu0 0.0
    %7374 = vmatmul.mubr.f32.gmra.mrb[0].mxu0 %v7302
    %v7375 = vpop.f32.mrb[0].mxu0
    %v7376 = vadd.f32 0.0, %v7375
    %v7377 = vpop.f32.mrb[0].mxu0
    %7378 = vdwg.mxu0
    %7381 = vrot.lane.b32.xlu0 %v7371, 16
    %v7382 = vpop.permute.xlu0 %7381
    %7383 = vrot.lane.b32.xlu0 %v7376, 16
    %v7384 = vpop.permute.xlu0 %7383
    %7387 = vst.msk [vmem:[#allocation2] sm:$0xff] %vm898, %v7382
    %7388 = vst.msk [vmem:[#allocation2 + $0x8] sm:$0xff] %vm898, %v7384
    %7389 = vrot.lane.b32.xlu0 %v6657, 104
    %v7390 = vpop.permute.xlu0 %7389
    %7391 = vrot.lane.b32.xlu0 %v6662, 104
    %v7392 = vpop.permute.xlu0 %7391
    %7393 = vrot.lane.b32.xlu0 %v6751, 104
    %v7394 = vpop.permute.xlu0 %7393
    %7395 = vrot.lane.b32.xlu0 %v6756, 104
    %v7396 = vpop.permute.xlu0 %7395
    %v7397 = vsel %vm267, %v7390, 0
    %v7399 = vsel %vm267, %v7392, 0
    %v7401 = vsel %vm267, %v7394, 0
    %v7403 = vsel %vm267, %v7396, 0
    %7405 = vmatprep.subr.mxu0 0.0
    %7406 = vmatpush1.xpose.msra.mxu0 %v7401
    %7407 = vmatprep.subr.mxu0 0.0
    %7408 = vmatpush1.xpose.msra.mxu0 %v7403
    %7409 = vmatprep.subr.mxu0 0.0
    %7410 = vmatpush1.xpose.msra.mxu0 0.0
    %7411 = vmatprep.subr.mxu0 0.0
    %7412 = vmatpush1.xpose.msra.mxu0 0.0
    %7413 = vmatprep.subr.mxu0 0.0
    %7414 = vmatpush1.xpose.msra.mxu0 0.0
    %7415 = vmatprep.subr.mxu0 0.0
    %7416 = vmatpush1.xpose.msra.mxu0 0.0
    %7417 = vmatprep.subr.mxu0 0.0
    %7418 = vmatpush1.xpose.msra.mxu0 0.0
    %7419 = vmatprep.subr.mxu0 0.0
    %7420 = vmatpush1.xpose.msra.mxu0 0.0
    %7421 = vmatprep.subr.mxu0 0.0
    %7422 = vmatpush1.xpose.msra.mxu0 0.0
    %7423 = vmatprep.subr.mxu0 0.0
    %7424 = vmatpush1.xpose.msra.mxu0 0.0
    %7425 = vmatprep.subr.mxu0 0.0
    %7426 = vmatpush1.xpose.msra.mxu0 0.0
    %7427 = vmatprep.subr.mxu0 0.0
    %7428 = vmatpush1.xpose.msra.mxu0 0.0
    %7429 = vmatprep.subr.mxu0 0.0
    %7430 = vmatpush1.xpose.msra.mxu0 0.0
    %7431 = vmatprep.subr.mxu0 0.0
    %7432 = vmatpush1.xpose.msra.mxu0 0.0
    %7433 = vmatprep.subr.mxu0 0.0
    %7434 = vmatpush1.xpose.msra.mxu0 0.0
    %7435 = vmatprep.subr.mxu0 0.0
    %7436 = vmatpush1.xpose.msra.mxu0 0.0
    %7437 = vmatprep.subr.mxu0 0.0
    %7438 = vmatpush1.xpose.msra.mxu0 0.0
    %7439 = vmatprep.subr.mxu0 0.0
    %7440 = vmatpush1.xpose.msra.mxu0 0.0
    %7441 = vmatprep.subr.mxu0 0.0
    %7442 = vmatpush1.xpose.msra.mxu0 0.0
    %7443 = vmatprep.subr.mxu0 0.0
    %7444 = vmatpush1.xpose.msra.mxu0 0.0
    %7445 = vmatprep.subr.mxu0 0.0
    %7446 = vmatpush1.xpose.msra.mxu0 0.0
    %7447 = vmatprep.subr.mxu0 0.0
    %7448 = vmatpush1.xpose.msra.mxu0 0.0
    %7449 = vmatprep.subr.mxu0 0.0
    %7450 = vmatpush1.xpose.msra.mxu0 0.0
    %7451 = vmatprep.subr.mxu0 0.0
    %7452 = vmatpush1.xpose.msra.mxu0 0.0
    %7453 = vmatprep.subr.mxu0 0.0
    %7454 = vmatpush1.xpose.msra.mxu0 0.0
    %7455 = vmatprep.subr.mxu0 0.0
    %7456 = vmatpush1.xpose.msra.mxu0 0.0
    %7457 = vmatprep.subr.mxu0 0.0
    %7458 = vmatpush1.xpose.msra.mxu0 0.0
    %7459 = vmatprep.subr.mxu0 0.0
    %7460 = vmatpush1.xpose.msra.mxu0 0.0
    %7461 = vmatprep.subr.mxu0 0.0
    %7462 = vmatpush1.xpose.msra.mxu0 0.0
    %7463 = vmatprep.subr.mxu0 0.0
    %7464 = vmatpush1.xpose.msra.mxu0 0.0
    %7465 = vmatprep.subr.mxu0 0.0
    %7466 = vmatpush1.xpose.msra.mxu0 0.0
    %7467 = vmatprep.subr.mxu0 0.0
    %7468 = vmatpush1.xpose.msra.mxu0 0.0
    %7469 = vmatprep.mubr.f32.mxu0 0.0
    %7470 = vmatmul.mubr.f32.gmra.mrb[0].mxu0 %v7397
    %v7471 = vpop.f32.mrb[0].mxu0
    %v7472 = vadd.f32 0.0, %v7471
    %v7473 = vpop.f32.mrb[0].mxu0
    %7474 = vmatprep.mubr.f32.mxu0 0.0
    %7475 = vmatmul.mubr.f32.gmra.mrb[0].mxu0 %v7399
    %v7476 = vpop.f32.mrb[0].mxu0
    %v7477 = vadd.f32 0.0, %v7476
    %v7478 = vpop.f32.mrb[0].mxu0
    %7479 = vdwg.mxu0
    %v7480 = vmul.f32 %v7472, 0.35355338
    %v7481 = vmul.f32 %v7477, 0.35355338
    %v7482 = vadd.f32 %v7480, %v49
    %v7483 = vadd.f32 %v7481, %v50
    %v7484 = vsel %vm359, %v7482, -inf
    %7485 = vmax.xlane.f32.xlu0 %v7484
    %v7486 = vpop.xlane.xlu0 %7485
    %v7487 = vsel %vm359, %v7483, -inf
    %7488 = vmax.xlane.f32.xlu0 %v7487
    %v7489 = vpop.xlane.xlu0 %7488
    %v7490 = vsub.f32 %v7482, %v7486
    %v7491 = vsub.f32 %v7483, %v7489
    %v7492 = vmul.f32 %v7490, 1.442695
    %v7493 = vpow.pop %v7492
    %v7494 = vmul.f32 %v7491, 1.442695
    %v7495 = vpow.pop %v7494
    %v7496 = vsel %vm359, %v7493, 0.0
    %7497 = vadd.xlane.f32.xlu0 %v7496
    %v7498 = vpop.xlane.xlu0 %7497
    %v7499 = vsel %vm359, %v7495, 0.0
    %7500 = vadd.xlane.f32.xlu0 %v7499
    %v7501 = vpop.xlane.xlu0 %7500
    %v7502 = vrcp.pop %v7498
    %v7503 = vrcp.pop %v7501
    %v7504 = vmul.f32 %v7493, %v7502
    %v7505 = vmul.f32 %v7495, %v7503
    %7506 = vrot.lane.b32.xlu0 %v6751, 72
    %v7507 = vpop.permute.xlu0 %7506
    %7508 = vrot.lane.b32.xlu0 %v6756, 72
    %v7509 = vpop.permute.xlu0 %7508
    %v7513 = vsel %vm359, %v7504, 0
    %v7516 = vsel %vm359, %v7505, 0
    %7518 = vmatprep.subr.mxu0 0.0
    %7519 = vmatpush1.msra.mxu0 %v7507
    %7520 = vmatprep.subr.mxu0 0.0
    %7521 = vmatpush1.msra.mxu0 %v7509
    %7522 = vmatprep.subr.mxu0 0.0
    %7523 = vmatpush1.msra.mxu0 0.0
    %7524 = vmatprep.subr.mxu0 0.0
    %7525 = vmatpush1.msra.mxu0 0.0
    %7526 = vmatprep.subr.mxu0 0.0
    %7527 = vmatpush1.msra.mxu0 0.0
    %7528 = vmatprep.subr.mxu0 0.0
    %7529 = vmatpush1.msra.mxu0 0.0
    %7530 = vmatprep.subr.mxu0 0.0
    %7531 = vmatpush1.msra.mxu0 0.0
    %7532 = vmatprep.subr.mxu0 0.0
    %7533 = vmatpush1.msra.mxu0 0.0
    %7534 = vmatprep.subr.mxu0 0.0
    %7535 = vmatpush1.msra.mxu0 0.0
    %7536 = vmatprep.subr.mxu0 0.0
    %7537 = vmatpush1.msra.mxu0 0.0
    %7538 = vmatprep.subr.mxu0 0.0
    %7539 = vmatpush1.msra.mxu0 0.0
    %7540 = vmatprep.subr.mxu0 0.0
    %7541 = vmatpush1.msra.mxu0 0.0
    %7542 = vmatprep.subr.mxu0 0.0
    %7543 = vmatpush1.msra.mxu0 0.0
    %7544 = vmatprep.subr.mxu0 0.0
    %7545 = vmatpush1.msra.mxu0 0.0
    %7546 = vmatprep.subr.mxu0 0.0
    %7547 = vmatpush1.msra.mxu0 0.0
    %7548 = vmatprep.subr.mxu0 0.0
    %7549 = vmatpush1.msra.mxu0 0.0
    %7550 = vmatprep.subr.mxu0 0.0
    %7551 = vmatpush1.msra.mxu0 0.0
    %7552 = vmatprep.subr.mxu0 0.0
    %7553 = vmatpush1.msra.mxu0 0.0
    %7554 = vmatprep.subr.mxu0 0.0
    %7555 = vmatpush1.msra.mxu0 0.0
    %7556 = vmatprep.subr.mxu0 0.0
    %7557 = vmatpush1.msra.mxu0 0.0
    %7558 = vmatprep.subr.mxu0 0.0
    %7559 = vmatpush1.msra.mxu0 0.0
    %7560 = vmatprep.subr.mxu0 0.0
    %7561 = vmatpush1.msra.mxu0 0.0
    %7562 = vmatprep.subr.mxu0 0.0
    %7563 = vmatpush1.msra.mxu0 0.0
    %7564 = vmatprep.subr.mxu0 0.0
    %7565 = vmatpush1.msra.mxu0 0.0
    %7566 = vmatprep.subr.mxu0 0.0
    %7567 = vmatpush1.msra.mxu0 0.0
    %7568 = vmatprep.subr.mxu0 0.0
    %7569 = vmatpush1.msra.mxu0 0.0
    %7570 = vmatprep.subr.mxu0 0.0
    %7571 = vmatpush1.msra.mxu0 0.0
    %7572 = vmatprep.subr.mxu0 0.0
    %7573 = vmatpush1.msra.mxu0 0.0
    %7574 = vmatprep.subr.mxu0 0.0
    %7575 = vmatpush1.msra.mxu0 0.0
    %7576 = vmatprep.subr.mxu0 0.0
    %7577 = vmatpush1.msra.mxu0 0.0
    %7578 = vmatprep.subr.mxu0 0.0
    %7579 = vmatpush1.msra.mxu0 0.0
    %7580 = vmatprep.subr.mxu0 0.0
    %7581 = vmatpush1.msra.mxu0 0.0
    %7582 = vmatprep.mubr.f32.mxu0 0.0
    %7583 = vmatmul.mubr.f32.gmra.mrb[0].mxu0 %v7513
    %v7584 = vpop.f32.mrb[0].mxu0
    %v7585 = vadd.f32 0.0, %v7584
    %v7586 = vpop.f32.mrb[0].mxu0
    %7587 = vmatprep.mubr.f32.mxu0 0.0
    %7588 = vmatmul.mubr.f32.gmra.mrb[0].mxu0 %v7516
    %v7589 = vpop.f32.mrb[0].mxu0
    %v7590 = vadd.f32 0.0, %v7589
    %v7591 = vpop.f32.mrb[0].mxu0
    %7592 = vdwg.mxu0
    %7595 = vrot.lane.b32.xlu0 %v7585, 24
    %v7596 = vpop.permute.xlu0 %7595
    %7597 = vrot.lane.b32.xlu0 %v7590, 24
    %v7598 = vpop.permute.xlu0 %7597
    %7601 = vst.msk [vmem:[#allocation2] sm:$0xff] %vm1113, %v7596
    %7602 = vst.msk [vmem:[#allocation2 + $0x8] sm:$0xff] %vm1113, %v7598
    %v7603 = vld [vmem:[#allocation2] sm:$0xff]
    %v7604 = vld [vmem:[#allocation2 + $0x8] sm:$0xff]
    %7605 = vrot.lane.b32.xlu0 %v6546, 32
    %v7606 = vpop.permute.xlu0 %7605
    %7607 = vrot.lane.b32.xlu0 %v6547, 32
    %v7608 = vpop.permute.xlu0 %7607
    %7609 = vrot.lane.b32.xlu0 %v6548, 32
    %v7610 = vpop.permute.xlu0 %7609
    %7611 = vrot.lane.b32.xlu0 %v6549, 32
    %v7612 = vpop.permute.xlu0 %7611
    %7617 = vrot.lane.b32.xlu0 %v6582, 32
    %v7618 = vpop.permute.xlu0 %7617
    %v7621 = vsel %vm58, %v7603, 0
    %v7624 = vsel %vm58, %v7604, 0
    %7626 = vmatprep.subr.mxu0 0.0
    %7627 = vmatpush1.msra.mxu0 %v7606
    %7628 = vmatprep.subr.mxu0 0.0
    %7629 = vmatpush1.msra.mxu0 %v7608
    %7630 = vmatprep.subr.mxu0 0.0
    %7631 = vmatpush1.msra.mxu0 %v7610
    %7632 = vmatprep.subr.mxu0 0.0
    %7633 = vmatpush1.msra.mxu0 %v7612
    %7634 = vmatprep.subr.mxu0 0.0
    %7635 = vmatpush1.msra.mxu0 0.0
    %7636 = vmatprep.subr.mxu0 0.0
    %7637 = vmatpush1.msra.mxu0 0.0
    %7638 = vmatprep.subr.mxu0 0.0
    %7639 = vmatpush1.msra.mxu0 0.0
    %7640 = vmatprep.subr.mxu0 0.0
    %7641 = vmatpush1.msra.mxu0 0.0
    %7642 = vmatprep.subr.mxu0 0.0
    %7643 = vmatpush1.msra.mxu0 0.0
    %7644 = vmatprep.subr.mxu0 0.0
    %7645 = vmatpush1.msra.mxu0 0.0
    %7646 = vmatprep.subr.mxu0 0.0
    %7647 = vmatpush1.msra.mxu0 0.0
    %7648 = vmatprep.subr.mxu0 0.0
    %7649 = vmatpush1.msra.mxu0 0.0
    %7650 = vmatprep.subr.mxu0 0.0
    %7651 = vmatpush1.msra.mxu0 0.0
    %7652 = vmatprep.subr.mxu0 0.0
    %7653 = vmatpush1.msra.mxu0 0.0
    %7654 = vmatprep.subr.mxu0 0.0
    %7655 = vmatpush1.msra.mxu0 0.0
    %7656 = vmatprep.subr.mxu0 0.0
    %7657 = vmatpush1.msra.mxu0 0.0
    %7658 = vmatprep.subr.mxu0 0.0
    %7659 = vmatpush1.msra.mxu0 0.0
    %7660 = vmatprep.subr.mxu0 0.0
    %7661 = vmatpush1.msra.mxu0 0.0
    %7662 = vmatprep.subr.mxu0 0.0
    %7663 = vmatpush1.msra.mxu0 0.0
    %7664 = vmatprep.subr.mxu0 0.0
    %7665 = vmatpush1.msra.mxu0 0.0
    %7666 = vmatprep.subr.mxu0 0.0
    %7667 = vmatpush1.msra.mxu0 0.0
    %7668 = vmatprep.subr.mxu0 0.0
    %7669 = vmatpush1.msra.mxu0 0.0
    %7670 = vmatprep.subr.mxu0 0.0
    %7671 = vmatpush1.msra.mxu0 0.0
    %7672 = vmatprep.subr.mxu0 0.0
    %7673 = vmatpush1.msra.mxu0 0.0
    %7674 = vmatprep.subr.mxu0 0.0
    %7675 = vmatpush1.msra.mxu0 0.0
    %7676 = vmatprep.subr.mxu0 0.0
    %7677 = vmatpush1.msra.mxu0 0.0
    %7678 = vmatprep.subr.mxu0 0.0
    %7679 = vmatpush1.msra.mxu0 0.0
    %7680 = vmatprep.subr.mxu0 0.0
    %7681 = vmatpush1.msra.mxu0 0.0
    %7682 = vmatprep.subr.mxu0 0.0
    %7683 = vmatpush1.msra.mxu0 0.0
    %7684 = vmatprep.subr.mxu0 0.0
    %7685 = vmatpush1.msra.mxu0 0.0
    %7686 = vmatprep.subr.mxu0 0.0
    %7687 = vmatpush1.msra.mxu0 0.0
    %7688 = vmatprep.subr.mxu0 0.0
    %7689 = vmatpush1.msra.mxu0 0.0
    %7690 = vmatprep.mubr.f32.mxu0 0.0
    %7691 = vmatmul.mubr.f32.gmra.mrb[0].mxu0 %v7621
    %v7692 = vpop.f32.mrb[0].mxu0
    %v7693 = vadd.f32 %v7618, %v7692
    %v7694 = vpop.f32.mrb[0].mxu0
    %7695 = vmatprep.mubr.f32.mxu0 0.0
    %7696 = vmatmul.mubr.f32.gmra.mrb[0].mxu0 %v7624
    %v7697 = vpop.f32.mrb[0].mxu0
    %v7698 = vadd.f32 %v7618, %v7697
    %v7699 = vpop.f32.mrb[0].mxu0
    %7700 = vdwg.mxu0
    %v7701 = vadd.f32 %v7693, %v6543
    %v7702 = vadd.f32 %v7698, %v6544
    %v7703 = vsel %vm58, %v7701, 0.0
    %7704 = vadd.xlane.f32.xlu0 %v7703
    %v7705 = vpop.xlane.xlu0 %7704
    %v7706 = vsel %vm58, %v7702, 0.0
    %7707 = vadd.xlane.f32.xlu0 %v7706
    %v7708 = vpop.xlane.xlu0 %7707
    %v7709 = vmul.f32 %v7705, %v65
    %v7710 = vmul.f32 %v7708, %v65
    %v7711 = vsub.f32 %v7701, %v7709
    %v7712 = vsub.f32 %v7702, %v7710
    %v7713 = vmul.f32 %v7711, %v7711
    %v7714 = vmul.f32 %v7712, %v7712
    %v7715 = vsel %vm58, %v7713, 0.0
    %7716 = vadd.xlane.f32.xlu0 %v7715
    %v7717 = vpop.xlane.xlu0 %7716
    %v7718 = vsel %vm58, %v7714, 0.0
    %7719 = vadd.xlane.f32.xlu0 %v7718
    %v7720 = vpop.xlane.xlu0 %7719
    %v7721 = vmul.f32 %v7717, %v65
    %v7722 = vmul.f32 %v7720, %v65
    %v7723 = vadd.f32 %v7721, 1e-05
    %v7724 = vadd.f32 %v7722, 1e-05
    %v7725 = vrsqrt.pop %v7723
    %v7726 = vrsqrt.pop %v7724
    %v7727 = vmul.f32 %v7711, %v7725
    %v7728 = vmul.f32 %v7712, %v7726
    %s7729 = scalar_lea.vmem %s9, 3
    %v7730 = vld [vmem:[%s7729] sm:$0x1]
    %s7731 = scalar_lea.vmem %s7, 96
    %v7732 = vld [vmem:[%s7731] sm:$0xff]
    %v7733 = vld [vmem:[%s7731 + $0x8] sm:$0xff]
    %v7734 = vld [vmem:[%s7731 + $0x10] sm:$0xff]
    %v7735 = vld [vmem:[%s7731 + $0x18] sm:$0xff]
    %v7737 = vlaneseq
    %v7738 = vshrl.u32 %v7737, 7
    %v7739 = vsub.s32 0, %v7738
    %v7740 = vrot.slane %v7730, %v7739
    %v7743 = vsel %vm58, %v7727, 0
    %v7746 = vsel %vm58, %v7728, 0
    %7748 = vmatprep.subr.mxu0 0.0
    %7749 = vmatpush1.msra.mxu0 %v7732
    %7750 = vmatprep.subr.mxu0 0.0
    %7751 = vmatpush1.msra.mxu0 %v7733
    %7752 = vmatprep.subr.mxu0 0.0
    %7753 = vmatpush1.msra.mxu0 %v7734
    %7754 = vmatprep.subr.mxu0 0.0
    %7755 = vmatpush1.msra.mxu0 %v7735
    %7756 = vmatprep.subr.mxu0 0.0
    %7757 = vmatpush1.msra.mxu0 0.0
    %7758 = vmatprep.subr.mxu0 0.0
    %7759 = vmatpush1.msra.mxu0 0.0
    %7760 = vmatprep.subr.mxu0 0.0
    %7761 = vmatpush1.msra.mxu0 0.0
    %7762 = vmatprep.subr.mxu0 0.0
    %7763 = vmatpush1.msra.mxu0 0.0
    %7764 = vmatprep.subr.mxu0 0.0
    %7765 = vmatpush1.msra.mxu0 0.0
    %7766 = vmatprep.subr.mxu0 0.0
    %7767 = vmatpush1.msra.mxu0 0.0
    %7768 = vmatprep.subr.mxu0 0.0
    %7769 = vmatpush1.msra.mxu0 0.0
    %7770 = vmatprep.subr.mxu0 0.0
    %7771 = vmatpush1.msra.mxu0 0.0
    %7772 = vmatprep.subr.mxu0 0.0
    %7773 = vmatpush1.msra.mxu0 0.0
    %7774 = vmatprep.subr.mxu0 0.0
    %7775 = vmatpush1.msra.mxu0 0.0
    %7776 = vmatprep.subr.mxu0 0.0
    %7777 = vmatpush1.msra.mxu0 0.0
    %7778 = vmatprep.subr.mxu0 0.0
    %7779 = vmatpush1.msra.mxu0 0.0
    %7780 = vmatprep.subr.mxu0 0.0
    %7781 = vmatpush1.msra.mxu0 0.0
    %7782 = vmatprep.subr.mxu0 0.0
    %7783 = vmatpush1.msra.mxu0 0.0
    %7784 = vmatprep.subr.mxu0 0.0
    %7785 = vmatpush1.msra.mxu0 0.0
    %7786 = vmatprep.subr.mxu0 0.0
    %7787 = vmatpush1.msra.mxu0 0.0
    %7788 = vmatprep.subr.mxu0 0.0
    %7789 = vmatpush1.msra.mxu0 0.0
    %7790 = vmatprep.subr.mxu0 0.0
    %7791 = vmatpush1.msra.mxu0 0.0
    %7792 = vmatprep.subr.mxu0 0.0
    %7793 = vmatpush1.msra.mxu0 0.0
    %7794 = vmatprep.subr.mxu0 0.0
    %7795 = vmatpush1.msra.mxu0 0.0
    %7796 = vmatprep.subr.mxu0 0.0
    %7797 = vmatpush1.msra.mxu0 0.0
    %7798 = vmatprep.subr.mxu0 0.0
    %7799 = vmatpush1.msra.mxu0 0.0
    %7800 = vmatprep.subr.mxu0 0.0
    %7801 = vmatpush1.msra.mxu0 0.0
    %7802 = vmatprep.subr.mxu0 0.0
    %7803 = vmatpush1.msra.mxu0 0.0
    %7804 = vmatprep.subr.mxu0 0.0
    %7805 = vmatpush1.msra.mxu0 0.0
    %7806 = vmatprep.subr.mxu0 0.0
    %7807 = vmatpush1.msra.mxu0 0.0
    %7808 = vmatprep.subr.mxu0 0.0
    %7809 = vmatpush1.msra.mxu0 0.0
    %7810 = vmatprep.subr.mxu0 0.0
    %7811 = vmatpush1.msra.mxu0 0.0
    %7812 = vmatprep.mubr.f32.mxu0 0.0
    %7813 = vmatmul.mubr.f32.gmra.mrb[0].mxu0 %v7743
    %v7814 = vpop.f32.mrb[0].mxu0
    %v7815 = vadd.f32 %v7740, %v7814
    %v7816 = vpop.f32.mrb[0].mxu0
    %7817 = vmatprep.mubr.f32.mxu0 0.0
    %7818 = vmatmul.mubr.f32.gmra.mrb[0].mxu0 %v7746
    %v7819 = vpop.f32.mrb[0].mxu0
    %v7820 = vadd.f32 %v7740, %v7819
    %v7821 = vpop.f32.mrb[0].mxu0
    %7822 = vdwg.mxu0
    %v7823 = vmax.f32 %v7815, 0.0
    %v7824 = vmax.f32 %v7820, 0.0
    %s7825 = scalar_lea.vmem %s8, 192
    %v7826 = vld [vmem:[%s7825] sm:$0xff]
    %v7827 = vld [vmem:[%s7825 + $0x8] sm:$0xff]
    %v7828 = vld [vmem:[%s7825 + $0x10] sm:$0xff]
    %v7829 = vld [vmem:[%s7825 + $0x18] sm:$0xff]
    %v7830 = vld [vmem:[%s7825 + $0x20] sm:$0xff]
    %v7831 = vld [vmem:[%s7825 + $0x28] sm:$0xff]
    %v7832 = vld [vmem:[%s7825 + $0x30] sm:$0xff]
    %v7833 = vld [vmem:[%s7825 + $0x38] sm:$0xff]
    %7834 = vrot.lane.b32.xlu0 %v7740, 64
    %v7835 = vpop.permute.xlu0 %7834
    %v7838 = vsel %vm1347, %v7823, 0
    %v7841 = vsel %vm1347, %v7824, 0
    %7843 = vmatprep.subr.mxu0 0.0
    %7844 = vmatpush1.msra.mxu0 %v7826
    %7845 = vmatprep.subr.mxu0 0.0
    %7846 = vmatpush1.msra.mxu0 %v7827
    %7847 = vmatprep.subr.mxu0 0.0
    %7848 = vmatpush1.msra.mxu0 %v7828
    %7849 = vmatprep.subr.mxu0 0.0
    %7850 = vmatpush1.msra.mxu0 %v7829
    %7851 = vmatprep.subr.mxu0 0.0
    %7852 = vmatpush1.msra.mxu0 %v7830
    %7853 = vmatprep.subr.mxu0 0.0
    %7854 = vmatpush1.msra.mxu0 %v7831
    %7855 = vmatprep.subr.mxu0 0.0
    %7856 = vmatpush1.msra.mxu0 %v7832
    %7857 = vmatprep.subr.mxu0 0.0
    %7858 = vmatpush1.msra.mxu0 %v7833
    %7859 = vmatprep.subr.mxu0 0.0
    %7860 = vmatpush1.msra.mxu0 0.0
    %7861 = vmatprep.subr.mxu0 0.0
    %7862 = vmatpush1.msra.mxu0 0.0
    %7863 = vmatprep.subr.mxu0 0.0
    %7864 = vmatpush1.msra.mxu0 0.0
    %7865 = vmatprep.subr.mxu0 0.0
    %7866 = vmatpush1.msra.mxu0 0.0
    %7867 = vmatprep.subr.mxu0 0.0
    %7868 = vmatpush1.msra.mxu0 0.0
    %7869 = vmatprep.subr.mxu0 0.0
    %7870 = vmatpush1.msra.mxu0 0.0
    %7871 = vmatprep.subr.mxu0 0.0
    %7872 = vmatpush1.msra.mxu0 0.0
    %7873 = vmatprep.subr.mxu0 0.0
    %7874 = vmatpush1.msra.mxu0 0.0
    %7875 = vmatprep.subr.mxu0 0.0
    %7876 = vmatpush1.msra.mxu0 0.0
    %7877 = vmatprep.subr.mxu0 0.0
    %7878 = vmatpush1.msra.mxu0 0.0
    %7879 = vmatprep.subr.mxu0 0.0
    %7880 = vmatpush1.msra.mxu0 0.0
    %7881 = vmatprep.subr.mxu0 0.0
    %7882 = vmatpush1.msra.mxu0 0.0
    %7883 = vmatprep.subr.mxu0 0.0
    %7884 = vmatpush1.msra.mxu0 0.0
    %7885 = vmatprep.subr.mxu0 0.0
    %7886 = vmatpush1.msra.mxu0 0.0
    %7887 = vmatprep.subr.mxu0 0.0
    %7888 = vmatpush1.msra.mxu0 0.0
    %7889 = vmatprep.subr.mxu0 0.0
    %7890 = vmatpush1.msra.mxu0 0.0
    %7891 = vmatprep.subr.mxu0 0.0
    %7892 = vmatpush1.msra.mxu0 0.0
    %7893 = vmatprep.subr.mxu0 0.0
    %7894 = vmatpush1.msra.mxu0 0.0
    %7895 = vmatprep.subr.mxu0 0.0
    %7896 = vmatpush1.msra.mxu0 0.0
    %7897 = vmatprep.subr.mxu0 0.0
    %7898 = vmatpush1.msra.mxu0 0.0
    %7899 = vmatprep.subr.mxu0 0.0
    %7900 = vmatpush1.msra.mxu0 0.0
    %7901 = vmatprep.subr.mxu0 0.0
    %7902 = vmatpush1.msra.mxu0 0.0
    %7903 = vmatprep.subr.mxu0 0.0
    %7904 = vmatpush1.msra.mxu0 0.0
    %7905 = vmatprep.subr.mxu0 0.0
    %7906 = vmatpush1.msra.mxu0 0.0
    %7907 = vmatprep.mubr.f32.mxu0 0.0
    %7908 = vmatmul.mubr.f32.gmra.mrb[0].mxu0 %v7838
    %v7909 = vpop.f32.mrb[0].mxu0
    %v7910 = vadd.f32 %v7835, %v7909
    %v7911 = vpop.f32.mrb[0].mxu0
    %7912 = vmatprep.mubr.f32.mxu0 0.0
    %7913 = vmatmul.mubr.f32.gmra.mrb[0].mxu0 %v7841
    %v7914 = vpop.f32.mrb[0].mxu0
    %v7915 = vadd.f32 %v7835, %v7914
    %v7916 = vpop.f32.mrb[0].mxu0
    %7917 = vdwg.mxu0
    %v7918 = vadd.f32 %v7910, %v7701
    %v7919 = vadd.f32 %v7915, %v7702
    %v7920 = vsel %vm58, %v7918, 0.0
    %7921 = vadd.xlane.f32.xlu0 %v7920
    %v7922 = vpop.xlane.xlu0 %7921
    %v7923 = vsel %vm58, %v7919, 0.0
    %7924 = vadd.xlane.f32.xlu0 %v7923
    %v7925 = vpop.xlane.xlu0 %7924
    %v7926 = vmul.f32 %v7922, %v65
    %v7927 = vmul.f32 %v7925, %v65
    %v7928 = vsub.f32 %v7918, %v7926
    %v7929 = vsub.f32 %v7919, %v7927
    %v7930 = vmul.f32 %v7928, %v7928
    %v7931 = vmul.f32 %v7929, %v7929
    %v7932 = vsel %vm58, %v7930, 0.0
    %7933 = vadd.xlane.f32.xlu0 %v7932
    %v7934 = vpop.xlane.xlu0 %7933
    %v7935 = vsel %vm58, %v7931, 0.0
    %7936 = vadd.xlane.f32.xlu0 %v7935
    %v7937 = vpop.xlane.xlu0 %7936
    %v7938 = vmul.f32 %v7934, %v65
    %v7939 = vmul.f32 %v7937, %v65
    %v7940 = vadd.f32 %v7938, 1e-05
    %v7941 = vadd.f32 %v7939, 1e-05
    %v7942 = vrsqrt.pop %v7940
    %v7943 = vrsqrt.pop %v7941
    %v7944 = vmul.f32 %v7928, %v7942
    %v7945 = vmul.f32 %v7929, %v7943
    %v7946 = vld [vmem:[%s10 + $0x2] sm:$0x1]
    %v7947 = vlaneseq
    %v7948 = vshrl.u32 %v7947, 7
    %v7949 = vsub.s32 0, %v7948
    %v7950 = vrot.slane %v7946, %v7949
    %v7951 = vmul.f32 %v7944, %v7950
    %v7952 = vmul.f32 %v7945, %v7950
    %v7953 = vld [vmem:[%s10 + $0x3] sm:$0x1]
    %v7954 = vlaneseq
    %v7955 = vshrl.u32 %v7954, 7
    %v7956 = vsub.s32 0, %v7955
    %v7957 = vrot.slane %v7953, %v7956
    %v7958 = vadd.f32 %v7951, %v7957
    %v7959 = vadd.f32 %v7952, %v7957
    %v7960 = vld [vmem:[%s11] sm:$0xff]
    %v7961 = vld [vmem:[%s11 + $0x8] sm:$0xff]
    %v7962 = vld [vmem:[%s11 + $0x10] sm:$0xff]
    %v7963 = vld [vmem:[%s11 + $0x18] sm:$0xff]
    %v7964 = vld [vmem:[%s12] sm:$0x1]
    %v7966 = vlaneseq
    %v7967 = vshrl.u32 %v7966, 7
    %v7968 = vsub.s32 0, %v7967
    %v7969 = vrot.slane %v7964, %v7968
    %v7972 = vsel %vm58, %v7958, 0
    %v7975 = vsel %vm58, %v7959, 0
    %7977 = vmatprep.subr.mxu0 0.0
    %7978 = vmatpush1.msra.mxu0 %v7960
    %7979 = vmatprep.subr.mxu0 0.0
    %7980 = vmatpush1.msra.mxu0 %v7961
    %7981 = vmatprep.subr.mxu0 0.0
    %7982 = vmatpush1.msra.mxu0 %v7962
    %7983 = vmatprep.subr.mxu0 0.0
    %7984 = vmatpush1.msra.mxu0 %v7963
    %7985 = vmatprep.subr.mxu0 0.0
    %7986 = vmatpush1.msra.mxu0 0.0
    %7987 = vmatprep.subr.mxu0 0.0
    %7988 = vmatpush1.msra.mxu0 0.0
    %7989 = vmatprep.subr.mxu0 0.0
    %7990 = vmatpush1.msra.mxu0 0.0
    %7991 = vmatprep.subr.mxu0 0.0
    %7992 = vmatpush1.msra.mxu0 0.0
    %7993 = vmatprep.subr.mxu0 0.0
    %7994 = vmatpush1.msra.mxu0 0.0
    %7995 = vmatprep.subr.mxu0 0.0
    %7996 = vmatpush1.msra.mxu0 0.0
    %7997 = vmatprep.subr.mxu0 0.0
    %7998 = vmatpush1.msra.mxu0 0.0
    %7999 = vmatprep.subr.mxu0 0.0
    %8000 = vmatpush1.msra.mxu0 0.0
    %8001 = vmatprep.subr.mxu0 0.0
    %8002 = vmatpush1.msra.mxu0 0.0
    %8003 = vmatprep.subr.mxu0 0.0
    %8004 = vmatpush1.msra.mxu0 0.0
    %8005 = vmatprep.subr.mxu0 0.0
    %8006 = vmatpush1.msra.mxu0 0.0
    %8007 = vmatprep.subr.mxu0 0.0
    %8008 = vmatpush1.msra.mxu0 0.0
    %8009 = vmatprep.subr.mxu0 0.0
    %8010 = vmatpush1.msra.mxu0 0.0
    %8011 = vmatprep.subr.mxu0 0.0
    %8012 = vmatpush1.msra.mxu0 0.0
    %8013 = vmatprep.subr.mxu0 0.0
    %8014 = vmatpush1.msra.mxu0 0.0
    %8015 = vmatprep.subr.mxu0 0.0
    %8016 = vmatpush1.msra.mxu0 0.0
    %8017 = vmatprep.subr.mxu0 0.0
    %8018 = vmatpush1.msra.mxu0 0.0
    %8019 = vmatprep.subr.mxu0 0.0
    %8020 = vmatpush1.msra.mxu0 0.0
    %8021 = vmatprep.subr.mxu0 0.0
    %8022 = vmatpush1.msra.mxu0 0.0
    %8023 = vmatprep.subr.mxu0 0.0
    %8024 = vmatpush1.msra.mxu0 0.0
    %8025 = vmatprep.subr.mxu0 0.0
    %8026 = vmatpush1.msra.mxu0 0.0
    %8027 = vmatprep.subr.mxu0 0.0
    %8028 = vmatpush1.msra.mxu0 0.0
    %8029 = vmatprep.subr.mxu0 0.0
    %8030 = vmatpush1.msra.mxu0 0.0
    %8031 = vmatprep.subr.mxu0 0.0
    %8032 = vmatpush1.msra.mxu0 0.0
    %8033 = vmatprep.subr.mxu0 0.0
    %8034 = vmatpush1.msra.mxu0 0.0
    %8035 = vmatprep.subr.mxu0 0.0
    %8036 = vmatpush1.msra.mxu0 0.0
    %8037 = vmatprep.subr.mxu0 0.0
    %8038 = vmatpush1.msra.mxu0 0.0
    %8039 = vmatprep.subr.mxu0 0.0
    %8040 = vmatpush1.msra.mxu0 0.0
    %8041 = vmatprep.mubr.f32.mxu0 0.0
    %8042 = vmatmul.mubr.f32.gmra.mrb[0].mxu0 %v7972
    %v8043 = vpop.f32.mrb[0].mxu0
    %v8044 = vadd.f32 %v7969, %v8043
    %v8045 = vpop.f32.mrb[0].mxu0
    %8046 = vmatprep.mubr.f32.mxu0 0.0
    %8047 = vmatmul.mubr.f32.gmra.mrb[0].mxu0 %v7975
    %v8048 = vpop.f32.mrb[0].mxu0
    %v8049 = vadd.f32 %v7969, %v8048
    %v8050 = vpop.f32.mrb[0].mxu0
    %8051 = vdwg.mxu0
    %8052 = vst [vmem:[#allocation3] sm:$0xff] %v8044
    %8053 = vst [vmem:[#allocation3 + $0x8] sm:$0xff] %v8049
    // Predicated region
    $region54: #{transformer_forward.1} parent=1 // pred_check
      _
    $region55: #{transformer_forward.1} parent=1 // pred_check_branch
      %8055 = sbr.rel (0) target = $region57
    $region56: #{transformer_forward.1} parent=1 // pred_region
      %s8057 = ssub.s32 256, 256
      %8058 = vsyncadd [#allocation4], %s8057
      %s8059 = sshll.u32 [#allocation3], 4
      %s8060 = int_to_ptr.vmem [resolvable:$true] %s8059
      %8065 = dma.vmem_to_hbm [thread:$0]  %s8060, 256, %s13, [#allocation4], 128, 128, 8
    $region57: #{transformer_forward.1} parent=1 // pred_fallthru
      _
    // Predicated region
    $region58: #{transformer_forward.1} parent=1 // pred_check
      _
    $region59: #{transformer_forward.1} parent=1 // pred_check_branch
      %8067 = sbr.rel (0) target = $region61
    $region60: #{transformer_forward.1} parent=1 // pred_region
      %8068 = dma.done [#allocation4], 256
    $region61: #{transformer_forward.1} parent=1 // pred_fallthru
      _
    %8069 = vsyncpa [#allocation4], 1

</llo_original>
